<compile_context>
chip_gen: v7x
topology: tpu7x:2x2x1
jax: 0.10.0
libtpu: 0.0.40
codegen_flags: <defaults>
</compile_context>

<pallas_src>
import math
import functools

import jax
import jax.numpy as jnp
from jax import lax
from jax.experimental import pallas as pl
from jax.experimental.pallas import tpu as pltpu

_DEFAULT_TILE = 256


# ---------------------------------------------------------------------------
# Shared bucket math (exactly mirrors T5RelativePositionBias._relative_position_bucket,
# including the trunc-toward-zero .long() cast).
# ---------------------------------------------------------------------------
def _relative_position_bucket(n, *, causal, num_buckets, max_distance):
    nb = num_buckets
    if not causal:
        nb //= 2
        ret = jnp.where(n < 0, jnp.int32(nb), jnp.int32(0))
        n = jnp.abs(n)
    else:
        ret = jnp.zeros_like(n)
        n = jnp.maximum(n, 0)
    max_exact = nb // 2
    is_small = n < max_exact
    n_f = jnp.maximum(n, 1).astype(jnp.float32)  # guard log(0); masked by is_small
    val_if_large = max_exact + (
        jnp.log(n_f / max_exact) / math.log(max_distance / max_exact)
        * (nb - max_exact)).astype(jnp.int32)    # trunc toward zero == torch .long()
    val_if_large = jnp.minimum(val_if_large, nb - 1)
    return ret + jnp.where(is_small, n, val_if_large)


# ---------------------------------------------------------------------------
# Primary path: Toeplitz materialization (strided pltpu.roll + triangular select)
# ---------------------------------------------------------------------------
def _toeplitz_tile_kernel(w_lo_ref, w_hi_ref, out_ref, *, tile):
    """out[r, c] = W[(tile-1) - r + c], where W = concat(w_lo, w_hi), len 2*tile."""
    T = tile
    lo = jnp.broadcast_to(w_lo_ref[...], (T, T))   # (1, T) -> (T, T), sublane bcast
    hi = jnp.broadcast_to(w_hi_ref[...], (T, T))
    # Strided lane rotation (XLU): sublane r is rolled by (1 + r) mod T, so lane c
    # of row r holds W_*[(c + T - 1 - r) mod T].
    lo = pltpu.roll(lo, 1, 1, stride=1, stride_axis=0)
    hi = pltpu.roll(hi, 1, 1, stride=1, stride_axis=0)
    r = lax.broadcasted_iota(jnp.int32, (T, T), 0)
    c = lax.broadcasted_iota(jnp.int32, (T, T), 1)
    # c <= r  ->  window index (T-1-r)+c < T  -> value comes from w_lo, else w_hi.
    out_ref[...] = jnp.where(c <= r, lo, hi)


def _bias_toeplitz(x, emb_weight, *, scale, causal, num_buckets, max_distance,
                   tile=_DEFAULT_TILE):
    i, j = int(x.shape[-2]), int(x.shape[-1])
    T = tile
    nbi, nbj = pl.cdiv(i, T), pl.cdiv(j, T)
    Ip, Jp = nbi * T, nbj * T

    emb_flat = emb_weight.reshape(num_buckets).astype(jnp.float32)

    # 1-D Toeplitz value vector, scale folded in:
    #   vals[p] = scale * emb[bucket(n = Ip - 1 - p)],  p in [0, Ip + Jp).
    # Row q of the padded output is vals[Ip-1-q : Ip-1-q+Jp].
    p = jnp.arange(Ip + Jp, dtype=jnp.int32)
    bucket = _relative_position_bucket((Ip - 1) - p, causal=causal,
                                       num_buckets=num_buckets,
                                       max_distance=max_distance)
    vals = (emb_flat[bucket] * jnp.float32(scale)).reshape(1, Ip + Jp)

    out_padded = pl.pallas_call(
        functools.partial(_toeplitz_tile_kernel, tile=T),
        out_shape=jax.ShapeDtypeStruct((Ip, Jp), jnp.float32),
        grid=(nbi, nbj),
        in_specs=[
            # Tile (ti, tj) reads vals[T*a : T*(a+2)) with a = nbi - 1 + tj - ti.
            pl.BlockSpec((1, T), lambda ti, tj: (0, nbi - 1 + tj - ti)),
            pl.BlockSpec((1, T), lambda ti, tj: (0, nbi + tj - ti)),
        ],
        out_specs=pl.BlockSpec((T, T), lambda ti, tj: (ti, tj)),
        compiler_params=pltpu.CompilerParams(
            dimension_semantics=("parallel", "parallel"),
            vmem_limit_bytes=32 * 1024 * 1024),
        cost_estimate=pl.CostEstimate(
            flops=4 * Ip * Jp, transcendentals=0,
            bytes_accessed=4 * Ip * Jp + 8 * T * nbi * nbj),
    )(vals, vals)
    return out_padded[:i, :j]


# ---------------------------------------------------------------------------
# Fallback path: in-kernel bucket math + balanced binary select tree over the
# pre-scaled 32-entry table (same tiling / parallel grid).
# ---------------------------------------------------------------------------
def _tree_tile_kernel(table_ref, out_ref, *, tile, causal, num_buckets,
                      max_distance):
    T = tile
    q = pl.program_id(0) * T + lax.broadcasted_iota(jnp.int32, (T, T), 0)
    k = pl.program_id(1) * T + lax.broadcasted_iota(jnp.int32, (T, T), 1)
    bucket = _relative_position_bucket(q - k, causal=causal,
                                       num_buckets=num_buckets,
                                       max_distance=max_distance)

    # log2(num_buckets) select levels instead of a num_buckets-way accumulate.
    def select(lo, hi):
        if hi - lo == 1:
            return table_ref[lo]
        mid = (lo + hi) // 2
        return jnp.where(bucket < mid, select(lo, mid), select(mid, hi))

    out_ref[...] = jnp.broadcast_to(select(0, num_buckets), (T, T))


def _bias_tree(x, emb_weight, *, scale, causal, num_buckets, max_distance,
               tile=_DEFAULT_TILE):
    i, j = int(x.shape[-2]), int(x.shape[-1])
    T = tile
    nbi, nbj = pl.cdiv(i, T), pl.cdiv(j, T)
    Ip, Jp = nbi * T, nbj * T

    # Fold scale into the tiny table (gather-then-scale == scale-then-gather).
    table = emb_weight.reshape(num_buckets).astype(jnp.float32) * jnp.float32(scale)

    out_padded = pl.pallas_call(
        functools.partial(_tree_tile_kernel, tile=T, causal=causal,
                          num_buckets=num_buckets, max_distance=max_distance),
        out_shape=jax.ShapeDtypeStruct((Ip, Jp), jnp.float32),
        grid=(nbi, nbj),
        in_specs=[pl.BlockSpec(memory_space=pltpu.MemorySpace.SMEM)],
        out_specs=pl.BlockSpec((T, T), lambda ti, tj: (ti, tj)),
        compiler_params=pltpu.CompilerParams(
            dimension_semantics=("parallel", "parallel"),
            vmem_limit_bytes=32 * 1024 * 1024),
        cost_estimate=pl.CostEstimate(
            flops=60 * Ip * Jp, transcendentals=Ip * Jp,
            bytes_accessed=4 * Ip * Jp),
    )(table)
    return out_padded[:i, :j]


# ---------------------------------------------------------------------------
# Pure-JAX reference (direct transcription of the PyTorch module).
# ---------------------------------------------------------------------------
def _reference(x, emb_weight, *, scale, causal, num_buckets, max_distance):
    i, j = x.shape[-2], x.shape[-1]
    q_pos = jnp.arange(i, dtype=jnp.int32)
    k_pos = jnp.arange(j, dtype=jnp.int32)
    rel_pos = k_pos[None, :] - q_pos[:, None]
    n = -rel_pos
    nb = num_buckets
    if not causal:
        nb //= 2
        ret = (n < 0).astype(jnp.int32) * nb
        n = jnp.abs(n)
    else:
        ret = jnp.zeros_like(n)
        n = jnp.maximum(n, 0)
    max_exact = nb // 2
    is_small = n < max_exact
    n_f = jnp.maximum(n, 1).astype(jnp.float32)
    val_if_large = max_exact + (
        jnp.log(n_f / max_exact) / math.log(max_distance / max_exact)
        * (nb - max_exact)).astype(jnp.int32)
    val_if_large = jnp.minimum(val_if_large, nb - 1)
    bucket = ret + jnp.where(is_small, n, val_if_large)
    values = emb_weight.reshape(num_buckets).astype(jnp.float32)[bucket]
    return values * scale


# ---------------------------------------------------------------------------
# Path selection: probe the strided-roll path once; fall back to the tree
# kernel if it does not lower or does not match the reference.
# ---------------------------------------------------------------------------
_USE_TOEPLITZ = None


def _toeplitz_path_ok():
    global _USE_TOEPLITZ
    if _USE_TOEPLITZ is None:
        try:
            xp = jnp.zeros((1, 1, 260, 300), jnp.float32)   # exercises a 2x2 grid
            wp = (jnp.arange(32, dtype=jnp.float32).reshape(32, 1) - 16.0) * 0.03125
            got = jax.block_until_ready(_bias_toeplitz(
                xp, wp, scale=0.25, causal=False,
                num_buckets=32, max_distance=128, tile=_DEFAULT_TILE))
            want = _reference(xp, wp, scale=0.25, causal=False,
                              num_buckets=32, max_distance=128)
            _USE_TOEPLITZ = bool(jnp.allclose(got, want, atol=1e-6, rtol=1e-6))
        except Exception:
            _USE_TOEPLITZ = False
    return _USE_TOEPLITZ


def t5_relative_position_bias(x, emb_weight, *, scale, causal=False,
                              num_buckets=32, max_distance=128,
                              tile=_DEFAULT_TILE):
    """Pallas equivalent of T5RelativePositionBias.forward(x) -> (i, j) f32 bias."""
    impl = _bias_toeplitz if _toeplitz_path_ok() else _bias_tree
    return impl(x, emb_weight, scale=scale, causal=causal,
                num_buckets=num_buckets, max_distance=max_distance, tile=tile)


if __name__ == "__main__":
    key = jax.random.PRNGKey(0)
    k_x, k_emb = jax.random.split(key)

    num_buckets = 32
    max_distance = 128
    scale = 1.0 / math.sqrt(32.0)

    # x: (batch, heads, i, j) attention-score-shaped tensor; only (i, j) matter.
    x = jax.random.normal(k_x, (2, 4, 16, 16), dtype=jnp.float32)
    # nn.Embedding(num_buckets, 1) default init ~ N(0, 1)
    emb_weight = jax.random.normal(k_emb, (num_buckets, 1), dtype=jnp.float32)

    test_cases = [
        (x, False),
        (x, True),
        (jnp.zeros((1, 1, 300, 512), jnp.float32), False),   # multi-tile + padding
    ]
    for xi, causal in test_cases:
        bias = jax.block_until_ready(t5_relative_position_bias(
            xi, emb_weight, scale=scale, causal=causal,
            num_buckets=num_buckets, max_distance=max_distance))
        ref = _reference(xi, emb_weight, scale=scale, causal=causal,
                         num_buckets=num_buckets, max_distance=max_distance)
        assert bias.shape == xi.shape[-2:], (bias.shape, xi.shape)
        assert jnp.allclose(bias, ref, atol=1e-6, rtol=1e-6), (
            f"mismatch vs reference (causal={causal}, shape={xi.shape[-2:]})")

    print("KERNEL_OK")
</pallas_src>

<mosaic_0001>
module attributes {stable_mosaic.version = 11 : i64} {
  func.func @_toeplitz_tile_kernel(%arg0: i32, %arg1: i32, %arg2: memref<1x256xf32, #tpu.memory_space<vmem>>, %arg3: memref<1x256xf32, #tpu.memory_space<vmem>>, %arg4: memref<256x256xf32, #tpu.memory_space<vmem>>) attributes {dimension_semantics = [#tpu.dimension_semantics<parallel>, #tpu.dimension_semantics<parallel>], iteration_bounds = array<i64: 2, 2>, scalar_prefetch = 0 : i64, scratch_operands = 0 : i64, tpu.core_type = #tpu.core_type<tc>, window_params = [{transform_indices = @transform_0, window_bounds = array<i64: 1, 256>}, {transform_indices = @transform_1, window_bounds = array<i64: 1, 256>}, {transform_indices = @transform_2, window_bounds = array<i64: 256, 256>}]} {
    %c0 = arith.constant 0 : index
    %c0_0 = arith.constant 0 : index
    %0 = vector.load %arg2[%c0, %c0_0] : memref<1x256xf32, #tpu.memory_space<vmem>>, vector<1x256xf32>
    %1 = vector.shape_cast %0 : vector<1x256xf32> to vector<1x256xf32>
    %2 = vector.broadcast %1 : vector<1x256xf32> to vector<256x256xf32>
    %c0_1 = arith.constant 0 : index
    %c0_2 = arith.constant 0 : index
    %3 = vector.load %arg3[%c0_1, %c0_2] : memref<1x256xf32, #tpu.memory_space<vmem>>, vector<1x256xf32>
    %4 = vector.shape_cast %3 : vector<1x256xf32> to vector<1x256xf32>
    %5 = vector.broadcast %4 : vector<1x256xf32> to vector<256x256xf32>
    %c1_i32 = arith.constant 1 : i32
    %6 = tpu.dynamic_rotate %2 by %c1_i32 dim 1 {stride = 1 : si32, stride_dimension = 0 : si32} : vector<256x256xf32>, i32 -> vector<256x256xf32>
    %c1_i32_3 = arith.constant 1 : i32
    %7 = tpu.dynamic_rotate %5 by %c1_i32_3 dim 1 {stride = 1 : si32, stride_dimension = 0 : si32} : vector<256x256xf32>, i32 -> vector<256x256xf32>
    %8 = tpu.iota {dimensions = array<i32: 0>} : vector<256x256xi32>
    %9 = tpu.iota {dimensions = array<i32: 1>} : vector<256x256xi32>
    %10 = arith.cmpi sle, %9, %8 : vector<256x256xi32>
    %11 = arith.select %10, %6, %7 : vector<256x256xi1>, vector<256x256xf32>
    %c0_4 = arith.constant 0 : index
    %c0_5 = arith.constant 0 : index
    %12 = vector.load %arg4[%c0_4, %c0_5] : memref<256x256xf32, #tpu.memory_space<vmem>>, vector<256x256xf32>
    tpu.vector_store %arg4[%c0_4, %c0_5], %11 {strides = array<i32>} : memref<256x256xf32, #tpu.memory_space<vmem>>, vector<256x256xf32>,
    return
  }
  func.func @transform_0(%arg0: i32, %arg1: i32) -> (i32, i32) {
    %c1_i32 = arith.constant 1 : i32
    %0 = arith.addi %c1_i32, %arg1 : i32
    %1 = arith.subi %0, %arg0 : i32
    %c0_i32 = arith.constant 0 : i32
    %c0_i32_0 = arith.constant 0 : i32
    return %c0_i32, %1 : i32, i32
  }
  func.func @transform_1(%arg0: i32, %arg1: i32) -> (i32, i32) {
    %c2_i32 = arith.constant 2 : i32
    %0 = arith.addi %c2_i32, %arg1 : i32
    %1 = arith.subi %0, %arg0 : i32
    %c0_i32 = arith.constant 0 : i32
    %c0_i32_0 = arith.constant 0 : i32
    return %c0_i32, %1 : i32, i32
  }
  func.func @transform_2(%arg0: i32, %arg1: i32) -> (i32, i32) {
    %c0_i32 = arith.constant 0 : i32
    return %arg0, %arg1 : i32, i32
  }
}

module attributes {stable_mosaic.version = 11 : i64} {
  func.func @_tree_tile_kernel(%arg0: i32, %arg1: i32, %arg2: memref<32xf32, #tpu.memory_space<smem>>, %arg3: memref<256x256xf32, #tpu.memory_space<vmem>>) attributes {dimension_semantics = [#tpu.dimension_semantics<parallel>, #tpu.dimension_semantics<parallel>], iteration_bounds = array<i64: 1, 1>, scalar_prefetch = 0 : i64, scratch_operands = 0 : i64, tpu.core_type = #tpu.core_type<tc>, window_params = [{transform_indices = @transform_0, window_bounds = array<i64: 32>}, {transform_indices = @transform_1, window_bounds = array<i64: 256, 256>}]} {
    %c256_i32 = arith.constant 256 : i32
    %0 = arith.muli %arg0, %c256_i32 : i32
    %1 = tpu.iota {dimensions = array<i32: 0>} : vector<256x256xi32>
    %2 = vector.broadcast %0 : i32 to vector<256x256xi32>
    %3 = arith.addi %2, %1 : vector<256x256xi32>
    %c256_i32_0 = arith.constant 256 : i32
    %4 = arith.muli %arg1, %c256_i32_0 : i32
    %5 = tpu.iota {dimensions = array<i32: 1>} : vector<256x256xi32>
    %6 = vector.broadcast %4 : i32 to vector<256x256xi32>
    %7 = arith.addi %6, %5 : vector<256x256xi32>
    %8 = arith.subi %3, %7 : vector<256x256xi32>
    %c0_i32 = arith.constant 0 : i32
    %9 = vector.broadcast %c0_i32 : i32 to vector<256x256xi32>
    %10 = arith.cmpi slt, %8, %9 : vector<256x256xi32>
    %c16_i32 = arith.constant 16 : i32
    %c0_i32_1 = arith.constant 0 : i32
    %11 = vector.broadcast %c16_i32 : i32 to vector<256x256xi32>
    %12 = vector.broadcast %c0_i32_1 : i32 to vector<256x256xi32>
    %13 = arith.select %10, %11, %12 : vector<256x256xi1>, vector<256x256xi32>
    %14 = math.absi %8 : vector<256x256xi32>
    %c8_i32 = arith.constant 8 : i32
    %15 = vector.broadcast %c8_i32 : i32 to vector<256x256xi32>
    %16 = arith.cmpi slt, %14, %15 : vector<256x256xi32>
    %c1_i32 = arith.constant 1 : i32
    %17 = vector.broadcast %c1_i32 : i32 to vector<256x256xi32>
    %18 = arith.maxsi %14, %17 : vector<256x256xi32>
    %19 = arith.sitofp %18 : vector<256x256xi32> to vector<256x256xf32>
    %cst = arith.constant 8.000000e+00 : f32
    %20 = vector.broadcast %cst : f32 to vector<256x256xf32>
    %21 = arith.divf %19, %20 : vector<256x256xf32>
    %22 = math.log %21 : vector<256x256xf32>
    %cst_2 = arith.constant 2.77258873 : f32
    %23 = vector.broadcast %cst_2 : f32 to vector<256x256xf32>
    %24 = arith.divf %22, %23 : vector<256x256xf32>
    %cst_3 = arith.constant 8.000000e+00 : f32
    %25 = vector.broadcast %cst_3 : f32 to vector<256x256xf32>
    %26 = arith.mulf %24, %25 : vector<256x256xf32>
    %27 = arith.fptosi %26 : vector<256x256xf32> to vector<256x256xi32>
    %c8_i32_4 = arith.constant 8 : i32
    %28 = vector.broadcast %c8_i32_4 : i32 to vector<256x256xi32>
    %29 = arith.addi %28, %27 : vector<256x256xi32>
    %c15_i32 = arith.constant 15 : i32
    %30 = vector.broadcast %c15_i32 : i32 to vector<256x256xi32>
    %31 = arith.minsi %29, %30 : vector<256x256xi32>
    %32 = arith.select %16, %14, %31 : vector<256x256xi1>, vector<256x256xi32>
    %33 = arith.addi %13, %32 : vector<256x256xi32>
    %c16_i32_5 = arith.constant 16 : i32
    %34 = vector.broadcast %c16_i32_5 : i32 to vector<256x256xi32>
    %35 = arith.cmpi slt, %33, %34 : vector<256x256xi32>
    %c8_i32_6 = arith.constant 8 : i32
    %36 = vector.broadcast %c8_i32_6 : i32 to vector<256x256xi32>
    %37 = arith.cmpi slt, %33, %36 : vector<256x256xi32>
    %c4_i32 = arith.constant 4 : i32
    %38 = vector.broadcast %c4_i32 : i32 to vector<256x256xi32>
    %39 = arith.cmpi slt, %33, %38 : vector<256x256xi32>
    %c2_i32 = arith.constant 2 : i32
    %40 = vector.broadcast %c2_i32 : i32 to vector<256x256xi32>
    %41 = arith.cmpi slt, %33, %40 : vector<256x256xi32>
    %c1_i32_7 = arith.constant 1 : i32
    %42 = vector.broadcast %c1_i32_7 : i32 to vector<256x256xi32>
    %43 = arith.cmpi slt, %33, %42 : vector<256x256xi32>
    %c0 = arith.constant 0 : index
    %44 = memref.load %arg2[%c0] : memref<32xf32, #tpu.memory_space<smem>>
    %c1 = arith.constant 1 : index
    %45 = memref.load %arg2[%c1] : memref<32xf32, #tpu.memory_space<smem>>
    %46 = vector.broadcast %44 : f32 to vector<256x256xf32>
    %47 = vector.broadcast %45 : f32 to vector<256x256xf32>
    %48 = arith.select %43, %46, %47 : vector<256x256xi1>, vector<256x256xf32>
    %c3_i32 = arith.constant 3 : i32
    %49 = vector.broadcast %c3_i32 : i32 to vector<256x256xi32>
    %50 = arith.cmpi slt, %33, %49 : vector<256x256xi32>
    %c2 = arith.constant 2 : index
    %51 = memref.load %arg2[%c2] : memref<32xf32, #tpu.memory_space<smem>>
    %c3 = arith.constant 3 : index
    %52 = memref.load %arg2[%c3] : memref<32xf32, #tpu.memory_space<smem>>
    %53 = vector.broadcast %51 : f32 to vector<256x256xf32>
    %54 = vector.broadcast %52 : f32 to vector<256x256xf32>
    %55 = arith.select %50, %53, %54 : vector<256x256xi1>, vector<256x256xf32>
    %56 = arith.select %41, %48, %55 : vector<256x256xi1>, vector<256x256xf32>
    %c6_i32 = arith.constant 6 : i32
    %57 = vector.broadcast %c6_i32 : i32 to vector<256x256xi32>
    %58 = arith.cmpi slt, %33, %57 : vector<256x256xi32>
    %c5_i32 = arith.constant 5 : i32
    %59 = vector.broadcast %c5_i32 : i32 to vector<256x256xi32>
    %60 = arith.cmpi slt, %33, %59 : vector<256x256xi32>
    %c4 = arith.constant 4 : index
    %61 = memref.load %arg2[%c4] : memref<32xf32, #tpu.memory_space<smem>>
    %c5 = arith.constant 5 : index
    %62 = memref.load %arg2[%c5] : memref<32xf32, #tpu.memory_space<smem>>
    %63 = vector.broadcast %61 : f32 to vector<256x256xf32>
    %64 = vector.broadcast %62 : f32 to vector<256x256xf32>
    %65 = arith.select %60, %63, %64 : vector<256x256xi1>, vector<256x256xf32>
    %c7_i32 = arith.constant 7 : i32
    %66 = vector.broadcast %c7_i32 : i32 to vector<256x256xi32>
    %67 = arith.cmpi slt, %33, %66 : vector<256x256xi32>
    %c6 = arith.constant 6 : index
    %68 = memref.load %arg2[%c6] : memref<32xf32, #tpu.memory_space<smem>>
    %c7 = arith.constant 7 : index
    %69 = memref.load %arg2[%c7] : memref<32xf32, #tpu.memory_space<smem>>
    %70 = vector.broadcast %68 : f32 to vector<256x256xf32>
    %71 = vector.broadcast %69 : f32 to vector<256x256xf32>
    %72 = arith.select %67, %70, %71 : vector<256x256xi1>, vector<256x256xf32>
    %73 = arith.select %58, %65, %72 : vector<256x256xi1>, vector<256x256xf32>
    %74 = arith.select %39, %56, %73 : vector<256x256xi1>, vector<256x256xf32>
    %c12_i32 = arith.constant 12 : i32
    %75 = vector.broadcast %c12_i32 : i32 to vector<256x256xi32>
    %76 = arith.cmpi slt, %33, %75 : vector<256x256xi32>
    %c10_i32 = arith.constant 10 : i32
    %77 = vector.broadcast %c10_i32 : i32 to vector<256x256xi32>
    %78 = arith.cmpi slt, %33, %77 : vector<256x256xi32>
    %c9_i32 = arith.constant 9 : i32
    %79 = vector.broadcast %c9_i32 : i32 to vector<256x256xi32>
    %80 = arith.cmpi slt, %33, %79 : vector<256x256xi32>
    %c8 = arith.constant 8 : index
    %81 = memref.load %arg2[%c8] : memref<32xf32, #tpu.memory_space<smem>>
    %c9 = arith.constant 9 : index
    %82 = memref.load %arg2[%c9] : memref<32xf32, #tpu.memory_space<smem>>
    %83 = vector.broadcast %81 : f32 to vector<256x256xf32>
    %84 = vector.broadcast %82 : f32 to vector<256x256xf32>
    %85 = arith.select %80, %83, %84 : vector<256x256xi1>, vector<256x256xf32>
    %c11_i32 = arith.constant 11 : i32
    %86 = vector.broadcast %c11_i32 : i32 to vector<256x256xi32>
    %87 = arith.cmpi slt, %33, %86 : vector<256x256xi32>
    %c10 = arith.constant 10 : index
    %88 = memref.load %arg2[%c10] : memref<32xf32, #tpu.memory_space<smem>>
    %c11 = arith.constant 11 : index
    %89 = memref.load %arg2[%c11] : memref<32xf32, #tpu.memory_space<smem>>
    %90 = vector.broadcast %88 : f32 to vector<256x256xf32>
    %91 = vector.broadcast %89 : f32 to vector<256x256xf32>
    %92 = arith.select %87, %90, %91 : vector<256x256xi1>, vector<256x256xf32>
    %93 = arith.select %78, %85, %92 : vector<256x256xi1>, vector<256x256xf32>
    %c14_i32 = arith.constant 14 : i32
    %94 = vector.broadcast %c14_i32 : i32 to vector<256x256xi32>
    %95 = arith.cmpi slt, %33, %94 : vector<256x256xi32>
    %c13_i32 = arith.constant 13 : i32
    %96 = vector.broadcast %c13_i32 : i32 to vector<256x256xi32>
    %97 = arith.cmpi slt, %33, %96 : vector<256x256xi32>
    %c12 = arith.constant 12 : index
    %98 = memref.load %arg2[%c12] : memref<32xf32, #tpu.memory_space<smem>>
    %c13 = arith.constant 13 : index
    %99 = memref.load %arg2[%c13] : memref<32xf32, #tpu.memory_space<smem>>
    %100 = vector.broadcast %98 : f32 to vector<256x256xf32>
    %101 = vector.broadcast %99 : f32 to vector<256x256xf32>
    %102 = arith.select %97, %100, %101 : vector<256x256xi1>, vector<256x256xf32>
    %c15_i32_8 = arith.constant 15 : i32
    %103 = vector.broadcast %c15_i32_8 : i32 to vector<256x256xi32>
    %104 = arith.cmpi slt, %33, %103 : vector<256x256xi32>
    %c14 = arith.constant 14 : index
    %105 = memref.load %arg2[%c14] : memref<32xf32, #tpu.memory_space<smem>>
    %c15 = arith.constant 15 : index
    %106 = memref.load %arg2[%c15] : memref<32xf32, #tpu.memory_space<smem>>
    %107 = vector.broadcast %105 : f32 to vector<256x256xf32>
    %108 = vector.broadcast %106 : f32 to vector<256x256xf32>
    %109 = arith.select %104, %107, %108 : vector<256x256xi1>, vector<256x256xf32>
    %110 = arith.select %95, %102, %109 : vector<256x256xi1>, vector<256x256xf32>
    %111 = arith.select %76, %93, %110 : vector<256x256xi1>, vector<256x256xf32>
    %112 = arith.select %37, %74, %111 : vector<256x256xi1>, vector<256x256xf32>
    %c24_i32 = arith.constant 24 : i32
    %113 = vector.broadcast %c24_i32 : i32 to vector<256x256xi32>
    %114 = arith.cmpi slt, %33, %113 : vector<256x256xi32>
    %c20_i32 = arith.constant 20 : i32
    %115 = vector.broadcast %c20_i32 : i32 to vector<256x256xi32>
    %116 = arith.cmpi slt, %33, %115 : vector<256x256xi32>
    %c18_i32 = arith.constant 18 : i32
    %117 = vector.broadcast %c18_i32 : i32 to vector<256x256xi32>
    %118 = arith.cmpi slt, %33, %117 : vector<256x256xi32>
    %c17_i32 = arith.constant 17 : i32
    %119 = vector.broadcast %c17_i32 : i32 to vector<256x256xi32>
    %120 = arith.cmpi slt, %33, %119 : vector<256x256xi32>
    %c16 = arith.constant 16 : index
    %121 = memref.load %arg2[%c16] : memref<32xf32, #tpu.memory_space<smem>>
    %c17 = arith.constant 17 : index
    %122 = memref.load %arg2[%c17] : memref<32xf32, #tpu.memory_space<smem>>
    %123 = vector.broadcast %121 : f32 to vector<256x256xf32>
    %124 = vector.broadcast %122 : f32 to vector<256x256xf32>
    %125 = arith.select %120, %123, %124 : vector<256x256xi1>, vector<256x256xf32>
    %c19_i32 = arith.constant 19 : i32
    %126 = vector.broadcast %c19_i32 : i32 to vector<256x256xi32>
    %127 = arith.cmpi slt, %33, %126 : vector<256x256xi32>
    %c18 = arith.constant 18 : index
    %128 = memref.load %arg2[%c18] : memref<32xf32, #tpu.memory_space<smem>>
    %c19 = arith.constant 19 : index
    %129 = memref.load %arg2[%c19] : memref<32xf32, #tpu.memory_space<smem>>
    %130 = vector.broadcast %128 : f32 to vector<256x256xf32>
    %131 = vector.broadcast %129 : f32 to vector<256x256xf32>
    %132 = arith.select %127, %130, %131 : vector<256x256xi1>, vector<256x256xf32>
    %133 = arith.select %118, %125, %132 : vector<256x256xi1>, vector<256x256xf32>
    %c22_i32 = arith.constant 22 : i32
    %134 = vector.broadcast %c22_i32 : i32 to vector<256x256xi32>
    %135 = arith.cmpi slt, %33, %134 : vector<256x256xi32>
    %c21_i32 = arith.constant 21 : i32
    %136 = vector.broadcast %c21_i32 : i32 to vector<256x256xi32>
    %137 = arith.cmpi slt, %33, %136 : vector<256x256xi32>
    %c20 = arith.constant 20 : index
    %138 = memref.load %arg2[%c20] : memref<32xf32, #tpu.memory_space<smem>>
    %c21 = arith.constant 21 : index
    %139 = memref.load %arg2[%c21] : memref<32xf32, #tpu.memory_space<smem>>
    %140 = vector.broadcast %138 : f32 to vector<256x256xf32>
    %141 = vector.broadcast %139 : f32 to vector<256x256xf32>
    %142 = arith.select %137, %140, %141 : vector<256x256xi1>, vector<256x256xf32>
    %c23_i32 = arith.constant 23 : i32
    %143 = vector.broadcast %c23_i32 : i32 to vector<256x256xi32>
    %144 = arith.cmpi slt, %33, %143 : vector<256x256xi32>
    %c22 = arith.constant 22 : index
    %145 = memref.load %arg2[%c22] : memref<32xf32, #tpu.memory_space<smem>>
    %c23 = arith.constant 23 : index
    %146 = memref.load %arg2[%c23] : memref<32xf32, #tpu.memory_space<smem>>
    %147 = vector.broadcast %145 : f32 to vector<256x256xf32>
    %148 = vector.broadcast %146 : f32 to vector<256x256xf32>
    %149 = arith.select %144, %147, %148 : vector<256x256xi1>, vector<256x256xf32>
    %150 = arith.select %135, %142, %149 : vector<256x256xi1>, vector<256x256xf32>
    %151 = arith.select %116, %133, %150 : vector<256x256xi1>, vector<256x256xf32>
    %c28_i32 = arith.constant 28 : i32
    %152 = vector.broadcast %c28_i32 : i32 to vector<256x256xi32>
    %153 = arith.cmpi slt, %33, %152 : vector<256x256xi32>
    %c26_i32 = arith.constant 26 : i32
    %154 = vector.broadcast %c26_i32 : i32 to vector<256x256xi32>
    %155 = arith.cmpi slt, %33, %154 : vector<256x256xi32>
    %c25_i32 = arith.constant 25 : i32
    %156 = vector.broadcast %c25_i32 : i32 to vector<256x256xi32>
    %157 = arith.cmpi slt, %33, %156 : vector<256x256xi32>
    %c24 = arith.constant 24 : index
    %158 = memref.load %arg2[%c24] : memref<32xf32, #tpu.memory_space<smem>>
    %c25 = arith.constant 25 : index
    %159 = memref.load %arg2[%c25] : memref<32xf32, #tpu.memory_space<smem>>
    %160 = vector.broadcast %158 : f32 to vector<256x256xf32>
    %161 = vector.broadcast %159 : f32 to vector<256x256xf32>
    %162 = arith.select %157, %160, %161 : vector<256x256xi1>, vector<256x256xf32>
    %c27_i32 = arith.constant 27 : i32
    %163 = vector.broadcast %c27_i32 : i32 to vector<256x256xi32>
    %164 = arith.cmpi slt, %33, %163 : vector<256x256xi32>
    %c26 = arith.constant 26 : index
    %165 = memref.load %arg2[%c26] : memref<32xf32, #tpu.memory_space<smem>>
    %c27 = arith.constant 27 : index
    %166 = memref.load %arg2[%c27] : memref<32xf32, #tpu.memory_space<smem>>
    %167 = vector.broadcast %165 : f32 to vector<256x256xf32>
    %168 = vector.broadcast %166 : f32 to vector<256x256xf32>
    %169 = arith.select %164, %167, %168 : vector<256x256xi1>, vector<256x256xf32>
    %170 = arith.select %155, %162, %169 : vector<256x256xi1>, vector<256x256xf32>
    %c30_i32 = arith.constant 30 : i32
    %171 = vector.broadcast %c30_i32 : i32 to vector<256x256xi32>
    %172 = arith.cmpi slt, %33, %171 : vector<256x256xi32>
    %c29_i32 = arith.constant 29 : i32
    %173 = vector.broadcast %c29_i32 : i32 to vector<256x256xi32>
    %174 = arith.cmpi slt, %33, %173 : vector<256x256xi32>
    %c28 = arith.constant 28 : index
    %175 = memref.load %arg2[%c28] : memref<32xf32, #tpu.memory_space<smem>>
    %c29 = arith.constant 29 : index
    %176 = memref.load %arg2[%c29] : memref<32xf32, #tpu.memory_space<smem>>
    %177 = vector.broadcast %175 : f32 to vector<256x256xf32>
    %178 = vector.broadcast %176 : f32 to vector<256x256xf32>
    %179 = arith.select %174, %177, %178 : vector<256x256xi1>, vector<256x256xf32>
    %c31_i32 = arith.constant 31 : i32
    %180 = vector.broadcast %c31_i32 : i32 to vector<256x256xi32>
    %181 = arith.cmpi slt, %33, %180 : vector<256x256xi32>
    %c30 = arith.constant 30 : index
    %182 = memref.load %arg2[%c30] : memref<32xf32, #tpu.memory_space<smem>>
    %c31 = arith.constant 31 : index
    %183 = memref.load %arg2[%c31] : memref<32xf32, #tpu.memory_space<smem>>
    %184 = vector.broadcast %182 : f32 to vector<256x256xf32>
    %185 = vector.broadcast %183 : f32 to vector<256x256xf32>
    %186 = arith.select %181, %184, %185 : vector<256x256xi1>, vector<256x256xf32>
    %187 = arith.select %172, %179, %186 : vector<256x256xi1>, vector<256x256xf32>
    %188 = arith.select %153, %170, %187 : vector<256x256xi1>, vector<256x256xf32>
    %189 = arith.select %114, %151, %188 : vector<256x256xi1>, vector<256x256xf32>
    %190 = arith.select %35, %112, %189 : vector<256x256xi1>, vector<256x256xf32>
    %c0_9 = arith.constant 0 : index
    %c0_10 = arith.constant 0 : index
    %191 = vector.load %arg3[%c0_9, %c0_10] : memref<256x256xf32, #tpu.memory_space<vmem>>, vector<256x256xf32>
    tpu.vector_store %arg3[%c0_9, %c0_10], %190 {strides = array<i32>} : memref<256x256xf32, #tpu.memory_space<vmem>>, vector<256x256xf32>,
    return
  }
  func.func @transform_0(%arg0: i32, %arg1: i32) -> i32 {
    %c0_i32 = arith.constant 0 : i32
    %c0_i32_0 = arith.constant 0 : i32
    return %c0_i32 : i32
  }
  func.func @transform_1(%arg0: i32, %arg1: i32) -> (i32, i32) {
    %c0_i32 = arith.constant 0 : i32
    return %arg0, %arg1 : i32, i32
  }
}

</mosaic_0001>

<llo_original>
// kernel: tpu_custom_call.1
$region0: #{tpu_custom_call.1}
  #allocation0 [shape = 'u32[]', space=smem, size = 0x4, offset = 0x4, fixed_abs, tag = 'smem constant byte address 0x4 - core index']
  #allocation1 [shape = 'u32[144,128]{1,0:T(1,128)}', space=vmem, size = 0x12000, scoped, tag = 'internal scratch']
  %s0 = inlined_call_operand.hbm [shape: f32[1,1024], index: 0, kind: input, shape index: {}]
  %s1 = inlined_call_operand.hbm [shape: f32[1,1024], index: 1, kind: input, shape index: {}]
  %s2 = inlined_call_operand.hbm [shape: f32[512,512], index: 2, kind: output, shape index: {}]
  %s3 = sld [smem:[#allocation0]]
  $region49: #{tpu_custom_call.1} parent=0
    _
  %s5 = ssub.s32 1, %s3
  %s6 = scalar_select 0, %s5, %s3
  $region1: #{tpu_custom_call.1} parent=0
    #allocation2 [shape = 'u8[2048]{0}', space=vmem, size = 0x800, scoped, tag = 'input window, operand 0']
    #allocation3 [shape = 's32[2]{0}', space=sflag, size = 0x8, scoped, tag = 'scoped memory for tpu_custom_call.1']
    #allocation4 [shape = 's32[2]{0}', space=sflag, size = 0x8, scoped, tag = 'scoped memory for tpu_custom_call.1']
    #allocation5 [shape = 'u8[2048]{0}', space=vmem, size = 0x800, scoped, tag = 'input window, operand 1']
    #allocation6 [shape = 's32[2]{0}', space=sflag, size = 0x8, scoped, tag = 'scoped memory for tpu_custom_call.1']
    #allocation7 [shape = 'u8[524288]{0}', space=vmem, size = 0x80000, scoped, tag = 'output window, operand 0']
    %7 = vsyncpa [#allocation3], 0
    %s8 = scalar_lea.sflag [#allocation3], 1
    %9 = vsyncpa %s8, 0
    %10 = vsyncpa [#allocation6], 0
    %s11 = scalar_lea.sflag [#allocation6], 1
    %12 = vsyncpa %s11, 0
    %13 = vsyncpa [#allocation4], 0
    %s14 = scalar_lea.sflag [#allocation4], 1
    %15 = vsyncpa %s14, 0
    loop: start=0, step=1, limit=6
    $region2: #{tpu_custom_call.1} parent=1 // loop_pre_header
      _
    $region3: #{tpu_custom_call.1} parent=1 // loop_header
      %s17 = sphi 0, %s21
      %p18 = scmp.ge.s32.totalorder %s17, 6
      %s24 = sphi 0, %s36
      %s25 = sphi 0, %s32
      %s26 = sphi 0, %s24
      %s27 = sphi 0, %s25
      %s28 = sphi 0, %s26
      %s29 = sphi 0, %s27
      %s43 = sphi 0, %s45
      %s46 = sphi 0, %s43
      %s47 = sphi 0, %s46
      %s63 = sphi 0, %s47
      %s73 = sphi 0, %s75
      %s76 = sphi 0, %s73
      %s77 = sphi 0, %s76
      %s93 = sphi 0, %s77
      %s101 = sphi 0, %s103
      %s104 = sphi 0, %s101
      %s105 = sphi 0, %s104
      %s121 = sphi 0, %s105
    $region4: #{tpu_custom_call.1} parent=1 // loop_header_branch
      %20 = sbr.rel (%p18) target = $region8
    $region5: #{tpu_custom_call.1} parent=1 // loop_body
      %s22 = ssub.s32 %s17, 1
      %s23 = ssub.s32 %s17, 2
      %s30 = sadd.s32 1, %s25
      %p31 = scmp.ge.s32.totalorder %s30, 2
      %s32 = scalar_select %p31, 0, %s30
      %s33 = sadd.s32 1, %s24
      %s34 = scalar_select %p31, %s33, %s24
      %p35 = scmp.ge.s32.totalorder %s34, 2
      %s36 = scalar_select %p35, 0, %s34
      %s37 = sadd.s32 %s25, 1
      %s38 = ssub.s32 %s37, %s24
      %s39 = sadd.s32 %s32, 1
      %s40 = ssub.s32 %s39, %s36
      %s41 = ssub.s32 %s38, %s40
      %p42 = scmp.eq.s32.totalorder %s41, 0
      %s44 = sadd.s32 %s43, 1
      %s45 = scalar_select %p42, %s43, %s44
      %p48 = pneg %p42
      %p49 = scmp.eq.s32.totalorder %s17, 3
      %p50 = por %p48, %p49
      %p51 = scmp.ne.s32.totalorder %s43, %s46
      %p52 = scmp.eq.s32.totalorder %s17, 0
      %p53 = por %p51, %p52
      %p54 = scmp.ne.s32.totalorder %s43, %s46
      %p55 = scmp.eq.s32.totalorder %s22, 3
      %p56 = por %p54, %p55
      %p57 = scmp.ne.s32.totalorder %s46, %s47
      %p58 = scmp.eq.s32.totalorder %s22, 0
      %p59 = por %p57, %p58
      %p60 = scmp.ne.s32.totalorder %s46, %s47
      %p61 = scmp.eq.s32.totalorder %s23, 3
      %p62 = por %p60, %p61
      %p64 = scmp.ne.s32.totalorder %s47, %s63
      %p65 = scmp.eq.s32.totalorder %s23, 0
      %p66 = por %p64, %p65
      %s67 = sadd.s32 %s25, 2
      %s68 = ssub.s32 %s67, %s24
      %s69 = sadd.s32 %s32, 2
      %s70 = ssub.s32 %s69, %s36
      %s71 = ssub.s32 %s68, %s70
      %p72 = scmp.eq.s32.totalorder %s71, 0
      %s74 = sadd.s32 %s73, 1
      %s75 = scalar_select %p72, %s73, %s74
      %p78 = pneg %p72
      %p79 = scmp.eq.s32.totalorder %s17, 3
      %p80 = por %p78, %p79
      %p81 = scmp.ne.s32.totalorder %s73, %s76
      %p82 = scmp.eq.s32.totalorder %s17, 0
      %p83 = por %p81, %p82
      %p84 = scmp.ne.s32.totalorder %s73, %s76
      %p85 = scmp.eq.s32.totalorder %s22, 3
      %p86 = por %p84, %p85
      %p87 = scmp.ne.s32.totalorder %s76, %s77
      %p88 = scmp.eq.s32.totalorder %s22, 0
      %p89 = por %p87, %p88
      %p90 = scmp.ne.s32.totalorder %s76, %s77
      %p91 = scmp.eq.s32.totalorder %s23, 3
      %p92 = por %p90, %p91
      %p94 = scmp.ne.s32.totalorder %s77, %s93
      %p95 = scmp.eq.s32.totalorder %s23, 0
      %p96 = por %p94, %p95
      %s97 = ssub.s32 %s24, %s36
      %s98 = ssub.s32 %s25, %s32
      %s99 = sor.u32 %s97, %s98
      %p100 = scmp.eq.s32.totalorder %s99, 0
      %s102 = sadd.s32 %s101, 1
      %s103 = scalar_select %p100, %s101, %s102
      %p106 = pneg %p100
      %p107 = scmp.eq.s32.totalorder %s17, 3
      %p108 = por %p106, %p107
      %p109 = scmp.ne.s32.totalorder %s101, %s104
      %p110 = scmp.eq.s32.totalorder %s17, 0
      %p111 = por %p109, %p110
      %p112 = scmp.ne.s32.totalorder %s101, %s104
      %p113 = scmp.eq.s32.totalorder %s22, 3
      %p114 = por %p112, %p113
      %p115 = scmp.ne.s32.totalorder %s104, %s105
      %p116 = scmp.eq.s32.totalorder %s22, 0
      %p117 = por %p115, %p116
      %p118 = scmp.ne.s32.totalorder %s104, %s105
      %p119 = scmp.eq.s32.totalorder %s23, 3
      %p120 = por %p118, %p119
      %p122 = scmp.ne.s32.totalorder %s105, %s121
      %p123 = scmp.eq.s32.totalorder %s23, 0
      %p124 = por %p122, %p123
      %p125 = scmp.le.s32.totalorder 1, %s17
      %p126 = scmp.lt.s32.totalorder %s17, 5
      %p127 = pnand %p125, %p126
      %p128 = pneg %p127
      // Predicated region
      $region9: #{tpu_custom_call.1} parent=5 // pred_check
        _
      $region10: #{tpu_custom_call.1} parent=5 // pred_check_branch
        %130 = sbr.rel (%p127) target = $region12
      $region11: #{tpu_custom_call.1} parent=5 // pred_region
        %s131 = ssub.s32 %s17, 1
      $region12: #{tpu_custom_call.1} parent=5 // pred_fallthru
        _
      %p132 = scmp.lt.s32.totalorder %s17, 4
      // Predicated region
      $region13: #{tpu_custom_call.1} parent=5 // pred_check
        %p133 = pneg %p132
      $region14: #{tpu_custom_call.1} parent=5 // pred_check_branch
        %135 = sbr.rel (%p133) target = $region16
      $region15: #{tpu_custom_call.1} parent=5 // pred_region
        // Predicated region
        $region17: #{tpu_custom_call.1} parent=15 // pred_check
          %p136 = pneg %p53
        $region18: #{tpu_custom_call.1} parent=15 // pred_check_branch
          %138 = sbr.rel (%p136) target = $region20
        $region19: #{tpu_custom_call.1} parent=15 // pred_region
          %s139 = sand.u32 %s43, 1
          %s140 = scalar_lea.sflag [#allocation3], %s139
          %s141 = sand.u32 %s43, 1
          %s142 = smul.addr %s141, 2
          %s143 = scalar_lea.vmem [#allocation2], %s142
          %s144 = sadd.s32 %s25, 1
          %s145 = ssub.s32 %s144, %s24
          %s146 = smul.u32 2, %s145
          %s148 = ssub.s32 32, 32
          %149 = vsyncadd %s140, %s148
          %s150 = smul.addr %s146, 16
          %s151 = scalar_lea.hbm %s0, %s150
          %s153 = sshll.u32 %s143, 4
          %s154 = int_to_ptr.vmem [resolvable:$true] %s153
          %156 = dma.hbm_to_vmem [thread:$0]  %s151, 32, %s154, %s140
        $region20: #{tpu_custom_call.1} parent=15 // pred_fallthru
          _
        // Predicated region
        $region21: #{tpu_custom_call.1} parent=15 // pred_check
          %p157 = pneg %p83
        $region22: #{tpu_custom_call.1} parent=15 // pred_check_branch
          %159 = sbr.rel (%p157) target = $region24
        $region23: #{tpu_custom_call.1} parent=15 // pred_region
          %s160 = sand.u32 %s73, 1
          %s161 = scalar_lea.sflag [#allocation6], %s160
          %s162 = sand.u32 %s73, 1
          %s163 = smul.addr %s162, 2
          %s164 = scalar_lea.vmem [#allocation5], %s163
          %s165 = sadd.s32 %s25, 2
          %s166 = ssub.s32 %s165, %s24
          %s167 = smul.u32 2, %s166
          %s169 = ssub.s32 32, 32
          %170 = vsyncadd %s161, %s169
          %s171 = smul.addr %s167, 16
          %s172 = scalar_lea.hbm %s1, %s171
          %s174 = sshll.u32 %s164, 4
          %s175 = int_to_ptr.vmem [resolvable:$true] %s174
          %177 = dma.hbm_to_vmem [thread:$0]  %s172, 32, %s175, %s161
        $region24: #{tpu_custom_call.1} parent=15 // pred_fallthru
          _
      $region16: #{tpu_custom_call.1} parent=5 // pred_fallthru
        _
      %p178 = scmp.le.s32.totalorder 1, %s17
      %p179 = scmp.lt.s32.totalorder %s17, 5
      %p180 = pnand %p178, %p179
      %p181 = pneg %p180
      // Predicated region
      $region25: #{tpu_custom_call.1} parent=5 // pred_check
        _
      $region26: #{tpu_custom_call.1} parent=5 // pred_check_branch
        %183 = sbr.rel (%p180) target = $region28
      $region27: #{tpu_custom_call.1} parent=5 // pred_region
        %s184 = ssub.s32 %s17, 1
        %s185 = sand.u32 %s46, 1
        %s186 = scalar_lea.sflag [#allocation3], %s185
        %s187 = sand.u32 %s46, 1
        %s188 = smul.addr %s187, 2
        %s189 = scalar_lea.vmem [#allocation2], %s188
        // Predicated region
        $region29: #{tpu_custom_call.1} parent=27 // pred_check
          %p190 = pneg %p59
        $region30: #{tpu_custom_call.1} parent=27 // pred_check_branch
          %192 = sbr.rel (%p190) target = $region32
        $region31: #{tpu_custom_call.1} parent=27 // pred_region
          %193 = dma.done %s186, 32
        $region32: #{tpu_custom_call.1} parent=27 // pred_fallthru
          _
        %s194 = sand.u32 %s76, 1
        %s195 = scalar_lea.sflag [#allocation6], %s194
        %s196 = sand.u32 %s76, 1
        %s197 = smul.addr %s196, 2
        %s198 = scalar_lea.vmem [#allocation5], %s197
        // Predicated region
        $region33: #{tpu_custom_call.1} parent=27 // pred_check
          %p199 = pneg %p89
        $region34: #{tpu_custom_call.1} parent=27 // pred_check_branch
          %201 = sbr.rel (%p199) target = $region36
        $region35: #{tpu_custom_call.1} parent=27 // pred_region
          %202 = dma.done %s195, 32
        $region36: #{tpu_custom_call.1} parent=27 // pred_fallthru
          _
        %s203 = sand.u32 %s46, 1
        %s204 = scalar_lea.sflag [#allocation3], %s203
        %s205 = sand.u32 %s46, 1
        %s206 = smul.addr %s205, 2
        %s207 = scalar_lea.vmem [#allocation2], %s206
        %p208 = pneg %p59
        %p209 = pneg %p56
        %s210 = sand.u32 %s76, 1
        %s211 = scalar_lea.sflag [#allocation6], %s210
        %s212 = sand.u32 %s76, 1
        %s213 = smul.addr %s212, 2
        %s214 = scalar_lea.vmem [#allocation5], %s213
        %p215 = pneg %p89
        %p216 = pneg %p86
        %p217 = pneg %p117
        %p218 = pneg %p114
        %s219 = sand.u32 %s104, 1
        %s220 = scalar_lea.sflag [#allocation4], %s219
        %s221 = sand.u32 %s104, 1
        %s222 = smul.addr %s221, 512
        %s223 = scalar_lea.vmem [#allocation7], %s222
        %s224 = sadd.s32 %s27, 1
        %s225 = ssub.s32 %s224, %s26
        %s226 = smul.u32 2, %s225
        %s227 = sadd.s32 %s27, 2
        %s228 = ssub.s32 %s227, %s26
        %s229 = smul.u32 2, %s228
        %s230 = smul.u32 32, %s26
        %s231 = smul.u32 2, %s27
        %v232 = vld [vmem:[%s189] sm:$0x3]
        %v234 = vlaneseq
        %v235 = vshrl.u32 %v234, 7
        %v236 = vsub.s32 0, %v235
        %v237 = vrot.slane %v232, %v236
        %v238 = vlaneseq
        %v239 = vshrl.u32 %v238, 7
        %v240 = vsub.s32 1, %v239
        %v241 = vrot.slane %v232, %v240
        %v244 = vld [vmem:[%s198] sm:$0x3]
        %v246 = vlaneseq
        %v247 = vshrl.u32 %v246, 7
        %v248 = vsub.s32 0, %v247
        %v249 = vrot.slane %v244, %v248
        %v250 = vlaneseq
        %v251 = vshrl.u32 %v250, 7
        %v252 = vsub.s32 1, %v251
        %v253 = vrot.slane %v244, %v252
        %s257 = sor.u32 256, 1
        %258 = vrot.lane.b32.xlu0 %v237, %s257
        %v259 = vpop.permute.xlu0 %258
        %s261 = sor.u32 256, 1
        %262 = vrot.lane.b32.xlu0 %v241, %s261
        %v263 = vpop.permute.xlu0 %262
        %v264 = vlaneseq
        %v265 = vshrl.u32 %v264, 7
        %v266 = vadd.s32 %v265, 1
        %v267 = vlaneseq
        %v268 = vand.u32 %v267, 127
        %vm269 = vcmp.lt.s32.totalorder %v268, %v266
        %v270 = vsel %vm269, %v259, %v263
        %v271 = vsel %vm269, %v263, %v259
        %s273 = sor.u32 256, 9
        %274 = vrot.lane.b32.xlu0 %v237, %s273
        %v275 = vpop.permute.xlu0 %274
        %s277 = sor.u32 256, 9
        %278 = vrot.lane.b32.xlu0 %v241, %s277
        %v279 = vpop.permute.xlu0 %278
        %v280 = vadd.s32 %v265, 9
        %vm281 = vcmp.lt.s32.totalorder %v268, %v280
        %v282 = vsel %vm281, %v275, %v279
        %v283 = vsel %vm281, %v279, %v275
        %s285 = sor.u32 256, 17
        %286 = vrot.lane.b32.xlu0 %v237, %s285
        %v287 = vpop.permute.xlu0 %286
        %s289 = sor.u32 256, 17
        %290 = vrot.lane.b32.xlu0 %v241, %s289
        %v291 = vpop.permute.xlu0 %290
        %v292 = vadd.s32 %v265, 17
        %vm293 = vcmp.lt.s32.totalorder %v268, %v292
        %v294 = vsel %vm293, %v287, %v291
        %v295 = vsel %vm293, %v291, %v287
        %s297 = sor.u32 256, 25
        %298 = vrot.lane.b32.xlu0 %v237, %s297
        %v299 = vpop.permute.xlu0 %298
        %s301 = sor.u32 256, 25
        %302 = vrot.lane.b32.xlu0 %v241, %s301
        %v303 = vpop.permute.xlu0 %302
        %v304 = vadd.s32 %v265, 25
        %vm305 = vcmp.lt.s32.totalorder %v268, %v304
        %v306 = vsel %vm305, %v299, %v303
        %v307 = vsel %vm305, %v303, %v299
        %s309 = sor.u32 256, 33
        %310 = vrot.lane.b32.xlu0 %v237, %s309
        %v311 = vpop.permute.xlu0 %310
        %s313 = sor.u32 256, 33
        %314 = vrot.lane.b32.xlu0 %v241, %s313
        %v315 = vpop.permute.xlu0 %314
        %v316 = vadd.s32 %v265, 33
        %vm317 = vcmp.lt.s32.totalorder %v268, %v316
        %v318 = vsel %vm317, %v311, %v315
        %v319 = vsel %vm317, %v315, %v311
        %s321 = sor.u32 256, 41
        %322 = vrot.lane.b32.xlu0 %v237, %s321
        %v323 = vpop.permute.xlu0 %322
        %s325 = sor.u32 256, 41
        %326 = vrot.lane.b32.xlu0 %v241, %s325
        %v327 = vpop.permute.xlu0 %326
        %v328 = vadd.s32 %v265, 41
        %vm329 = vcmp.lt.s32.totalorder %v268, %v328
        %v330 = vsel %vm329, %v323, %v327
        %v331 = vsel %vm329, %v327, %v323
        %s333 = sor.u32 256, 49
        %334 = vrot.lane.b32.xlu0 %v237, %s333
        %v335 = vpop.permute.xlu0 %334
        %s337 = sor.u32 256, 49
        %338 = vrot.lane.b32.xlu0 %v241, %s337
        %v339 = vpop.permute.xlu0 %338
        %v340 = vadd.s32 %v265, 49
        %vm341 = vcmp.lt.s32.totalorder %v268, %v340
        %v342 = vsel %vm341, %v335, %v339
        %v343 = vsel %vm341, %v339, %v335
        %s345 = sor.u32 256, 57
        %346 = vrot.lane.b32.xlu0 %v237, %s345
        %v347 = vpop.permute.xlu0 %346
        %s349 = sor.u32 256, 57
        %350 = vrot.lane.b32.xlu0 %v241, %s349
        %v351 = vpop.permute.xlu0 %350
        %v352 = vadd.s32 %v265, 57
        %vm353 = vcmp.lt.s32.totalorder %v268, %v352
        %v354 = vsel %vm353, %v347, %v351
        %v355 = vsel %vm353, %v351, %v347
        %s357 = sor.u32 256, 65
        %358 = vrot.lane.b32.xlu0 %v237, %s357
        %v359 = vpop.permute.xlu0 %358
        %s361 = sor.u32 256, 65
        %362 = vrot.lane.b32.xlu0 %v241, %s361
        %v363 = vpop.permute.xlu0 %362
        %v364 = vadd.s32 %v265, 65
        %vm365 = vcmp.lt.s32.totalorder %v268, %v364
        %v366 = vsel %vm365, %v359, %v363
        %v367 = vsel %vm365, %v363, %v359
        %s369 = sor.u32 256, 73
        %370 = vrot.lane.b32.xlu0 %v237, %s369
        %v371 = vpop.permute.xlu0 %370
        %s373 = sor.u32 256, 73
        %374 = vrot.lane.b32.xlu0 %v241, %s373
        %v375 = vpop.permute.xlu0 %374
        %v376 = vadd.s32 %v265, 73
        %vm377 = vcmp.lt.s32.totalorder %v268, %v376
        %v378 = vsel %vm377, %v371, %v375
        %v379 = vsel %vm377, %v375, %v371
        %s381 = sor.u32 256, 81
        %382 = vrot.lane.b32.xlu0 %v237, %s381
        %v383 = vpop.permute.xlu0 %382
        %s385 = sor.u32 256, 81
        %386 = vrot.lane.b32.xlu0 %v241, %s385
        %v387 = vpop.permute.xlu0 %386
        %v388 = vadd.s32 %v265, 81
        %vm389 = vcmp.lt.s32.totalorder %v268, %v388
        %v390 = vsel %vm389, %v383, %v387
        %v391 = vsel %vm389, %v387, %v383
        %s393 = sor.u32 256, 89
        %394 = vrot.lane.b32.xlu0 %v237, %s393
        %v395 = vpop.permute.xlu0 %394
        %s397 = sor.u32 256, 89
        %398 = vrot.lane.b32.xlu0 %v241, %s397
        %v399 = vpop.permute.xlu0 %398
        %v400 = vadd.s32 %v265, 89
        %vm401 = vcmp.lt.s32.totalorder %v268, %v400
        %v402 = vsel %vm401, %v395, %v399
        %v403 = vsel %vm401, %v399, %v395
        %s405 = sor.u32 256, 97
        %406 = vrot.lane.b32.xlu0 %v237, %s405
        %v407 = vpop.permute.xlu0 %406
        %s409 = sor.u32 256, 97
        %410 = vrot.lane.b32.xlu0 %v241, %s409
        %v411 = vpop.permute.xlu0 %410
        %v412 = vadd.s32 %v265, 97
        %vm413 = vcmp.lt.s32.totalorder %v268, %v412
        %v414 = vsel %vm413, %v407, %v411
        %v415 = vsel %vm413, %v411, %v407
        %s417 = sor.u32 256, 105
        %418 = vrot.lane.b32.xlu0 %v237, %s417
        %v419 = vpop.permute.xlu0 %418
        %s421 = sor.u32 256, 105
        %422 = vrot.lane.b32.xlu0 %v241, %s421
        %v423 = vpop.permute.xlu0 %422
        %v424 = vadd.s32 %v265, 105
        %vm425 = vcmp.lt.s32.totalorder %v268, %v424
        %v426 = vsel %vm425, %v419, %v423
        %v427 = vsel %vm425, %v423, %v419
        %s429 = sor.u32 256, 113
        %430 = vrot.lane.b32.xlu0 %v237, %s429
        %v431 = vpop.permute.xlu0 %430
        %s433 = sor.u32 256, 113
        %434 = vrot.lane.b32.xlu0 %v241, %s433
        %v435 = vpop.permute.xlu0 %434
        %v436 = vadd.s32 %v265, 113
        %vm437 = vcmp.lt.s32.totalorder %v268, %v436
        %v438 = vsel %vm437, %v431, %v435
        %v439 = vsel %vm437, %v435, %v431
        %s441 = sor.u32 256, 121
        %442 = vrot.lane.b32.xlu0 %v237, %s441
        %v443 = vpop.permute.xlu0 %442
        %s445 = sor.u32 256, 121
        %446 = vrot.lane.b32.xlu0 %v241, %s445
        %v447 = vpop.permute.xlu0 %446
        %v448 = vadd.s32 %v265, 121
        %vm449 = vcmp.lt.s32.totalorder %v268, %v448
        %v450 = vsel %vm449, %v443, %v447
        %v451 = vsel %vm449, %v447, %v443
        %s453 = sor.u32 256, 1
        %454 = vrot.lane.b32.xlu0 %v249, %s453
        %v455 = vpop.permute.xlu0 %454
        %s457 = sor.u32 256, 1
        %458 = vrot.lane.b32.xlu0 %v253, %s457
        %v459 = vpop.permute.xlu0 %458
        %v460 = vsel %vm269, %v455, %v459
        %v461 = vsel %vm269, %v459, %v455
        %s463 = sor.u32 256, 9
        %464 = vrot.lane.b32.xlu0 %v249, %s463
        %v465 = vpop.permute.xlu0 %464
        %s467 = sor.u32 256, 9
        %468 = vrot.lane.b32.xlu0 %v253, %s467
        %v469 = vpop.permute.xlu0 %468
        %v470 = vsel %vm281, %v465, %v469
        %v471 = vsel %vm281, %v469, %v465
        %s473 = sor.u32 256, 17
        %474 = vrot.lane.b32.xlu0 %v249, %s473
        %v475 = vpop.permute.xlu0 %474
        %s477 = sor.u32 256, 17
        %478 = vrot.lane.b32.xlu0 %v253, %s477
        %v479 = vpop.permute.xlu0 %478
        %v480 = vsel %vm293, %v475, %v479
        %v481 = vsel %vm293, %v479, %v475
        %s483 = sor.u32 256, 25
        %484 = vrot.lane.b32.xlu0 %v249, %s483
        %v485 = vpop.permute.xlu0 %484
        %s487 = sor.u32 256, 25
        %488 = vrot.lane.b32.xlu0 %v253, %s487
        %v489 = vpop.permute.xlu0 %488
        %v490 = vsel %vm305, %v485, %v489
        %v491 = vsel %vm305, %v489, %v485
        %s493 = sor.u32 256, 33
        %494 = vrot.lane.b32.xlu0 %v249, %s493
        %v495 = vpop.permute.xlu0 %494
        %s497 = sor.u32 256, 33
        %498 = vrot.lane.b32.xlu0 %v253, %s497
        %v499 = vpop.permute.xlu0 %498
        %v500 = vsel %vm317, %v495, %v499
        %v501 = vsel %vm317, %v499, %v495
        %s503 = sor.u32 256, 41
        %504 = vrot.lane.b32.xlu0 %v249, %s503
        %v505 = vpop.permute.xlu0 %504
        %s507 = sor.u32 256, 41
        %508 = vrot.lane.b32.xlu0 %v253, %s507
        %v509 = vpop.permute.xlu0 %508
        %v510 = vsel %vm329, %v505, %v509
        %v511 = vsel %vm329, %v509, %v505
        %s513 = sor.u32 256, 49
        %514 = vrot.lane.b32.xlu0 %v249, %s513
        %v515 = vpop.permute.xlu0 %514
        %s517 = sor.u32 256, 49
        %518 = vrot.lane.b32.xlu0 %v253, %s517
        %v519 = vpop.permute.xlu0 %518
        %v520 = vsel %vm341, %v515, %v519
        %v521 = vsel %vm341, %v519, %v515
        %s523 = sor.u32 256, 57
        %524 = vrot.lane.b32.xlu0 %v249, %s523
        %v525 = vpop.permute.xlu0 %524
        %s527 = sor.u32 256, 57
        %528 = vrot.lane.b32.xlu0 %v253, %s527
        %v529 = vpop.permute.xlu0 %528
        %v530 = vsel %vm353, %v525, %v529
        %v531 = vsel %vm353, %v529, %v525
        %s533 = sor.u32 256, 65
        %534 = vrot.lane.b32.xlu0 %v249, %s533
        %v535 = vpop.permute.xlu0 %534
        %s537 = sor.u32 256, 65
        %538 = vrot.lane.b32.xlu0 %v253, %s537
        %v539 = vpop.permute.xlu0 %538
        %v540 = vsel %vm365, %v535, %v539
        %v541 = vsel %vm365, %v539, %v535
        %s543 = sor.u32 256, 73
        %544 = vrot.lane.b32.xlu0 %v249, %s543
        %v545 = vpop.permute.xlu0 %544
        %s547 = sor.u32 256, 73
        %548 = vrot.lane.b32.xlu0 %v253, %s547
        %v549 = vpop.permute.xlu0 %548
        %v550 = vsel %vm377, %v545, %v549
        %v551 = vsel %vm377, %v549, %v545
        %s553 = sor.u32 256, 81
        %554 = vrot.lane.b32.xlu0 %v249, %s553
        %v555 = vpop.permute.xlu0 %554
        %s557 = sor.u32 256, 81
        %558 = vrot.lane.b32.xlu0 %v253, %s557
        %v559 = vpop.permute.xlu0 %558
        %v560 = vsel %vm389, %v555, %v559
        %v561 = vsel %vm389, %v559, %v555
        %s563 = sor.u32 256, 89
        %564 = vrot.lane.b32.xlu0 %v249, %s563
        %v565 = vpop.permute.xlu0 %564
        %s567 = sor.u32 256, 89
        %568 = vrot.lane.b32.xlu0 %v253, %s567
        %v569 = vpop.permute.xlu0 %568
        %v570 = vsel %vm401, %v565, %v569
        %v571 = vsel %vm401, %v569, %v565
        %s573 = sor.u32 256, 97
        %574 = vrot.lane.b32.xlu0 %v249, %s573
        %v575 = vpop.permute.xlu0 %574
        %s577 = sor.u32 256, 97
        %578 = vrot.lane.b32.xlu0 %v253, %s577
        %v579 = vpop.permute.xlu0 %578
        %v580 = vsel %vm413, %v575, %v579
        %v581 = vsel %vm413, %v579, %v575
        %s583 = sor.u32 256, 105
        %584 = vrot.lane.b32.xlu0 %v249, %s583
        %v585 = vpop.permute.xlu0 %584
        %s587 = sor.u32 256, 105
        %588 = vrot.lane.b32.xlu0 %v253, %s587
        %v589 = vpop.permute.xlu0 %588
        %v590 = vsel %vm425, %v585, %v589
        %v591 = vsel %vm425, %v589, %v585
        %s593 = sor.u32 256, 113
        %594 = vrot.lane.b32.xlu0 %v249, %s593
        %v595 = vpop.permute.xlu0 %594
        %s597 = sor.u32 256, 113
        %598 = vrot.lane.b32.xlu0 %v253, %s597
        %v599 = vpop.permute.xlu0 %598
        %v600 = vsel %vm437, %v595, %v599
        %v601 = vsel %vm437, %v599, %v595
        %s603 = sor.u32 256, 121
        %604 = vrot.lane.b32.xlu0 %v249, %s603
        %v605 = vpop.permute.xlu0 %604
        %s607 = sor.u32 256, 121
        %608 = vrot.lane.b32.xlu0 %v253, %s607
        %v609 = vpop.permute.xlu0 %608
        %v610 = vsel %vm449, %v605, %v609
        %v611 = vsel %vm449, %v609, %v605
        %v612 = vadd.s32 %v265, 8
        %v613 = vadd.s32 %v265, 16
        %v614 = vadd.s32 %v265, 24
        %v615 = vadd.s32 %v265, 32
        %v616 = vadd.s32 %v265, 40
        %v617 = vadd.s32 %v265, 48
        %v618 = vadd.s32 %v265, 56
        %v619 = vadd.s32 %v265, 64
        %v620 = vadd.s32 %v265, 72
        %v621 = vadd.s32 %v265, 80
        %v622 = vadd.s32 %v265, 88
        %v623 = vadd.s32 %v265, 96
        %v624 = vadd.s32 %v265, 104
        %v625 = vadd.s32 %v265, 112
        %v626 = vadd.s32 %v265, 120
        %v627 = vadd.s32 %v265, 128
        %v628 = vadd.s32 %v265, 136
        %v629 = vadd.s32 %v265, 144
        %v630 = vadd.s32 %v265, 152
        %v631 = vadd.s32 %v265, 160
        %v632 = vadd.s32 %v265, 168
        %v633 = vadd.s32 %v265, 176
        %v634 = vadd.s32 %v265, 184
        %v635 = vadd.s32 %v265, 192
        %v636 = vadd.s32 %v265, 200
        %v637 = vadd.s32 %v265, 208
        %v638 = vadd.s32 %v265, 216
        %v639 = vadd.s32 %v265, 224
        %v640 = vadd.s32 %v265, 232
        %v641 = vadd.s32 %v265, 240
        %v642 = vadd.s32 %v265, 248
        %v643 = vadd.s32 %v268, 128
        %vm644 = vcmp.le.s32.totalorder %v268, %v265
        %vm645 = vcmp.le.s32.totalorder %v643, %v265
        %vm646 = vcmp.le.s32.totalorder %v268, %v612
        %vm647 = vcmp.le.s32.totalorder %v643, %v612
        %vm648 = vcmp.le.s32.totalorder %v268, %v613
        %vm649 = vcmp.le.s32.totalorder %v643, %v613
        %vm650 = vcmp.le.s32.totalorder %v268, %v614
        %vm651 = vcmp.le.s32.totalorder %v643, %v614
        %vm652 = vcmp.le.s32.totalorder %v268, %v615
        %vm653 = vcmp.le.s32.totalorder %v643, %v615
        %vm654 = vcmp.le.s32.totalorder %v268, %v616
        %vm655 = vcmp.le.s32.totalorder %v643, %v616
        %vm656 = vcmp.le.s32.totalorder %v268, %v617
        %vm657 = vcmp.le.s32.totalorder %v643, %v617
        %vm658 = vcmp.le.s32.totalorder %v268, %v618
        %vm659 = vcmp.le.s32.totalorder %v643, %v618
        %vm660 = vcmp.le.s32.totalorder %v268, %v619
        %vm661 = vcmp.le.s32.totalorder %v643, %v619
        %vm662 = vcmp.le.s32.totalorder %v268, %v620
        %vm663 = vcmp.le.s32.totalorder %v643, %v620
        %vm664 = vcmp.le.s32.totalorder %v268, %v621
        %vm665 = vcmp.le.s32.totalorder %v643, %v621
        %vm666 = vcmp.le.s32.totalorder %v268, %v622
        %vm667 = vcmp.le.s32.totalorder %v643, %v622
        %vm668 = vcmp.le.s32.totalorder %v268, %v623
        %vm669 = vcmp.le.s32.totalorder %v643, %v623
        %vm670 = vcmp.le.s32.totalorder %v268, %v624
        %vm671 = vcmp.le.s32.totalorder %v643, %v624
        %vm672 = vcmp.le.s32.totalorder %v268, %v625
        %vm673 = vcmp.le.s32.totalorder %v643, %v625
        %vm674 = vcmp.le.s32.totalorder %v268, %v626
        %vm675 = vcmp.le.s32.totalorder %v643, %v626
        %vm676 = vcmp.le.s32.totalorder %v268, %v627
        %vm677 = vcmp.le.s32.totalorder %v643, %v627
        %vm678 = vcmp.le.s32.totalorder %v268, %v628
        %vm679 = vcmp.le.s32.totalorder %v643, %v628
        %vm680 = vcmp.le.s32.totalorder %v268, %v629
        %vm681 = vcmp.le.s32.totalorder %v643, %v629
        %vm682 = vcmp.le.s32.totalorder %v268, %v630
        %vm683 = vcmp.le.s32.totalorder %v643, %v630
        %vm684 = vcmp.le.s32.totalorder %v268, %v631
        %vm685 = vcmp.le.s32.totalorder %v643, %v631
        %vm686 = vcmp.le.s32.totalorder %v268, %v632
        %vm687 = vcmp.le.s32.totalorder %v643, %v632
        %vm688 = vcmp.le.s32.totalorder %v268, %v633
        %vm689 = vcmp.le.s32.totalorder %v643, %v633
        %vm690 = vcmp.le.s32.totalorder %v268, %v634
        %vm691 = vcmp.le.s32.totalorder %v643, %v634
        %vm692 = vcmp.le.s32.totalorder %v268, %v635
        %vm693 = vcmp.le.s32.totalorder %v643, %v635
        %vm694 = vcmp.le.s32.totalorder %v268, %v636
        %vm695 = vcmp.le.s32.totalorder %v643, %v636
        %vm696 = vcmp.le.s32.totalorder %v268, %v637
        %vm697 = vcmp.le.s32.totalorder %v643, %v637
        %vm698 = vcmp.le.s32.totalorder %v268, %v638
        %vm699 = vcmp.le.s32.totalorder %v643, %v638
        %vm700 = vcmp.le.s32.totalorder %v268, %v639
        %vm701 = vcmp.le.s32.totalorder %v643, %v639
        %vm702 = vcmp.le.s32.totalorder %v268, %v640
        %vm703 = vcmp.le.s32.totalorder %v643, %v640
        %vm704 = vcmp.le.s32.totalorder %v268, %v641
        %vm705 = vcmp.le.s32.totalorder %v643, %v641
        %vm706 = vcmp.le.s32.totalorder %v268, %v642
        %vm707 = vcmp.le.s32.totalorder %v643, %v642
        %v708 = vsel %vm644, %v271, %v461
        %v709 = vsel %vm645, %v270, %v460
        %v710 = vsel %vm646, %v283, %v471
        %v711 = vsel %vm647, %v282, %v470
        %v712 = vsel %vm648, %v295, %v481
        %v713 = vsel %vm649, %v294, %v480
        %v714 = vsel %vm650, %v307, %v491
        %v715 = vsel %vm651, %v306, %v490
        %v716 = vsel %vm652, %v319, %v501
        %v717 = vsel %vm653, %v318, %v500
        %v718 = vsel %vm654, %v331, %v511
        %v719 = vsel %vm655, %v330, %v510
        %v720 = vsel %vm656, %v343, %v521
        %v721 = vsel %vm657, %v342, %v520
        %v722 = vsel %vm658, %v355, %v531
        %v723 = vsel %vm659, %v354, %v530
        %v724 = vsel %vm660, %v367, %v541
        %v725 = vsel %vm661, %v366, %v540
        %v726 = vsel %vm662, %v379, %v551
        %v727 = vsel %vm663, %v378, %v550
        %v728 = vsel %vm664, %v391, %v561
        %v729 = vsel %vm665, %v390, %v560
        %v730 = vsel %vm666, %v403, %v571
        %v731 = vsel %vm667, %v402, %v570
        %v732 = vsel %vm668, %v415, %v581
        %v733 = vsel %vm669, %v414, %v580
        %v734 = vsel %vm670, %v427, %v591
        %v735 = vsel %vm671, %v426, %v590
        %v736 = vsel %vm672, %v439, %v601
        %v737 = vsel %vm673, %v438, %v600
        %v738 = vsel %vm674, %v451, %v611
        %v739 = vsel %vm675, %v450, %v610
        %v740 = vsel %vm676, %v270, %v460
        %v741 = vsel %vm677, %v271, %v461
        %v742 = vsel %vm678, %v282, %v470
        %v743 = vsel %vm679, %v283, %v471
        %v744 = vsel %vm680, %v294, %v480
        %v745 = vsel %vm681, %v295, %v481
        %v746 = vsel %vm682, %v306, %v490
        %v747 = vsel %vm683, %v307, %v491
        %v748 = vsel %vm684, %v318, %v500
        %v749 = vsel %vm685, %v319, %v501
        %v750 = vsel %vm686, %v330, %v510
        %v751 = vsel %vm687, %v331, %v511
        %v752 = vsel %vm688, %v342, %v520
        %v753 = vsel %vm689, %v343, %v521
        %v754 = vsel %vm690, %v354, %v530
        %v755 = vsel %vm691, %v355, %v531
        %v756 = vsel %vm692, %v366, %v540
        %v757 = vsel %vm693, %v367, %v541
        %v758 = vsel %vm694, %v378, %v550
        %v759 = vsel %vm695, %v379, %v551
        %v760 = vsel %vm696, %v390, %v560
        %v761 = vsel %vm697, %v391, %v561
        %v762 = vsel %vm698, %v402, %v570
        %v763 = vsel %vm699, %v403, %v571
        %v764 = vsel %vm700, %v414, %v580
        %v765 = vsel %vm701, %v415, %v581
        %v766 = vsel %vm702, %v426, %v590
        %v767 = vsel %vm703, %v427, %v591
        %v768 = vsel %vm704, %v438, %v600
        %v769 = vsel %vm705, %v439, %v601
        %v770 = vsel %vm706, %v450, %v610
        %v771 = vsel %vm707, %v451, %v611
        %772 = vst [vmem:[%s223] sm:$0xff] %v708
        %773 = vst [vmem:[%s223 + $0x8] sm:$0xff] %v709
        %774 = vst [vmem:[%s223 + $0x10] sm:$0xff] %v710
        %775 = vst [vmem:[%s223 + $0x18] sm:$0xff] %v711
        %776 = vst [vmem:[%s223 + $0x20] sm:$0xff] %v712
        %777 = vst [vmem:[%s223 + $0x28] sm:$0xff] %v713
        %778 = vst [vmem:[%s223 + $0x30] sm:$0xff] %v714
        %779 = vst [vmem:[%s223 + $0x38] sm:$0xff] %v715
        %780 = vst [vmem:[%s223 + $0x40] sm:$0xff] %v716
        %781 = vst [vmem:[%s223 + $0x48] sm:$0xff] %v717
        %782 = vst [vmem:[%s223 + $0x50] sm:$0xff] %v718
        %783 = vst [vmem:[%s223 + $0x58] sm:$0xff] %v719
        %784 = vst [vmem:[%s223 + $0x60] sm:$0xff] %v720
        %785 = vst [vmem:[%s223 + $0x68] sm:$0xff] %v721
        %786 = vst [vmem:[%s223 + $0x70] sm:$0xff] %v722
        %787 = vst [vmem:[%s223 + $0x78] sm:$0xff] %v723
        %788 = vst [vmem:[%s223 + $0x80] sm:$0xff] %v724
        %789 = vst [vmem:[%s223 + $0x88] sm:$0xff] %v725
        %790 = vst [vmem:[%s223 + $0x90] sm:$0xff] %v726
        %791 = vst [vmem:[%s223 + $0x98] sm:$0xff] %v727
        %792 = vst [vmem:[%s223 + $0xa0] sm:$0xff] %v728
        %793 = vst [vmem:[%s223 + $0xa8] sm:$0xff] %v729
        %794 = vst [vmem:[%s223 + $0xb0] sm:$0xff] %v730
        %795 = vst [vmem:[%s223 + $0xb8] sm:$0xff] %v731
        %796 = vst [vmem:[%s223 + $0xc0] sm:$0xff] %v732
        %797 = vst [vmem:[%s223 + $0xc8] sm:$0xff] %v733
        %798 = vst [vmem:[%s223 + $0xd0] sm:$0xff] %v734
        %799 = vst [vmem:[%s223 + $0xd8] sm:$0xff] %v735
        %800 = vst [vmem:[%s223 + $0xe0] sm:$0xff] %v736
        %801 = vst [vmem:[%s223 + $0xe8] sm:$0xff] %v737
        %802 = vst [vmem:[%s223 + $0xf0] sm:$0xff] %v738
        %803 = vst [vmem:[%s223 + $0xf8] sm:$0xff] %v739
        %804 = vst [vmem:[%s223 + $0x100] sm:$0xff] %v740
        %805 = vst [vmem:[%s223 + $0x108] sm:$0xff] %v741
        %806 = vst [vmem:[%s223 + $0x110] sm:$0xff] %v742
        %807 = vst [vmem:[%s223 + $0x118] sm:$0xff] %v743
        %808 = vst [vmem:[%s223 + $0x120] sm:$0xff] %v744
        %809 = vst [vmem:[%s223 + $0x128] sm:$0xff] %v745
        %810 = vst [vmem:[%s223 + $0x130] sm:$0xff] %v746
        %811 = vst [vmem:[%s223 + $0x138] sm:$0xff] %v747
        %812 = vst [vmem:[%s223 + $0x140] sm:$0xff] %v748
        %813 = vst [vmem:[%s223 + $0x148] sm:$0xff] %v749
        %814 = vst [vmem:[%s223 + $0x150] sm:$0xff] %v750
        %815 = vst [vmem:[%s223 + $0x158] sm:$0xff] %v751
        %816 = vst [vmem:[%s223 + $0x160] sm:$0xff] %v752
        %817 = vst [vmem:[%s223 + $0x168] sm:$0xff] %v753
        %818 = vst [vmem:[%s223 + $0x170] sm:$0xff] %v754
        %819 = vst [vmem:[%s223 + $0x178] sm:$0xff] %v755
        %820 = vst [vmem:[%s223 + $0x180] sm:$0xff] %v756
        %821 = vst [vmem:[%s223 + $0x188] sm:$0xff] %v757
        %822 = vst [vmem:[%s223 + $0x190] sm:$0xff] %v758
        %823 = vst [vmem:[%s223 + $0x198] sm:$0xff] %v759
        %824 = vst [vmem:[%s223 + $0x1a0] sm:$0xff] %v760
        %825 = vst [vmem:[%s223 + $0x1a8] sm:$0xff] %v761
        %826 = vst [vmem:[%s223 + $0x1b0] sm:$0xff] %v762
        %827 = vst [vmem:[%s223 + $0x1b8] sm:$0xff] %v763
        %828 = vst [vmem:[%s223 + $0x1c0] sm:$0xff] %v764
        %829 = vst [vmem:[%s223 + $0x1c8] sm:$0xff] %v765
        %830 = vst [vmem:[%s223 + $0x1d0] sm:$0xff] %v766
        %831 = vst [vmem:[%s223 + $0x1d8] sm:$0xff] %v767
        %832 = vst [vmem:[%s223 + $0x1e0] sm:$0xff] %v768
        %833 = vst [vmem:[%s223 + $0x1e8] sm:$0xff] %v769
        %834 = vst [vmem:[%s223 + $0x1f0] sm:$0xff] %v770
        %835 = vst [vmem:[%s223 + $0x1f8] sm:$0xff] %v771
        %s836 = sand.u32 %s104, 1
        %s837 = scalar_lea.sflag [#allocation4], %s836
        %s838 = sand.u32 %s104, 1
        %s839 = smul.addr %s838, 512
        %s840 = scalar_lea.vmem [#allocation7], %s839
        // Predicated region
        $region37: #{tpu_custom_call.1} parent=27 // pred_check
          %p841 = pneg %p114
        $region38: #{tpu_custom_call.1} parent=27 // pred_check_branch
          %843 = sbr.rel (%p841) target = $region40
        $region39: #{tpu_custom_call.1} parent=27 // pred_region
          %s844 = smul.u32 32, %s26
          %s845 = smul.u32 2, %s27
          %s847 = ssub.s32 8192, 8192
          %848 = vsyncadd %s837, %s847
          %s849 = smul.addr %s844, 4
          %s850 = sadd.s32 %s845, %s849
          %s851 = smul.addr %s850, 128
          %s852 = scalar_lea.hbm %s2, %s851
          %s853 = sshll.u32 %s840, 4
          %s854 = int_to_ptr.vmem [resolvable:$true] %s853
          %859 = dma.vmem_to_hbm [thread:$0]  %s854, 8192, %s852, %s837, 256, 512, 16
        $region40: #{tpu_custom_call.1} parent=27 // pred_fallthru
          _
      $region28: #{tpu_custom_call.1} parent=5 // pred_fallthru
        _
      %p860 = scmp.le.s32.totalorder 2, %s17
      // Predicated region
      $region41: #{tpu_custom_call.1} parent=5 // pred_check
        %p861 = pneg %p860
      $region42: #{tpu_custom_call.1} parent=5 // pred_check_branch
        %863 = sbr.rel (%p861) target = $region44
      $region43: #{tpu_custom_call.1} parent=5 // pred_region
        %s864 = ssub.s32 %s17, 2
        // Predicated region
        $region45: #{tpu_custom_call.1} parent=43 // pred_check
          %p865 = pneg %p120
        $region46: #{tpu_custom_call.1} parent=43 // pred_check_branch
          %867 = sbr.rel (%p865) target = $region48
        $region47: #{tpu_custom_call.1} parent=43 // pred_region
          %s868 = sand.u32 %s105, 1
          %s869 = scalar_lea.sflag [#allocation4], %s868
          %s870 = sand.u32 %s105, 1
          %s871 = smul.addr %s870, 512
          %s872 = scalar_lea.vmem [#allocation7], %s871
          %873 = dma.done %s869, 8192
        $region48: #{tpu_custom_call.1} parent=43 // pred_fallthru
          _
      $region44: #{tpu_custom_call.1} parent=5 // pred_fallthru
        _
    $region6: #{tpu_custom_call.1} parent=1 // loop_footer
      %s21 = sadd.s32 1, %s17
    $region7: #{tpu_custom_call.1} parent=1 // loop_footer_branch
      %16 = sbr.rel target = $region3
    $region8: #{tpu_custom_call.1} parent=1 // loop_exit
      _
    %874 = vsyncpa [#allocation3], 1
    %s875 = scalar_lea.sflag [#allocation3], 1
    %876 = vsyncpa %s875, 1
    %877 = vsyncpa [#allocation6], 1
    %s878 = scalar_lea.sflag [#allocation6], 1
    %879 = vsyncpa %s878, 1
    %880 = vsyncpa [#allocation4], 1
    %s881 = scalar_lea.sflag [#allocation4], 1
    %882 = vsyncpa %s881, 1

// kernel: tpu_custom_call.1
$region0: #{tpu_custom_call.1}
  #allocation0 [shape = 'u32[]', space=smem, size = 0x4, offset = 0x4, fixed_abs, tag = 'smem constant byte address 0x4 - core index']
  #allocation1 [shape = 'u32[144,128]{1,0:T(1,128)}', space=vmem, size = 0x12000, scoped, tag = 'internal scratch']
  %s0 = inlined_call_operand.hbm [shape: f32[32], index: 0, kind: input, shape index: {}]
  %s1 = inlined_call_operand.hbm [shape: f32[256,256], index: 1, kind: output, shape index: {}]
  %s2 = sld [smem:[#allocation0]]
  $region18: #{tpu_custom_call.1} parent=0
    _
  %s4 = ssub.s32 1, %s2
  %s5 = scalar_select 0, %s4, %s2
  $region1: #{tpu_custom_call.1} parent=0
    #allocation2 [shape = 'u8[512]{0}', space=smem, size = 0x200, scoped, tag = 'input window, operand 0, single buffered']
    #allocation3 [shape = 's32[1]{0}', space=sflag, size = 0x4, scoped, tag = 'scoped memory for tpu_custom_call.1']
    #allocation4 [shape = 's32[1]{0}', space=sflag, size = 0x4, scoped, tag = 'scoped memory for tpu_custom_call.1']
    #allocation5 [shape = 'u8[262144]{0}', space=vmem, size = 0x40000, scoped, tag = 'output window, operand 0, single buffered']
    %6 = vsyncpa [#allocation4], 0
    %7 = vsyncpa [#allocation3], 0
    // Predicated region
    $region2: #{tpu_custom_call.1} parent=1 // pred_check
      _
    $region3: #{tpu_custom_call.1} parent=1 // pred_check_branch
      %9 = sbr.rel (0) target = $region5
    $region4: #{tpu_custom_call.1} parent=1 // pred_region
      %s11 = ssub.s32 16, 16
      %12 = vsyncadd [#allocation4], %s11
      %15 = dma.hbm_to_smem %s0, 16, [#allocation2], [#allocation4]
    $region5: #{tpu_custom_call.1} parent=1 // pred_fallthru
      _
    // Predicated region
    $region6: #{tpu_custom_call.1} parent=1 // pred_check
      _
    $region7: #{tpu_custom_call.1} parent=1 // pred_check_branch
      %17 = sbr.rel (0) target = $region9
    $region8: #{tpu_custom_call.1} parent=1 // pred_region
      %18 = dma.done [#allocation4], 16
    $region9: #{tpu_custom_call.1} parent=1 // pred_fallthru
      _
    %19 = sfence
    %s20 = smul.u32 0, 256
    %v21 = vlaneseq
    %v22 = vshrl.u32 %v21, 7
    %v23 = vadd.s32 %v22, 8
    %v24 = vadd.s32 %v22, 16
    %v25 = vadd.s32 %v22, 24
    %v26 = vadd.s32 %v22, 32
    %v27 = vadd.s32 %v22, 40
    %v28 = vadd.s32 %v22, 48
    %v29 = vadd.s32 %v22, 56
    %v30 = vadd.s32 %v22, 64
    %v31 = vadd.s32 %v22, 72
    %v32 = vadd.s32 %v22, 80
    %v33 = vadd.s32 %v22, 88
    %v34 = vadd.s32 %v22, 96
    %v35 = vadd.s32 %v22, 104
    %v36 = vadd.s32 %v22, 112
    %v37 = vadd.s32 %v22, 120
    %v38 = vadd.s32 %v22, 128
    %v39 = vadd.s32 %v22, 136
    %v40 = vadd.s32 %v22, 144
    %v41 = vadd.s32 %v22, 152
    %v42 = vadd.s32 %v22, 160
    %v43 = vadd.s32 %v22, 168
    %v44 = vadd.s32 %v22, 176
    %v45 = vadd.s32 %v22, 184
    %v46 = vadd.s32 %v22, 192
    %v47 = vadd.s32 %v22, 200
    %v48 = vadd.s32 %v22, 208
    %v49 = vadd.s32 %v22, 216
    %v50 = vadd.s32 %v22, 224
    %v51 = vadd.s32 %v22, 232
    %v52 = vadd.s32 %v22, 240
    %v53 = vadd.s32 %v22, 248
    %v54 = vstv %s20
    %v55 = vadd.s32 %v54, %v22
    %v56 = vadd.s32 %v54, %v23
    %v57 = vadd.s32 %v54, %v24
    %v58 = vadd.s32 %v54, %v25
    %v59 = vadd.s32 %v54, %v26
    %v60 = vadd.s32 %v54, %v27
    %v61 = vadd.s32 %v54, %v28
    %v62 = vadd.s32 %v54, %v29
    %v63 = vadd.s32 %v54, %v30
    %v64 = vadd.s32 %v54, %v31
    %v65 = vadd.s32 %v54, %v32
    %v66 = vadd.s32 %v54, %v33
    %v67 = vadd.s32 %v54, %v34
    %v68 = vadd.s32 %v54, %v35
    %v69 = vadd.s32 %v54, %v36
    %v70 = vadd.s32 %v54, %v37
    %v71 = vadd.s32 %v54, %v38
    %v72 = vadd.s32 %v54, %v39
    %v73 = vadd.s32 %v54, %v40
    %v74 = vadd.s32 %v54, %v41
    %v75 = vadd.s32 %v54, %v42
    %v76 = vadd.s32 %v54, %v43
    %v77 = vadd.s32 %v54, %v44
    %v78 = vadd.s32 %v54, %v45
    %v79 = vadd.s32 %v54, %v46
    %v80 = vadd.s32 %v54, %v47
    %v81 = vadd.s32 %v54, %v48
    %v82 = vadd.s32 %v54, %v49
    %v83 = vadd.s32 %v54, %v50
    %v84 = vadd.s32 %v54, %v51
    %v85 = vadd.s32 %v54, %v52
    %v86 = vadd.s32 %v54, %v53
    %s87 = smul.u32 0, 256
    %v88 = vlaneseq
    %v89 = vand.u32 %v88, 127
    %v90 = vadd.s32 %v89, 128
    %v91 = vstv %s87
    %v92 = vadd.s32 %v91, %v89
    %v93 = vadd.s32 %v91, %v90
    %v94 = vsub.s32 %v55, %v92
    %v95 = vsub.s32 %v55, %v93
    %v96 = vsub.s32 %v56, %v92
    %v97 = vsub.s32 %v56, %v93
    %v98 = vsub.s32 %v57, %v92
    %v99 = vsub.s32 %v57, %v93
    %v100 = vsub.s32 %v58, %v92
    %v101 = vsub.s32 %v58, %v93
    %v102 = vsub.s32 %v59, %v92
    %v103 = vsub.s32 %v59, %v93
    %v104 = vsub.s32 %v60, %v92
    %v105 = vsub.s32 %v60, %v93
    %v106 = vsub.s32 %v61, %v92
    %v107 = vsub.s32 %v61, %v93
    %v108 = vsub.s32 %v62, %v92
    %v109 = vsub.s32 %v62, %v93
    %v110 = vsub.s32 %v63, %v92
    %v111 = vsub.s32 %v63, %v93
    %v112 = vsub.s32 %v64, %v92
    %v113 = vsub.s32 %v64, %v93
    %v114 = vsub.s32 %v65, %v92
    %v115 = vsub.s32 %v65, %v93
    %v116 = vsub.s32 %v66, %v92
    %v117 = vsub.s32 %v66, %v93
    %v118 = vsub.s32 %v67, %v92
    %v119 = vsub.s32 %v67, %v93
    %v120 = vsub.s32 %v68, %v92
    %v121 = vsub.s32 %v68, %v93
    %v122 = vsub.s32 %v69, %v92
    %v123 = vsub.s32 %v69, %v93
    %v124 = vsub.s32 %v70, %v92
    %v125 = vsub.s32 %v70, %v93
    %v126 = vsub.s32 %v71, %v92
    %v127 = vsub.s32 %v71, %v93
    %v128 = vsub.s32 %v72, %v92
    %v129 = vsub.s32 %v72, %v93
    %v130 = vsub.s32 %v73, %v92
    %v131 = vsub.s32 %v73, %v93
    %v132 = vsub.s32 %v74, %v92
    %v133 = vsub.s32 %v74, %v93
    %v134 = vsub.s32 %v75, %v92
    %v135 = vsub.s32 %v75, %v93
    %v136 = vsub.s32 %v76, %v92
    %v137 = vsub.s32 %v76, %v93
    %v138 = vsub.s32 %v77, %v92
    %v139 = vsub.s32 %v77, %v93
    %v140 = vsub.s32 %v78, %v92
    %v141 = vsub.s32 %v78, %v93
    %v142 = vsub.s32 %v79, %v92
    %v143 = vsub.s32 %v79, %v93
    %v144 = vsub.s32 %v80, %v92
    %v145 = vsub.s32 %v80, %v93
    %v146 = vsub.s32 %v81, %v92
    %v147 = vsub.s32 %v81, %v93
    %v148 = vsub.s32 %v82, %v92
    %v149 = vsub.s32 %v82, %v93
    %v150 = vsub.s32 %v83, %v92
    %v151 = vsub.s32 %v83, %v93
    %v152 = vsub.s32 %v84, %v92
    %v153 = vsub.s32 %v84, %v93
    %v154 = vsub.s32 %v85, %v92
    %v155 = vsub.s32 %v85, %v93
    %v156 = vsub.s32 %v86, %v92
    %v157 = vsub.s32 %v86, %v93
    %vm158 = vcmp.lt.s32.totalorder %v94, 0
    %vm159 = vcmp.lt.s32.totalorder %v95, 0
    %vm160 = vcmp.lt.s32.totalorder %v96, 0
    %vm161 = vcmp.lt.s32.totalorder %v97, 0
    %vm162 = vcmp.lt.s32.totalorder %v98, 0
    %vm163 = vcmp.lt.s32.totalorder %v99, 0
    %vm164 = vcmp.lt.s32.totalorder %v100, 0
    %vm165 = vcmp.lt.s32.totalorder %v101, 0
    %vm166 = vcmp.lt.s32.totalorder %v102, 0
    %vm167 = vcmp.lt.s32.totalorder %v103, 0
    %vm168 = vcmp.lt.s32.totalorder %v104, 0
    %vm169 = vcmp.lt.s32.totalorder %v105, 0
    %vm170 = vcmp.lt.s32.totalorder %v106, 0
    %vm171 = vcmp.lt.s32.totalorder %v107, 0
    %vm172 = vcmp.lt.s32.totalorder %v108, 0
    %vm173 = vcmp.lt.s32.totalorder %v109, 0
    %vm174 = vcmp.lt.s32.totalorder %v110, 0
    %vm175 = vcmp.lt.s32.totalorder %v111, 0
    %vm176 = vcmp.lt.s32.totalorder %v112, 0
    %vm177 = vcmp.lt.s32.totalorder %v113, 0
    %vm178 = vcmp.lt.s32.totalorder %v114, 0
    %vm179 = vcmp.lt.s32.totalorder %v115, 0
    %vm180 = vcmp.lt.s32.totalorder %v116, 0
    %vm181 = vcmp.lt.s32.totalorder %v117, 0
    %vm182 = vcmp.lt.s32.totalorder %v118, 0
    %vm183 = vcmp.lt.s32.totalorder %v119, 0
    %vm184 = vcmp.lt.s32.totalorder %v120, 0
    %vm185 = vcmp.lt.s32.totalorder %v121, 0
    %vm186 = vcmp.lt.s32.totalorder %v122, 0
    %vm187 = vcmp.lt.s32.totalorder %v123, 0
    %vm188 = vcmp.lt.s32.totalorder %v124, 0
    %vm189 = vcmp.lt.s32.totalorder %v125, 0
    %vm190 = vcmp.lt.s32.totalorder %v126, 0
    %vm191 = vcmp.lt.s32.totalorder %v127, 0
    %vm192 = vcmp.lt.s32.totalorder %v128, 0
    %vm193 = vcmp.lt.s32.totalorder %v129, 0
    %vm194 = vcmp.lt.s32.totalorder %v130, 0
    %vm195 = vcmp.lt.s32.totalorder %v131, 0
    %vm196 = vcmp.lt.s32.totalorder %v132, 0
    %vm197 = vcmp.lt.s32.totalorder %v133, 0
    %vm198 = vcmp.lt.s32.totalorder %v134, 0
    %vm199 = vcmp.lt.s32.totalorder %v135, 0
    %vm200 = vcmp.lt.s32.totalorder %v136, 0
    %vm201 = vcmp.lt.s32.totalorder %v137, 0
    %vm202 = vcmp.lt.s32.totalorder %v138, 0
    %vm203 = vcmp.lt.s32.totalorder %v139, 0
    %vm204 = vcmp.lt.s32.totalorder %v140, 0
    %vm205 = vcmp.lt.s32.totalorder %v141, 0
    %vm206 = vcmp.lt.s32.totalorder %v142, 0
    %vm207 = vcmp.lt.s32.totalorder %v143, 0
    %vm208 = vcmp.lt.s32.totalorder %v144, 0
    %vm209 = vcmp.lt.s32.totalorder %v145, 0
    %vm210 = vcmp.lt.s32.totalorder %v146, 0
    %vm211 = vcmp.lt.s32.totalorder %v147, 0
    %vm212 = vcmp.lt.s32.totalorder %v148, 0
    %vm213 = vcmp.lt.s32.totalorder %v149, 0
    %vm214 = vcmp.lt.s32.totalorder %v150, 0
    %vm215 = vcmp.lt.s32.totalorder %v151, 0
    %vm216 = vcmp.lt.s32.totalorder %v152, 0
    %vm217 = vcmp.lt.s32.totalorder %v153, 0
    %vm218 = vcmp.lt.s32.totalorder %v154, 0
    %vm219 = vcmp.lt.s32.totalorder %v155, 0
    %vm220 = vcmp.lt.s32.totalorder %v156, 0
    %vm221 = vcmp.lt.s32.totalorder %v157, 0
    %v222 = vsel %vm158, 16, 0
    %v223 = vsel %vm159, 16, 0
    %v224 = vsel %vm160, 16, 0
    %v225 = vsel %vm161, 16, 0
    %v226 = vsel %vm162, 16, 0
    %v227 = vsel %vm163, 16, 0
    %v228 = vsel %vm164, 16, 0
    %v229 = vsel %vm165, 16, 0
    %v230 = vsel %vm166, 16, 0
    %v231 = vsel %vm167, 16, 0
    %v232 = vsel %vm168, 16, 0
    %v233 = vsel %vm169, 16, 0
    %v234 = vsel %vm170, 16, 0
    %v235 = vsel %vm171, 16, 0
    %v236 = vsel %vm172, 16, 0
    %v237 = vsel %vm173, 16, 0
    %v238 = vsel %vm174, 16, 0
    %v239 = vsel %vm175, 16, 0
    %v240 = vsel %vm176, 16, 0
    %v241 = vsel %vm177, 16, 0
    %v242 = vsel %vm178, 16, 0
    %v243 = vsel %vm179, 16, 0
    %v244 = vsel %vm180, 16, 0
    %v245 = vsel %vm181, 16, 0
    %v246 = vsel %vm182, 16, 0
    %v247 = vsel %vm183, 16, 0
    %v248 = vsel %vm184, 16, 0
    %v249 = vsel %vm185, 16, 0
    %v250 = vsel %vm186, 16, 0
    %v251 = vsel %vm187, 16, 0
    %v252 = vsel %vm188, 16, 0
    %v253 = vsel %vm189, 16, 0
    %v254 = vsel %vm190, 16, 0
    %v255 = vsel %vm191, 16, 0
    %v256 = vsel %vm192, 16, 0
    %v257 = vsel %vm193, 16, 0
    %v258 = vsel %vm194, 16, 0
    %v259 = vsel %vm195, 16, 0
    %v260 = vsel %vm196, 16, 0
    %v261 = vsel %vm197, 16, 0
    %v262 = vsel %vm198, 16, 0
    %v263 = vsel %vm199, 16, 0
    %v264 = vsel %vm200, 16, 0
    %v265 = vsel %vm201, 16, 0
    %v266 = vsel %vm202, 16, 0
    %v267 = vsel %vm203, 16, 0
    %v268 = vsel %vm204, 16, 0
    %v269 = vsel %vm205, 16, 0
    %v270 = vsel %vm206, 16, 0
    %v271 = vsel %vm207, 16, 0
    %v272 = vsel %vm208, 16, 0
    %v273 = vsel %vm209, 16, 0
    %v274 = vsel %vm210, 16, 0
    %v275 = vsel %vm211, 16, 0
    %v276 = vsel %vm212, 16, 0
    %v277 = vsel %vm213, 16, 0
    %v278 = vsel %vm214, 16, 0
    %v279 = vsel %vm215, 16, 0
    %v280 = vsel %vm216, 16, 0
    %v281 = vsel %vm217, 16, 0
    %v282 = vsel %vm218, 16, 0
    %v283 = vsel %vm219, 16, 0
    %v284 = vsel %vm220, 16, 0
    %v285 = vsel %vm221, 16, 0
    %v286 = vsub.s32 0, %v94
    %v287 = vsel %vm158, %v286, %v94
    %v288 = vsub.s32 0, %v95
    %v289 = vsel %vm159, %v288, %v95
    %v290 = vsub.s32 0, %v96
    %v291 = vsel %vm160, %v290, %v96
    %v292 = vsub.s32 0, %v97
    %v293 = vsel %vm161, %v292, %v97
    %v294 = vsub.s32 0, %v98
    %v295 = vsel %vm162, %v294, %v98
    %v296 = vsub.s32 0, %v99
    %v297 = vsel %vm163, %v296, %v99
    %v298 = vsub.s32 0, %v100
    %v299 = vsel %vm164, %v298, %v100
    %v300 = vsub.s32 0, %v101
    %v301 = vsel %vm165, %v300, %v101
    %v302 = vsub.s32 0, %v102
    %v303 = vsel %vm166, %v302, %v102
    %v304 = vsub.s32 0, %v103
    %v305 = vsel %vm167, %v304, %v103
    %v306 = vsub.s32 0, %v104
    %v307 = vsel %vm168, %v306, %v104
    %v308 = vsub.s32 0, %v105
    %v309 = vsel %vm169, %v308, %v105
    %v310 = vsub.s32 0, %v106
    %v311 = vsel %vm170, %v310, %v106
    %v312 = vsub.s32 0, %v107
    %v313 = vsel %vm171, %v312, %v107
    %v314 = vsub.s32 0, %v108
    %v315 = vsel %vm172, %v314, %v108
    %v316 = vsub.s32 0, %v109
    %v317 = vsel %vm173, %v316, %v109
    %v318 = vsub.s32 0, %v110
    %v319 = vsel %vm174, %v318, %v110
    %v320 = vsub.s32 0, %v111
    %v321 = vsel %vm175, %v320, %v111
    %v322 = vsub.s32 0, %v112
    %v323 = vsel %vm176, %v322, %v112
    %v324 = vsub.s32 0, %v113
    %v325 = vsel %vm177, %v324, %v113
    %v326 = vsub.s32 0, %v114
    %v327 = vsel %vm178, %v326, %v114
    %v328 = vsub.s32 0, %v115
    %v329 = vsel %vm179, %v328, %v115
    %v330 = vsub.s32 0, %v116
    %v331 = vsel %vm180, %v330, %v116
    %v332 = vsub.s32 0, %v117
    %v333 = vsel %vm181, %v332, %v117
    %v334 = vsub.s32 0, %v118
    %v335 = vsel %vm182, %v334, %v118
    %v336 = vsub.s32 0, %v119
    %v337 = vsel %vm183, %v336, %v119
    %v338 = vsub.s32 0, %v120
    %v339 = vsel %vm184, %v338, %v120
    %v340 = vsub.s32 0, %v121
    %v341 = vsel %vm185, %v340, %v121
    %v342 = vsub.s32 0, %v122
    %v343 = vsel %vm186, %v342, %v122
    %v344 = vsub.s32 0, %v123
    %v345 = vsel %vm187, %v344, %v123
    %v346 = vsub.s32 0, %v124
    %v347 = vsel %vm188, %v346, %v124
    %v348 = vsub.s32 0, %v125
    %v349 = vsel %vm189, %v348, %v125
    %v350 = vsub.s32 0, %v126
    %v351 = vsel %vm190, %v350, %v126
    %v352 = vsub.s32 0, %v127
    %v353 = vsel %vm191, %v352, %v127
    %v354 = vsub.s32 0, %v128
    %v355 = vsel %vm192, %v354, %v128
    %v356 = vsub.s32 0, %v129
    %v357 = vsel %vm193, %v356, %v129
    %v358 = vsub.s32 0, %v130
    %v359 = vsel %vm194, %v358, %v130
    %v360 = vsub.s32 0, %v131
    %v361 = vsel %vm195, %v360, %v131
    %v362 = vsub.s32 0, %v132
    %v363 = vsel %vm196, %v362, %v132
    %v364 = vsub.s32 0, %v133
    %v365 = vsel %vm197, %v364, %v133
    %v366 = vsub.s32 0, %v134
    %v367 = vsel %vm198, %v366, %v134
    %v368 = vsub.s32 0, %v135
    %v369 = vsel %vm199, %v368, %v135
    %v370 = vsub.s32 0, %v136
    %v371 = vsel %vm200, %v370, %v136
    %v372 = vsub.s32 0, %v137
    %v373 = vsel %vm201, %v372, %v137
    %v374 = vsub.s32 0, %v138
    %v375 = vsel %vm202, %v374, %v138
    %v376 = vsub.s32 0, %v139
    %v377 = vsel %vm203, %v376, %v139
    %v378 = vsub.s32 0, %v140
    %v379 = vsel %vm204, %v378, %v140
    %v380 = vsub.s32 0, %v141
    %v381 = vsel %vm205, %v380, %v141
    %v382 = vsub.s32 0, %v142
    %v383 = vsel %vm206, %v382, %v142
    %v384 = vsub.s32 0, %v143
    %v385 = vsel %vm207, %v384, %v143
    %v386 = vsub.s32 0, %v144
    %v387 = vsel %vm208, %v386, %v144
    %v388 = vsub.s32 0, %v145
    %v389 = vsel %vm209, %v388, %v145
    %v390 = vsub.s32 0, %v146
    %v391 = vsel %vm210, %v390, %v146
    %v392 = vsub.s32 0, %v147
    %v393 = vsel %vm211, %v392, %v147
    %v394 = vsub.s32 0, %v148
    %v395 = vsel %vm212, %v394, %v148
    %v396 = vsub.s32 0, %v149
    %v397 = vsel %vm213, %v396, %v149
    %v398 = vsub.s32 0, %v150
    %v399 = vsel %vm214, %v398, %v150
    %v400 = vsub.s32 0, %v151
    %v401 = vsel %vm215, %v400, %v151
    %v402 = vsub.s32 0, %v152
    %v403 = vsel %vm216, %v402, %v152
    %v404 = vsub.s32 0, %v153
    %v405 = vsel %vm217, %v404, %v153
    %v406 = vsub.s32 0, %v154
    %v407 = vsel %vm218, %v406, %v154
    %v408 = vsub.s32 0, %v155
    %v409 = vsel %vm219, %v408, %v155
    %v410 = vsub.s32 0, %v156
    %v411 = vsel %vm220, %v410, %v156
    %v412 = vsub.s32 0, %v157
    %v413 = vsel %vm221, %v412, %v157
    %vm414 = vcmp.lt.s32.totalorder %v287, 8
    %vm415 = vcmp.lt.s32.totalorder %v289, 8
    %vm416 = vcmp.lt.s32.totalorder %v291, 8
    %vm417 = vcmp.lt.s32.totalorder %v293, 8
    %vm418 = vcmp.lt.s32.totalorder %v295, 8
    %vm419 = vcmp.lt.s32.totalorder %v297, 8
    %vm420 = vcmp.lt.s32.totalorder %v299, 8
    %vm421 = vcmp.lt.s32.totalorder %v301, 8
    %vm422 = vcmp.lt.s32.totalorder %v303, 8
    %vm423 = vcmp.lt.s32.totalorder %v305, 8
    %vm424 = vcmp.lt.s32.totalorder %v307, 8
    %vm425 = vcmp.lt.s32.totalorder %v309, 8
    %vm426 = vcmp.lt.s32.totalorder %v311, 8
    %vm427 = vcmp.lt.s32.totalorder %v313, 8
    %vm428 = vcmp.lt.s32.totalorder %v315, 8
    %vm429 = vcmp.lt.s32.totalorder %v317, 8
    %vm430 = vcmp.lt.s32.totalorder %v319, 8
    %vm431 = vcmp.lt.s32.totalorder %v321, 8
    %vm432 = vcmp.lt.s32.totalorder %v323, 8
    %vm433 = vcmp.lt.s32.totalorder %v325, 8
    %vm434 = vcmp.lt.s32.totalorder %v327, 8
    %vm435 = vcmp.lt.s32.totalorder %v329, 8
    %vm436 = vcmp.lt.s32.totalorder %v331, 8
    %vm437 = vcmp.lt.s32.totalorder %v333, 8
    %vm438 = vcmp.lt.s32.totalorder %v335, 8
    %vm439 = vcmp.lt.s32.totalorder %v337, 8
    %vm440 = vcmp.lt.s32.totalorder %v339, 8
    %vm441 = vcmp.lt.s32.totalorder %v341, 8
    %vm442 = vcmp.lt.s32.totalorder %v343, 8
    %vm443 = vcmp.lt.s32.totalorder %v345, 8
    %vm444 = vcmp.lt.s32.totalorder %v347, 8
    %vm445 = vcmp.lt.s32.totalorder %v349, 8
    %vm446 = vcmp.lt.s32.totalorder %v351, 8
    %vm447 = vcmp.lt.s32.totalorder %v353, 8
    %vm448 = vcmp.lt.s32.totalorder %v355, 8
    %vm449 = vcmp.lt.s32.totalorder %v357, 8
    %vm450 = vcmp.lt.s32.totalorder %v359, 8
    %vm451 = vcmp.lt.s32.totalorder %v361, 8
    %vm452 = vcmp.lt.s32.totalorder %v363, 8
    %vm453 = vcmp.lt.s32.totalorder %v365, 8
    %vm454 = vcmp.lt.s32.totalorder %v367, 8
    %vm455 = vcmp.lt.s32.totalorder %v369, 8
    %vm456 = vcmp.lt.s32.totalorder %v371, 8
    %vm457 = vcmp.lt.s32.totalorder %v373, 8
    %vm458 = vcmp.lt.s32.totalorder %v375, 8
    %vm459 = vcmp.lt.s32.totalorder %v377, 8
    %vm460 = vcmp.lt.s32.totalorder %v379, 8
    %vm461 = vcmp.lt.s32.totalorder %v381, 8
    %vm462 = vcmp.lt.s32.totalorder %v383, 8
    %vm463 = vcmp.lt.s32.totalorder %v385, 8
    %vm464 = vcmp.lt.s32.totalorder %v387, 8
    %vm465 = vcmp.lt.s32.totalorder %v389, 8
    %vm466 = vcmp.lt.s32.totalorder %v391, 8
    %vm467 = vcmp.lt.s32.totalorder %v393, 8
    %vm468 = vcmp.lt.s32.totalorder %v395, 8
    %vm469 = vcmp.lt.s32.totalorder %v397, 8
    %vm470 = vcmp.lt.s32.totalorder %v399, 8
    %vm471 = vcmp.lt.s32.totalorder %v401, 8
    %vm472 = vcmp.lt.s32.totalorder %v403, 8
    %vm473 = vcmp.lt.s32.totalorder %v405, 8
    %vm474 = vcmp.lt.s32.totalorder %v407, 8
    %vm475 = vcmp.lt.s32.totalorder %v409, 8
    %vm476 = vcmp.lt.s32.totalorder %v411, 8
    %vm477 = vcmp.lt.s32.totalorder %v413, 8
    %vm478 = vcmp.gt.s32.totalorder %v287, 1
    %v479 = vsel %vm478, %v287, 1
    %vm480 = vcmp.gt.s32.totalorder %v289, 1
    %v481 = vsel %vm480, %v289, 1
    %vm482 = vcmp.gt.s32.totalorder %v291, 1
    %v483 = vsel %vm482, %v291, 1
    %vm484 = vcmp.gt.s32.totalorder %v293, 1
    %v485 = vsel %vm484, %v293, 1
    %vm486 = vcmp.gt.s32.totalorder %v295, 1
    %v487 = vsel %vm486, %v295, 1
    %vm488 = vcmp.gt.s32.totalorder %v297, 1
    %v489 = vsel %vm488, %v297, 1
    %vm490 = vcmp.gt.s32.totalorder %v299, 1
    %v491 = vsel %vm490, %v299, 1
    %vm492 = vcmp.gt.s32.totalorder %v301, 1
    %v493 = vsel %vm492, %v301, 1
    %vm494 = vcmp.gt.s32.totalorder %v303, 1
    %v495 = vsel %vm494, %v303, 1
    %vm496 = vcmp.gt.s32.totalorder %v305, 1
    %v497 = vsel %vm496, %v305, 1
    %vm498 = vcmp.gt.s32.totalorder %v307, 1
    %v499 = vsel %vm498, %v307, 1
    %vm500 = vcmp.gt.s32.totalorder %v309, 1
    %v501 = vsel %vm500, %v309, 1
    %vm502 = vcmp.gt.s32.totalorder %v311, 1
    %v503 = vsel %vm502, %v311, 1
    %vm504 = vcmp.gt.s32.totalorder %v313, 1
    %v505 = vsel %vm504, %v313, 1
    %vm506 = vcmp.gt.s32.totalorder %v315, 1
    %v507 = vsel %vm506, %v315, 1
    %vm508 = vcmp.gt.s32.totalorder %v317, 1
    %v509 = vsel %vm508, %v317, 1
    %vm510 = vcmp.gt.s32.totalorder %v319, 1
    %v511 = vsel %vm510, %v319, 1
    %vm512 = vcmp.gt.s32.totalorder %v321, 1
    %v513 = vsel %vm512, %v321, 1
    %vm514 = vcmp.gt.s32.totalorder %v323, 1
    %v515 = vsel %vm514, %v323, 1
    %vm516 = vcmp.gt.s32.totalorder %v325, 1
    %v517 = vsel %vm516, %v325, 1
    %vm518 = vcmp.gt.s32.totalorder %v327, 1
    %v519 = vsel %vm518, %v327, 1
    %vm520 = vcmp.gt.s32.totalorder %v329, 1
    %v521 = vsel %vm520, %v329, 1
    %vm522 = vcmp.gt.s32.totalorder %v331, 1
    %v523 = vsel %vm522, %v331, 1
    %vm524 = vcmp.gt.s32.totalorder %v333, 1
    %v525 = vsel %vm524, %v333, 1
    %vm526 = vcmp.gt.s32.totalorder %v335, 1
    %v527 = vsel %vm526, %v335, 1
    %vm528 = vcmp.gt.s32.totalorder %v337, 1
    %v529 = vsel %vm528, %v337, 1
    %vm530 = vcmp.gt.s32.totalorder %v339, 1
    %v531 = vsel %vm530, %v339, 1
    %vm532 = vcmp.gt.s32.totalorder %v341, 1
    %v533 = vsel %vm532, %v341, 1
    %vm534 = vcmp.gt.s32.totalorder %v343, 1
    %v535 = vsel %vm534, %v343, 1
    %vm536 = vcmp.gt.s32.totalorder %v345, 1
    %v537 = vsel %vm536, %v345, 1
    %vm538 = vcmp.gt.s32.totalorder %v347, 1
    %v539 = vsel %vm538, %v347, 1
    %vm540 = vcmp.gt.s32.totalorder %v349, 1
    %v541 = vsel %vm540, %v349, 1
    %vm542 = vcmp.gt.s32.totalorder %v351, 1
    %v543 = vsel %vm542, %v351, 1
    %vm544 = vcmp.gt.s32.totalorder %v353, 1
    %v545 = vsel %vm544, %v353, 1
    %vm546 = vcmp.gt.s32.totalorder %v355, 1
    %v547 = vsel %vm546, %v355, 1
    %vm548 = vcmp.gt.s32.totalorder %v357, 1
    %v549 = vsel %vm548, %v357, 1
    %vm550 = vcmp.gt.s32.totalorder %v359, 1
    %v551 = vsel %vm550, %v359, 1
    %vm552 = vcmp.gt.s32.totalorder %v361, 1
    %v553 = vsel %vm552, %v361, 1
    %vm554 = vcmp.gt.s32.totalorder %v363, 1
    %v555 = vsel %vm554, %v363, 1
    %vm556 = vcmp.gt.s32.totalorder %v365, 1
    %v557 = vsel %vm556, %v365, 1
    %vm558 = vcmp.gt.s32.totalorder %v367, 1
    %v559 = vsel %vm558, %v367, 1
    %vm560 = vcmp.gt.s32.totalorder %v369, 1
    %v561 = vsel %vm560, %v369, 1
    %vm562 = vcmp.gt.s32.totalorder %v371, 1
    %v563 = vsel %vm562, %v371, 1
    %vm564 = vcmp.gt.s32.totalorder %v373, 1
    %v565 = vsel %vm564, %v373, 1
    %vm566 = vcmp.gt.s32.totalorder %v375, 1
    %v567 = vsel %vm566, %v375, 1
    %vm568 = vcmp.gt.s32.totalorder %v377, 1
    %v569 = vsel %vm568, %v377, 1
    %vm570 = vcmp.gt.s32.totalorder %v379, 1
    %v571 = vsel %vm570, %v379, 1
    %vm572 = vcmp.gt.s32.totalorder %v381, 1
    %v573 = vsel %vm572, %v381, 1
    %vm574 = vcmp.gt.s32.totalorder %v383, 1
    %v575 = vsel %vm574, %v383, 1
    %vm576 = vcmp.gt.s32.totalorder %v385, 1
    %v577 = vsel %vm576, %v385, 1
    %vm578 = vcmp.gt.s32.totalorder %v387, 1
    %v579 = vsel %vm578, %v387, 1
    %vm580 = vcmp.gt.s32.totalorder %v389, 1
    %v581 = vsel %vm580, %v389, 1
    %vm582 = vcmp.gt.s32.totalorder %v391, 1
    %v583 = vsel %vm582, %v391, 1
    %vm584 = vcmp.gt.s32.totalorder %v393, 1
    %v585 = vsel %vm584, %v393, 1
    %vm586 = vcmp.gt.s32.totalorder %v395, 1
    %v587 = vsel %vm586, %v395, 1
    %vm588 = vcmp.gt.s32.totalorder %v397, 1
    %v589 = vsel %vm588, %v397, 1
    %vm590 = vcmp.gt.s32.totalorder %v399, 1
    %v591 = vsel %vm590, %v399, 1
    %vm592 = vcmp.gt.s32.totalorder %v401, 1
    %v593 = vsel %vm592, %v401, 1
    %vm594 = vcmp.gt.s32.totalorder %v403, 1
    %v595 = vsel %vm594, %v403, 1
    %vm596 = vcmp.gt.s32.totalorder %v405, 1
    %v597 = vsel %vm596, %v405, 1
    %vm598 = vcmp.gt.s32.totalorder %v407, 1
    %v599 = vsel %vm598, %v407, 1
    %vm600 = vcmp.gt.s32.totalorder %v409, 1
    %v601 = vsel %vm600, %v409, 1
    %vm602 = vcmp.gt.s32.totalorder %v411, 1
    %v603 = vsel %vm602, %v411, 1
    %vm604 = vcmp.gt.s32.totalorder %v413, 1
    %v605 = vsel %vm604, %v413, 1
    %v606 = vcvt.s32.f32 %v479
    %v607 = vcvt.s32.f32 %v481
    %v608 = vcvt.s32.f32 %v483
    %v609 = vcvt.s32.f32 %v485
    %v610 = vcvt.s32.f32 %v487
    %v611 = vcvt.s32.f32 %v489
    %v612 = vcvt.s32.f32 %v491
    %v613 = vcvt.s32.f32 %v493
    %v614 = vcvt.s32.f32 %v495
    %v615 = vcvt.s32.f32 %v497
    %v616 = vcvt.s32.f32 %v499
    %v617 = vcvt.s32.f32 %v501
    %v618 = vcvt.s32.f32 %v503
    %v619 = vcvt.s32.f32 %v505
    %v620 = vcvt.s32.f32 %v507
    %v621 = vcvt.s32.f32 %v509
    %v622 = vcvt.s32.f32 %v511
    %v623 = vcvt.s32.f32 %v513
    %v624 = vcvt.s32.f32 %v515
    %v625 = vcvt.s32.f32 %v517
    %v626 = vcvt.s32.f32 %v519
    %v627 = vcvt.s32.f32 %v521
    %v628 = vcvt.s32.f32 %v523
    %v629 = vcvt.s32.f32 %v525
    %v630 = vcvt.s32.f32 %v527
    %v631 = vcvt.s32.f32 %v529
    %v632 = vcvt.s32.f32 %v531
    %v633 = vcvt.s32.f32 %v533
    %v634 = vcvt.s32.f32 %v535
    %v635 = vcvt.s32.f32 %v537
    %v636 = vcvt.s32.f32 %v539
    %v637 = vcvt.s32.f32 %v541
    %v638 = vcvt.s32.f32 %v543
    %v639 = vcvt.s32.f32 %v545
    %v640 = vcvt.s32.f32 %v547
    %v641 = vcvt.s32.f32 %v549
    %v642 = vcvt.s32.f32 %v551
    %v643 = vcvt.s32.f32 %v553
    %v644 = vcvt.s32.f32 %v555
    %v645 = vcvt.s32.f32 %v557
    %v646 = vcvt.s32.f32 %v559
    %v647 = vcvt.s32.f32 %v561
    %v648 = vcvt.s32.f32 %v563
    %v649 = vcvt.s32.f32 %v565
    %v650 = vcvt.s32.f32 %v567
    %v651 = vcvt.s32.f32 %v569
    %v652 = vcvt.s32.f32 %v571
    %v653 = vcvt.s32.f32 %v573
    %v654 = vcvt.s32.f32 %v575
    %v655 = vcvt.s32.f32 %v577
    %v656 = vcvt.s32.f32 %v579
    %v657 = vcvt.s32.f32 %v581
    %v658 = vcvt.s32.f32 %v583
    %v659 = vcvt.s32.f32 %v585
    %v660 = vcvt.s32.f32 %v587
    %v661 = vcvt.s32.f32 %v589
    %v662 = vcvt.s32.f32 %v591
    %v663 = vcvt.s32.f32 %v593
    %v664 = vcvt.s32.f32 %v595
    %v665 = vcvt.s32.f32 %v597
    %v666 = vcvt.s32.f32 %v599
    %v667 = vcvt.s32.f32 %v601
    %v668 = vcvt.s32.f32 %v603
    %v669 = vcvt.s32.f32 %v605
    %v670 = vrcp.pop 8.0
    %v671 = vmul.f32 %v606, %v670
    %v672 = vmul.f32 %v607, %v670
    %v673 = vmul.f32 %v608, %v670
    %v674 = vmul.f32 %v609, %v670
    %v675 = vmul.f32 %v610, %v670
    %v676 = vmul.f32 %v611, %v670
    %v677 = vmul.f32 %v612, %v670
    %v678 = vmul.f32 %v613, %v670
    %v679 = vmul.f32 %v614, %v670
    %v680 = vmul.f32 %v615, %v670
    %v681 = vmul.f32 %v616, %v670
    %v682 = vmul.f32 %v617, %v670
    %v683 = vmul.f32 %v618, %v670
    %v684 = vmul.f32 %v619, %v670
    %v685 = vmul.f32 %v620, %v670
    %v686 = vmul.f32 %v621, %v670
    %v687 = vmul.f32 %v622, %v670
    %v688 = vmul.f32 %v623, %v670
    %v689 = vmul.f32 %v624, %v670
    %v690 = vmul.f32 %v625, %v670
    %v691 = vmul.f32 %v626, %v670
    %v692 = vmul.f32 %v627, %v670
    %v693 = vmul.f32 %v628, %v670
    %v694 = vmul.f32 %v629, %v670
    %v695 = vmul.f32 %v630, %v670
    %v696 = vmul.f32 %v631, %v670
    %v697 = vmul.f32 %v632, %v670
    %v698 = vmul.f32 %v633, %v670
    %v699 = vmul.f32 %v634, %v670
    %v700 = vmul.f32 %v635, %v670
    %v701 = vmul.f32 %v636, %v670
    %v702 = vmul.f32 %v637, %v670
    %v703 = vmul.f32 %v638, %v670
    %v704 = vmul.f32 %v639, %v670
    %v705 = vmul.f32 %v640, %v670
    %v706 = vmul.f32 %v641, %v670
    %v707 = vmul.f32 %v642, %v670
    %v708 = vmul.f32 %v643, %v670
    %v709 = vmul.f32 %v644, %v670
    %v710 = vmul.f32 %v645, %v670
    %v711 = vmul.f32 %v646, %v670
    %v712 = vmul.f32 %v647, %v670
    %v713 = vmul.f32 %v648, %v670
    %v714 = vmul.f32 %v649, %v670
    %v715 = vmul.f32 %v650, %v670
    %v716 = vmul.f32 %v651, %v670
    %v717 = vmul.f32 %v652, %v670
    %v718 = vmul.f32 %v653, %v670
    %v719 = vmul.f32 %v654, %v670
    %v720 = vmul.f32 %v655, %v670
    %v721 = vmul.f32 %v656, %v670
    %v722 = vmul.f32 %v657, %v670
    %v723 = vmul.f32 %v658, %v670
    %v724 = vmul.f32 %v659, %v670
    %v725 = vmul.f32 %v660, %v670
    %v726 = vmul.f32 %v661, %v670
    %v727 = vmul.f32 %v662, %v670
    %v728 = vmul.f32 %v663, %v670
    %v729 = vmul.f32 %v664, %v670
    %v730 = vmul.f32 %v665, %v670
    %v731 = vmul.f32 %v666, %v670
    %v732 = vmul.f32 %v667, %v670
    %v733 = vmul.f32 %v668, %v670
    %v734 = vmul.f32 %v669, %v670
    %v735 = vlog2.pop %v671
    %v736 = vmul.f32 %v735, 0.6931472
    %v737 = vlog2.pop %v672
    %v738 = vmul.f32 %v737, 0.6931472
    %v739 = vlog2.pop %v673
    %v740 = vmul.f32 %v739, 0.6931472
    %v741 = vlog2.pop %v674
    %v742 = vmul.f32 %v741, 0.6931472
    %v743 = vlog2.pop %v675
    %v744 = vmul.f32 %v743, 0.6931472
    %v745 = vlog2.pop %v676
    %v746 = vmul.f32 %v745, 0.6931472
    %v747 = vlog2.pop %v677
    %v748 = vmul.f32 %v747, 0.6931472
    %v749 = vlog2.pop %v678
    %v750 = vmul.f32 %v749, 0.6931472
    %v751 = vlog2.pop %v679
    %v752 = vmul.f32 %v751, 0.6931472
    %v753 = vlog2.pop %v680
    %v754 = vmul.f32 %v753, 0.6931472
    %v755 = vlog2.pop %v681
    %v756 = vmul.f32 %v755, 0.6931472
    %v757 = vlog2.pop %v682
    %v758 = vmul.f32 %v757, 0.6931472
    %v759 = vlog2.pop %v683
    %v760 = vmul.f32 %v759, 0.6931472
    %v761 = vlog2.pop %v684
    %v762 = vmul.f32 %v761, 0.6931472
    %v763 = vlog2.pop %v685
    %v764 = vmul.f32 %v763, 0.6931472
    %v765 = vlog2.pop %v686
    %v766 = vmul.f32 %v765, 0.6931472
    %v767 = vlog2.pop %v687
    %v768 = vmul.f32 %v767, 0.6931472
    %v769 = vlog2.pop %v688
    %v770 = vmul.f32 %v769, 0.6931472
    %v771 = vlog2.pop %v689
    %v772 = vmul.f32 %v771, 0.6931472
    %v773 = vlog2.pop %v690
    %v774 = vmul.f32 %v773, 0.6931472
    %v775 = vlog2.pop %v691
    %v776 = vmul.f32 %v775, 0.6931472
    %v777 = vlog2.pop %v692
    %v778 = vmul.f32 %v777, 0.6931472
    %v779 = vlog2.pop %v693
    %v780 = vmul.f32 %v779, 0.6931472
    %v781 = vlog2.pop %v694
    %v782 = vmul.f32 %v781, 0.6931472
    %v783 = vlog2.pop %v695
    %v784 = vmul.f32 %v783, 0.6931472
    %v785 = vlog2.pop %v696
    %v786 = vmul.f32 %v785, 0.6931472
    %v787 = vlog2.pop %v697
    %v788 = vmul.f32 %v787, 0.6931472
    %v789 = vlog2.pop %v698
    %v790 = vmul.f32 %v789, 0.6931472
    %v791 = vlog2.pop %v699
    %v792 = vmul.f32 %v791, 0.6931472
    %v793 = vlog2.pop %v700
    %v794 = vmul.f32 %v793, 0.6931472
    %v795 = vlog2.pop %v701
    %v796 = vmul.f32 %v795, 0.6931472
    %v797 = vlog2.pop %v702
    %v798 = vmul.f32 %v797, 0.6931472
    %v799 = vlog2.pop %v703
    %v800 = vmul.f32 %v799, 0.6931472
    %v801 = vlog2.pop %v704
    %v802 = vmul.f32 %v801, 0.6931472
    %v803 = vlog2.pop %v705
    %v804 = vmul.f32 %v803, 0.6931472
    %v805 = vlog2.pop %v706
    %v806 = vmul.f32 %v805, 0.6931472
    %v807 = vlog2.pop %v707
    %v808 = vmul.f32 %v807, 0.6931472
    %v809 = vlog2.pop %v708
    %v810 = vmul.f32 %v809, 0.6931472
    %v811 = vlog2.pop %v709
    %v812 = vmul.f32 %v811, 0.6931472
    %v813 = vlog2.pop %v710
    %v814 = vmul.f32 %v813, 0.6931472
    %v815 = vlog2.pop %v711
    %v816 = vmul.f32 %v815, 0.6931472
    %v817 = vlog2.pop %v712
    %v818 = vmul.f32 %v817, 0.6931472
    %v819 = vlog2.pop %v713
    %v820 = vmul.f32 %v819, 0.6931472
    %v821 = vlog2.pop %v714
    %v822 = vmul.f32 %v821, 0.6931472
    %v823 = vlog2.pop %v715
    %v824 = vmul.f32 %v823, 0.6931472
    %v825 = vlog2.pop %v716
    %v826 = vmul.f32 %v825, 0.6931472
    %v827 = vlog2.pop %v717
    %v828 = vmul.f32 %v827, 0.6931472
    %v829 = vlog2.pop %v718
    %v830 = vmul.f32 %v829, 0.6931472
    %v831 = vlog2.pop %v719
    %v832 = vmul.f32 %v831, 0.6931472
    %v833 = vlog2.pop %v720
    %v834 = vmul.f32 %v833, 0.6931472
    %v835 = vlog2.pop %v721
    %v836 = vmul.f32 %v835, 0.6931472
    %v837 = vlog2.pop %v722
    %v838 = vmul.f32 %v837, 0.6931472
    %v839 = vlog2.pop %v723
    %v840 = vmul.f32 %v839, 0.6931472
    %v841 = vlog2.pop %v724
    %v842 = vmul.f32 %v841, 0.6931472
    %v843 = vlog2.pop %v725
    %v844 = vmul.f32 %v843, 0.6931472
    %v845 = vlog2.pop %v726
    %v846 = vmul.f32 %v845, 0.6931472
    %v847 = vlog2.pop %v727
    %v848 = vmul.f32 %v847, 0.6931472
    %v849 = vlog2.pop %v728
    %v850 = vmul.f32 %v849, 0.6931472
    %v851 = vlog2.pop %v729
    %v852 = vmul.f32 %v851, 0.6931472
    %v853 = vlog2.pop %v730
    %v854 = vmul.f32 %v853, 0.6931472
    %v855 = vlog2.pop %v731
    %v856 = vmul.f32 %v855, 0.6931472
    %v857 = vlog2.pop %v732
    %v858 = vmul.f32 %v857, 0.6931472
    %v859 = vlog2.pop %v733
    %v860 = vmul.f32 %v859, 0.6931472
    %v861 = vlog2.pop %v734
    %v862 = vmul.f32 %v861, 0.6931472
    %v863 = vrcp.pop 2.7725887
    %v864 = vmul.f32 %v736, %v863
    %v865 = vmul.f32 %v738, %v863
    %v866 = vmul.f32 %v740, %v863
    %v867 = vmul.f32 %v742, %v863
    %v868 = vmul.f32 %v744, %v863
    %v869 = vmul.f32 %v746, %v863
    %v870 = vmul.f32 %v748, %v863
    %v871 = vmul.f32 %v750, %v863
    %v872 = vmul.f32 %v752, %v863
    %v873 = vmul.f32 %v754, %v863
    %v874 = vmul.f32 %v756, %v863
    %v875 = vmul.f32 %v758, %v863
    %v876 = vmul.f32 %v760, %v863
    %v877 = vmul.f32 %v762, %v863
    %v878 = vmul.f32 %v764, %v863
    %v879 = vmul.f32 %v766, %v863
    %v880 = vmul.f32 %v768, %v863
    %v881 = vmul.f32 %v770, %v863
    %v882 = vmul.f32 %v772, %v863
    %v883 = vmul.f32 %v774, %v863
    %v884 = vmul.f32 %v776, %v863
    %v885 = vmul.f32 %v778, %v863
    %v886 = vmul.f32 %v780, %v863
    %v887 = vmul.f32 %v782, %v863
    %v888 = vmul.f32 %v784, %v863
    %v889 = vmul.f32 %v786, %v863
    %v890 = vmul.f32 %v788, %v863
    %v891 = vmul.f32 %v790, %v863
    %v892 = vmul.f32 %v792, %v863
    %v893 = vmul.f32 %v794, %v863
    %v894 = vmul.f32 %v796, %v863
    %v895 = vmul.f32 %v798, %v863
    %v896 = vmul.f32 %v800, %v863
    %v897 = vmul.f32 %v802, %v863
    %v898 = vmul.f32 %v804, %v863
    %v899 = vmul.f32 %v806, %v863
    %v900 = vmul.f32 %v808, %v863
    %v901 = vmul.f32 %v810, %v863
    %v902 = vmul.f32 %v812, %v863
    %v903 = vmul.f32 %v814, %v863
    %v904 = vmul.f32 %v816, %v863
    %v905 = vmul.f32 %v818, %v863
    %v906 = vmul.f32 %v820, %v863
    %v907 = vmul.f32 %v822, %v863
    %v908 = vmul.f32 %v824, %v863
    %v909 = vmul.f32 %v826, %v863
    %v910 = vmul.f32 %v828, %v863
    %v911 = vmul.f32 %v830, %v863
    %v912 = vmul.f32 %v832, %v863
    %v913 = vmul.f32 %v834, %v863
    %v914 = vmul.f32 %v836, %v863
    %v915 = vmul.f32 %v838, %v863
    %v916 = vmul.f32 %v840, %v863
    %v917 = vmul.f32 %v842, %v863
    %v918 = vmul.f32 %v844, %v863
    %v919 = vmul.f32 %v846, %v863
    %v920 = vmul.f32 %v848, %v863
    %v921 = vmul.f32 %v850, %v863
    %v922 = vmul.f32 %v852, %v863
    %v923 = vmul.f32 %v854, %v863
    %v924 = vmul.f32 %v856, %v863
    %v925 = vmul.f32 %v858, %v863
    %v926 = vmul.f32 %v860, %v863
    %v927 = vmul.f32 %v862, %v863
    %v928 = vmul.f32 %v864, 8.0
    %v929 = vmul.f32 %v865, 8.0
    %v930 = vmul.f32 %v866, 8.0
    %v931 = vmul.f32 %v867, 8.0
    %v932 = vmul.f32 %v868, 8.0
    %v933 = vmul.f32 %v869, 8.0
    %v934 = vmul.f32 %v870, 8.0
    %v935 = vmul.f32 %v871, 8.0
    %v936 = vmul.f32 %v872, 8.0
    %v937 = vmul.f32 %v873, 8.0
    %v938 = vmul.f32 %v874, 8.0
    %v939 = vmul.f32 %v875, 8.0
    %v940 = vmul.f32 %v876, 8.0
    %v941 = vmul.f32 %v877, 8.0
    %v942 = vmul.f32 %v878, 8.0
    %v943 = vmul.f32 %v879, 8.0
    %v944 = vmul.f32 %v880, 8.0
    %v945 = vmul.f32 %v881, 8.0
    %v946 = vmul.f32 %v882, 8.0
    %v947 = vmul.f32 %v883, 8.0
    %v948 = vmul.f32 %v884, 8.0
    %v949 = vmul.f32 %v885, 8.0
    %v950 = vmul.f32 %v886, 8.0
    %v951 = vmul.f32 %v887, 8.0
    %v952 = vmul.f32 %v888, 8.0
    %v953 = vmul.f32 %v889, 8.0
    %v954 = vmul.f32 %v890, 8.0
    %v955 = vmul.f32 %v891, 8.0
    %v956 = vmul.f32 %v892, 8.0
    %v957 = vmul.f32 %v893, 8.0
    %v958 = vmul.f32 %v894, 8.0
    %v959 = vmul.f32 %v895, 8.0
    %v960 = vmul.f32 %v896, 8.0
    %v961 = vmul.f32 %v897, 8.0
    %v962 = vmul.f32 %v898, 8.0
    %v963 = vmul.f32 %v899, 8.0
    %v964 = vmul.f32 %v900, 8.0
    %v965 = vmul.f32 %v901, 8.0
    %v966 = vmul.f32 %v902, 8.0
    %v967 = vmul.f32 %v903, 8.0
    %v968 = vmul.f32 %v904, 8.0
    %v969 = vmul.f32 %v905, 8.0
    %v970 = vmul.f32 %v906, 8.0
    %v971 = vmul.f32 %v907, 8.0
    %v972 = vmul.f32 %v908, 8.0
    %v973 = vmul.f32 %v909, 8.0
    %v974 = vmul.f32 %v910, 8.0
    %v975 = vmul.f32 %v911, 8.0
    %v976 = vmul.f32 %v912, 8.0
    %v977 = vmul.f32 %v913, 8.0
    %v978 = vmul.f32 %v914, 8.0
    %v979 = vmul.f32 %v915, 8.0
    %v980 = vmul.f32 %v916, 8.0
    %v981 = vmul.f32 %v917, 8.0
    %v982 = vmul.f32 %v918, 8.0
    %v983 = vmul.f32 %v919, 8.0
    %v984 = vmul.f32 %v920, 8.0
    %v985 = vmul.f32 %v921, 8.0
    %v986 = vmul.f32 %v922, 8.0
    %v987 = vmul.f32 %v923, 8.0
    %v988 = vmul.f32 %v924, 8.0
    %v989 = vmul.f32 %v925, 8.0
    %v990 = vmul.f32 %v926, 8.0
    %v991 = vmul.f32 %v927, 8.0
    %v992 = vcvt.f32.s32.to.zero.pseudo %v928
    %v993 = vcvt.f32.s32.to.zero.pseudo %v929
    %v994 = vcvt.f32.s32.to.zero.pseudo %v930
    %v995 = vcvt.f32.s32.to.zero.pseudo %v931
    %v996 = vcvt.f32.s32.to.zero.pseudo %v932
    %v997 = vcvt.f32.s32.to.zero.pseudo %v933
    %v998 = vcvt.f32.s32.to.zero.pseudo %v934
    %v999 = vcvt.f32.s32.to.zero.pseudo %v935
    %v1000 = vcvt.f32.s32.to.zero.pseudo %v936
    %v1001 = vcvt.f32.s32.to.zero.pseudo %v937
    %v1002 = vcvt.f32.s32.to.zero.pseudo %v938
    %v1003 = vcvt.f32.s32.to.zero.pseudo %v939
    %v1004 = vcvt.f32.s32.to.zero.pseudo %v940
    %v1005 = vcvt.f32.s32.to.zero.pseudo %v941
    %v1006 = vcvt.f32.s32.to.zero.pseudo %v942
    %v1007 = vcvt.f32.s32.to.zero.pseudo %v943
    %v1008 = vcvt.f32.s32.to.zero.pseudo %v944
    %v1009 = vcvt.f32.s32.to.zero.pseudo %v945
    %v1010 = vcvt.f32.s32.to.zero.pseudo %v946
    %v1011 = vcvt.f32.s32.to.zero.pseudo %v947
    %v1012 = vcvt.f32.s32.to.zero.pseudo %v948
    %v1013 = vcvt.f32.s32.to.zero.pseudo %v949
    %v1014 = vcvt.f32.s32.to.zero.pseudo %v950
    %v1015 = vcvt.f32.s32.to.zero.pseudo %v951
    %v1016 = vcvt.f32.s32.to.zero.pseudo %v952
    %v1017 = vcvt.f32.s32.to.zero.pseudo %v953
    %v1018 = vcvt.f32.s32.to.zero.pseudo %v954
    %v1019 = vcvt.f32.s32.to.zero.pseudo %v955
    %v1020 = vcvt.f32.s32.to.zero.pseudo %v956
    %v1021 = vcvt.f32.s32.to.zero.pseudo %v957
    %v1022 = vcvt.f32.s32.to.zero.pseudo %v958
    %v1023 = vcvt.f32.s32.to.zero.pseudo %v959
    %v1024 = vcvt.f32.s32.to.zero.pseudo %v960
    %v1025 = vcvt.f32.s32.to.zero.pseudo %v961
    %v1026 = vcvt.f32.s32.to.zero.pseudo %v962
    %v1027 = vcvt.f32.s32.to.zero.pseudo %v963
    %v1028 = vcvt.f32.s32.to.zero.pseudo %v964
    %v1029 = vcvt.f32.s32.to.zero.pseudo %v965
    %v1030 = vcvt.f32.s32.to.zero.pseudo %v966
    %v1031 = vcvt.f32.s32.to.zero.pseudo %v967
    %v1032 = vcvt.f32.s32.to.zero.pseudo %v968
    %v1033 = vcvt.f32.s32.to.zero.pseudo %v969
    %v1034 = vcvt.f32.s32.to.zero.pseudo %v970
    %v1035 = vcvt.f32.s32.to.zero.pseudo %v971
    %v1036 = vcvt.f32.s32.to.zero.pseudo %v972
    %v1037 = vcvt.f32.s32.to.zero.pseudo %v973
    %v1038 = vcvt.f32.s32.to.zero.pseudo %v974
    %v1039 = vcvt.f32.s32.to.zero.pseudo %v975
    %v1040 = vcvt.f32.s32.to.zero.pseudo %v976
    %v1041 = vcvt.f32.s32.to.zero.pseudo %v977
    %v1042 = vcvt.f32.s32.to.zero.pseudo %v978
    %v1043 = vcvt.f32.s32.to.zero.pseudo %v979
    %v1044 = vcvt.f32.s32.to.zero.pseudo %v980
    %v1045 = vcvt.f32.s32.to.zero.pseudo %v981
    %v1046 = vcvt.f32.s32.to.zero.pseudo %v982
    %v1047 = vcvt.f32.s32.to.zero.pseudo %v983
    %v1048 = vcvt.f32.s32.to.zero.pseudo %v984
    %v1049 = vcvt.f32.s32.to.zero.pseudo %v985
    %v1050 = vcvt.f32.s32.to.zero.pseudo %v986
    %v1051 = vcvt.f32.s32.to.zero.pseudo %v987
    %v1052 = vcvt.f32.s32.to.zero.pseudo %v988
    %v1053 = vcvt.f32.s32.to.zero.pseudo %v989
    %v1054 = vcvt.f32.s32.to.zero.pseudo %v990
    %v1055 = vcvt.f32.s32.to.zero.pseudo %v991
    %v1056 = vadd.s32 %v992, 8
    %v1057 = vadd.s32 %v993, 8
    %v1058 = vadd.s32 %v994, 8
    %v1059 = vadd.s32 %v995, 8
    %v1060 = vadd.s32 %v996, 8
    %v1061 = vadd.s32 %v997, 8
    %v1062 = vadd.s32 %v998, 8
    %v1063 = vadd.s32 %v999, 8
    %v1064 = vadd.s32 %v1000, 8
    %v1065 = vadd.s32 %v1001, 8
    %v1066 = vadd.s32 %v1002, 8
    %v1067 = vadd.s32 %v1003, 8
    %v1068 = vadd.s32 %v1004, 8
    %v1069 = vadd.s32 %v1005, 8
    %v1070 = vadd.s32 %v1006, 8
    %v1071 = vadd.s32 %v1007, 8
    %v1072 = vadd.s32 %v1008, 8
    %v1073 = vadd.s32 %v1009, 8
    %v1074 = vadd.s32 %v1010, 8
    %v1075 = vadd.s32 %v1011, 8
    %v1076 = vadd.s32 %v1012, 8
    %v1077 = vadd.s32 %v1013, 8
    %v1078 = vadd.s32 %v1014, 8
    %v1079 = vadd.s32 %v1015, 8
    %v1080 = vadd.s32 %v1016, 8
    %v1081 = vadd.s32 %v1017, 8
    %v1082 = vadd.s32 %v1018, 8
    %v1083 = vadd.s32 %v1019, 8
    %v1084 = vadd.s32 %v1020, 8
    %v1085 = vadd.s32 %v1021, 8
    %v1086 = vadd.s32 %v1022, 8
    %v1087 = vadd.s32 %v1023, 8
    %v1088 = vadd.s32 %v1024, 8
    %v1089 = vadd.s32 %v1025, 8
    %v1090 = vadd.s32 %v1026, 8
    %v1091 = vadd.s32 %v1027, 8
    %v1092 = vadd.s32 %v1028, 8
    %v1093 = vadd.s32 %v1029, 8
    %v1094 = vadd.s32 %v1030, 8
    %v1095 = vadd.s32 %v1031, 8
    %v1096 = vadd.s32 %v1032, 8
    %v1097 = vadd.s32 %v1033, 8
    %v1098 = vadd.s32 %v1034, 8
    %v1099 = vadd.s32 %v1035, 8
    %v1100 = vadd.s32 %v1036, 8
    %v1101 = vadd.s32 %v1037, 8
    %v1102 = vadd.s32 %v1038, 8
    %v1103 = vadd.s32 %v1039, 8
    %v1104 = vadd.s32 %v1040, 8
    %v1105 = vadd.s32 %v1041, 8
    %v1106 = vadd.s32 %v1042, 8
    %v1107 = vadd.s32 %v1043, 8
    %v1108 = vadd.s32 %v1044, 8
    %v1109 = vadd.s32 %v1045, 8
    %v1110 = vadd.s32 %v1046, 8
    %v1111 = vadd.s32 %v1047, 8
    %v1112 = vadd.s32 %v1048, 8
    %v1113 = vadd.s32 %v1049, 8
    %v1114 = vadd.s32 %v1050, 8
    %v1115 = vadd.s32 %v1051, 8
    %v1116 = vadd.s32 %v1052, 8
    %v1117 = vadd.s32 %v1053, 8
    %v1118 = vadd.s32 %v1054, 8
    %v1119 = vadd.s32 %v1055, 8
    %vm1120 = vcmp.lt.s32.totalorder %v1056, 15
    %v1121 = vsel %vm1120, %v1056, 15
    %vm1122 = vcmp.lt.s32.totalorder %v1057, 15
    %v1123 = vsel %vm1122, %v1057, 15
    %vm1124 = vcmp.lt.s32.totalorder %v1058, 15
    %v1125 = vsel %vm1124, %v1058, 15
    %vm1126 = vcmp.lt.s32.totalorder %v1059, 15
    %v1127 = vsel %vm1126, %v1059, 15
    %vm1128 = vcmp.lt.s32.totalorder %v1060, 15
    %v1129 = vsel %vm1128, %v1060, 15
    %vm1130 = vcmp.lt.s32.totalorder %v1061, 15
    %v1131 = vsel %vm1130, %v1061, 15
    %vm1132 = vcmp.lt.s32.totalorder %v1062, 15
    %v1133 = vsel %vm1132, %v1062, 15
    %vm1134 = vcmp.lt.s32.totalorder %v1063, 15
    %v1135 = vsel %vm1134, %v1063, 15
    %vm1136 = vcmp.lt.s32.totalorder %v1064, 15
    %v1137 = vsel %vm1136, %v1064, 15
    %vm1138 = vcmp.lt.s32.totalorder %v1065, 15
    %v1139 = vsel %vm1138, %v1065, 15
    %vm1140 = vcmp.lt.s32.totalorder %v1066, 15
    %v1141 = vsel %vm1140, %v1066, 15
    %vm1142 = vcmp.lt.s32.totalorder %v1067, 15
    %v1143 = vsel %vm1142, %v1067, 15
    %vm1144 = vcmp.lt.s32.totalorder %v1068, 15
    %v1145 = vsel %vm1144, %v1068, 15
    %vm1146 = vcmp.lt.s32.totalorder %v1069, 15
    %v1147 = vsel %vm1146, %v1069, 15
    %vm1148 = vcmp.lt.s32.totalorder %v1070, 15
    %v1149 = vsel %vm1148, %v1070, 15
    %vm1150 = vcmp.lt.s32.totalorder %v1071, 15
    %v1151 = vsel %vm1150, %v1071, 15
    %vm1152 = vcmp.lt.s32.totalorder %v1072, 15
    %v1153 = vsel %vm1152, %v1072, 15
    %vm1154 = vcmp.lt.s32.totalorder %v1073, 15
    %v1155 = vsel %vm1154, %v1073, 15
    %vm1156 = vcmp.lt.s32.totalorder %v1074, 15
    %v1157 = vsel %vm1156, %v1074, 15
    %vm1158 = vcmp.lt.s32.totalorder %v1075, 15
    %v1159 = vsel %vm1158, %v1075, 15
    %vm1160 = vcmp.lt.s32.totalorder %v1076, 15
    %v1161 = vsel %vm1160, %v1076, 15
    %vm1162 = vcmp.lt.s32.totalorder %v1077, 15
    %v1163 = vsel %vm1162, %v1077, 15
    %vm1164 = vcmp.lt.s32.totalorder %v1078, 15
    %v1165 = vsel %vm1164, %v1078, 15
    %vm1166 = vcmp.lt.s32.totalorder %v1079, 15
    %v1167 = vsel %vm1166, %v1079, 15
    %vm1168 = vcmp.lt.s32.totalorder %v1080, 15
    %v1169 = vsel %vm1168, %v1080, 15
    %vm1170 = vcmp.lt.s32.totalorder %v1081, 15
    %v1171 = vsel %vm1170, %v1081, 15
    %vm1172 = vcmp.lt.s32.totalorder %v1082, 15
    %v1173 = vsel %vm1172, %v1082, 15
    %vm1174 = vcmp.lt.s32.totalorder %v1083, 15
    %v1175 = vsel %vm1174, %v1083, 15
    %vm1176 = vcmp.lt.s32.totalorder %v1084, 15
    %v1177 = vsel %vm1176, %v1084, 15
    %vm1178 = vcmp.lt.s32.totalorder %v1085, 15
    %v1179 = vsel %vm1178, %v1085, 15
    %vm1180 = vcmp.lt.s32.totalorder %v1086, 15
    %v1181 = vsel %vm1180, %v1086, 15
    %vm1182 = vcmp.lt.s32.totalorder %v1087, 15
    %v1183 = vsel %vm1182, %v1087, 15
    %vm1184 = vcmp.lt.s32.totalorder %v1088, 15
    %v1185 = vsel %vm1184, %v1088, 15
    %vm1186 = vcmp.lt.s32.totalorder %v1089, 15
    %v1187 = vsel %vm1186, %v1089, 15
    %vm1188 = vcmp.lt.s32.totalorder %v1090, 15
    %v1189 = vsel %vm1188, %v1090, 15
    %vm1190 = vcmp.lt.s32.totalorder %v1091, 15
    %v1191 = vsel %vm1190, %v1091, 15
    %vm1192 = vcmp.lt.s32.totalorder %v1092, 15
    %v1193 = vsel %vm1192, %v1092, 15
    %vm1194 = vcmp.lt.s32.totalorder %v1093, 15
    %v1195 = vsel %vm1194, %v1093, 15
    %vm1196 = vcmp.lt.s32.totalorder %v1094, 15
    %v1197 = vsel %vm1196, %v1094, 15
    %vm1198 = vcmp.lt.s32.totalorder %v1095, 15
    %v1199 = vsel %vm1198, %v1095, 15
    %vm1200 = vcmp.lt.s32.totalorder %v1096, 15
    %v1201 = vsel %vm1200, %v1096, 15
    %vm1202 = vcmp.lt.s32.totalorder %v1097, 15
    %v1203 = vsel %vm1202, %v1097, 15
    %vm1204 = vcmp.lt.s32.totalorder %v1098, 15
    %v1205 = vsel %vm1204, %v1098, 15
    %vm1206 = vcmp.lt.s32.totalorder %v1099, 15
    %v1207 = vsel %vm1206, %v1099, 15
    %vm1208 = vcmp.lt.s32.totalorder %v1100, 15
    %v1209 = vsel %vm1208, %v1100, 15
    %vm1210 = vcmp.lt.s32.totalorder %v1101, 15
    %v1211 = vsel %vm1210, %v1101, 15
    %vm1212 = vcmp.lt.s32.totalorder %v1102, 15
    %v1213 = vsel %vm1212, %v1102, 15
    %vm1214 = vcmp.lt.s32.totalorder %v1103, 15
    %v1215 = vsel %vm1214, %v1103, 15
    %vm1216 = vcmp.lt.s32.totalorder %v1104, 15
    %v1217 = vsel %vm1216, %v1104, 15
    %vm1218 = vcmp.lt.s32.totalorder %v1105, 15
    %v1219 = vsel %vm1218, %v1105, 15
    %vm1220 = vcmp.lt.s32.totalorder %v1106, 15
    %v1221 = vsel %vm1220, %v1106, 15
    %vm1222 = vcmp.lt.s32.totalorder %v1107, 15
    %v1223 = vsel %vm1222, %v1107, 15
    %vm1224 = vcmp.lt.s32.totalorder %v1108, 15
    %v1225 = vsel %vm1224, %v1108, 15
    %vm1226 = vcmp.lt.s32.totalorder %v1109, 15
    %v1227 = vsel %vm1226, %v1109, 15
    %vm1228 = vcmp.lt.s32.totalorder %v1110, 15
    %v1229 = vsel %vm1228, %v1110, 15
    %vm1230 = vcmp.lt.s32.totalorder %v1111, 15
    %v1231 = vsel %vm1230, %v1111, 15
    %vm1232 = vcmp.lt.s32.totalorder %v1112, 15
    %v1233 = vsel %vm1232, %v1112, 15
    %vm1234 = vcmp.lt.s32.totalorder %v1113, 15
    %v1235 = vsel %vm1234, %v1113, 15
    %vm1236 = vcmp.lt.s32.totalorder %v1114, 15
    %v1237 = vsel %vm1236, %v1114, 15
    %vm1238 = vcmp.lt.s32.totalorder %v1115, 15
    %v1239 = vsel %vm1238, %v1115, 15
    %vm1240 = vcmp.lt.s32.totalorder %v1116, 15
    %v1241 = vsel %vm1240, %v1116, 15
    %vm1242 = vcmp.lt.s32.totalorder %v1117, 15
    %v1243 = vsel %vm1242, %v1117, 15
    %vm1244 = vcmp.lt.s32.totalorder %v1118, 15
    %v1245 = vsel %vm1244, %v1118, 15
    %vm1246 = vcmp.lt.s32.totalorder %v1119, 15
    %v1247 = vsel %vm1246, %v1119, 15
    %v1248 = vsel %vm414, %v287, %v1121
    %v1249 = vsel %vm415, %v289, %v1123
    %v1250 = vsel %vm416, %v291, %v1125
    %v1251 = vsel %vm417, %v293, %v1127
    %v1252 = vsel %vm418, %v295, %v1129
    %v1253 = vsel %vm419, %v297, %v1131
    %v1254 = vsel %vm420, %v299, %v1133
    %v1255 = vsel %vm421, %v301, %v1135
    %v1256 = vsel %vm422, %v303, %v1137
    %v1257 = vsel %vm423, %v305, %v1139
    %v1258 = vsel %vm424, %v307, %v1141
    %v1259 = vsel %vm425, %v309, %v1143
    %v1260 = vsel %vm426, %v311, %v1145
    %v1261 = vsel %vm427, %v313, %v1147
    %v1262 = vsel %vm428, %v315, %v1149
    %v1263 = vsel %vm429, %v317, %v1151
    %v1264 = vsel %vm430, %v319, %v1153
    %v1265 = vsel %vm431, %v321, %v1155
    %v1266 = vsel %vm432, %v323, %v1157
    %v1267 = vsel %vm433, %v325, %v1159
    %v1268 = vsel %vm434, %v327, %v1161
    %v1269 = vsel %vm435, %v329, %v1163
    %v1270 = vsel %vm436, %v331, %v1165
    %v1271 = vsel %vm437, %v333, %v1167
    %v1272 = vsel %vm438, %v335, %v1169
    %v1273 = vsel %vm439, %v337, %v1171
    %v1274 = vsel %vm440, %v339, %v1173
    %v1275 = vsel %vm441, %v341, %v1175
    %v1276 = vsel %vm442, %v343, %v1177
    %v1277 = vsel %vm443, %v345, %v1179
    %v1278 = vsel %vm444, %v347, %v1181
    %v1279 = vsel %vm445, %v349, %v1183
    %v1280 = vsel %vm446, %v351, %v1185
    %v1281 = vsel %vm447, %v353, %v1187
    %v1282 = vsel %vm448, %v355, %v1189
    %v1283 = vsel %vm449, %v357, %v1191
    %v1284 = vsel %vm450, %v359, %v1193
    %v1285 = vsel %vm451, %v361, %v1195
    %v1286 = vsel %vm452, %v363, %v1197
    %v1287 = vsel %vm453, %v365, %v1199
    %v1288 = vsel %vm454, %v367, %v1201
    %v1289 = vsel %vm455, %v369, %v1203
    %v1290 = vsel %vm456, %v371, %v1205
    %v1291 = vsel %vm457, %v373, %v1207
    %v1292 = vsel %vm458, %v375, %v1209
    %v1293 = vsel %vm459, %v377, %v1211
    %v1294 = vsel %vm460, %v379, %v1213
    %v1295 = vsel %vm461, %v381, %v1215
    %v1296 = vsel %vm462, %v383, %v1217
    %v1297 = vsel %vm463, %v385, %v1219
    %v1298 = vsel %vm464, %v387, %v1221
    %v1299 = vsel %vm465, %v389, %v1223
    %v1300 = vsel %vm466, %v391, %v1225
    %v1301 = vsel %vm467, %v393, %v1227
    %v1302 = vsel %vm468, %v395, %v1229
    %v1303 = vsel %vm469, %v397, %v1231
    %v1304 = vsel %vm470, %v399, %v1233
    %v1305 = vsel %vm471, %v401, %v1235
    %v1306 = vsel %vm472, %v403, %v1237
    %v1307 = vsel %vm473, %v405, %v1239
    %v1308 = vsel %vm474, %v407, %v1241
    %v1309 = vsel %vm475, %v409, %v1243
    %v1310 = vsel %vm476, %v411, %v1245
    %v1311 = vsel %vm477, %v413, %v1247
    %v1312 = vadd.s32 %v222, %v1248
    %v1313 = vadd.s32 %v223, %v1249
    %v1314 = vadd.s32 %v224, %v1250
    %v1315 = vadd.s32 %v225, %v1251
    %v1316 = vadd.s32 %v226, %v1252
    %v1317 = vadd.s32 %v227, %v1253
    %v1318 = vadd.s32 %v228, %v1254
    %v1319 = vadd.s32 %v229, %v1255
    %v1320 = vadd.s32 %v230, %v1256
    %v1321 = vadd.s32 %v231, %v1257
    %v1322 = vadd.s32 %v232, %v1258
    %v1323 = vadd.s32 %v233, %v1259
    %v1324 = vadd.s32 %v234, %v1260
    %v1325 = vadd.s32 %v235, %v1261
    %v1326 = vadd.s32 %v236, %v1262
    %v1327 = vadd.s32 %v237, %v1263
    %v1328 = vadd.s32 %v238, %v1264
    %v1329 = vadd.s32 %v239, %v1265
    %v1330 = vadd.s32 %v240, %v1266
    %v1331 = vadd.s32 %v241, %v1267
    %v1332 = vadd.s32 %v242, %v1268
    %v1333 = vadd.s32 %v243, %v1269
    %v1334 = vadd.s32 %v244, %v1270
    %v1335 = vadd.s32 %v245, %v1271
    %v1336 = vadd.s32 %v246, %v1272
    %v1337 = vadd.s32 %v247, %v1273
    %v1338 = vadd.s32 %v248, %v1274
    %v1339 = vadd.s32 %v249, %v1275
    %v1340 = vadd.s32 %v250, %v1276
    %v1341 = vadd.s32 %v251, %v1277
    %v1342 = vadd.s32 %v252, %v1278
    %v1343 = vadd.s32 %v253, %v1279
    %v1344 = vadd.s32 %v254, %v1280
    %v1345 = vadd.s32 %v255, %v1281
    %v1346 = vadd.s32 %v256, %v1282
    %v1347 = vadd.s32 %v257, %v1283
    %v1348 = vadd.s32 %v258, %v1284
    %v1349 = vadd.s32 %v259, %v1285
    %v1350 = vadd.s32 %v260, %v1286
    %v1351 = vadd.s32 %v261, %v1287
    %v1352 = vadd.s32 %v262, %v1288
    %v1353 = vadd.s32 %v263, %v1289
    %v1354 = vadd.s32 %v264, %v1290
    %v1355 = vadd.s32 %v265, %v1291
    %v1356 = vadd.s32 %v266, %v1292
    %v1357 = vadd.s32 %v267, %v1293
    %v1358 = vadd.s32 %v268, %v1294
    %v1359 = vadd.s32 %v269, %v1295
    %v1360 = vadd.s32 %v270, %v1296
    %v1361 = vadd.s32 %v271, %v1297
    %v1362 = vadd.s32 %v272, %v1298
    %v1363 = vadd.s32 %v273, %v1299
    %v1364 = vadd.s32 %v274, %v1300
    %v1365 = vadd.s32 %v275, %v1301
    %v1366 = vadd.s32 %v276, %v1302
    %v1367 = vadd.s32 %v277, %v1303
    %v1368 = vadd.s32 %v278, %v1304
    %v1369 = vadd.s32 %v279, %v1305
    %v1370 = vadd.s32 %v280, %v1306
    %v1371 = vadd.s32 %v281, %v1307
    %v1372 = vadd.s32 %v282, %v1308
    %v1373 = vadd.s32 %v283, %v1309
    %v1374 = vadd.s32 %v284, %v1310
    %v1375 = vadd.s32 %v285, %v1311
    %vm1376 = vcmp.lt.s32.totalorder %v1312, 16
    %vm1377 = vcmp.lt.s32.totalorder %v1313, 16
    %vm1378 = vcmp.lt.s32.totalorder %v1314, 16
    %vm1379 = vcmp.lt.s32.totalorder %v1315, 16
    %vm1380 = vcmp.lt.s32.totalorder %v1316, 16
    %vm1381 = vcmp.lt.s32.totalorder %v1317, 16
    %vm1382 = vcmp.lt.s32.totalorder %v1318, 16
    %vm1383 = vcmp.lt.s32.totalorder %v1319, 16
    %vm1384 = vcmp.lt.s32.totalorder %v1320, 16
    %vm1385 = vcmp.lt.s32.totalorder %v1321, 16
    %vm1386 = vcmp.lt.s32.totalorder %v1322, 16
    %vm1387 = vcmp.lt.s32.totalorder %v1323, 16
    %vm1388 = vcmp.lt.s32.totalorder %v1324, 16
    %vm1389 = vcmp.lt.s32.totalorder %v1325, 16
    %vm1390 = vcmp.lt.s32.totalorder %v1326, 16
    %vm1391 = vcmp.lt.s32.totalorder %v1327, 16
    %vm1392 = vcmp.lt.s32.totalorder %v1328, 16
    %vm1393 = vcmp.lt.s32.totalorder %v1329, 16
    %vm1394 = vcmp.lt.s32.totalorder %v1330, 16
    %vm1395 = vcmp.lt.s32.totalorder %v1331, 16
    %vm1396 = vcmp.lt.s32.totalorder %v1332, 16
    %vm1397 = vcmp.lt.s32.totalorder %v1333, 16
    %vm1398 = vcmp.lt.s32.totalorder %v1334, 16
    %vm1399 = vcmp.lt.s32.totalorder %v1335, 16
    %vm1400 = vcmp.lt.s32.totalorder %v1336, 16
    %vm1401 = vcmp.lt.s32.totalorder %v1337, 16
    %vm1402 = vcmp.lt.s32.totalorder %v1338, 16
    %vm1403 = vcmp.lt.s32.totalorder %v1339, 16
    %vm1404 = vcmp.lt.s32.totalorder %v1340, 16
    %vm1405 = vcmp.lt.s32.totalorder %v1341, 16
    %vm1406 = vcmp.lt.s32.totalorder %v1342, 16
    %vm1407 = vcmp.lt.s32.totalorder %v1343, 16
    %vm1408 = vcmp.lt.s32.totalorder %v1344, 16
    %vm1409 = vcmp.lt.s32.totalorder %v1345, 16
    %vm1410 = vcmp.lt.s32.totalorder %v1346, 16
    %vm1411 = vcmp.lt.s32.totalorder %v1347, 16
    %vm1412 = vcmp.lt.s32.totalorder %v1348, 16
    %vm1413 = vcmp.lt.s32.totalorder %v1349, 16
    %vm1414 = vcmp.lt.s32.totalorder %v1350, 16
    %vm1415 = vcmp.lt.s32.totalorder %v1351, 16
    %vm1416 = vcmp.lt.s32.totalorder %v1352, 16
    %vm1417 = vcmp.lt.s32.totalorder %v1353, 16
    %vm1418 = vcmp.lt.s32.totalorder %v1354, 16
    %vm1419 = vcmp.lt.s32.totalorder %v1355, 16
    %vm1420 = vcmp.lt.s32.totalorder %v1356, 16
    %vm1421 = vcmp.lt.s32.totalorder %v1357, 16
    %vm1422 = vcmp.lt.s32.totalorder %v1358, 16
    %vm1423 = vcmp.lt.s32.totalorder %v1359, 16
    %vm1424 = vcmp.lt.s32.totalorder %v1360, 16
    %vm1425 = vcmp.lt.s32.totalorder %v1361, 16
    %vm1426 = vcmp.lt.s32.totalorder %v1362, 16
    %vm1427 = vcmp.lt.s32.totalorder %v1363, 16
    %vm1428 = vcmp.lt.s32.totalorder %v1364, 16
    %vm1429 = vcmp.lt.s32.totalorder %v1365, 16
    %vm1430 = vcmp.lt.s32.totalorder %v1366, 16
    %vm1431 = vcmp.lt.s32.totalorder %v1367, 16
    %vm1432 = vcmp.lt.s32.totalorder %v1368, 16
    %vm1433 = vcmp.lt.s32.totalorder %v1369, 16
    %vm1434 = vcmp.lt.s32.totalorder %v1370, 16
    %vm1435 = vcmp.lt.s32.totalorder %v1371, 16
    %vm1436 = vcmp.lt.s32.totalorder %v1372, 16
    %vm1437 = vcmp.lt.s32.totalorder %v1373, 16
    %vm1438 = vcmp.lt.s32.totalorder %v1374, 16
    %vm1439 = vcmp.lt.s32.totalorder %v1375, 16
    %vm1440 = vcmp.lt.s32.totalorder %v1312, 8
    %vm1441 = vcmp.lt.s32.totalorder %v1313, 8
    %vm1442 = vcmp.lt.s32.totalorder %v1314, 8
    %vm1443 = vcmp.lt.s32.totalorder %v1315, 8
    %vm1444 = vcmp.lt.s32.totalorder %v1316, 8
    %vm1445 = vcmp.lt.s32.totalorder %v1317, 8
    %vm1446 = vcmp.lt.s32.totalorder %v1318, 8
    %vm1447 = vcmp.lt.s32.totalorder %v1319, 8
    %vm1448 = vcmp.lt.s32.totalorder %v1320, 8
    %vm1449 = vcmp.lt.s32.totalorder %v1321, 8
    %vm1450 = vcmp.lt.s32.totalorder %v1322, 8
    %vm1451 = vcmp.lt.s32.totalorder %v1323, 8
    %vm1452 = vcmp.lt.s32.totalorder %v1324, 8
    %vm1453 = vcmp.lt.s32.totalorder %v1325, 8
    %vm1454 = vcmp.lt.s32.totalorder %v1326, 8
    %vm1455 = vcmp.lt.s32.totalorder %v1327, 8
    %vm1456 = vcmp.lt.s32.totalorder %v1328, 8
    %vm1457 = vcmp.lt.s32.totalorder %v1329, 8
    %vm1458 = vcmp.lt.s32.totalorder %v1330, 8
    %vm1459 = vcmp.lt.s32.totalorder %v1331, 8
    %vm1460 = vcmp.lt.s32.totalorder %v1332, 8
    %vm1461 = vcmp.lt.s32.totalorder %v1333, 8
    %vm1462 = vcmp.lt.s32.totalorder %v1334, 8
    %vm1463 = vcmp.lt.s32.totalorder %v1335, 8
    %vm1464 = vcmp.lt.s32.totalorder %v1336, 8
    %vm1465 = vcmp.lt.s32.totalorder %v1337, 8
    %vm1466 = vcmp.lt.s32.totalorder %v1338, 8
    %vm1467 = vcmp.lt.s32.totalorder %v1339, 8
    %vm1468 = vcmp.lt.s32.totalorder %v1340, 8
    %vm1469 = vcmp.lt.s32.totalorder %v1341, 8
    %vm1470 = vcmp.lt.s32.totalorder %v1342, 8
    %vm1471 = vcmp.lt.s32.totalorder %v1343, 8
    %vm1472 = vcmp.lt.s32.totalorder %v1344, 8
    %vm1473 = vcmp.lt.s32.totalorder %v1345, 8
    %vm1474 = vcmp.lt.s32.totalorder %v1346, 8
    %vm1475 = vcmp.lt.s32.totalorder %v1347, 8
    %vm1476 = vcmp.lt.s32.totalorder %v1348, 8
    %vm1477 = vcmp.lt.s32.totalorder %v1349, 8
    %vm1478 = vcmp.lt.s32.totalorder %v1350, 8
    %vm1479 = vcmp.lt.s32.totalorder %v1351, 8
    %vm1480 = vcmp.lt.s32.totalorder %v1352, 8
    %vm1481 = vcmp.lt.s32.totalorder %v1353, 8
    %vm1482 = vcmp.lt.s32.totalorder %v1354, 8
    %vm1483 = vcmp.lt.s32.totalorder %v1355, 8
    %vm1484 = vcmp.lt.s32.totalorder %v1356, 8
    %vm1485 = vcmp.lt.s32.totalorder %v1357, 8
    %vm1486 = vcmp.lt.s32.totalorder %v1358, 8
    %vm1487 = vcmp.lt.s32.totalorder %v1359, 8
    %vm1488 = vcmp.lt.s32.totalorder %v1360, 8
    %vm1489 = vcmp.lt.s32.totalorder %v1361, 8
    %vm1490 = vcmp.lt.s32.totalorder %v1362, 8
    %vm1491 = vcmp.lt.s32.totalorder %v1363, 8
    %vm1492 = vcmp.lt.s32.totalorder %v1364, 8
    %vm1493 = vcmp.lt.s32.totalorder %v1365, 8
    %vm1494 = vcmp.lt.s32.totalorder %v1366, 8
    %vm1495 = vcmp.lt.s32.totalorder %v1367, 8
    %vm1496 = vcmp.lt.s32.totalorder %v1368, 8
    %vm1497 = vcmp.lt.s32.totalorder %v1369, 8
    %vm1498 = vcmp.lt.s32.totalorder %v1370, 8
    %vm1499 = vcmp.lt.s32.totalorder %v1371, 8
    %vm1500 = vcmp.lt.s32.totalorder %v1372, 8
    %vm1501 = vcmp.lt.s32.totalorder %v1373, 8
    %vm1502 = vcmp.lt.s32.totalorder %v1374, 8
    %vm1503 = vcmp.lt.s32.totalorder %v1375, 8
    %vm1504 = vcmp.lt.s32.totalorder %v1312, 4
    %vm1505 = vcmp.lt.s32.totalorder %v1313, 4
    %vm1506 = vcmp.lt.s32.totalorder %v1314, 4
    %vm1507 = vcmp.lt.s32.totalorder %v1315, 4
    %vm1508 = vcmp.lt.s32.totalorder %v1316, 4
    %vm1509 = vcmp.lt.s32.totalorder %v1317, 4
    %vm1510 = vcmp.lt.s32.totalorder %v1318, 4
    %vm1511 = vcmp.lt.s32.totalorder %v1319, 4
    %vm1512 = vcmp.lt.s32.totalorder %v1320, 4
    %vm1513 = vcmp.lt.s32.totalorder %v1321, 4
    %vm1514 = vcmp.lt.s32.totalorder %v1322, 4
    %vm1515 = vcmp.lt.s32.totalorder %v1323, 4
    %vm1516 = vcmp.lt.s32.totalorder %v1324, 4
    %vm1517 = vcmp.lt.s32.totalorder %v1325, 4
    %vm1518 = vcmp.lt.s32.totalorder %v1326, 4
    %vm1519 = vcmp.lt.s32.totalorder %v1327, 4
    %vm1520 = vcmp.lt.s32.totalorder %v1328, 4
    %vm1521 = vcmp.lt.s32.totalorder %v1329, 4
    %vm1522 = vcmp.lt.s32.totalorder %v1330, 4
    %vm1523 = vcmp.lt.s32.totalorder %v1331, 4
    %vm1524 = vcmp.lt.s32.totalorder %v1332, 4
    %vm1525 = vcmp.lt.s32.totalorder %v1333, 4
    %vm1526 = vcmp.lt.s32.totalorder %v1334, 4
    %vm1527 = vcmp.lt.s32.totalorder %v1335, 4
    %vm1528 = vcmp.lt.s32.totalorder %v1336, 4
    %vm1529 = vcmp.lt.s32.totalorder %v1337, 4
    %vm1530 = vcmp.lt.s32.totalorder %v1338, 4
    %vm1531 = vcmp.lt.s32.totalorder %v1339, 4
    %vm1532 = vcmp.lt.s32.totalorder %v1340, 4
    %vm1533 = vcmp.lt.s32.totalorder %v1341, 4
    %vm1534 = vcmp.lt.s32.totalorder %v1342, 4
    %vm1535 = vcmp.lt.s32.totalorder %v1343, 4
    %vm1536 = vcmp.lt.s32.totalorder %v1344, 4
    %vm1537 = vcmp.lt.s32.totalorder %v1345, 4
    %vm1538 = vcmp.lt.s32.totalorder %v1346, 4
    %vm1539 = vcmp.lt.s32.totalorder %v1347, 4
    %vm1540 = vcmp.lt.s32.totalorder %v1348, 4
    %vm1541 = vcmp.lt.s32.totalorder %v1349, 4
    %vm1542 = vcmp.lt.s32.totalorder %v1350, 4
    %vm1543 = vcmp.lt.s32.totalorder %v1351, 4
    %vm1544 = vcmp.lt.s32.totalorder %v1352, 4
    %vm1545 = vcmp.lt.s32.totalorder %v1353, 4
    %vm1546 = vcmp.lt.s32.totalorder %v1354, 4
    %vm1547 = vcmp.lt.s32.totalorder %v1355, 4
    %vm1548 = vcmp.lt.s32.totalorder %v1356, 4
    %vm1549 = vcmp.lt.s32.totalorder %v1357, 4
    %vm1550 = vcmp.lt.s32.totalorder %v1358, 4
    %vm1551 = vcmp.lt.s32.totalorder %v1359, 4
    %vm1552 = vcmp.lt.s32.totalorder %v1360, 4
    %vm1553 = vcmp.lt.s32.totalorder %v1361, 4
    %vm1554 = vcmp.lt.s32.totalorder %v1362, 4
    %vm1555 = vcmp.lt.s32.totalorder %v1363, 4
    %vm1556 = vcmp.lt.s32.totalorder %v1364, 4
    %vm1557 = vcmp.lt.s32.totalorder %v1365, 4
    %vm1558 = vcmp.lt.s32.totalorder %v1366, 4
    %vm1559 = vcmp.lt.s32.totalorder %v1367, 4
    %vm1560 = vcmp.lt.s32.totalorder %v1368, 4
    %vm1561 = vcmp.lt.s32.totalorder %v1369, 4
    %vm1562 = vcmp.lt.s32.totalorder %v1370, 4
    %vm1563 = vcmp.lt.s32.totalorder %v1371, 4
    %vm1564 = vcmp.lt.s32.totalorder %v1372, 4
    %vm1565 = vcmp.lt.s32.totalorder %v1373, 4
    %vm1566 = vcmp.lt.s32.totalorder %v1374, 4
    %vm1567 = vcmp.lt.s32.totalorder %v1375, 4
    %vm1568 = vcmp.lt.s32.totalorder %v1312, 2
    %vm1569 = vcmp.lt.s32.totalorder %v1313, 2
    %vm1570 = vcmp.lt.s32.totalorder %v1314, 2
    %vm1571 = vcmp.lt.s32.totalorder %v1315, 2
    %vm1572 = vcmp.lt.s32.totalorder %v1316, 2
    %vm1573 = vcmp.lt.s32.totalorder %v1317, 2
    %vm1574 = vcmp.lt.s32.totalorder %v1318, 2
    %vm1575 = vcmp.lt.s32.totalorder %v1319, 2
    %vm1576 = vcmp.lt.s32.totalorder %v1320, 2
    %vm1577 = vcmp.lt.s32.totalorder %v1321, 2
    %vm1578 = vcmp.lt.s32.totalorder %v1322, 2
    %vm1579 = vcmp.lt.s32.totalorder %v1323, 2
    %vm1580 = vcmp.lt.s32.totalorder %v1324, 2
    %vm1581 = vcmp.lt.s32.totalorder %v1325, 2
    %vm1582 = vcmp.lt.s32.totalorder %v1326, 2
    %vm1583 = vcmp.lt.s32.totalorder %v1327, 2
    %vm1584 = vcmp.lt.s32.totalorder %v1328, 2
    %vm1585 = vcmp.lt.s32.totalorder %v1329, 2
    %vm1586 = vcmp.lt.s32.totalorder %v1330, 2
    %vm1587 = vcmp.lt.s32.totalorder %v1331, 2
    %vm1588 = vcmp.lt.s32.totalorder %v1332, 2
    %vm1589 = vcmp.lt.s32.totalorder %v1333, 2
    %vm1590 = vcmp.lt.s32.totalorder %v1334, 2
    %vm1591 = vcmp.lt.s32.totalorder %v1335, 2
    %vm1592 = vcmp.lt.s32.totalorder %v1336, 2
    %vm1593 = vcmp.lt.s32.totalorder %v1337, 2
    %vm1594 = vcmp.lt.s32.totalorder %v1338, 2
    %vm1595 = vcmp.lt.s32.totalorder %v1339, 2
    %vm1596 = vcmp.lt.s32.totalorder %v1340, 2
    %vm1597 = vcmp.lt.s32.totalorder %v1341, 2
    %vm1598 = vcmp.lt.s32.totalorder %v1342, 2
    %vm1599 = vcmp.lt.s32.totalorder %v1343, 2
    %vm1600 = vcmp.lt.s32.totalorder %v1344, 2
    %vm1601 = vcmp.lt.s32.totalorder %v1345, 2
    %vm1602 = vcmp.lt.s32.totalorder %v1346, 2
    %vm1603 = vcmp.lt.s32.totalorder %v1347, 2
    %vm1604 = vcmp.lt.s32.totalorder %v1348, 2
    %vm1605 = vcmp.lt.s32.totalorder %v1349, 2
    %vm1606 = vcmp.lt.s32.totalorder %v1350, 2
    %vm1607 = vcmp.lt.s32.totalorder %v1351, 2
    %vm1608 = vcmp.lt.s32.totalorder %v1352, 2
    %vm1609 = vcmp.lt.s32.totalorder %v1353, 2
    %vm1610 = vcmp.lt.s32.totalorder %v1354, 2
    %vm1611 = vcmp.lt.s32.totalorder %v1355, 2
    %vm1612 = vcmp.lt.s32.totalorder %v1356, 2
    %vm1613 = vcmp.lt.s32.totalorder %v1357, 2
    %vm1614 = vcmp.lt.s32.totalorder %v1358, 2
    %vm1615 = vcmp.lt.s32.totalorder %v1359, 2
    %vm1616 = vcmp.lt.s32.totalorder %v1360, 2
    %vm1617 = vcmp.lt.s32.totalorder %v1361, 2
    %vm1618 = vcmp.lt.s32.totalorder %v1362, 2
    %vm1619 = vcmp.lt.s32.totalorder %v1363, 2
    %vm1620 = vcmp.lt.s32.totalorder %v1364, 2
    %vm1621 = vcmp.lt.s32.totalorder %v1365, 2
    %vm1622 = vcmp.lt.s32.totalorder %v1366, 2
    %vm1623 = vcmp.lt.s32.totalorder %v1367, 2
    %vm1624 = vcmp.lt.s32.totalorder %v1368, 2
    %vm1625 = vcmp.lt.s32.totalorder %v1369, 2
    %vm1626 = vcmp.lt.s32.totalorder %v1370, 2
    %vm1627 = vcmp.lt.s32.totalorder %v1371, 2
    %vm1628 = vcmp.lt.s32.totalorder %v1372, 2
    %vm1629 = vcmp.lt.s32.totalorder %v1373, 2
    %vm1630 = vcmp.lt.s32.totalorder %v1374, 2
    %vm1631 = vcmp.lt.s32.totalorder %v1375, 2
    %vm1632 = vcmp.lt.s32.totalorder %v1312, 1
    %vm1633 = vcmp.lt.s32.totalorder %v1313, 1
    %vm1634 = vcmp.lt.s32.totalorder %v1314, 1
    %vm1635 = vcmp.lt.s32.totalorder %v1315, 1
    %vm1636 = vcmp.lt.s32.totalorder %v1316, 1
    %vm1637 = vcmp.lt.s32.totalorder %v1317, 1
    %vm1638 = vcmp.lt.s32.totalorder %v1318, 1
    %vm1639 = vcmp.lt.s32.totalorder %v1319, 1
    %vm1640 = vcmp.lt.s32.totalorder %v1320, 1
    %vm1641 = vcmp.lt.s32.totalorder %v1321, 1
    %vm1642 = vcmp.lt.s32.totalorder %v1322, 1
    %vm1643 = vcmp.lt.s32.totalorder %v1323, 1
    %vm1644 = vcmp.lt.s32.totalorder %v1324, 1
    %vm1645 = vcmp.lt.s32.totalorder %v1325, 1
    %vm1646 = vcmp.lt.s32.totalorder %v1326, 1
    %vm1647 = vcmp.lt.s32.totalorder %v1327, 1
    %vm1648 = vcmp.lt.s32.totalorder %v1328, 1
    %vm1649 = vcmp.lt.s32.totalorder %v1329, 1
    %vm1650 = vcmp.lt.s32.totalorder %v1330, 1
    %vm1651 = vcmp.lt.s32.totalorder %v1331, 1
    %vm1652 = vcmp.lt.s32.totalorder %v1332, 1
    %vm1653 = vcmp.lt.s32.totalorder %v1333, 1
    %vm1654 = vcmp.lt.s32.totalorder %v1334, 1
    %vm1655 = vcmp.lt.s32.totalorder %v1335, 1
    %vm1656 = vcmp.lt.s32.totalorder %v1336, 1
    %vm1657 = vcmp.lt.s32.totalorder %v1337, 1
    %vm1658 = vcmp.lt.s32.totalorder %v1338, 1
    %vm1659 = vcmp.lt.s32.totalorder %v1339, 1
    %vm1660 = vcmp.lt.s32.totalorder %v1340, 1
    %vm1661 = vcmp.lt.s32.totalorder %v1341, 1
    %vm1662 = vcmp.lt.s32.totalorder %v1342, 1
    %vm1663 = vcmp.lt.s32.totalorder %v1343, 1
    %vm1664 = vcmp.lt.s32.totalorder %v1344, 1
    %vm1665 = vcmp.lt.s32.totalorder %v1345, 1
    %vm1666 = vcmp.lt.s32.totalorder %v1346, 1
    %vm1667 = vcmp.lt.s32.totalorder %v1347, 1
    %vm1668 = vcmp.lt.s32.totalorder %v1348, 1
    %vm1669 = vcmp.lt.s32.totalorder %v1349, 1
    %vm1670 = vcmp.lt.s32.totalorder %v1350, 1
    %vm1671 = vcmp.lt.s32.totalorder %v1351, 1
    %vm1672 = vcmp.lt.s32.totalorder %v1352, 1
    %vm1673 = vcmp.lt.s32.totalorder %v1353, 1
    %vm1674 = vcmp.lt.s32.totalorder %v1354, 1
    %vm1675 = vcmp.lt.s32.totalorder %v1355, 1
    %vm1676 = vcmp.lt.s32.totalorder %v1356, 1
    %vm1677 = vcmp.lt.s32.totalorder %v1357, 1
    %vm1678 = vcmp.lt.s32.totalorder %v1358, 1
    %vm1679 = vcmp.lt.s32.totalorder %v1359, 1
    %vm1680 = vcmp.lt.s32.totalorder %v1360, 1
    %vm1681 = vcmp.lt.s32.totalorder %v1361, 1
    %vm1682 = vcmp.lt.s32.totalorder %v1362, 1
    %vm1683 = vcmp.lt.s32.totalorder %v1363, 1
    %vm1684 = vcmp.lt.s32.totalorder %v1364, 1
    %vm1685 = vcmp.lt.s32.totalorder %v1365, 1
    %vm1686 = vcmp.lt.s32.totalorder %v1366, 1
    %vm1687 = vcmp.lt.s32.totalorder %v1367, 1
    %vm1688 = vcmp.lt.s32.totalorder %v1368, 1
    %vm1689 = vcmp.lt.s32.totalorder %v1369, 1
    %vm1690 = vcmp.lt.s32.totalorder %v1370, 1
    %vm1691 = vcmp.lt.s32.totalorder %v1371, 1
    %vm1692 = vcmp.lt.s32.totalorder %v1372, 1
    %vm1693 = vcmp.lt.s32.totalorder %v1373, 1
    %vm1694 = vcmp.lt.s32.totalorder %v1374, 1
    %vm1695 = vcmp.lt.s32.totalorder %v1375, 1
    %s1696 = sld [smem:[#allocation2]]
    %s1697 = sld [smem:[#allocation2 + $0x1]]
    %v1698 = vstv %s1696
    %v1699 = vstv %s1697
    %v1700 = vsel %vm1632, %v1698, %v1699
    %v1701 = vsel %vm1633, %v1698, %v1699
    %v1702 = vsel %vm1634, %v1698, %v1699
    %v1703 = vsel %vm1635, %v1698, %v1699
    %v1704 = vsel %vm1636, %v1698, %v1699
    %v1705 = vsel %vm1637, %v1698, %v1699
    %v1706 = vsel %vm1638, %v1698, %v1699
    %v1707 = vsel %vm1639, %v1698, %v1699
    %v1708 = vsel %vm1640, %v1698, %v1699
    %v1709 = vsel %vm1641, %v1698, %v1699
    %v1710 = vsel %vm1642, %v1698, %v1699
    %v1711 = vsel %vm1643, %v1698, %v1699
    %v1712 = vsel %vm1644, %v1698, %v1699
    %v1713 = vsel %vm1645, %v1698, %v1699
    %v1714 = vsel %vm1646, %v1698, %v1699
    %v1715 = vsel %vm1647, %v1698, %v1699
    %v1716 = vsel %vm1648, %v1698, %v1699
    %v1717 = vsel %vm1649, %v1698, %v1699
    %v1718 = vsel %vm1650, %v1698, %v1699
    %v1719 = vsel %vm1651, %v1698, %v1699
    %v1720 = vsel %vm1652, %v1698, %v1699
    %v1721 = vsel %vm1653, %v1698, %v1699
    %v1722 = vsel %vm1654, %v1698, %v1699
    %v1723 = vsel %vm1655, %v1698, %v1699
    %v1724 = vsel %vm1656, %v1698, %v1699
    %v1725 = vsel %vm1657, %v1698, %v1699
    %v1726 = vsel %vm1658, %v1698, %v1699
    %v1727 = vsel %vm1659, %v1698, %v1699
    %v1728 = vsel %vm1660, %v1698, %v1699
    %v1729 = vsel %vm1661, %v1698, %v1699
    %v1730 = vsel %vm1662, %v1698, %v1699
    %v1731 = vsel %vm1663, %v1698, %v1699
    %v1732 = vsel %vm1664, %v1698, %v1699
    %v1733 = vsel %vm1665, %v1698, %v1699
    %v1734 = vsel %vm1666, %v1698, %v1699
    %v1735 = vsel %vm1667, %v1698, %v1699
    %v1736 = vsel %vm1668, %v1698, %v1699
    %v1737 = vsel %vm1669, %v1698, %v1699
    %v1738 = vsel %vm1670, %v1698, %v1699
    %v1739 = vsel %vm1671, %v1698, %v1699
    %v1740 = vsel %vm1672, %v1698, %v1699
    %v1741 = vsel %vm1673, %v1698, %v1699
    %v1742 = vsel %vm1674, %v1698, %v1699
    %v1743 = vsel %vm1675, %v1698, %v1699
    %v1744 = vsel %vm1676, %v1698, %v1699
    %v1745 = vsel %vm1677, %v1698, %v1699
    %v1746 = vsel %vm1678, %v1698, %v1699
    %v1747 = vsel %vm1679, %v1698, %v1699
    %v1748 = vsel %vm1680, %v1698, %v1699
    %v1749 = vsel %vm1681, %v1698, %v1699
    %v1750 = vsel %vm1682, %v1698, %v1699
    %v1751 = vsel %vm1683, %v1698, %v1699
    %v1752 = vsel %vm1684, %v1698, %v1699
    %v1753 = vsel %vm1685, %v1698, %v1699
    %v1754 = vsel %vm1686, %v1698, %v1699
    %v1755 = vsel %vm1687, %v1698, %v1699
    %v1756 = vsel %vm1688, %v1698, %v1699
    %v1757 = vsel %vm1689, %v1698, %v1699
    %v1758 = vsel %vm1690, %v1698, %v1699
    %v1759 = vsel %vm1691, %v1698, %v1699
    %v1760 = vsel %vm1692, %v1698, %v1699
    %v1761 = vsel %vm1693, %v1698, %v1699
    %v1762 = vsel %vm1694, %v1698, %v1699
    %v1763 = vsel %vm1695, %v1698, %v1699
    %vm1764 = vcmp.lt.s32.totalorder %v1312, 3
    %vm1765 = vcmp.lt.s32.totalorder %v1313, 3
    %vm1766 = vcmp.lt.s32.totalorder %v1314, 3
    %vm1767 = vcmp.lt.s32.totalorder %v1315, 3
    %vm1768 = vcmp.lt.s32.totalorder %v1316, 3
    %vm1769 = vcmp.lt.s32.totalorder %v1317, 3
    %vm1770 = vcmp.lt.s32.totalorder %v1318, 3
    %vm1771 = vcmp.lt.s32.totalorder %v1319, 3
    %vm1772 = vcmp.lt.s32.totalorder %v1320, 3
    %vm1773 = vcmp.lt.s32.totalorder %v1321, 3
    %vm1774 = vcmp.lt.s32.totalorder %v1322, 3
    %vm1775 = vcmp.lt.s32.totalorder %v1323, 3
    %vm1776 = vcmp.lt.s32.totalorder %v1324, 3
    %vm1777 = vcmp.lt.s32.totalorder %v1325, 3
    %vm1778 = vcmp.lt.s32.totalorder %v1326, 3
    %vm1779 = vcmp.lt.s32.totalorder %v1327, 3
    %vm1780 = vcmp.lt.s32.totalorder %v1328, 3
    %vm1781 = vcmp.lt.s32.totalorder %v1329, 3
    %vm1782 = vcmp.lt.s32.totalorder %v1330, 3
    %vm1783 = vcmp.lt.s32.totalorder %v1331, 3
    %vm1784 = vcmp.lt.s32.totalorder %v1332, 3
    %vm1785 = vcmp.lt.s32.totalorder %v1333, 3
    %vm1786 = vcmp.lt.s32.totalorder %v1334, 3
    %vm1787 = vcmp.lt.s32.totalorder %v1335, 3
    %vm1788 = vcmp.lt.s32.totalorder %v1336, 3
    %vm1789 = vcmp.lt.s32.totalorder %v1337, 3
    %vm1790 = vcmp.lt.s32.totalorder %v1338, 3
    %vm1791 = vcmp.lt.s32.totalorder %v1339, 3
    %vm1792 = vcmp.lt.s32.totalorder %v1340, 3
    %vm1793 = vcmp.lt.s32.totalorder %v1341, 3
    %vm1794 = vcmp.lt.s32.totalorder %v1342, 3
    %vm1795 = vcmp.lt.s32.totalorder %v1343, 3
    %vm1796 = vcmp.lt.s32.totalorder %v1344, 3
    %vm1797 = vcmp.lt.s32.totalorder %v1345, 3
    %vm1798 = vcmp.lt.s32.totalorder %v1346, 3
    %vm1799 = vcmp.lt.s32.totalorder %v1347, 3
    %vm1800 = vcmp.lt.s32.totalorder %v1348, 3
    %vm1801 = vcmp.lt.s32.totalorder %v1349, 3
    %vm1802 = vcmp.lt.s32.totalorder %v1350, 3
    %vm1803 = vcmp.lt.s32.totalorder %v1351, 3
    %vm1804 = vcmp.lt.s32.totalorder %v1352, 3
    %vm1805 = vcmp.lt.s32.totalorder %v1353, 3
    %vm1806 = vcmp.lt.s32.totalorder %v1354, 3
    %vm1807 = vcmp.lt.s32.totalorder %v1355, 3
    %vm1808 = vcmp.lt.s32.totalorder %v1356, 3
    %vm1809 = vcmp.lt.s32.totalorder %v1357, 3
    %vm1810 = vcmp.lt.s32.totalorder %v1358, 3
    %vm1811 = vcmp.lt.s32.totalorder %v1359, 3
    %vm1812 = vcmp.lt.s32.totalorder %v1360, 3
    %vm1813 = vcmp.lt.s32.totalorder %v1361, 3
    %vm1814 = vcmp.lt.s32.totalorder %v1362, 3
    %vm1815 = vcmp.lt.s32.totalorder %v1363, 3
    %vm1816 = vcmp.lt.s32.totalorder %v1364, 3
    %vm1817 = vcmp.lt.s32.totalorder %v1365, 3
    %vm1818 = vcmp.lt.s32.totalorder %v1366, 3
    %vm1819 = vcmp.lt.s32.totalorder %v1367, 3
    %vm1820 = vcmp.lt.s32.totalorder %v1368, 3
    %vm1821 = vcmp.lt.s32.totalorder %v1369, 3
    %vm1822 = vcmp.lt.s32.totalorder %v1370, 3
    %vm1823 = vcmp.lt.s32.totalorder %v1371, 3
    %vm1824 = vcmp.lt.s32.totalorder %v1372, 3
    %vm1825 = vcmp.lt.s32.totalorder %v1373, 3
    %vm1826 = vcmp.lt.s32.totalorder %v1374, 3
    %vm1827 = vcmp.lt.s32.totalorder %v1375, 3
    %s1828 = sld [smem:[#allocation2 + $0x2]]
    %s1829 = sld [smem:[#allocation2 + $0x3]]
    %v1830 = vstv %s1828
    %v1831 = vstv %s1829
    %v1832 = vsel %vm1764, %v1830, %v1831
    %v1833 = vsel %vm1765, %v1830, %v1831
    %v1834 = vsel %vm1766, %v1830, %v1831
    %v1835 = vsel %vm1767, %v1830, %v1831
    %v1836 = vsel %vm1768, %v1830, %v1831
    %v1837 = vsel %vm1769, %v1830, %v1831
    %v1838 = vsel %vm1770, %v1830, %v1831
    %v1839 = vsel %vm1771, %v1830, %v1831
    %v1840 = vsel %vm1772, %v1830, %v1831
    %v1841 = vsel %vm1773, %v1830, %v1831
    %v1842 = vsel %vm1774, %v1830, %v1831
    %v1843 = vsel %vm1775, %v1830, %v1831
    %v1844 = vsel %vm1776, %v1830, %v1831
    %v1845 = vsel %vm1777, %v1830, %v1831
    %v1846 = vsel %vm1778, %v1830, %v1831
    %v1847 = vsel %vm1779, %v1830, %v1831
    %v1848 = vsel %vm1780, %v1830, %v1831
    %v1849 = vsel %vm1781, %v1830, %v1831
    %v1850 = vsel %vm1782, %v1830, %v1831
    %v1851 = vsel %vm1783, %v1830, %v1831
    %v1852 = vsel %vm1784, %v1830, %v1831
    %v1853 = vsel %vm1785, %v1830, %v1831
    %v1854 = vsel %vm1786, %v1830, %v1831
    %v1855 = vsel %vm1787, %v1830, %v1831
    %v1856 = vsel %vm1788, %v1830, %v1831
    %v1857 = vsel %vm1789, %v1830, %v1831
    %v1858 = vsel %vm1790, %v1830, %v1831
    %v1859 = vsel %vm1791, %v1830, %v1831
    %v1860 = vsel %vm1792, %v1830, %v1831
    %v1861 = vsel %vm1793, %v1830, %v1831
    %v1862 = vsel %vm1794, %v1830, %v1831
    %v1863 = vsel %vm1795, %v1830, %v1831
    %v1864 = vsel %vm1796, %v1830, %v1831
    %v1865 = vsel %vm1797, %v1830, %v1831
    %v1866 = vsel %vm1798, %v1830, %v1831
    %v1867 = vsel %vm1799, %v1830, %v1831
    %v1868 = vsel %vm1800, %v1830, %v1831
    %v1869 = vsel %vm1801, %v1830, %v1831
    %v1870 = vsel %vm1802, %v1830, %v1831
    %v1871 = vsel %vm1803, %v1830, %v1831
    %v1872 = vsel %vm1804, %v1830, %v1831
    %v1873 = vsel %vm1805, %v1830, %v1831
    %v1874 = vsel %vm1806, %v1830, %v1831
    %v1875 = vsel %vm1807, %v1830, %v1831
    %v1876 = vsel %vm1808, %v1830, %v1831
    %v1877 = vsel %vm1809, %v1830, %v1831
    %v1878 = vsel %vm1810, %v1830, %v1831
    %v1879 = vsel %vm1811, %v1830, %v1831
    %v1880 = vsel %vm1812, %v1830, %v1831
    %v1881 = vsel %vm1813, %v1830, %v1831
    %v1882 = vsel %vm1814, %v1830, %v1831
    %v1883 = vsel %vm1815, %v1830, %v1831
    %v1884 = vsel %vm1816, %v1830, %v1831
    %v1885 = vsel %vm1817, %v1830, %v1831
    %v1886 = vsel %vm1818, %v1830, %v1831
    %v1887 = vsel %vm1819, %v1830, %v1831
    %v1888 = vsel %vm1820, %v1830, %v1831
    %v1889 = vsel %vm1821, %v1830, %v1831
    %v1890 = vsel %vm1822, %v1830, %v1831
    %v1891 = vsel %vm1823, %v1830, %v1831
    %v1892 = vsel %vm1824, %v1830, %v1831
    %v1893 = vsel %vm1825, %v1830, %v1831
    %v1894 = vsel %vm1826, %v1830, %v1831
    %v1895 = vsel %vm1827, %v1830, %v1831
    %v1896 = vsel %vm1568, %v1700, %v1832
    %v1897 = vsel %vm1569, %v1701, %v1833
    %v1898 = vsel %vm1570, %v1702, %v1834
    %v1899 = vsel %vm1571, %v1703, %v1835
    %v1900 = vsel %vm1572, %v1704, %v1836
    %v1901 = vsel %vm1573, %v1705, %v1837
    %v1902 = vsel %vm1574, %v1706, %v1838
    %v1903 = vsel %vm1575, %v1707, %v1839
    %v1904 = vsel %vm1576, %v1708, %v1840
    %v1905 = vsel %vm1577, %v1709, %v1841
    %v1906 = vsel %vm1578, %v1710, %v1842
    %v1907 = vsel %vm1579, %v1711, %v1843
    %v1908 = vsel %vm1580, %v1712, %v1844
    %v1909 = vsel %vm1581, %v1713, %v1845
    %v1910 = vsel %vm1582, %v1714, %v1846
    %v1911 = vsel %vm1583, %v1715, %v1847
    %v1912 = vsel %vm1584, %v1716, %v1848
    %v1913 = vsel %vm1585, %v1717, %v1849
    %v1914 = vsel %vm1586, %v1718, %v1850
    %v1915 = vsel %vm1587, %v1719, %v1851
    %v1916 = vsel %vm1588, %v1720, %v1852
    %v1917 = vsel %vm1589, %v1721, %v1853
    %v1918 = vsel %vm1590, %v1722, %v1854
    %v1919 = vsel %vm1591, %v1723, %v1855
    %v1920 = vsel %vm1592, %v1724, %v1856
    %v1921 = vsel %vm1593, %v1725, %v1857
    %v1922 = vsel %vm1594, %v1726, %v1858
    %v1923 = vsel %vm1595, %v1727, %v1859
    %v1924 = vsel %vm1596, %v1728, %v1860
    %v1925 = vsel %vm1597, %v1729, %v1861
    %v1926 = vsel %vm1598, %v1730, %v1862
    %v1927 = vsel %vm1599, %v1731, %v1863
    %v1928 = vsel %vm1600, %v1732, %v1864
    %v1929 = vsel %vm1601, %v1733, %v1865
    %v1930 = vsel %vm1602, %v1734, %v1866
    %v1931 = vsel %vm1603, %v1735, %v1867
    %v1932 = vsel %vm1604, %v1736, %v1868
    %v1933 = vsel %vm1605, %v1737, %v1869
    %v1934 = vsel %vm1606, %v1738, %v1870
    %v1935 = vsel %vm1607, %v1739, %v1871
    %v1936 = vsel %vm1608, %v1740, %v1872
    %v1937 = vsel %vm1609, %v1741, %v1873
    %v1938 = vsel %vm1610, %v1742, %v1874
    %v1939 = vsel %vm1611, %v1743, %v1875
    %v1940 = vsel %vm1612, %v1744, %v1876
    %v1941 = vsel %vm1613, %v1745, %v1877
    %v1942 = vsel %vm1614, %v1746, %v1878
    %v1943 = vsel %vm1615, %v1747, %v1879
    %v1944 = vsel %vm1616, %v1748, %v1880
    %v1945 = vsel %vm1617, %v1749, %v1881
    %v1946 = vsel %vm1618, %v1750, %v1882
    %v1947 = vsel %vm1619, %v1751, %v1883
    %v1948 = vsel %vm1620, %v1752, %v1884
    %v1949 = vsel %vm1621, %v1753, %v1885
    %v1950 = vsel %vm1622, %v1754, %v1886
    %v1951 = vsel %vm1623, %v1755, %v1887
    %v1952 = vsel %vm1624, %v1756, %v1888
    %v1953 = vsel %vm1625, %v1757, %v1889
    %v1954 = vsel %vm1626, %v1758, %v1890
    %v1955 = vsel %vm1627, %v1759, %v1891
    %v1956 = vsel %vm1628, %v1760, %v1892
    %v1957 = vsel %vm1629, %v1761, %v1893
    %v1958 = vsel %vm1630, %v1762, %v1894
    %v1959 = vsel %vm1631, %v1763, %v1895
    %vm1960 = vcmp.lt.s32.totalorder %v1312, 6
    %vm1961 = vcmp.lt.s32.totalorder %v1313, 6
    %vm1962 = vcmp.lt.s32.totalorder %v1314, 6
    %vm1963 = vcmp.lt.s32.totalorder %v1315, 6
    %vm1964 = vcmp.lt.s32.totalorder %v1316, 6
    %vm1965 = vcmp.lt.s32.totalorder %v1317, 6
    %vm1966 = vcmp.lt.s32.totalorder %v1318, 6
    %vm1967 = vcmp.lt.s32.totalorder %v1319, 6
    %vm1968 = vcmp.lt.s32.totalorder %v1320, 6
    %vm1969 = vcmp.lt.s32.totalorder %v1321, 6
    %vm1970 = vcmp.lt.s32.totalorder %v1322, 6
    %vm1971 = vcmp.lt.s32.totalorder %v1323, 6
    %vm1972 = vcmp.lt.s32.totalorder %v1324, 6
    %vm1973 = vcmp.lt.s32.totalorder %v1325, 6
    %vm1974 = vcmp.lt.s32.totalorder %v1326, 6
    %vm1975 = vcmp.lt.s32.totalorder %v1327, 6
    %vm1976 = vcmp.lt.s32.totalorder %v1328, 6
    %vm1977 = vcmp.lt.s32.totalorder %v1329, 6
    %vm1978 = vcmp.lt.s32.totalorder %v1330, 6
    %vm1979 = vcmp.lt.s32.totalorder %v1331, 6
    %vm1980 = vcmp.lt.s32.totalorder %v1332, 6
    %vm1981 = vcmp.lt.s32.totalorder %v1333, 6
    %vm1982 = vcmp.lt.s32.totalorder %v1334, 6
    %vm1983 = vcmp.lt.s32.totalorder %v1335, 6
    %vm1984 = vcmp.lt.s32.totalorder %v1336, 6
    %vm1985 = vcmp.lt.s32.totalorder %v1337, 6
    %vm1986 = vcmp.lt.s32.totalorder %v1338, 6
    %vm1987 = vcmp.lt.s32.totalorder %v1339, 6
    %vm1988 = vcmp.lt.s32.totalorder %v1340, 6
    %vm1989 = vcmp.lt.s32.totalorder %v1341, 6
    %vm1990 = vcmp.lt.s32.totalorder %v1342, 6
    %vm1991 = vcmp.lt.s32.totalorder %v1343, 6
    %vm1992 = vcmp.lt.s32.totalorder %v1344, 6
    %vm1993 = vcmp.lt.s32.totalorder %v1345, 6
    %vm1994 = vcmp.lt.s32.totalorder %v1346, 6
    %vm1995 = vcmp.lt.s32.totalorder %v1347, 6
    %vm1996 = vcmp.lt.s32.totalorder %v1348, 6
    %vm1997 = vcmp.lt.s32.totalorder %v1349, 6
    %vm1998 = vcmp.lt.s32.totalorder %v1350, 6
    %vm1999 = vcmp.lt.s32.totalorder %v1351, 6
    %vm2000 = vcmp.lt.s32.totalorder %v1352, 6
    %vm2001 = vcmp.lt.s32.totalorder %v1353, 6
    %vm2002 = vcmp.lt.s32.totalorder %v1354, 6
    %vm2003 = vcmp.lt.s32.totalorder %v1355, 6
    %vm2004 = vcmp.lt.s32.totalorder %v1356, 6
    %vm2005 = vcmp.lt.s32.totalorder %v1357, 6
    %vm2006 = vcmp.lt.s32.totalorder %v1358, 6
    %vm2007 = vcmp.lt.s32.totalorder %v1359, 6
    %vm2008 = vcmp.lt.s32.totalorder %v1360, 6
    %vm2009 = vcmp.lt.s32.totalorder %v1361, 6
    %vm2010 = vcmp.lt.s32.totalorder %v1362, 6
    %vm2011 = vcmp.lt.s32.totalorder %v1363, 6
    %vm2012 = vcmp.lt.s32.totalorder %v1364, 6
    %vm2013 = vcmp.lt.s32.totalorder %v1365, 6
    %vm2014 = vcmp.lt.s32.totalorder %v1366, 6
    %vm2015 = vcmp.lt.s32.totalorder %v1367, 6
    %vm2016 = vcmp.lt.s32.totalorder %v1368, 6
    %vm2017 = vcmp.lt.s32.totalorder %v1369, 6
    %vm2018 = vcmp.lt.s32.totalorder %v1370, 6
    %vm2019 = vcmp.lt.s32.totalorder %v1371, 6
    %vm2020 = vcmp.lt.s32.totalorder %v1372, 6
    %vm2021 = vcmp.lt.s32.totalorder %v1373, 6
    %vm2022 = vcmp.lt.s32.totalorder %v1374, 6
    %vm2023 = vcmp.lt.s32.totalorder %v1375, 6
    %vm2024 = vcmp.lt.s32.totalorder %v1312, 5
    %vm2025 = vcmp.lt.s32.totalorder %v1313, 5
    %vm2026 = vcmp.lt.s32.totalorder %v1314, 5
    %vm2027 = vcmp.lt.s32.totalorder %v1315, 5
    %vm2028 = vcmp.lt.s32.totalorder %v1316, 5
    %vm2029 = vcmp.lt.s32.totalorder %v1317, 5
    %vm2030 = vcmp.lt.s32.totalorder %v1318, 5
    %vm2031 = vcmp.lt.s32.totalorder %v1319, 5
    %vm2032 = vcmp.lt.s32.totalorder %v1320, 5
    %vm2033 = vcmp.lt.s32.totalorder %v1321, 5
    %vm2034 = vcmp.lt.s32.totalorder %v1322, 5
    %vm2035 = vcmp.lt.s32.totalorder %v1323, 5
    %vm2036 = vcmp.lt.s32.totalorder %v1324, 5
    %vm2037 = vcmp.lt.s32.totalorder %v1325, 5
    %vm2038 = vcmp.lt.s32.totalorder %v1326, 5
    %vm2039 = vcmp.lt.s32.totalorder %v1327, 5
    %vm2040 = vcmp.lt.s32.totalorder %v1328, 5
    %vm2041 = vcmp.lt.s32.totalorder %v1329, 5
    %vm2042 = vcmp.lt.s32.totalorder %v1330, 5
    %vm2043 = vcmp.lt.s32.totalorder %v1331, 5
    %vm2044 = vcmp.lt.s32.totalorder %v1332, 5
    %vm2045 = vcmp.lt.s32.totalorder %v1333, 5
    %vm2046 = vcmp.lt.s32.totalorder %v1334, 5
    %vm2047 = vcmp.lt.s32.totalorder %v1335, 5
    %vm2048 = vcmp.lt.s32.totalorder %v1336, 5
    %vm2049 = vcmp.lt.s32.totalorder %v1337, 5
    %vm2050 = vcmp.lt.s32.totalorder %v1338, 5
    %vm2051 = vcmp.lt.s32.totalorder %v1339, 5
    %vm2052 = vcmp.lt.s32.totalorder %v1340, 5
    %vm2053 = vcmp.lt.s32.totalorder %v1341, 5
    %vm2054 = vcmp.lt.s32.totalorder %v1342, 5
    %vm2055 = vcmp.lt.s32.totalorder %v1343, 5
    %vm2056 = vcmp.lt.s32.totalorder %v1344, 5
    %vm2057 = vcmp.lt.s32.totalorder %v1345, 5
    %vm2058 = vcmp.lt.s32.totalorder %v1346, 5
    %vm2059 = vcmp.lt.s32.totalorder %v1347, 5
    %vm2060 = vcmp.lt.s32.totalorder %v1348, 5
    %vm2061 = vcmp.lt.s32.totalorder %v1349, 5
    %vm2062 = vcmp.lt.s32.totalorder %v1350, 5
    %vm2063 = vcmp.lt.s32.totalorder %v1351, 5
    %vm2064 = vcmp.lt.s32.totalorder %v1352, 5
    %vm2065 = vcmp.lt.s32.totalorder %v1353, 5
    %vm2066 = vcmp.lt.s32.totalorder %v1354, 5
    %vm2067 = vcmp.lt.s32.totalorder %v1355, 5
    %vm2068 = vcmp.lt.s32.totalorder %v1356, 5
    %vm2069 = vcmp.lt.s32.totalorder %v1357, 5
    %vm2070 = vcmp.lt.s32.totalorder %v1358, 5
    %vm2071 = vcmp.lt.s32.totalorder %v1359, 5
    %vm2072 = vcmp.lt.s32.totalorder %v1360, 5
    %vm2073 = vcmp.lt.s32.totalorder %v1361, 5
    %vm2074 = vcmp.lt.s32.totalorder %v1362, 5
    %vm2075 = vcmp.lt.s32.totalorder %v1363, 5
    %vm2076 = vcmp.lt.s32.totalorder %v1364, 5
    %vm2077 = vcmp.lt.s32.totalorder %v1365, 5
    %vm2078 = vcmp.lt.s32.totalorder %v1366, 5
    %vm2079 = vcmp.lt.s32.totalorder %v1367, 5
    %vm2080 = vcmp.lt.s32.totalorder %v1368, 5
    %vm2081 = vcmp.lt.s32.totalorder %v1369, 5
    %vm2082 = vcmp.lt.s32.totalorder %v1370, 5
    %vm2083 = vcmp.lt.s32.totalorder %v1371, 5
    %vm2084 = vcmp.lt.s32.totalorder %v1372, 5
    %vm2085 = vcmp.lt.s32.totalorder %v1373, 5
    %vm2086 = vcmp.lt.s32.totalorder %v1374, 5
    %vm2087 = vcmp.lt.s32.totalorder %v1375, 5
    %s2088 = sld [smem:[#allocation2 + $0x4]]
    %s2089 = sld [smem:[#allocation2 + $0x5]]
    %v2090 = vstv %s2088
    %v2091 = vstv %s2089
    %v2092 = vsel %vm2024, %v2090, %v2091
    %v2093 = vsel %vm2025, %v2090, %v2091
    %v2094 = vsel %vm2026, %v2090, %v2091
    %v2095 = vsel %vm2027, %v2090, %v2091
    %v2096 = vsel %vm2028, %v2090, %v2091
    %v2097 = vsel %vm2029, %v2090, %v2091
    %v2098 = vsel %vm2030, %v2090, %v2091
    %v2099 = vsel %vm2031, %v2090, %v2091
    %v2100 = vsel %vm2032, %v2090, %v2091
    %v2101 = vsel %vm2033, %v2090, %v2091
    %v2102 = vsel %vm2034, %v2090, %v2091
    %v2103 = vsel %vm2035, %v2090, %v2091
    %v2104 = vsel %vm2036, %v2090, %v2091
    %v2105 = vsel %vm2037, %v2090, %v2091
    %v2106 = vsel %vm2038, %v2090, %v2091
    %v2107 = vsel %vm2039, %v2090, %v2091
    %v2108 = vsel %vm2040, %v2090, %v2091
    %v2109 = vsel %vm2041, %v2090, %v2091
    %v2110 = vsel %vm2042, %v2090, %v2091
    %v2111 = vsel %vm2043, %v2090, %v2091
    %v2112 = vsel %vm2044, %v2090, %v2091
    %v2113 = vsel %vm2045, %v2090, %v2091
    %v2114 = vsel %vm2046, %v2090, %v2091
    %v2115 = vsel %vm2047, %v2090, %v2091
    %v2116 = vsel %vm2048, %v2090, %v2091
    %v2117 = vsel %vm2049, %v2090, %v2091
    %v2118 = vsel %vm2050, %v2090, %v2091
    %v2119 = vsel %vm2051, %v2090, %v2091
    %v2120 = vsel %vm2052, %v2090, %v2091
    %v2121 = vsel %vm2053, %v2090, %v2091
    %v2122 = vsel %vm2054, %v2090, %v2091
    %v2123 = vsel %vm2055, %v2090, %v2091
    %v2124 = vsel %vm2056, %v2090, %v2091
    %v2125 = vsel %vm2057, %v2090, %v2091
    %v2126 = vsel %vm2058, %v2090, %v2091
    %v2127 = vsel %vm2059, %v2090, %v2091
    %v2128 = vsel %vm2060, %v2090, %v2091
    %v2129 = vsel %vm2061, %v2090, %v2091
    %v2130 = vsel %vm2062, %v2090, %v2091
    %v2131 = vsel %vm2063, %v2090, %v2091
    %v2132 = vsel %vm2064, %v2090, %v2091
    %v2133 = vsel %vm2065, %v2090, %v2091
    %v2134 = vsel %vm2066, %v2090, %v2091
    %v2135 = vsel %vm2067, %v2090, %v2091
    %v2136 = vsel %vm2068, %v2090, %v2091
    %v2137 = vsel %vm2069, %v2090, %v2091
    %v2138 = vsel %vm2070, %v2090, %v2091
    %v2139 = vsel %vm2071, %v2090, %v2091
    %v2140 = vsel %vm2072, %v2090, %v2091
    %v2141 = vsel %vm2073, %v2090, %v2091
    %v2142 = vsel %vm2074, %v2090, %v2091
    %v2143 = vsel %vm2075, %v2090, %v2091
    %v2144 = vsel %vm2076, %v2090, %v2091
    %v2145 = vsel %vm2077, %v2090, %v2091
    %v2146 = vsel %vm2078, %v2090, %v2091
    %v2147 = vsel %vm2079, %v2090, %v2091
    %v2148 = vsel %vm2080, %v2090, %v2091
    %v2149 = vsel %vm2081, %v2090, %v2091
    %v2150 = vsel %vm2082, %v2090, %v2091
    %v2151 = vsel %vm2083, %v2090, %v2091
    %v2152 = vsel %vm2084, %v2090, %v2091
    %v2153 = vsel %vm2085, %v2090, %v2091
    %v2154 = vsel %vm2086, %v2090, %v2091
    %v2155 = vsel %vm2087, %v2090, %v2091
    %vm2156 = vcmp.lt.s32.totalorder %v1312, 7
    %vm2157 = vcmp.lt.s32.totalorder %v1313, 7
    %vm2158 = vcmp.lt.s32.totalorder %v1314, 7
    %vm2159 = vcmp.lt.s32.totalorder %v1315, 7
    %vm2160 = vcmp.lt.s32.totalorder %v1316, 7
    %vm2161 = vcmp.lt.s32.totalorder %v1317, 7
    %vm2162 = vcmp.lt.s32.totalorder %v1318, 7
    %vm2163 = vcmp.lt.s32.totalorder %v1319, 7
    %vm2164 = vcmp.lt.s32.totalorder %v1320, 7
    %vm2165 = vcmp.lt.s32.totalorder %v1321, 7
    %vm2166 = vcmp.lt.s32.totalorder %v1322, 7
    %vm2167 = vcmp.lt.s32.totalorder %v1323, 7
    %vm2168 = vcmp.lt.s32.totalorder %v1324, 7
    %vm2169 = vcmp.lt.s32.totalorder %v1325, 7
    %vm2170 = vcmp.lt.s32.totalorder %v1326, 7
    %vm2171 = vcmp.lt.s32.totalorder %v1327, 7
    %vm2172 = vcmp.lt.s32.totalorder %v1328, 7
    %vm2173 = vcmp.lt.s32.totalorder %v1329, 7
    %vm2174 = vcmp.lt.s32.totalorder %v1330, 7
    %vm2175 = vcmp.lt.s32.totalorder %v1331, 7
    %vm2176 = vcmp.lt.s32.totalorder %v1332, 7
    %vm2177 = vcmp.lt.s32.totalorder %v1333, 7
    %vm2178 = vcmp.lt.s32.totalorder %v1334, 7
    %vm2179 = vcmp.lt.s32.totalorder %v1335, 7
    %vm2180 = vcmp.lt.s32.totalorder %v1336, 7
    %vm2181 = vcmp.lt.s32.totalorder %v1337, 7
    %vm2182 = vcmp.lt.s32.totalorder %v1338, 7
    %vm2183 = vcmp.lt.s32.totalorder %v1339, 7
    %vm2184 = vcmp.lt.s32.totalorder %v1340, 7
    %vm2185 = vcmp.lt.s32.totalorder %v1341, 7
    %vm2186 = vcmp.lt.s32.totalorder %v1342, 7
    %vm2187 = vcmp.lt.s32.totalorder %v1343, 7
    %vm2188 = vcmp.lt.s32.totalorder %v1344, 7
    %vm2189 = vcmp.lt.s32.totalorder %v1345, 7
    %vm2190 = vcmp.lt.s32.totalorder %v1346, 7
    %vm2191 = vcmp.lt.s32.totalorder %v1347, 7
    %vm2192 = vcmp.lt.s32.totalorder %v1348, 7
    %vm2193 = vcmp.lt.s32.totalorder %v1349, 7
    %vm2194 = vcmp.lt.s32.totalorder %v1350, 7
    %vm2195 = vcmp.lt.s32.totalorder %v1351, 7
    %vm2196 = vcmp.lt.s32.totalorder %v1352, 7
    %vm2197 = vcmp.lt.s32.totalorder %v1353, 7
    %vm2198 = vcmp.lt.s32.totalorder %v1354, 7
    %vm2199 = vcmp.lt.s32.totalorder %v1355, 7
    %vm2200 = vcmp.lt.s32.totalorder %v1356, 7
    %vm2201 = vcmp.lt.s32.totalorder %v1357, 7
    %vm2202 = vcmp.lt.s32.totalorder %v1358, 7
    %vm2203 = vcmp.lt.s32.totalorder %v1359, 7
    %vm2204 = vcmp.lt.s32.totalorder %v1360, 7
    %vm2205 = vcmp.lt.s32.totalorder %v1361, 7
    %vm2206 = vcmp.lt.s32.totalorder %v1362, 7
    %vm2207 = vcmp.lt.s32.totalorder %v1363, 7
    %vm2208 = vcmp.lt.s32.totalorder %v1364, 7
    %vm2209 = vcmp.lt.s32.totalorder %v1365, 7
    %vm2210 = vcmp.lt.s32.totalorder %v1366, 7
    %vm2211 = vcmp.lt.s32.totalorder %v1367, 7
    %vm2212 = vcmp.lt.s32.totalorder %v1368, 7
    %vm2213 = vcmp.lt.s32.totalorder %v1369, 7
    %vm2214 = vcmp.lt.s32.totalorder %v1370, 7
    %vm2215 = vcmp.lt.s32.totalorder %v1371, 7
    %vm2216 = vcmp.lt.s32.totalorder %v1372, 7
    %vm2217 = vcmp.lt.s32.totalorder %v1373, 7
    %vm2218 = vcmp.lt.s32.totalorder %v1374, 7
    %vm2219 = vcmp.lt.s32.totalorder %v1375, 7
    %s2220 = sld [smem:[#allocation2 + $0x6]]
    %s2221 = sld [smem:[#allocation2 + $0x7]]
    %v2222 = vstv %s2220
    %v2223 = vstv %s2221
    %v2224 = vsel %vm2156, %v2222, %v2223
    %v2225 = vsel %vm2157, %v2222, %v2223
    %v2226 = vsel %vm2158, %v2222, %v2223
    %v2227 = vsel %vm2159, %v2222, %v2223
    %v2228 = vsel %vm2160, %v2222, %v2223
    %v2229 = vsel %vm2161, %v2222, %v2223
    %v2230 = vsel %vm2162, %v2222, %v2223
    %v2231 = vsel %vm2163, %v2222, %v2223
    %v2232 = vsel %vm2164, %v2222, %v2223
    %v2233 = vsel %vm2165, %v2222, %v2223
    %v2234 = vsel %vm2166, %v2222, %v2223
    %v2235 = vsel %vm2167, %v2222, %v2223
    %v2236 = vsel %vm2168, %v2222, %v2223
    %v2237 = vsel %vm2169, %v2222, %v2223
    %v2238 = vsel %vm2170, %v2222, %v2223
    %v2239 = vsel %vm2171, %v2222, %v2223
    %v2240 = vsel %vm2172, %v2222, %v2223
    %v2241 = vsel %vm2173, %v2222, %v2223
    %v2242 = vsel %vm2174, %v2222, %v2223
    %v2243 = vsel %vm2175, %v2222, %v2223
    %v2244 = vsel %vm2176, %v2222, %v2223
    %v2245 = vsel %vm2177, %v2222, %v2223
    %v2246 = vsel %vm2178, %v2222, %v2223
    %v2247 = vsel %vm2179, %v2222, %v2223
    %v2248 = vsel %vm2180, %v2222, %v2223
    %v2249 = vsel %vm2181, %v2222, %v2223
    %v2250 = vsel %vm2182, %v2222, %v2223
    %v2251 = vsel %vm2183, %v2222, %v2223
    %v2252 = vsel %vm2184, %v2222, %v2223
    %v2253 = vsel %vm2185, %v2222, %v2223
    %v2254 = vsel %vm2186, %v2222, %v2223
    %v2255 = vsel %vm2187, %v2222, %v2223
    %v2256 = vsel %vm2188, %v2222, %v2223
    %v2257 = vsel %vm2189, %v2222, %v2223
    %v2258 = vsel %vm2190, %v2222, %v2223
    %v2259 = vsel %vm2191, %v2222, %v2223
    %v2260 = vsel %vm2192, %v2222, %v2223
    %v2261 = vsel %vm2193, %v2222, %v2223
    %v2262 = vsel %vm2194, %v2222, %v2223
    %v2263 = vsel %vm2195, %v2222, %v2223
    %v2264 = vsel %vm2196, %v2222, %v2223
    %v2265 = vsel %vm2197, %v2222, %v2223
    %v2266 = vsel %vm2198, %v2222, %v2223
    %v2267 = vsel %vm2199, %v2222, %v2223
    %v2268 = vsel %vm2200, %v2222, %v2223
    %v2269 = vsel %vm2201, %v2222, %v2223
    %v2270 = vsel %vm2202, %v2222, %v2223
    %v2271 = vsel %vm2203, %v2222, %v2223
    %v2272 = vsel %vm2204, %v2222, %v2223
    %v2273 = vsel %vm2205, %v2222, %v2223
    %v2274 = vsel %vm2206, %v2222, %v2223
    %v2275 = vsel %vm2207, %v2222, %v2223
    %v2276 = vsel %vm2208, %v2222, %v2223
    %v2277 = vsel %vm2209, %v2222, %v2223
    %v2278 = vsel %vm2210, %v2222, %v2223
    %v2279 = vsel %vm2211, %v2222, %v2223
    %v2280 = vsel %vm2212, %v2222, %v2223
    %v2281 = vsel %vm2213, %v2222, %v2223
    %v2282 = vsel %vm2214, %v2222, %v2223
    %v2283 = vsel %vm2215, %v2222, %v2223
    %v2284 = vsel %vm2216, %v2222, %v2223
    %v2285 = vsel %vm2217, %v2222, %v2223
    %v2286 = vsel %vm2218, %v2222, %v2223
    %v2287 = vsel %vm2219, %v2222, %v2223
    %v2288 = vsel %vm1960, %v2092, %v2224
    %v2289 = vsel %vm1961, %v2093, %v2225
    %v2290 = vsel %vm1962, %v2094, %v2226
    %v2291 = vsel %vm1963, %v2095, %v2227
    %v2292 = vsel %vm1964, %v2096, %v2228
    %v2293 = vsel %vm1965, %v2097, %v2229
    %v2294 = vsel %vm1966, %v2098, %v2230
    %v2295 = vsel %vm1967, %v2099, %v2231
    %v2296 = vsel %vm1968, %v2100, %v2232
    %v2297 = vsel %vm1969, %v2101, %v2233
    %v2298 = vsel %vm1970, %v2102, %v2234
    %v2299 = vsel %vm1971, %v2103, %v2235
    %v2300 = vsel %vm1972, %v2104, %v2236
    %v2301 = vsel %vm1973, %v2105, %v2237
    %v2302 = vsel %vm1974, %v2106, %v2238
    %v2303 = vsel %vm1975, %v2107, %v2239
    %v2304 = vsel %vm1976, %v2108, %v2240
    %v2305 = vsel %vm1977, %v2109, %v2241
    %v2306 = vsel %vm1978, %v2110, %v2242
    %v2307 = vsel %vm1979, %v2111, %v2243
    %v2308 = vsel %vm1980, %v2112, %v2244
    %v2309 = vsel %vm1981, %v2113, %v2245
    %v2310 = vsel %vm1982, %v2114, %v2246
    %v2311 = vsel %vm1983, %v2115, %v2247
    %v2312 = vsel %vm1984, %v2116, %v2248
    %v2313 = vsel %vm1985, %v2117, %v2249
    %v2314 = vsel %vm1986, %v2118, %v2250
    %v2315 = vsel %vm1987, %v2119, %v2251
    %v2316 = vsel %vm1988, %v2120, %v2252
    %v2317 = vsel %vm1989, %v2121, %v2253
    %v2318 = vsel %vm1990, %v2122, %v2254
    %v2319 = vsel %vm1991, %v2123, %v2255
    %v2320 = vsel %vm1992, %v2124, %v2256
    %v2321 = vsel %vm1993, %v2125, %v2257
    %v2322 = vsel %vm1994, %v2126, %v2258
    %v2323 = vsel %vm1995, %v2127, %v2259
    %v2324 = vsel %vm1996, %v2128, %v2260
    %v2325 = vsel %vm1997, %v2129, %v2261
    %v2326 = vsel %vm1998, %v2130, %v2262
    %v2327 = vsel %vm1999, %v2131, %v2263
    %v2328 = vsel %vm2000, %v2132, %v2264
    %v2329 = vsel %vm2001, %v2133, %v2265
    %v2330 = vsel %vm2002, %v2134, %v2266
    %v2331 = vsel %vm2003, %v2135, %v2267
    %v2332 = vsel %vm2004, %v2136, %v2268
    %v2333 = vsel %vm2005, %v2137, %v2269
    %v2334 = vsel %vm2006, %v2138, %v2270
    %v2335 = vsel %vm2007, %v2139, %v2271
    %v2336 = vsel %vm2008, %v2140, %v2272
    %v2337 = vsel %vm2009, %v2141, %v2273
    %v2338 = vsel %vm2010, %v2142, %v2274
    %v2339 = vsel %vm2011, %v2143, %v2275
    %v2340 = vsel %vm2012, %v2144, %v2276
    %v2341 = vsel %vm2013, %v2145, %v2277
    %v2342 = vsel %vm2014, %v2146, %v2278
    %v2343 = vsel %vm2015, %v2147, %v2279
    %v2344 = vsel %vm2016, %v2148, %v2280
    %v2345 = vsel %vm2017, %v2149, %v2281
    %v2346 = vsel %vm2018, %v2150, %v2282
    %v2347 = vsel %vm2019, %v2151, %v2283
    %v2348 = vsel %vm2020, %v2152, %v2284
    %v2349 = vsel %vm2021, %v2153, %v2285
    %v2350 = vsel %vm2022, %v2154, %v2286
    %v2351 = vsel %vm2023, %v2155, %v2287
    %v2352 = vsel %vm1504, %v1896, %v2288
    %v2353 = vsel %vm1505, %v1897, %v2289
    %v2354 = vsel %vm1506, %v1898, %v2290
    %v2355 = vsel %vm1507, %v1899, %v2291
    %v2356 = vsel %vm1508, %v1900, %v2292
    %v2357 = vsel %vm1509, %v1901, %v2293
    %v2358 = vsel %vm1510, %v1902, %v2294
    %v2359 = vsel %vm1511, %v1903, %v2295
    %v2360 = vsel %vm1512, %v1904, %v2296
    %v2361 = vsel %vm1513, %v1905, %v2297
    %v2362 = vsel %vm1514, %v1906, %v2298
    %v2363 = vsel %vm1515, %v1907, %v2299
    %v2364 = vsel %vm1516, %v1908, %v2300
    %v2365 = vsel %vm1517, %v1909, %v2301
    %v2366 = vsel %vm1518, %v1910, %v2302
    %v2367 = vsel %vm1519, %v1911, %v2303
    %v2368 = vsel %vm1520, %v1912, %v2304
    %v2369 = vsel %vm1521, %v1913, %v2305
    %v2370 = vsel %vm1522, %v1914, %v2306
    %v2371 = vsel %vm1523, %v1915, %v2307
    %v2372 = vsel %vm1524, %v1916, %v2308
    %v2373 = vsel %vm1525, %v1917, %v2309
    %v2374 = vsel %vm1526, %v1918, %v2310
    %v2375 = vsel %vm1527, %v1919, %v2311
    %v2376 = vsel %vm1528, %v1920, %v2312
    %v2377 = vsel %vm1529, %v1921, %v2313
    %v2378 = vsel %vm1530, %v1922, %v2314
    %v2379 = vsel %vm1531, %v1923, %v2315
    %v2380 = vsel %vm1532, %v1924, %v2316
    %v2381 = vsel %vm1533, %v1925, %v2317
    %v2382 = vsel %vm1534, %v1926, %v2318
    %v2383 = vsel %vm1535, %v1927, %v2319
    %v2384 = vsel %vm1536, %v1928, %v2320
    %v2385 = vsel %vm1537, %v1929, %v2321
    %v2386 = vsel %vm1538, %v1930, %v2322
    %v2387 = vsel %vm1539, %v1931, %v2323
    %v2388 = vsel %vm1540, %v1932, %v2324
    %v2389 = vsel %vm1541, %v1933, %v2325
    %v2390 = vsel %vm1542, %v1934, %v2326
    %v2391 = vsel %vm1543, %v1935, %v2327
    %v2392 = vsel %vm1544, %v1936, %v2328
    %v2393 = vsel %vm1545, %v1937, %v2329
    %v2394 = vsel %vm1546, %v1938, %v2330
    %v2395 = vsel %vm1547, %v1939, %v2331
    %v2396 = vsel %vm1548, %v1940, %v2332
    %v2397 = vsel %vm1549, %v1941, %v2333
    %v2398 = vsel %vm1550, %v1942, %v2334
    %v2399 = vsel %vm1551, %v1943, %v2335
    %v2400 = vsel %vm1552, %v1944, %v2336
    %v2401 = vsel %vm1553, %v1945, %v2337
    %v2402 = vsel %vm1554, %v1946, %v2338
    %v2403 = vsel %vm1555, %v1947, %v2339
    %v2404 = vsel %vm1556, %v1948, %v2340
    %v2405 = vsel %vm1557, %v1949, %v2341
    %v2406 = vsel %vm1558, %v1950, %v2342
    %v2407 = vsel %vm1559, %v1951, %v2343
    %v2408 = vsel %vm1560, %v1952, %v2344
    %v2409 = vsel %vm1561, %v1953, %v2345
    %v2410 = vsel %vm1562, %v1954, %v2346
    %v2411 = vsel %vm1563, %v1955, %v2347
    %v2412 = vsel %vm1564, %v1956, %v2348
    %v2413 = vsel %vm1565, %v1957, %v2349
    %v2414 = vsel %vm1566, %v1958, %v2350
    %v2415 = vsel %vm1567, %v1959, %v2351
    %vm2416 = vcmp.lt.s32.totalorder %v1312, 12
    %vm2417 = vcmp.lt.s32.totalorder %v1313, 12
    %vm2418 = vcmp.lt.s32.totalorder %v1314, 12
    %vm2419 = vcmp.lt.s32.totalorder %v1315, 12
    %vm2420 = vcmp.lt.s32.totalorder %v1316, 12
    %vm2421 = vcmp.lt.s32.totalorder %v1317, 12
    %vm2422 = vcmp.lt.s32.totalorder %v1318, 12
    %vm2423 = vcmp.lt.s32.totalorder %v1319, 12
    %vm2424 = vcmp.lt.s32.totalorder %v1320, 12
    %vm2425 = vcmp.lt.s32.totalorder %v1321, 12
    %vm2426 = vcmp.lt.s32.totalorder %v1322, 12
    %vm2427 = vcmp.lt.s32.totalorder %v1323, 12
    %vm2428 = vcmp.lt.s32.totalorder %v1324, 12
    %vm2429 = vcmp.lt.s32.totalorder %v1325, 12
    %vm2430 = vcmp.lt.s32.totalorder %v1326, 12
    %vm2431 = vcmp.lt.s32.totalorder %v1327, 12
    %vm2432 = vcmp.lt.s32.totalorder %v1328, 12
    %vm2433 = vcmp.lt.s32.totalorder %v1329, 12
    %vm2434 = vcmp.lt.s32.totalorder %v1330, 12
    %vm2435 = vcmp.lt.s32.totalorder %v1331, 12
    %vm2436 = vcmp.lt.s32.totalorder %v1332, 12
    %vm2437 = vcmp.lt.s32.totalorder %v1333, 12
    %vm2438 = vcmp.lt.s32.totalorder %v1334, 12
    %vm2439 = vcmp.lt.s32.totalorder %v1335, 12
    %vm2440 = vcmp.lt.s32.totalorder %v1336, 12
    %vm2441 = vcmp.lt.s32.totalorder %v1337, 12
    %vm2442 = vcmp.lt.s32.totalorder %v1338, 12
    %vm2443 = vcmp.lt.s32.totalorder %v1339, 12
    %vm2444 = vcmp.lt.s32.totalorder %v1340, 12
    %vm2445 = vcmp.lt.s32.totalorder %v1341, 12
    %vm2446 = vcmp.lt.s32.totalorder %v1342, 12
    %vm2447 = vcmp.lt.s32.totalorder %v1343, 12
    %vm2448 = vcmp.lt.s32.totalorder %v1344, 12
    %vm2449 = vcmp.lt.s32.totalorder %v1345, 12
    %vm2450 = vcmp.lt.s32.totalorder %v1346, 12
    %vm2451 = vcmp.lt.s32.totalorder %v1347, 12
    %vm2452 = vcmp.lt.s32.totalorder %v1348, 12
    %vm2453 = vcmp.lt.s32.totalorder %v1349, 12
    %vm2454 = vcmp.lt.s32.totalorder %v1350, 12
    %vm2455 = vcmp.lt.s32.totalorder %v1351, 12
    %vm2456 = vcmp.lt.s32.totalorder %v1352, 12
    %vm2457 = vcmp.lt.s32.totalorder %v1353, 12
    %vm2458 = vcmp.lt.s32.totalorder %v1354, 12
    %vm2459 = vcmp.lt.s32.totalorder %v1355, 12
    %vm2460 = vcmp.lt.s32.totalorder %v1356, 12
    %vm2461 = vcmp.lt.s32.totalorder %v1357, 12
    %vm2462 = vcmp.lt.s32.totalorder %v1358, 12
    %vm2463 = vcmp.lt.s32.totalorder %v1359, 12
    %vm2464 = vcmp.lt.s32.totalorder %v1360, 12
    %vm2465 = vcmp.lt.s32.totalorder %v1361, 12
    %vm2466 = vcmp.lt.s32.totalorder %v1362, 12
    %vm2467 = vcmp.lt.s32.totalorder %v1363, 12
    %vm2468 = vcmp.lt.s32.totalorder %v1364, 12
    %vm2469 = vcmp.lt.s32.totalorder %v1365, 12
    %vm2470 = vcmp.lt.s32.totalorder %v1366, 12
    %vm2471 = vcmp.lt.s32.totalorder %v1367, 12
    %vm2472 = vcmp.lt.s32.totalorder %v1368, 12
    %vm2473 = vcmp.lt.s32.totalorder %v1369, 12
    %vm2474 = vcmp.lt.s32.totalorder %v1370, 12
    %vm2475 = vcmp.lt.s32.totalorder %v1371, 12
    %vm2476 = vcmp.lt.s32.totalorder %v1372, 12
    %vm2477 = vcmp.lt.s32.totalorder %v1373, 12
    %vm2478 = vcmp.lt.s32.totalorder %v1374, 12
    %vm2479 = vcmp.lt.s32.totalorder %v1375, 12
    %vm2480 = vcmp.lt.s32.totalorder %v1312, 10
    %vm2481 = vcmp.lt.s32.totalorder %v1313, 10
    %vm2482 = vcmp.lt.s32.totalorder %v1314, 10
    %vm2483 = vcmp.lt.s32.totalorder %v1315, 10
    %vm2484 = vcmp.lt.s32.totalorder %v1316, 10
    %vm2485 = vcmp.lt.s32.totalorder %v1317, 10
    %vm2486 = vcmp.lt.s32.totalorder %v1318, 10
    %vm2487 = vcmp.lt.s32.totalorder %v1319, 10
    %vm2488 = vcmp.lt.s32.totalorder %v1320, 10
    %vm2489 = vcmp.lt.s32.totalorder %v1321, 10
    %vm2490 = vcmp.lt.s32.totalorder %v1322, 10
    %vm2491 = vcmp.lt.s32.totalorder %v1323, 10
    %vm2492 = vcmp.lt.s32.totalorder %v1324, 10
    %vm2493 = vcmp.lt.s32.totalorder %v1325, 10
    %vm2494 = vcmp.lt.s32.totalorder %v1326, 10
    %vm2495 = vcmp.lt.s32.totalorder %v1327, 10
    %vm2496 = vcmp.lt.s32.totalorder %v1328, 10
    %vm2497 = vcmp.lt.s32.totalorder %v1329, 10
    %vm2498 = vcmp.lt.s32.totalorder %v1330, 10
    %vm2499 = vcmp.lt.s32.totalorder %v1331, 10
    %vm2500 = vcmp.lt.s32.totalorder %v1332, 10
    %vm2501 = vcmp.lt.s32.totalorder %v1333, 10
    %vm2502 = vcmp.lt.s32.totalorder %v1334, 10
    %vm2503 = vcmp.lt.s32.totalorder %v1335, 10
    %vm2504 = vcmp.lt.s32.totalorder %v1336, 10
    %vm2505 = vcmp.lt.s32.totalorder %v1337, 10
    %vm2506 = vcmp.lt.s32.totalorder %v1338, 10
    %vm2507 = vcmp.lt.s32.totalorder %v1339, 10
    %vm2508 = vcmp.lt.s32.totalorder %v1340, 10
    %vm2509 = vcmp.lt.s32.totalorder %v1341, 10
    %vm2510 = vcmp.lt.s32.totalorder %v1342, 10
    %vm2511 = vcmp.lt.s32.totalorder %v1343, 10
    %vm2512 = vcmp.lt.s32.totalorder %v1344, 10
    %vm2513 = vcmp.lt.s32.totalorder %v1345, 10
    %vm2514 = vcmp.lt.s32.totalorder %v1346, 10
    %vm2515 = vcmp.lt.s32.totalorder %v1347, 10
    %vm2516 = vcmp.lt.s32.totalorder %v1348, 10
    %vm2517 = vcmp.lt.s32.totalorder %v1349, 10
    %vm2518 = vcmp.lt.s32.totalorder %v1350, 10
    %vm2519 = vcmp.lt.s32.totalorder %v1351, 10
    %vm2520 = vcmp.lt.s32.totalorder %v1352, 10
    %vm2521 = vcmp.lt.s32.totalorder %v1353, 10
    %vm2522 = vcmp.lt.s32.totalorder %v1354, 10
    %vm2523 = vcmp.lt.s32.totalorder %v1355, 10
    %vm2524 = vcmp.lt.s32.totalorder %v1356, 10
    %vm2525 = vcmp.lt.s32.totalorder %v1357, 10
    %vm2526 = vcmp.lt.s32.totalorder %v1358, 10
    %vm2527 = vcmp.lt.s32.totalorder %v1359, 10
    %vm2528 = vcmp.lt.s32.totalorder %v1360, 10
    %vm2529 = vcmp.lt.s32.totalorder %v1361, 10
    %vm2530 = vcmp.lt.s32.totalorder %v1362, 10
    %vm2531 = vcmp.lt.s32.totalorder %v1363, 10
    %vm2532 = vcmp.lt.s32.totalorder %v1364, 10
    %vm2533 = vcmp.lt.s32.totalorder %v1365, 10
    %vm2534 = vcmp.lt.s32.totalorder %v1366, 10
    %vm2535 = vcmp.lt.s32.totalorder %v1367, 10
    %vm2536 = vcmp.lt.s32.totalorder %v1368, 10
    %vm2537 = vcmp.lt.s32.totalorder %v1369, 10
    %vm2538 = vcmp.lt.s32.totalorder %v1370, 10
    %vm2539 = vcmp.lt.s32.totalorder %v1371, 10
    %vm2540 = vcmp.lt.s32.totalorder %v1372, 10
    %vm2541 = vcmp.lt.s32.totalorder %v1373, 10
    %vm2542 = vcmp.lt.s32.totalorder %v1374, 10
    %vm2543 = vcmp.lt.s32.totalorder %v1375, 10
    %vm2544 = vcmp.lt.s32.totalorder %v1312, 9
    %vm2545 = vcmp.lt.s32.totalorder %v1313, 9
    %vm2546 = vcmp.lt.s32.totalorder %v1314, 9
    %vm2547 = vcmp.lt.s32.totalorder %v1315, 9
    %vm2548 = vcmp.lt.s32.totalorder %v1316, 9
    %vm2549 = vcmp.lt.s32.totalorder %v1317, 9
    %vm2550 = vcmp.lt.s32.totalorder %v1318, 9
    %vm2551 = vcmp.lt.s32.totalorder %v1319, 9
    %vm2552 = vcmp.lt.s32.totalorder %v1320, 9
    %vm2553 = vcmp.lt.s32.totalorder %v1321, 9
    %vm2554 = vcmp.lt.s32.totalorder %v1322, 9
    %vm2555 = vcmp.lt.s32.totalorder %v1323, 9
    %vm2556 = vcmp.lt.s32.totalorder %v1324, 9
    %vm2557 = vcmp.lt.s32.totalorder %v1325, 9
    %vm2558 = vcmp.lt.s32.totalorder %v1326, 9
    %vm2559 = vcmp.lt.s32.totalorder %v1327, 9
    %vm2560 = vcmp.lt.s32.totalorder %v1328, 9
    %vm2561 = vcmp.lt.s32.totalorder %v1329, 9
    %vm2562 = vcmp.lt.s32.totalorder %v1330, 9
    %vm2563 = vcmp.lt.s32.totalorder %v1331, 9
    %vm2564 = vcmp.lt.s32.totalorder %v1332, 9
    %vm2565 = vcmp.lt.s32.totalorder %v1333, 9
    %vm2566 = vcmp.lt.s32.totalorder %v1334, 9
    %vm2567 = vcmp.lt.s32.totalorder %v1335, 9
    %vm2568 = vcmp.lt.s32.totalorder %v1336, 9
    %vm2569 = vcmp.lt.s32.totalorder %v1337, 9
    %vm2570 = vcmp.lt.s32.totalorder %v1338, 9
    %vm2571 = vcmp.lt.s32.totalorder %v1339, 9
    %vm2572 = vcmp.lt.s32.totalorder %v1340, 9
    %vm2573 = vcmp.lt.s32.totalorder %v1341, 9
    %vm2574 = vcmp.lt.s32.totalorder %v1342, 9
    %vm2575 = vcmp.lt.s32.totalorder %v1343, 9
    %vm2576 = vcmp.lt.s32.totalorder %v1344, 9
    %vm2577 = vcmp.lt.s32.totalorder %v1345, 9
    %vm2578 = vcmp.lt.s32.totalorder %v1346, 9
    %vm2579 = vcmp.lt.s32.totalorder %v1347, 9
    %vm2580 = vcmp.lt.s32.totalorder %v1348, 9
    %vm2581 = vcmp.lt.s32.totalorder %v1349, 9
    %vm2582 = vcmp.lt.s32.totalorder %v1350, 9
    %vm2583 = vcmp.lt.s32.totalorder %v1351, 9
    %vm2584 = vcmp.lt.s32.totalorder %v1352, 9
    %vm2585 = vcmp.lt.s32.totalorder %v1353, 9
    %vm2586 = vcmp.lt.s32.totalorder %v1354, 9
    %vm2587 = vcmp.lt.s32.totalorder %v1355, 9
    %vm2588 = vcmp.lt.s32.totalorder %v1356, 9
    %vm2589 = vcmp.lt.s32.totalorder %v1357, 9
    %vm2590 = vcmp.lt.s32.totalorder %v1358, 9
    %vm2591 = vcmp.lt.s32.totalorder %v1359, 9
    %vm2592 = vcmp.lt.s32.totalorder %v1360, 9
    %vm2593 = vcmp.lt.s32.totalorder %v1361, 9
    %vm2594 = vcmp.lt.s32.totalorder %v1362, 9
    %vm2595 = vcmp.lt.s32.totalorder %v1363, 9
    %vm2596 = vcmp.lt.s32.totalorder %v1364, 9
    %vm2597 = vcmp.lt.s32.totalorder %v1365, 9
    %vm2598 = vcmp.lt.s32.totalorder %v1366, 9
    %vm2599 = vcmp.lt.s32.totalorder %v1367, 9
    %vm2600 = vcmp.lt.s32.totalorder %v1368, 9
    %vm2601 = vcmp.lt.s32.totalorder %v1369, 9
    %vm2602 = vcmp.lt.s32.totalorder %v1370, 9
    %vm2603 = vcmp.lt.s32.totalorder %v1371, 9
    %vm2604 = vcmp.lt.s32.totalorder %v1372, 9
    %vm2605 = vcmp.lt.s32.totalorder %v1373, 9
    %vm2606 = vcmp.lt.s32.totalorder %v1374, 9
    %vm2607 = vcmp.lt.s32.totalorder %v1375, 9
    %s2608 = sld [smem:[#allocation2 + $0x8]]
    %s2609 = sld [smem:[#allocation2 + $0x9]]
    %v2610 = vstv %s2608
    %v2611 = vstv %s2609
    %v2612 = vsel %vm2544, %v2610, %v2611
    %v2613 = vsel %vm2545, %v2610, %v2611
    %v2614 = vsel %vm2546, %v2610, %v2611
    %v2615 = vsel %vm2547, %v2610, %v2611
    %v2616 = vsel %vm2548, %v2610, %v2611
    %v2617 = vsel %vm2549, %v2610, %v2611
    %v2618 = vsel %vm2550, %v2610, %v2611
    %v2619 = vsel %vm2551, %v2610, %v2611
    %v2620 = vsel %vm2552, %v2610, %v2611
    %v2621 = vsel %vm2553, %v2610, %v2611
    %v2622 = vsel %vm2554, %v2610, %v2611
    %v2623 = vsel %vm2555, %v2610, %v2611
    %v2624 = vsel %vm2556, %v2610, %v2611
    %v2625 = vsel %vm2557, %v2610, %v2611
    %v2626 = vsel %vm2558, %v2610, %v2611
    %v2627 = vsel %vm2559, %v2610, %v2611
    %v2628 = vsel %vm2560, %v2610, %v2611
    %v2629 = vsel %vm2561, %v2610, %v2611
    %v2630 = vsel %vm2562, %v2610, %v2611
    %v2631 = vsel %vm2563, %v2610, %v2611
    %v2632 = vsel %vm2564, %v2610, %v2611
    %v2633 = vsel %vm2565, %v2610, %v2611
    %v2634 = vsel %vm2566, %v2610, %v2611
    %v2635 = vsel %vm2567, %v2610, %v2611
    %v2636 = vsel %vm2568, %v2610, %v2611
    %v2637 = vsel %vm2569, %v2610, %v2611
    %v2638 = vsel %vm2570, %v2610, %v2611
    %v2639 = vsel %vm2571, %v2610, %v2611
    %v2640 = vsel %vm2572, %v2610, %v2611
    %v2641 = vsel %vm2573, %v2610, %v2611
    %v2642 = vsel %vm2574, %v2610, %v2611
    %v2643 = vsel %vm2575, %v2610, %v2611
    %v2644 = vsel %vm2576, %v2610, %v2611
    %v2645 = vsel %vm2577, %v2610, %v2611
    %v2646 = vsel %vm2578, %v2610, %v2611
    %v2647 = vsel %vm2579, %v2610, %v2611
    %v2648 = vsel %vm2580, %v2610, %v2611
    %v2649 = vsel %vm2581, %v2610, %v2611
    %v2650 = vsel %vm2582, %v2610, %v2611
    %v2651 = vsel %vm2583, %v2610, %v2611
    %v2652 = vsel %vm2584, %v2610, %v2611
    %v2653 = vsel %vm2585, %v2610, %v2611
    %v2654 = vsel %vm2586, %v2610, %v2611
    %v2655 = vsel %vm2587, %v2610, %v2611
    %v2656 = vsel %vm2588, %v2610, %v2611
    %v2657 = vsel %vm2589, %v2610, %v2611
    %v2658 = vsel %vm2590, %v2610, %v2611
    %v2659 = vsel %vm2591, %v2610, %v2611
    %v2660 = vsel %vm2592, %v2610, %v2611
    %v2661 = vsel %vm2593, %v2610, %v2611
    %v2662 = vsel %vm2594, %v2610, %v2611
    %v2663 = vsel %vm2595, %v2610, %v2611
    %v2664 = vsel %vm2596, %v2610, %v2611
    %v2665 = vsel %vm2597, %v2610, %v2611
    %v2666 = vsel %vm2598, %v2610, %v2611
    %v2667 = vsel %vm2599, %v2610, %v2611
    %v2668 = vsel %vm2600, %v2610, %v2611
    %v2669 = vsel %vm2601, %v2610, %v2611
    %v2670 = vsel %vm2602, %v2610, %v2611
    %v2671 = vsel %vm2603, %v2610, %v2611
    %v2672 = vsel %vm2604, %v2610, %v2611
    %v2673 = vsel %vm2605, %v2610, %v2611
    %v2674 = vsel %vm2606, %v2610, %v2611
    %v2675 = vsel %vm2607, %v2610, %v2611
    %vm2676 = vcmp.lt.s32.totalorder %v1312, 11
    %vm2677 = vcmp.lt.s32.totalorder %v1313, 11
    %vm2678 = vcmp.lt.s32.totalorder %v1314, 11
    %vm2679 = vcmp.lt.s32.totalorder %v1315, 11
    %vm2680 = vcmp.lt.s32.totalorder %v1316, 11
    %vm2681 = vcmp.lt.s32.totalorder %v1317, 11
    %vm2682 = vcmp.lt.s32.totalorder %v1318, 11
    %vm2683 = vcmp.lt.s32.totalorder %v1319, 11
    %vm2684 = vcmp.lt.s32.totalorder %v1320, 11
    %vm2685 = vcmp.lt.s32.totalorder %v1321, 11
    %vm2686 = vcmp.lt.s32.totalorder %v1322, 11
    %vm2687 = vcmp.lt.s32.totalorder %v1323, 11
    %vm2688 = vcmp.lt.s32.totalorder %v1324, 11
    %vm2689 = vcmp.lt.s32.totalorder %v1325, 11
    %vm2690 = vcmp.lt.s32.totalorder %v1326, 11
    %vm2691 = vcmp.lt.s32.totalorder %v1327, 11
    %vm2692 = vcmp.lt.s32.totalorder %v1328, 11
    %vm2693 = vcmp.lt.s32.totalorder %v1329, 11
    %vm2694 = vcmp.lt.s32.totalorder %v1330, 11
    %vm2695 = vcmp.lt.s32.totalorder %v1331, 11
    %vm2696 = vcmp.lt.s32.totalorder %v1332, 11
    %vm2697 = vcmp.lt.s32.totalorder %v1333, 11
    %vm2698 = vcmp.lt.s32.totalorder %v1334, 11
    %vm2699 = vcmp.lt.s32.totalorder %v1335, 11
    %vm2700 = vcmp.lt.s32.totalorder %v1336, 11
    %vm2701 = vcmp.lt.s32.totalorder %v1337, 11
    %vm2702 = vcmp.lt.s32.totalorder %v1338, 11
    %vm2703 = vcmp.lt.s32.totalorder %v1339, 11
    %vm2704 = vcmp.lt.s32.totalorder %v1340, 11
    %vm2705 = vcmp.lt.s32.totalorder %v1341, 11
    %vm2706 = vcmp.lt.s32.totalorder %v1342, 11
    %vm2707 = vcmp.lt.s32.totalorder %v1343, 11
    %vm2708 = vcmp.lt.s32.totalorder %v1344, 11
    %vm2709 = vcmp.lt.s32.totalorder %v1345, 11
    %vm2710 = vcmp.lt.s32.totalorder %v1346, 11
    %vm2711 = vcmp.lt.s32.totalorder %v1347, 11
    %vm2712 = vcmp.lt.s32.totalorder %v1348, 11
    %vm2713 = vcmp.lt.s32.totalorder %v1349, 11
    %vm2714 = vcmp.lt.s32.totalorder %v1350, 11
    %vm2715 = vcmp.lt.s32.totalorder %v1351, 11
    %vm2716 = vcmp.lt.s32.totalorder %v1352, 11
    %vm2717 = vcmp.lt.s32.totalorder %v1353, 11
    %vm2718 = vcmp.lt.s32.totalorder %v1354, 11
    %vm2719 = vcmp.lt.s32.totalorder %v1355, 11
    %vm2720 = vcmp.lt.s32.totalorder %v1356, 11
    %vm2721 = vcmp.lt.s32.totalorder %v1357, 11
    %vm2722 = vcmp.lt.s32.totalorder %v1358, 11
    %vm2723 = vcmp.lt.s32.totalorder %v1359, 11
    %vm2724 = vcmp.lt.s32.totalorder %v1360, 11
    %vm2725 = vcmp.lt.s32.totalorder %v1361, 11
    %vm2726 = vcmp.lt.s32.totalorder %v1362, 11
    %vm2727 = vcmp.lt.s32.totalorder %v1363, 11
    %vm2728 = vcmp.lt.s32.totalorder %v1364, 11
    %vm2729 = vcmp.lt.s32.totalorder %v1365, 11
    %vm2730 = vcmp.lt.s32.totalorder %v1366, 11
    %vm2731 = vcmp.lt.s32.totalorder %v1367, 11
    %vm2732 = vcmp.lt.s32.totalorder %v1368, 11
    %vm2733 = vcmp.lt.s32.totalorder %v1369, 11
    %vm2734 = vcmp.lt.s32.totalorder %v1370, 11
    %vm2735 = vcmp.lt.s32.totalorder %v1371, 11
    %vm2736 = vcmp.lt.s32.totalorder %v1372, 11
    %vm2737 = vcmp.lt.s32.totalorder %v1373, 11
    %vm2738 = vcmp.lt.s32.totalorder %v1374, 11
    %vm2739 = vcmp.lt.s32.totalorder %v1375, 11
    %s2740 = sld [smem:[#allocation2 + $0xa]]
    %s2741 = sld [smem:[#allocation2 + $0xb]]
    %v2742 = vstv %s2740
    %v2743 = vstv %s2741
    %v2744 = vsel %vm2676, %v2742, %v2743
    %v2745 = vsel %vm2677, %v2742, %v2743
    %v2746 = vsel %vm2678, %v2742, %v2743
    %v2747 = vsel %vm2679, %v2742, %v2743
    %v2748 = vsel %vm2680, %v2742, %v2743
    %v2749 = vsel %vm2681, %v2742, %v2743
    %v2750 = vsel %vm2682, %v2742, %v2743
    %v2751 = vsel %vm2683, %v2742, %v2743
    %v2752 = vsel %vm2684, %v2742, %v2743
    %v2753 = vsel %vm2685, %v2742, %v2743
    %v2754 = vsel %vm2686, %v2742, %v2743
    %v2755 = vsel %vm2687, %v2742, %v2743
    %v2756 = vsel %vm2688, %v2742, %v2743
    %v2757 = vsel %vm2689, %v2742, %v2743
    %v2758 = vsel %vm2690, %v2742, %v2743
    %v2759 = vsel %vm2691, %v2742, %v2743
    %v2760 = vsel %vm2692, %v2742, %v2743
    %v2761 = vsel %vm2693, %v2742, %v2743
    %v2762 = vsel %vm2694, %v2742, %v2743
    %v2763 = vsel %vm2695, %v2742, %v2743
    %v2764 = vsel %vm2696, %v2742, %v2743
    %v2765 = vsel %vm2697, %v2742, %v2743
    %v2766 = vsel %vm2698, %v2742, %v2743
    %v2767 = vsel %vm2699, %v2742, %v2743
    %v2768 = vsel %vm2700, %v2742, %v2743
    %v2769 = vsel %vm2701, %v2742, %v2743
    %v2770 = vsel %vm2702, %v2742, %v2743
    %v2771 = vsel %vm2703, %v2742, %v2743
    %v2772 = vsel %vm2704, %v2742, %v2743
    %v2773 = vsel %vm2705, %v2742, %v2743
    %v2774 = vsel %vm2706, %v2742, %v2743
    %v2775 = vsel %vm2707, %v2742, %v2743
    %v2776 = vsel %vm2708, %v2742, %v2743
    %v2777 = vsel %vm2709, %v2742, %v2743
    %v2778 = vsel %vm2710, %v2742, %v2743
    %v2779 = vsel %vm2711, %v2742, %v2743
    %v2780 = vsel %vm2712, %v2742, %v2743
    %v2781 = vsel %vm2713, %v2742, %v2743
    %v2782 = vsel %vm2714, %v2742, %v2743
    %v2783 = vsel %vm2715, %v2742, %v2743
    %v2784 = vsel %vm2716, %v2742, %v2743
    %v2785 = vsel %vm2717, %v2742, %v2743
    %v2786 = vsel %vm2718, %v2742, %v2743
    %v2787 = vsel %vm2719, %v2742, %v2743
    %v2788 = vsel %vm2720, %v2742, %v2743
    %v2789 = vsel %vm2721, %v2742, %v2743
    %v2790 = vsel %vm2722, %v2742, %v2743
    %v2791 = vsel %vm2723, %v2742, %v2743
    %v2792 = vsel %vm2724, %v2742, %v2743
    %v2793 = vsel %vm2725, %v2742, %v2743
    %v2794 = vsel %vm2726, %v2742, %v2743
    %v2795 = vsel %vm2727, %v2742, %v2743
    %v2796 = vsel %vm2728, %v2742, %v2743
    %v2797 = vsel %vm2729, %v2742, %v2743
    %v2798 = vsel %vm2730, %v2742, %v2743
    %v2799 = vsel %vm2731, %v2742, %v2743
    %v2800 = vsel %vm2732, %v2742, %v2743
    %v2801 = vsel %vm2733, %v2742, %v2743
    %v2802 = vsel %vm2734, %v2742, %v2743
    %v2803 = vsel %vm2735, %v2742, %v2743
    %v2804 = vsel %vm2736, %v2742, %v2743
    %v2805 = vsel %vm2737, %v2742, %v2743
    %v2806 = vsel %vm2738, %v2742, %v2743
    %v2807 = vsel %vm2739, %v2742, %v2743
    %v2808 = vsel %vm2480, %v2612, %v2744
    %v2809 = vsel %vm2481, %v2613, %v2745
    %v2810 = vsel %vm2482, %v2614, %v2746
    %v2811 = vsel %vm2483, %v2615, %v2747
    %v2812 = vsel %vm2484, %v2616, %v2748
    %v2813 = vsel %vm2485, %v2617, %v2749
    %v2814 = vsel %vm2486, %v2618, %v2750
    %v2815 = vsel %vm2487, %v2619, %v2751
    %v2816 = vsel %vm2488, %v2620, %v2752
    %v2817 = vsel %vm2489, %v2621, %v2753
    %v2818 = vsel %vm2490, %v2622, %v2754
    %v2819 = vsel %vm2491, %v2623, %v2755
    %v2820 = vsel %vm2492, %v2624, %v2756
    %v2821 = vsel %vm2493, %v2625, %v2757
    %v2822 = vsel %vm2494, %v2626, %v2758
    %v2823 = vsel %vm2495, %v2627, %v2759
    %v2824 = vsel %vm2496, %v2628, %v2760
    %v2825 = vsel %vm2497, %v2629, %v2761
    %v2826 = vsel %vm2498, %v2630, %v2762
    %v2827 = vsel %vm2499, %v2631, %v2763
    %v2828 = vsel %vm2500, %v2632, %v2764
    %v2829 = vsel %vm2501, %v2633, %v2765
    %v2830 = vsel %vm2502, %v2634, %v2766
    %v2831 = vsel %vm2503, %v2635, %v2767
    %v2832 = vsel %vm2504, %v2636, %v2768
    %v2833 = vsel %vm2505, %v2637, %v2769
    %v2834 = vsel %vm2506, %v2638, %v2770
    %v2835 = vsel %vm2507, %v2639, %v2771
    %v2836 = vsel %vm2508, %v2640, %v2772
    %v2837 = vsel %vm2509, %v2641, %v2773
    %v2838 = vsel %vm2510, %v2642, %v2774
    %v2839 = vsel %vm2511, %v2643, %v2775
    %v2840 = vsel %vm2512, %v2644, %v2776
    %v2841 = vsel %vm2513, %v2645, %v2777
    %v2842 = vsel %vm2514, %v2646, %v2778
    %v2843 = vsel %vm2515, %v2647, %v2779
    %v2844 = vsel %vm2516, %v2648, %v2780
    %v2845 = vsel %vm2517, %v2649, %v2781
    %v2846 = vsel %vm2518, %v2650, %v2782
    %v2847 = vsel %vm2519, %v2651, %v2783
    %v2848 = vsel %vm2520, %v2652, %v2784
    %v2849 = vsel %vm2521, %v2653, %v2785
    %v2850 = vsel %vm2522, %v2654, %v2786
    %v2851 = vsel %vm2523, %v2655, %v2787
    %v2852 = vsel %vm2524, %v2656, %v2788
    %v2853 = vsel %vm2525, %v2657, %v2789
    %v2854 = vsel %vm2526, %v2658, %v2790
    %v2855 = vsel %vm2527, %v2659, %v2791
    %v2856 = vsel %vm2528, %v2660, %v2792
    %v2857 = vsel %vm2529, %v2661, %v2793
    %v2858 = vsel %vm2530, %v2662, %v2794
    %v2859 = vsel %vm2531, %v2663, %v2795
    %v2860 = vsel %vm2532, %v2664, %v2796
    %v2861 = vsel %vm2533, %v2665, %v2797
    %v2862 = vsel %vm2534, %v2666, %v2798
    %v2863 = vsel %vm2535, %v2667, %v2799
    %v2864 = vsel %vm2536, %v2668, %v2800
    %v2865 = vsel %vm2537, %v2669, %v2801
    %v2866 = vsel %vm2538, %v2670, %v2802
    %v2867 = vsel %vm2539, %v2671, %v2803
    %v2868 = vsel %vm2540, %v2672, %v2804
    %v2869 = vsel %vm2541, %v2673, %v2805
    %v2870 = vsel %vm2542, %v2674, %v2806
    %v2871 = vsel %vm2543, %v2675, %v2807
    %vm2872 = vcmp.lt.s32.totalorder %v1312, 14
    %vm2873 = vcmp.lt.s32.totalorder %v1313, 14
    %vm2874 = vcmp.lt.s32.totalorder %v1314, 14
    %vm2875 = vcmp.lt.s32.totalorder %v1315, 14
    %vm2876 = vcmp.lt.s32.totalorder %v1316, 14
    %vm2877 = vcmp.lt.s32.totalorder %v1317, 14
    %vm2878 = vcmp.lt.s32.totalorder %v1318, 14
    %vm2879 = vcmp.lt.s32.totalorder %v1319, 14
    %vm2880 = vcmp.lt.s32.totalorder %v1320, 14
    %vm2881 = vcmp.lt.s32.totalorder %v1321, 14
    %vm2882 = vcmp.lt.s32.totalorder %v1322, 14
    %vm2883 = vcmp.lt.s32.totalorder %v1323, 14
    %vm2884 = vcmp.lt.s32.totalorder %v1324, 14
    %vm2885 = vcmp.lt.s32.totalorder %v1325, 14
    %vm2886 = vcmp.lt.s32.totalorder %v1326, 14
    %vm2887 = vcmp.lt.s32.totalorder %v1327, 14
    %vm2888 = vcmp.lt.s32.totalorder %v1328, 14
    %vm2889 = vcmp.lt.s32.totalorder %v1329, 14
    %vm2890 = vcmp.lt.s32.totalorder %v1330, 14
    %vm2891 = vcmp.lt.s32.totalorder %v1331, 14
    %vm2892 = vcmp.lt.s32.totalorder %v1332, 14
    %vm2893 = vcmp.lt.s32.totalorder %v1333, 14
    %vm2894 = vcmp.lt.s32.totalorder %v1334, 14
    %vm2895 = vcmp.lt.s32.totalorder %v1335, 14
    %vm2896 = vcmp.lt.s32.totalorder %v1336, 14
    %vm2897 = vcmp.lt.s32.totalorder %v1337, 14
    %vm2898 = vcmp.lt.s32.totalorder %v1338, 14
    %vm2899 = vcmp.lt.s32.totalorder %v1339, 14
    %vm2900 = vcmp.lt.s32.totalorder %v1340, 14
    %vm2901 = vcmp.lt.s32.totalorder %v1341, 14
    %vm2902 = vcmp.lt.s32.totalorder %v1342, 14
    %vm2903 = vcmp.lt.s32.totalorder %v1343, 14
    %vm2904 = vcmp.lt.s32.totalorder %v1344, 14
    %vm2905 = vcmp.lt.s32.totalorder %v1345, 14
    %vm2906 = vcmp.lt.s32.totalorder %v1346, 14
    %vm2907 = vcmp.lt.s32.totalorder %v1347, 14
    %vm2908 = vcmp.lt.s32.totalorder %v1348, 14
    %vm2909 = vcmp.lt.s32.totalorder %v1349, 14
    %vm2910 = vcmp.lt.s32.totalorder %v1350, 14
    %vm2911 = vcmp.lt.s32.totalorder %v1351, 14
    %vm2912 = vcmp.lt.s32.totalorder %v1352, 14
    %vm2913 = vcmp.lt.s32.totalorder %v1353, 14
    %vm2914 = vcmp.lt.s32.totalorder %v1354, 14
    %vm2915 = vcmp.lt.s32.totalorder %v1355, 14
    %vm2916 = vcmp.lt.s32.totalorder %v1356, 14
    %vm2917 = vcmp.lt.s32.totalorder %v1357, 14
    %vm2918 = vcmp.lt.s32.totalorder %v1358, 14
    %vm2919 = vcmp.lt.s32.totalorder %v1359, 14
    %vm2920 = vcmp.lt.s32.totalorder %v1360, 14
    %vm2921 = vcmp.lt.s32.totalorder %v1361, 14
    %vm2922 = vcmp.lt.s32.totalorder %v1362, 14
    %vm2923 = vcmp.lt.s32.totalorder %v1363, 14
    %vm2924 = vcmp.lt.s32.totalorder %v1364, 14
    %vm2925 = vcmp.lt.s32.totalorder %v1365, 14
    %vm2926 = vcmp.lt.s32.totalorder %v1366, 14
    %vm2927 = vcmp.lt.s32.totalorder %v1367, 14
    %vm2928 = vcmp.lt.s32.totalorder %v1368, 14
    %vm2929 = vcmp.lt.s32.totalorder %v1369, 14
    %vm2930 = vcmp.lt.s32.totalorder %v1370, 14
    %vm2931 = vcmp.lt.s32.totalorder %v1371, 14
    %vm2932 = vcmp.lt.s32.totalorder %v1372, 14
    %vm2933 = vcmp.lt.s32.totalorder %v1373, 14
    %vm2934 = vcmp.lt.s32.totalorder %v1374, 14
    %vm2935 = vcmp.lt.s32.totalorder %v1375, 14
    %vm2936 = vcmp.lt.s32.totalorder %v1312, 13
    %vm2937 = vcmp.lt.s32.totalorder %v1313, 13
    %vm2938 = vcmp.lt.s32.totalorder %v1314, 13
    %vm2939 = vcmp.lt.s32.totalorder %v1315, 13
    %vm2940 = vcmp.lt.s32.totalorder %v1316, 13
    %vm2941 = vcmp.lt.s32.totalorder %v1317, 13
    %vm2942 = vcmp.lt.s32.totalorder %v1318, 13
    %vm2943 = vcmp.lt.s32.totalorder %v1319, 13
    %vm2944 = vcmp.lt.s32.totalorder %v1320, 13
    %vm2945 = vcmp.lt.s32.totalorder %v1321, 13
    %vm2946 = vcmp.lt.s32.totalorder %v1322, 13
    %vm2947 = vcmp.lt.s32.totalorder %v1323, 13
    %vm2948 = vcmp.lt.s32.totalorder %v1324, 13
    %vm2949 = vcmp.lt.s32.totalorder %v1325, 13
    %vm2950 = vcmp.lt.s32.totalorder %v1326, 13
    %vm2951 = vcmp.lt.s32.totalorder %v1327, 13
    %vm2952 = vcmp.lt.s32.totalorder %v1328, 13
    %vm2953 = vcmp.lt.s32.totalorder %v1329, 13
    %vm2954 = vcmp.lt.s32.totalorder %v1330, 13
    %vm2955 = vcmp.lt.s32.totalorder %v1331, 13
    %vm2956 = vcmp.lt.s32.totalorder %v1332, 13
    %vm2957 = vcmp.lt.s32.totalorder %v1333, 13
    %vm2958 = vcmp.lt.s32.totalorder %v1334, 13
    %vm2959 = vcmp.lt.s32.totalorder %v1335, 13
    %vm2960 = vcmp.lt.s32.totalorder %v1336, 13
    %vm2961 = vcmp.lt.s32.totalorder %v1337, 13
    %vm2962 = vcmp.lt.s32.totalorder %v1338, 13
    %vm2963 = vcmp.lt.s32.totalorder %v1339, 13
    %vm2964 = vcmp.lt.s32.totalorder %v1340, 13
    %vm2965 = vcmp.lt.s32.totalorder %v1341, 13
    %vm2966 = vcmp.lt.s32.totalorder %v1342, 13
    %vm2967 = vcmp.lt.s32.totalorder %v1343, 13
    %vm2968 = vcmp.lt.s32.totalorder %v1344, 13
    %vm2969 = vcmp.lt.s32.totalorder %v1345, 13
    %vm2970 = vcmp.lt.s32.totalorder %v1346, 13
    %vm2971 = vcmp.lt.s32.totalorder %v1347, 13
    %vm2972 = vcmp.lt.s32.totalorder %v1348, 13
    %vm2973 = vcmp.lt.s32.totalorder %v1349, 13
    %vm2974 = vcmp.lt.s32.totalorder %v1350, 13
    %vm2975 = vcmp.lt.s32.totalorder %v1351, 13
    %vm2976 = vcmp.lt.s32.totalorder %v1352, 13
    %vm2977 = vcmp.lt.s32.totalorder %v1353, 13
    %vm2978 = vcmp.lt.s32.totalorder %v1354, 13
    %vm2979 = vcmp.lt.s32.totalorder %v1355, 13
    %vm2980 = vcmp.lt.s32.totalorder %v1356, 13
    %vm2981 = vcmp.lt.s32.totalorder %v1357, 13
    %vm2982 = vcmp.lt.s32.totalorder %v1358, 13
    %vm2983 = vcmp.lt.s32.totalorder %v1359, 13
    %vm2984 = vcmp.lt.s32.totalorder %v1360, 13
    %vm2985 = vcmp.lt.s32.totalorder %v1361, 13
    %vm2986 = vcmp.lt.s32.totalorder %v1362, 13
    %vm2987 = vcmp.lt.s32.totalorder %v1363, 13
    %vm2988 = vcmp.lt.s32.totalorder %v1364, 13
    %vm2989 = vcmp.lt.s32.totalorder %v1365, 13
    %vm2990 = vcmp.lt.s32.totalorder %v1366, 13
    %vm2991 = vcmp.lt.s32.totalorder %v1367, 13
    %vm2992 = vcmp.lt.s32.totalorder %v1368, 13
    %vm2993 = vcmp.lt.s32.totalorder %v1369, 13
    %vm2994 = vcmp.lt.s32.totalorder %v1370, 13
    %vm2995 = vcmp.lt.s32.totalorder %v1371, 13
    %vm2996 = vcmp.lt.s32.totalorder %v1372, 13
    %vm2997 = vcmp.lt.s32.totalorder %v1373, 13
    %vm2998 = vcmp.lt.s32.totalorder %v1374, 13
    %vm2999 = vcmp.lt.s32.totalorder %v1375, 13
    %s3000 = sld [smem:[#allocation2 + $0xc]]
    %s3001 = sld [smem:[#allocation2 + $0xd]]
    %v3002 = vstv %s3000
    %v3003 = vstv %s3001
    %v3004 = vsel %vm2936, %v3002, %v3003
    %v3005 = vsel %vm2937, %v3002, %v3003
    %v3006 = vsel %vm2938, %v3002, %v3003
    %v3007 = vsel %vm2939, %v3002, %v3003
    %v3008 = vsel %vm2940, %v3002, %v3003
    %v3009 = vsel %vm2941, %v3002, %v3003
    %v3010 = vsel %vm2942, %v3002, %v3003
    %v3011 = vsel %vm2943, %v3002, %v3003
    %v3012 = vsel %vm2944, %v3002, %v3003
    %v3013 = vsel %vm2945, %v3002, %v3003
    %v3014 = vsel %vm2946, %v3002, %v3003
    %v3015 = vsel %vm2947, %v3002, %v3003
    %v3016 = vsel %vm2948, %v3002, %v3003
    %v3017 = vsel %vm2949, %v3002, %v3003
    %v3018 = vsel %vm2950, %v3002, %v3003
    %v3019 = vsel %vm2951, %v3002, %v3003
    %v3020 = vsel %vm2952, %v3002, %v3003
    %v3021 = vsel %vm2953, %v3002, %v3003
    %v3022 = vsel %vm2954, %v3002, %v3003
    %v3023 = vsel %vm2955, %v3002, %v3003
    %v3024 = vsel %vm2956, %v3002, %v3003
    %v3025 = vsel %vm2957, %v3002, %v3003
    %v3026 = vsel %vm2958, %v3002, %v3003
    %v3027 = vsel %vm2959, %v3002, %v3003
    %v3028 = vsel %vm2960, %v3002, %v3003
    %v3029 = vsel %vm2961, %v3002, %v3003
    %v3030 = vsel %vm2962, %v3002, %v3003
    %v3031 = vsel %vm2963, %v3002, %v3003
    %v3032 = vsel %vm2964, %v3002, %v3003
    %v3033 = vsel %vm2965, %v3002, %v3003
    %v3034 = vsel %vm2966, %v3002, %v3003
    %v3035 = vsel %vm2967, %v3002, %v3003
    %v3036 = vsel %vm2968, %v3002, %v3003
    %v3037 = vsel %vm2969, %v3002, %v3003
    %v3038 = vsel %vm2970, %v3002, %v3003
    %v3039 = vsel %vm2971, %v3002, %v3003
    %v3040 = vsel %vm2972, %v3002, %v3003
    %v3041 = vsel %vm2973, %v3002, %v3003
    %v3042 = vsel %vm2974, %v3002, %v3003
    %v3043 = vsel %vm2975, %v3002, %v3003
    %v3044 = vsel %vm2976, %v3002, %v3003
    %v3045 = vsel %vm2977, %v3002, %v3003
    %v3046 = vsel %vm2978, %v3002, %v3003
    %v3047 = vsel %vm2979, %v3002, %v3003
    %v3048 = vsel %vm2980, %v3002, %v3003
    %v3049 = vsel %vm2981, %v3002, %v3003
    %v3050 = vsel %vm2982, %v3002, %v3003
    %v3051 = vsel %vm2983, %v3002, %v3003
    %v3052 = vsel %vm2984, %v3002, %v3003
    %v3053 = vsel %vm2985, %v3002, %v3003
    %v3054 = vsel %vm2986, %v3002, %v3003
    %v3055 = vsel %vm2987, %v3002, %v3003
    %v3056 = vsel %vm2988, %v3002, %v3003
    %v3057 = vsel %vm2989, %v3002, %v3003
    %v3058 = vsel %vm2990, %v3002, %v3003
    %v3059 = vsel %vm2991, %v3002, %v3003
    %v3060 = vsel %vm2992, %v3002, %v3003
    %v3061 = vsel %vm2993, %v3002, %v3003
    %v3062 = vsel %vm2994, %v3002, %v3003
    %v3063 = vsel %vm2995, %v3002, %v3003
    %v3064 = vsel %vm2996, %v3002, %v3003
    %v3065 = vsel %vm2997, %v3002, %v3003
    %v3066 = vsel %vm2998, %v3002, %v3003
    %v3067 = vsel %vm2999, %v3002, %v3003
    %vm3068 = vcmp.lt.s32.totalorder %v1312, 15
    %vm3069 = vcmp.lt.s32.totalorder %v1313, 15
    %vm3070 = vcmp.lt.s32.totalorder %v1314, 15
    %vm3071 = vcmp.lt.s32.totalorder %v1315, 15
    %vm3072 = vcmp.lt.s32.totalorder %v1316, 15
    %vm3073 = vcmp.lt.s32.totalorder %v1317, 15
    %vm3074 = vcmp.lt.s32.totalorder %v1318, 15
    %vm3075 = vcmp.lt.s32.totalorder %v1319, 15
    %vm3076 = vcmp.lt.s32.totalorder %v1320, 15
    %vm3077 = vcmp.lt.s32.totalorder %v1321, 15
    %vm3078 = vcmp.lt.s32.totalorder %v1322, 15
    %vm3079 = vcmp.lt.s32.totalorder %v1323, 15
    %vm3080 = vcmp.lt.s32.totalorder %v1324, 15
    %vm3081 = vcmp.lt.s32.totalorder %v1325, 15
    %vm3082 = vcmp.lt.s32.totalorder %v1326, 15
    %vm3083 = vcmp.lt.s32.totalorder %v1327, 15
    %vm3084 = vcmp.lt.s32.totalorder %v1328, 15
    %vm3085 = vcmp.lt.s32.totalorder %v1329, 15
    %vm3086 = vcmp.lt.s32.totalorder %v1330, 15
    %vm3087 = vcmp.lt.s32.totalorder %v1331, 15
    %vm3088 = vcmp.lt.s32.totalorder %v1332, 15
    %vm3089 = vcmp.lt.s32.totalorder %v1333, 15
    %vm3090 = vcmp.lt.s32.totalorder %v1334, 15
    %vm3091 = vcmp.lt.s32.totalorder %v1335, 15
    %vm3092 = vcmp.lt.s32.totalorder %v1336, 15
    %vm3093 = vcmp.lt.s32.totalorder %v1337, 15
    %vm3094 = vcmp.lt.s32.totalorder %v1338, 15
    %vm3095 = vcmp.lt.s32.totalorder %v1339, 15
    %vm3096 = vcmp.lt.s32.totalorder %v1340, 15
    %vm3097 = vcmp.lt.s32.totalorder %v1341, 15
    %vm3098 = vcmp.lt.s32.totalorder %v1342, 15
    %vm3099 = vcmp.lt.s32.totalorder %v1343, 15
    %vm3100 = vcmp.lt.s32.totalorder %v1344, 15
    %vm3101 = vcmp.lt.s32.totalorder %v1345, 15
    %vm3102 = vcmp.lt.s32.totalorder %v1346, 15
    %vm3103 = vcmp.lt.s32.totalorder %v1347, 15
    %vm3104 = vcmp.lt.s32.totalorder %v1348, 15
    %vm3105 = vcmp.lt.s32.totalorder %v1349, 15
    %vm3106 = vcmp.lt.s32.totalorder %v1350, 15
    %vm3107 = vcmp.lt.s32.totalorder %v1351, 15
    %vm3108 = vcmp.lt.s32.totalorder %v1352, 15
    %vm3109 = vcmp.lt.s32.totalorder %v1353, 15
    %vm3110 = vcmp.lt.s32.totalorder %v1354, 15
    %vm3111 = vcmp.lt.s32.totalorder %v1355, 15
    %vm3112 = vcmp.lt.s32.totalorder %v1356, 15
    %vm3113 = vcmp.lt.s32.totalorder %v1357, 15
    %vm3114 = vcmp.lt.s32.totalorder %v1358, 15
    %vm3115 = vcmp.lt.s32.totalorder %v1359, 15
    %vm3116 = vcmp.lt.s32.totalorder %v1360, 15
    %vm3117 = vcmp.lt.s32.totalorder %v1361, 15
    %vm3118 = vcmp.lt.s32.totalorder %v1362, 15
    %vm3119 = vcmp.lt.s32.totalorder %v1363, 15
    %vm3120 = vcmp.lt.s32.totalorder %v1364, 15
    %vm3121 = vcmp.lt.s32.totalorder %v1365, 15
    %vm3122 = vcmp.lt.s32.totalorder %v1366, 15
    %vm3123 = vcmp.lt.s32.totalorder %v1367, 15
    %vm3124 = vcmp.lt.s32.totalorder %v1368, 15
    %vm3125 = vcmp.lt.s32.totalorder %v1369, 15
    %vm3126 = vcmp.lt.s32.totalorder %v1370, 15
    %vm3127 = vcmp.lt.s32.totalorder %v1371, 15
    %vm3128 = vcmp.lt.s32.totalorder %v1372, 15
    %vm3129 = vcmp.lt.s32.totalorder %v1373, 15
    %vm3130 = vcmp.lt.s32.totalorder %v1374, 15
    %vm3131 = vcmp.lt.s32.totalorder %v1375, 15
    %s3132 = sld [smem:[#allocation2 + $0xe]]
    %s3133 = sld [smem:[#allocation2 + $0xf]]
    %v3134 = vstv %s3132
    %v3135 = vstv %s3133
    %v3136 = vsel %vm3068, %v3134, %v3135
    %v3137 = vsel %vm3069, %v3134, %v3135
    %v3138 = vsel %vm3070, %v3134, %v3135
    %v3139 = vsel %vm3071, %v3134, %v3135
    %v3140 = vsel %vm3072, %v3134, %v3135
    %v3141 = vsel %vm3073, %v3134, %v3135
    %v3142 = vsel %vm3074, %v3134, %v3135
    %v3143 = vsel %vm3075, %v3134, %v3135
    %v3144 = vsel %vm3076, %v3134, %v3135
    %v3145 = vsel %vm3077, %v3134, %v3135
    %v3146 = vsel %vm3078, %v3134, %v3135
    %v3147 = vsel %vm3079, %v3134, %v3135
    %v3148 = vsel %vm3080, %v3134, %v3135
    %v3149 = vsel %vm3081, %v3134, %v3135
    %v3150 = vsel %vm3082, %v3134, %v3135
    %v3151 = vsel %vm3083, %v3134, %v3135
    %v3152 = vsel %vm3084, %v3134, %v3135
    %v3153 = vsel %vm3085, %v3134, %v3135
    %v3154 = vsel %vm3086, %v3134, %v3135
    %v3155 = vsel %vm3087, %v3134, %v3135
    %v3156 = vsel %vm3088, %v3134, %v3135
    %v3157 = vsel %vm3089, %v3134, %v3135
    %v3158 = vsel %vm3090, %v3134, %v3135
    %v3159 = vsel %vm3091, %v3134, %v3135
    %v3160 = vsel %vm3092, %v3134, %v3135
    %v3161 = vsel %vm3093, %v3134, %v3135
    %v3162 = vsel %vm3094, %v3134, %v3135
    %v3163 = vsel %vm3095, %v3134, %v3135
    %v3164 = vsel %vm3096, %v3134, %v3135
    %v3165 = vsel %vm3097, %v3134, %v3135
    %v3166 = vsel %vm3098, %v3134, %v3135
    %v3167 = vsel %vm3099, %v3134, %v3135
    %v3168 = vsel %vm3100, %v3134, %v3135
    %v3169 = vsel %vm3101, %v3134, %v3135
    %v3170 = vsel %vm3102, %v3134, %v3135
    %v3171 = vsel %vm3103, %v3134, %v3135
    %v3172 = vsel %vm3104, %v3134, %v3135
    %v3173 = vsel %vm3105, %v3134, %v3135
    %v3174 = vsel %vm3106, %v3134, %v3135
    %v3175 = vsel %vm3107, %v3134, %v3135
    %v3176 = vsel %vm3108, %v3134, %v3135
    %v3177 = vsel %vm3109, %v3134, %v3135
    %v3178 = vsel %vm3110, %v3134, %v3135
    %v3179 = vsel %vm3111, %v3134, %v3135
    %v3180 = vsel %vm3112, %v3134, %v3135
    %v3181 = vsel %vm3113, %v3134, %v3135
    %v3182 = vsel %vm3114, %v3134, %v3135
    %v3183 = vsel %vm3115, %v3134, %v3135
    %v3184 = vsel %vm3116, %v3134, %v3135
    %v3185 = vsel %vm3117, %v3134, %v3135
    %v3186 = vsel %vm3118, %v3134, %v3135
    %v3187 = vsel %vm3119, %v3134, %v3135
    %v3188 = vsel %vm3120, %v3134, %v3135
    %v3189 = vsel %vm3121, %v3134, %v3135
    %v3190 = vsel %vm3122, %v3134, %v3135
    %v3191 = vsel %vm3123, %v3134, %v3135
    %v3192 = vsel %vm3124, %v3134, %v3135
    %v3193 = vsel %vm3125, %v3134, %v3135
    %v3194 = vsel %vm3126, %v3134, %v3135
    %v3195 = vsel %vm3127, %v3134, %v3135
    %v3196 = vsel %vm3128, %v3134, %v3135
    %v3197 = vsel %vm3129, %v3134, %v3135
    %v3198 = vsel %vm3130, %v3134, %v3135
    %v3199 = vsel %vm3131, %v3134, %v3135
    %v3200 = vsel %vm2872, %v3004, %v3136
    %v3201 = vsel %vm2873, %v3005, %v3137
    %v3202 = vsel %vm2874, %v3006, %v3138
    %v3203 = vsel %vm2875, %v3007, %v3139
    %v3204 = vsel %vm2876, %v3008, %v3140
    %v3205 = vsel %vm2877, %v3009, %v3141
    %v3206 = vsel %vm2878, %v3010, %v3142
    %v3207 = vsel %vm2879, %v3011, %v3143
    %v3208 = vsel %vm2880, %v3012, %v3144
    %v3209 = vsel %vm2881, %v3013, %v3145
    %v3210 = vsel %vm2882, %v3014, %v3146
    %v3211 = vsel %vm2883, %v3015, %v3147
    %v3212 = vsel %vm2884, %v3016, %v3148
    %v3213 = vsel %vm2885, %v3017, %v3149
    %v3214 = vsel %vm2886, %v3018, %v3150
    %v3215 = vsel %vm2887, %v3019, %v3151
    %v3216 = vsel %vm2888, %v3020, %v3152
    %v3217 = vsel %vm2889, %v3021, %v3153
    %v3218 = vsel %vm2890, %v3022, %v3154
    %v3219 = vsel %vm2891, %v3023, %v3155
    %v3220 = vsel %vm2892, %v3024, %v3156
    %v3221 = vsel %vm2893, %v3025, %v3157
    %v3222 = vsel %vm2894, %v3026, %v3158
    %v3223 = vsel %vm2895, %v3027, %v3159
    %v3224 = vsel %vm2896, %v3028, %v3160
    %v3225 = vsel %vm2897, %v3029, %v3161
    %v3226 = vsel %vm2898, %v3030, %v3162
    %v3227 = vsel %vm2899, %v3031, %v3163
    %v3228 = vsel %vm2900, %v3032, %v3164
    %v3229 = vsel %vm2901, %v3033, %v3165
    %v3230 = vsel %vm2902, %v3034, %v3166
    %v3231 = vsel %vm2903, %v3035, %v3167
    %v3232 = vsel %vm2904, %v3036, %v3168
    %v3233 = vsel %vm2905, %v3037, %v3169
    %v3234 = vsel %vm2906, %v3038, %v3170
    %v3235 = vsel %vm2907, %v3039, %v3171
    %v3236 = vsel %vm2908, %v3040, %v3172
    %v3237 = vsel %vm2909, %v3041, %v3173
    %v3238 = vsel %vm2910, %v3042, %v3174
    %v3239 = vsel %vm2911, %v3043, %v3175
    %v3240 = vsel %vm2912, %v3044, %v3176
    %v3241 = vsel %vm2913, %v3045, %v3177
    %v3242 = vsel %vm2914, %v3046, %v3178
    %v3243 = vsel %vm2915, %v3047, %v3179
    %v3244 = vsel %vm2916, %v3048, %v3180
    %v3245 = vsel %vm2917, %v3049, %v3181
    %v3246 = vsel %vm2918, %v3050, %v3182
    %v3247 = vsel %vm2919, %v3051, %v3183
    %v3248 = vsel %vm2920, %v3052, %v3184
    %v3249 = vsel %vm2921, %v3053, %v3185
    %v3250 = vsel %vm2922, %v3054, %v3186
    %v3251 = vsel %vm2923, %v3055, %v3187
    %v3252 = vsel %vm2924, %v3056, %v3188
    %v3253 = vsel %vm2925, %v3057, %v3189
    %v3254 = vsel %vm2926, %v3058, %v3190
    %v3255 = vsel %vm2927, %v3059, %v3191
    %v3256 = vsel %vm2928, %v3060, %v3192
    %v3257 = vsel %vm2929, %v3061, %v3193
    %v3258 = vsel %vm2930, %v3062, %v3194
    %v3259 = vsel %vm2931, %v3063, %v3195
    %v3260 = vsel %vm2932, %v3064, %v3196
    %v3261 = vsel %vm2933, %v3065, %v3197
    %v3262 = vsel %vm2934, %v3066, %v3198
    %v3263 = vsel %vm2935, %v3067, %v3199
    %v3264 = vsel %vm2416, %v2808, %v3200
    %v3265 = vsel %vm2417, %v2809, %v3201
    %v3266 = vsel %vm2418, %v2810, %v3202
    %v3267 = vsel %vm2419, %v2811, %v3203
    %v3268 = vsel %vm2420, %v2812, %v3204
    %v3269 = vsel %vm2421, %v2813, %v3205
    %v3270 = vsel %vm2422, %v2814, %v3206
    %v3271 = vsel %vm2423, %v2815, %v3207
    %v3272 = vsel %vm2424, %v2816, %v3208
    %v3273 = vsel %vm2425, %v2817, %v3209
    %v3274 = vsel %vm2426, %v2818, %v3210
    %v3275 = vsel %vm2427, %v2819, %v3211
    %v3276 = vsel %vm2428, %v2820, %v3212
    %v3277 = vsel %vm2429, %v2821, %v3213
    %v3278 = vsel %vm2430, %v2822, %v3214
    %v3279 = vsel %vm2431, %v2823, %v3215
    %v3280 = vsel %vm2432, %v2824, %v3216
    %v3281 = vsel %vm2433, %v2825, %v3217
    %v3282 = vsel %vm2434, %v2826, %v3218
    %v3283 = vsel %vm2435, %v2827, %v3219
    %v3284 = vsel %vm2436, %v2828, %v3220
    %v3285 = vsel %vm2437, %v2829, %v3221
    %v3286 = vsel %vm2438, %v2830, %v3222
    %v3287 = vsel %vm2439, %v2831, %v3223
    %v3288 = vsel %vm2440, %v2832, %v3224
    %v3289 = vsel %vm2441, %v2833, %v3225
    %v3290 = vsel %vm2442, %v2834, %v3226
    %v3291 = vsel %vm2443, %v2835, %v3227
    %v3292 = vsel %vm2444, %v2836, %v3228
    %v3293 = vsel %vm2445, %v2837, %v3229
    %v3294 = vsel %vm2446, %v2838, %v3230
    %v3295 = vsel %vm2447, %v2839, %v3231
    %v3296 = vsel %vm2448, %v2840, %v3232
    %v3297 = vsel %vm2449, %v2841, %v3233
    %v3298 = vsel %vm2450, %v2842, %v3234
    %v3299 = vsel %vm2451, %v2843, %v3235
    %v3300 = vsel %vm2452, %v2844, %v3236
    %v3301 = vsel %vm2453, %v2845, %v3237
    %v3302 = vsel %vm2454, %v2846, %v3238
    %v3303 = vsel %vm2455, %v2847, %v3239
    %v3304 = vsel %vm2456, %v2848, %v3240
    %v3305 = vsel %vm2457, %v2849, %v3241
    %v3306 = vsel %vm2458, %v2850, %v3242
    %v3307 = vsel %vm2459, %v2851, %v3243
    %v3308 = vsel %vm2460, %v2852, %v3244
    %v3309 = vsel %vm2461, %v2853, %v3245
    %v3310 = vsel %vm2462, %v2854, %v3246
    %v3311 = vsel %vm2463, %v2855, %v3247
    %v3312 = vsel %vm2464, %v2856, %v3248
    %v3313 = vsel %vm2465, %v2857, %v3249
    %v3314 = vsel %vm2466, %v2858, %v3250
    %v3315 = vsel %vm2467, %v2859, %v3251
    %v3316 = vsel %vm2468, %v2860, %v3252
    %v3317 = vsel %vm2469, %v2861, %v3253
    %v3318 = vsel %vm2470, %v2862, %v3254
    %v3319 = vsel %vm2471, %v2863, %v3255
    %v3320 = vsel %vm2472, %v2864, %v3256
    %v3321 = vsel %vm2473, %v2865, %v3257
    %v3322 = vsel %vm2474, %v2866, %v3258
    %v3323 = vsel %vm2475, %v2867, %v3259
    %v3324 = vsel %vm2476, %v2868, %v3260
    %v3325 = vsel %vm2477, %v2869, %v3261
    %v3326 = vsel %vm2478, %v2870, %v3262
    %v3327 = vsel %vm2479, %v2871, %v3263
    %v3328 = vsel %vm1440, %v2352, %v3264
    %v3329 = vsel %vm1441, %v2353, %v3265
    %v3330 = vsel %vm1442, %v2354, %v3266
    %v3331 = vsel %vm1443, %v2355, %v3267
    %v3332 = vsel %vm1444, %v2356, %v3268
    %v3333 = vsel %vm1445, %v2357, %v3269
    %v3334 = vsel %vm1446, %v2358, %v3270
    %v3335 = vsel %vm1447, %v2359, %v3271
    %v3336 = vsel %vm1448, %v2360, %v3272
    %v3337 = vsel %vm1449, %v2361, %v3273
    %v3338 = vsel %vm1450, %v2362, %v3274
    %v3339 = vsel %vm1451, %v2363, %v3275
    %v3340 = vsel %vm1452, %v2364, %v3276
    %v3341 = vsel %vm1453, %v2365, %v3277
    %v3342 = vsel %vm1454, %v2366, %v3278
    %v3343 = vsel %vm1455, %v2367, %v3279
    %v3344 = vsel %vm1456, %v2368, %v3280
    %v3345 = vsel %vm1457, %v2369, %v3281
    %v3346 = vsel %vm1458, %v2370, %v3282
    %v3347 = vsel %vm1459, %v2371, %v3283
    %v3348 = vsel %vm1460, %v2372, %v3284
    %v3349 = vsel %vm1461, %v2373, %v3285
    %v3350 = vsel %vm1462, %v2374, %v3286
    %v3351 = vsel %vm1463, %v2375, %v3287
    %v3352 = vsel %vm1464, %v2376, %v3288
    %v3353 = vsel %vm1465, %v2377, %v3289
    %v3354 = vsel %vm1466, %v2378, %v3290
    %v3355 = vsel %vm1467, %v2379, %v3291
    %v3356 = vsel %vm1468, %v2380, %v3292
    %v3357 = vsel %vm1469, %v2381, %v3293
    %v3358 = vsel %vm1470, %v2382, %v3294
    %v3359 = vsel %vm1471, %v2383, %v3295
    %v3360 = vsel %vm1472, %v2384, %v3296
    %v3361 = vsel %vm1473, %v2385, %v3297
    %v3362 = vsel %vm1474, %v2386, %v3298
    %v3363 = vsel %vm1475, %v2387, %v3299
    %v3364 = vsel %vm1476, %v2388, %v3300
    %v3365 = vsel %vm1477, %v2389, %v3301
    %v3366 = vsel %vm1478, %v2390, %v3302
    %v3367 = vsel %vm1479, %v2391, %v3303
    %v3368 = vsel %vm1480, %v2392, %v3304
    %v3369 = vsel %vm1481, %v2393, %v3305
    %v3370 = vsel %vm1482, %v2394, %v3306
    %v3371 = vsel %vm1483, %v2395, %v3307
    %v3372 = vsel %vm1484, %v2396, %v3308
    %v3373 = vsel %vm1485, %v2397, %v3309
    %v3374 = vsel %vm1486, %v2398, %v3310
    %v3375 = vsel %vm1487, %v2399, %v3311
    %v3376 = vsel %vm1488, %v2400, %v3312
    %v3377 = vsel %vm1489, %v2401, %v3313
    %v3378 = vsel %vm1490, %v2402, %v3314
    %v3379 = vsel %vm1491, %v2403, %v3315
    %v3380 = vsel %vm1492, %v2404, %v3316
    %v3381 = vsel %vm1493, %v2405, %v3317
    %v3382 = vsel %vm1494, %v2406, %v3318
    %v3383 = vsel %vm1495, %v2407, %v3319
    %v3384 = vsel %vm1496, %v2408, %v3320
    %v3385 = vsel %vm1497, %v2409, %v3321
    %v3386 = vsel %vm1498, %v2410, %v3322
    %v3387 = vsel %vm1499, %v2411, %v3323
    %v3388 = vsel %vm1500, %v2412, %v3324
    %v3389 = vsel %vm1501, %v2413, %v3325
    %v3390 = vsel %vm1502, %v2414, %v3326
    %v3391 = vsel %vm1503, %v2415, %v3327
    %vm3392 = vcmp.lt.s32.totalorder %v1312, 24
    %vm3393 = vcmp.lt.s32.totalorder %v1313, 24
    %vm3394 = vcmp.lt.s32.totalorder %v1314, 24
    %vm3395 = vcmp.lt.s32.totalorder %v1315, 24
    %vm3396 = vcmp.lt.s32.totalorder %v1316, 24
    %vm3397 = vcmp.lt.s32.totalorder %v1317, 24
    %vm3398 = vcmp.lt.s32.totalorder %v1318, 24
    %vm3399 = vcmp.lt.s32.totalorder %v1319, 24
    %vm3400 = vcmp.lt.s32.totalorder %v1320, 24
    %vm3401 = vcmp.lt.s32.totalorder %v1321, 24
    %vm3402 = vcmp.lt.s32.totalorder %v1322, 24
    %vm3403 = vcmp.lt.s32.totalorder %v1323, 24
    %vm3404 = vcmp.lt.s32.totalorder %v1324, 24
    %vm3405 = vcmp.lt.s32.totalorder %v1325, 24
    %vm3406 = vcmp.lt.s32.totalorder %v1326, 24
    %vm3407 = vcmp.lt.s32.totalorder %v1327, 24
    %vm3408 = vcmp.lt.s32.totalorder %v1328, 24
    %vm3409 = vcmp.lt.s32.totalorder %v1329, 24
    %vm3410 = vcmp.lt.s32.totalorder %v1330, 24
    %vm3411 = vcmp.lt.s32.totalorder %v1331, 24
    %vm3412 = vcmp.lt.s32.totalorder %v1332, 24
    %vm3413 = vcmp.lt.s32.totalorder %v1333, 24
    %vm3414 = vcmp.lt.s32.totalorder %v1334, 24
    %vm3415 = vcmp.lt.s32.totalorder %v1335, 24
    %vm3416 = vcmp.lt.s32.totalorder %v1336, 24
    %vm3417 = vcmp.lt.s32.totalorder %v1337, 24
    %vm3418 = vcmp.lt.s32.totalorder %v1338, 24
    %vm3419 = vcmp.lt.s32.totalorder %v1339, 24
    %vm3420 = vcmp.lt.s32.totalorder %v1340, 24
    %vm3421 = vcmp.lt.s32.totalorder %v1341, 24
    %vm3422 = vcmp.lt.s32.totalorder %v1342, 24
    %vm3423 = vcmp.lt.s32.totalorder %v1343, 24
    %vm3424 = vcmp.lt.s32.totalorder %v1344, 24
    %vm3425 = vcmp.lt.s32.totalorder %v1345, 24
    %vm3426 = vcmp.lt.s32.totalorder %v1346, 24
    %vm3427 = vcmp.lt.s32.totalorder %v1347, 24
    %vm3428 = vcmp.lt.s32.totalorder %v1348, 24
    %vm3429 = vcmp.lt.s32.totalorder %v1349, 24
    %vm3430 = vcmp.lt.s32.totalorder %v1350, 24
    %vm3431 = vcmp.lt.s32.totalorder %v1351, 24
    %vm3432 = vcmp.lt.s32.totalorder %v1352, 24
    %vm3433 = vcmp.lt.s32.totalorder %v1353, 24
    %vm3434 = vcmp.lt.s32.totalorder %v1354, 24
    %vm3435 = vcmp.lt.s32.totalorder %v1355, 24
    %vm3436 = vcmp.lt.s32.totalorder %v1356, 24
    %vm3437 = vcmp.lt.s32.totalorder %v1357, 24
    %vm3438 = vcmp.lt.s32.totalorder %v1358, 24
    %vm3439 = vcmp.lt.s32.totalorder %v1359, 24
    %vm3440 = vcmp.lt.s32.totalorder %v1360, 24
    %vm3441 = vcmp.lt.s32.totalorder %v1361, 24
    %vm3442 = vcmp.lt.s32.totalorder %v1362, 24
    %vm3443 = vcmp.lt.s32.totalorder %v1363, 24
    %vm3444 = vcmp.lt.s32.totalorder %v1364, 24
    %vm3445 = vcmp.lt.s32.totalorder %v1365, 24
    %vm3446 = vcmp.lt.s32.totalorder %v1366, 24
    %vm3447 = vcmp.lt.s32.totalorder %v1367, 24
    %vm3448 = vcmp.lt.s32.totalorder %v1368, 24
    %vm3449 = vcmp.lt.s32.totalorder %v1369, 24
    %vm3450 = vcmp.lt.s32.totalorder %v1370, 24
    %vm3451 = vcmp.lt.s32.totalorder %v1371, 24
    %vm3452 = vcmp.lt.s32.totalorder %v1372, 24
    %vm3453 = vcmp.lt.s32.totalorder %v1373, 24
    %vm3454 = vcmp.lt.s32.totalorder %v1374, 24
    %vm3455 = vcmp.lt.s32.totalorder %v1375, 24
    %vm3456 = vcmp.lt.s32.totalorder %v1312, 20
    %vm3457 = vcmp.lt.s32.totalorder %v1313, 20
    %vm3458 = vcmp.lt.s32.totalorder %v1314, 20
    %vm3459 = vcmp.lt.s32.totalorder %v1315, 20
    %vm3460 = vcmp.lt.s32.totalorder %v1316, 20
    %vm3461 = vcmp.lt.s32.totalorder %v1317, 20
    %vm3462 = vcmp.lt.s32.totalorder %v1318, 20
    %vm3463 = vcmp.lt.s32.totalorder %v1319, 20
    %vm3464 = vcmp.lt.s32.totalorder %v1320, 20
    %vm3465 = vcmp.lt.s32.totalorder %v1321, 20
    %vm3466 = vcmp.lt.s32.totalorder %v1322, 20
    %vm3467 = vcmp.lt.s32.totalorder %v1323, 20
    %vm3468 = vcmp.lt.s32.totalorder %v1324, 20
    %vm3469 = vcmp.lt.s32.totalorder %v1325, 20
    %vm3470 = vcmp.lt.s32.totalorder %v1326, 20
    %vm3471 = vcmp.lt.s32.totalorder %v1327, 20
    %vm3472 = vcmp.lt.s32.totalorder %v1328, 20
    %vm3473 = vcmp.lt.s32.totalorder %v1329, 20
    %vm3474 = vcmp.lt.s32.totalorder %v1330, 20
    %vm3475 = vcmp.lt.s32.totalorder %v1331, 20
    %vm3476 = vcmp.lt.s32.totalorder %v1332, 20
    %vm3477 = vcmp.lt.s32.totalorder %v1333, 20
    %vm3478 = vcmp.lt.s32.totalorder %v1334, 20
    %vm3479 = vcmp.lt.s32.totalorder %v1335, 20
    %vm3480 = vcmp.lt.s32.totalorder %v1336, 20
    %vm3481 = vcmp.lt.s32.totalorder %v1337, 20
    %vm3482 = vcmp.lt.s32.totalorder %v1338, 20
    %vm3483 = vcmp.lt.s32.totalorder %v1339, 20
    %vm3484 = vcmp.lt.s32.totalorder %v1340, 20
    %vm3485 = vcmp.lt.s32.totalorder %v1341, 20
    %vm3486 = vcmp.lt.s32.totalorder %v1342, 20
    %vm3487 = vcmp.lt.s32.totalorder %v1343, 20
    %vm3488 = vcmp.lt.s32.totalorder %v1344, 20
    %vm3489 = vcmp.lt.s32.totalorder %v1345, 20
    %vm3490 = vcmp.lt.s32.totalorder %v1346, 20
    %vm3491 = vcmp.lt.s32.totalorder %v1347, 20
    %vm3492 = vcmp.lt.s32.totalorder %v1348, 20
    %vm3493 = vcmp.lt.s32.totalorder %v1349, 20
    %vm3494 = vcmp.lt.s32.totalorder %v1350, 20
    %vm3495 = vcmp.lt.s32.totalorder %v1351, 20
    %vm3496 = vcmp.lt.s32.totalorder %v1352, 20
    %vm3497 = vcmp.lt.s32.totalorder %v1353, 20
    %vm3498 = vcmp.lt.s32.totalorder %v1354, 20
    %vm3499 = vcmp.lt.s32.totalorder %v1355, 20
    %vm3500 = vcmp.lt.s32.totalorder %v1356, 20
    %vm3501 = vcmp.lt.s32.totalorder %v1357, 20
    %vm3502 = vcmp.lt.s32.totalorder %v1358, 20
    %vm3503 = vcmp.lt.s32.totalorder %v1359, 20
    %vm3504 = vcmp.lt.s32.totalorder %v1360, 20
    %vm3505 = vcmp.lt.s32.totalorder %v1361, 20
    %vm3506 = vcmp.lt.s32.totalorder %v1362, 20
    %vm3507 = vcmp.lt.s32.totalorder %v1363, 20
    %vm3508 = vcmp.lt.s32.totalorder %v1364, 20
    %vm3509 = vcmp.lt.s32.totalorder %v1365, 20
    %vm3510 = vcmp.lt.s32.totalorder %v1366, 20
    %vm3511 = vcmp.lt.s32.totalorder %v1367, 20
    %vm3512 = vcmp.lt.s32.totalorder %v1368, 20
    %vm3513 = vcmp.lt.s32.totalorder %v1369, 20
    %vm3514 = vcmp.lt.s32.totalorder %v1370, 20
    %vm3515 = vcmp.lt.s32.totalorder %v1371, 20
    %vm3516 = vcmp.lt.s32.totalorder %v1372, 20
    %vm3517 = vcmp.lt.s32.totalorder %v1373, 20
    %vm3518 = vcmp.lt.s32.totalorder %v1374, 20
    %vm3519 = vcmp.lt.s32.totalorder %v1375, 20
    %vm3520 = vcmp.lt.s32.totalorder %v1312, 18
    %vm3521 = vcmp.lt.s32.totalorder %v1313, 18
    %vm3522 = vcmp.lt.s32.totalorder %v1314, 18
    %vm3523 = vcmp.lt.s32.totalorder %v1315, 18
    %vm3524 = vcmp.lt.s32.totalorder %v1316, 18
    %vm3525 = vcmp.lt.s32.totalorder %v1317, 18
    %vm3526 = vcmp.lt.s32.totalorder %v1318, 18
    %vm3527 = vcmp.lt.s32.totalorder %v1319, 18
    %vm3528 = vcmp.lt.s32.totalorder %v1320, 18
    %vm3529 = vcmp.lt.s32.totalorder %v1321, 18
    %vm3530 = vcmp.lt.s32.totalorder %v1322, 18
    %vm3531 = vcmp.lt.s32.totalorder %v1323, 18
    %vm3532 = vcmp.lt.s32.totalorder %v1324, 18
    %vm3533 = vcmp.lt.s32.totalorder %v1325, 18
    %vm3534 = vcmp.lt.s32.totalorder %v1326, 18
    %vm3535 = vcmp.lt.s32.totalorder %v1327, 18
    %vm3536 = vcmp.lt.s32.totalorder %v1328, 18
    %vm3537 = vcmp.lt.s32.totalorder %v1329, 18
    %vm3538 = vcmp.lt.s32.totalorder %v1330, 18
    %vm3539 = vcmp.lt.s32.totalorder %v1331, 18
    %vm3540 = vcmp.lt.s32.totalorder %v1332, 18
    %vm3541 = vcmp.lt.s32.totalorder %v1333, 18
    %vm3542 = vcmp.lt.s32.totalorder %v1334, 18
    %vm3543 = vcmp.lt.s32.totalorder %v1335, 18
    %vm3544 = vcmp.lt.s32.totalorder %v1336, 18
    %vm3545 = vcmp.lt.s32.totalorder %v1337, 18
    %vm3546 = vcmp.lt.s32.totalorder %v1338, 18
    %vm3547 = vcmp.lt.s32.totalorder %v1339, 18
    %vm3548 = vcmp.lt.s32.totalorder %v1340, 18
    %vm3549 = vcmp.lt.s32.totalorder %v1341, 18
    %vm3550 = vcmp.lt.s32.totalorder %v1342, 18
    %vm3551 = vcmp.lt.s32.totalorder %v1343, 18
    %vm3552 = vcmp.lt.s32.totalorder %v1344, 18
    %vm3553 = vcmp.lt.s32.totalorder %v1345, 18
    %vm3554 = vcmp.lt.s32.totalorder %v1346, 18
    %vm3555 = vcmp.lt.s32.totalorder %v1347, 18
    %vm3556 = vcmp.lt.s32.totalorder %v1348, 18
    %vm3557 = vcmp.lt.s32.totalorder %v1349, 18
    %vm3558 = vcmp.lt.s32.totalorder %v1350, 18
    %vm3559 = vcmp.lt.s32.totalorder %v1351, 18
    %vm3560 = vcmp.lt.s32.totalorder %v1352, 18
    %vm3561 = vcmp.lt.s32.totalorder %v1353, 18
    %vm3562 = vcmp.lt.s32.totalorder %v1354, 18
    %vm3563 = vcmp.lt.s32.totalorder %v1355, 18
    %vm3564 = vcmp.lt.s32.totalorder %v1356, 18
    %vm3565 = vcmp.lt.s32.totalorder %v1357, 18
    %vm3566 = vcmp.lt.s32.totalorder %v1358, 18
    %vm3567 = vcmp.lt.s32.totalorder %v1359, 18
    %vm3568 = vcmp.lt.s32.totalorder %v1360, 18
    %vm3569 = vcmp.lt.s32.totalorder %v1361, 18
    %vm3570 = vcmp.lt.s32.totalorder %v1362, 18
    %vm3571 = vcmp.lt.s32.totalorder %v1363, 18
    %vm3572 = vcmp.lt.s32.totalorder %v1364, 18
    %vm3573 = vcmp.lt.s32.totalorder %v1365, 18
    %vm3574 = vcmp.lt.s32.totalorder %v1366, 18
    %vm3575 = vcmp.lt.s32.totalorder %v1367, 18
    %vm3576 = vcmp.lt.s32.totalorder %v1368, 18
    %vm3577 = vcmp.lt.s32.totalorder %v1369, 18
    %vm3578 = vcmp.lt.s32.totalorder %v1370, 18
    %vm3579 = vcmp.lt.s32.totalorder %v1371, 18
    %vm3580 = vcmp.lt.s32.totalorder %v1372, 18
    %vm3581 = vcmp.lt.s32.totalorder %v1373, 18
    %vm3582 = vcmp.lt.s32.totalorder %v1374, 18
    %vm3583 = vcmp.lt.s32.totalorder %v1375, 18
    %vm3584 = vcmp.lt.s32.totalorder %v1312, 17
    %vm3585 = vcmp.lt.s32.totalorder %v1313, 17
    %vm3586 = vcmp.lt.s32.totalorder %v1314, 17
    %vm3587 = vcmp.lt.s32.totalorder %v1315, 17
    %vm3588 = vcmp.lt.s32.totalorder %v1316, 17
    %vm3589 = vcmp.lt.s32.totalorder %v1317, 17
    %vm3590 = vcmp.lt.s32.totalorder %v1318, 17
    %vm3591 = vcmp.lt.s32.totalorder %v1319, 17
    %vm3592 = vcmp.lt.s32.totalorder %v1320, 17
    %vm3593 = vcmp.lt.s32.totalorder %v1321, 17
    %vm3594 = vcmp.lt.s32.totalorder %v1322, 17
    %vm3595 = vcmp.lt.s32.totalorder %v1323, 17
    %vm3596 = vcmp.lt.s32.totalorder %v1324, 17
    %vm3597 = vcmp.lt.s32.totalorder %v1325, 17
    %vm3598 = vcmp.lt.s32.totalorder %v1326, 17
    %vm3599 = vcmp.lt.s32.totalorder %v1327, 17
    %vm3600 = vcmp.lt.s32.totalorder %v1328, 17
    %vm3601 = vcmp.lt.s32.totalorder %v1329, 17
    %vm3602 = vcmp.lt.s32.totalorder %v1330, 17
    %vm3603 = vcmp.lt.s32.totalorder %v1331, 17
    %vm3604 = vcmp.lt.s32.totalorder %v1332, 17
    %vm3605 = vcmp.lt.s32.totalorder %v1333, 17
    %vm3606 = vcmp.lt.s32.totalorder %v1334, 17
    %vm3607 = vcmp.lt.s32.totalorder %v1335, 17
    %vm3608 = vcmp.lt.s32.totalorder %v1336, 17
    %vm3609 = vcmp.lt.s32.totalorder %v1337, 17
    %vm3610 = vcmp.lt.s32.totalorder %v1338, 17
    %vm3611 = vcmp.lt.s32.totalorder %v1339, 17
    %vm3612 = vcmp.lt.s32.totalorder %v1340, 17
    %vm3613 = vcmp.lt.s32.totalorder %v1341, 17
    %vm3614 = vcmp.lt.s32.totalorder %v1342, 17
    %vm3615 = vcmp.lt.s32.totalorder %v1343, 17
    %vm3616 = vcmp.lt.s32.totalorder %v1344, 17
    %vm3617 = vcmp.lt.s32.totalorder %v1345, 17
    %vm3618 = vcmp.lt.s32.totalorder %v1346, 17
    %vm3619 = vcmp.lt.s32.totalorder %v1347, 17
    %vm3620 = vcmp.lt.s32.totalorder %v1348, 17
    %vm3621 = vcmp.lt.s32.totalorder %v1349, 17
    %vm3622 = vcmp.lt.s32.totalorder %v1350, 17
    %vm3623 = vcmp.lt.s32.totalorder %v1351, 17
    %vm3624 = vcmp.lt.s32.totalorder %v1352, 17
    %vm3625 = vcmp.lt.s32.totalorder %v1353, 17
    %vm3626 = vcmp.lt.s32.totalorder %v1354, 17
    %vm3627 = vcmp.lt.s32.totalorder %v1355, 17
    %vm3628 = vcmp.lt.s32.totalorder %v1356, 17
    %vm3629 = vcmp.lt.s32.totalorder %v1357, 17
    %vm3630 = vcmp.lt.s32.totalorder %v1358, 17
    %vm3631 = vcmp.lt.s32.totalorder %v1359, 17
    %vm3632 = vcmp.lt.s32.totalorder %v1360, 17
    %vm3633 = vcmp.lt.s32.totalorder %v1361, 17
    %vm3634 = vcmp.lt.s32.totalorder %v1362, 17
    %vm3635 = vcmp.lt.s32.totalorder %v1363, 17
    %vm3636 = vcmp.lt.s32.totalorder %v1364, 17
    %vm3637 = vcmp.lt.s32.totalorder %v1365, 17
    %vm3638 = vcmp.lt.s32.totalorder %v1366, 17
    %vm3639 = vcmp.lt.s32.totalorder %v1367, 17
    %vm3640 = vcmp.lt.s32.totalorder %v1368, 17
    %vm3641 = vcmp.lt.s32.totalorder %v1369, 17
    %vm3642 = vcmp.lt.s32.totalorder %v1370, 17
    %vm3643 = vcmp.lt.s32.totalorder %v1371, 17
    %vm3644 = vcmp.lt.s32.totalorder %v1372, 17
    %vm3645 = vcmp.lt.s32.totalorder %v1373, 17
    %vm3646 = vcmp.lt.s32.totalorder %v1374, 17
    %vm3647 = vcmp.lt.s32.totalorder %v1375, 17
    %s3648 = sld [smem:[#allocation2 + $0x10]]
    %s3649 = sld [smem:[#allocation2 + $0x11]]
    %v3650 = vstv %s3648
    %v3651 = vstv %s3649
    %v3652 = vsel %vm3584, %v3650, %v3651
    %v3653 = vsel %vm3585, %v3650, %v3651
    %v3654 = vsel %vm3586, %v3650, %v3651
    %v3655 = vsel %vm3587, %v3650, %v3651
    %v3656 = vsel %vm3588, %v3650, %v3651
    %v3657 = vsel %vm3589, %v3650, %v3651
    %v3658 = vsel %vm3590, %v3650, %v3651
    %v3659 = vsel %vm3591, %v3650, %v3651
    %v3660 = vsel %vm3592, %v3650, %v3651
    %v3661 = vsel %vm3593, %v3650, %v3651
    %v3662 = vsel %vm3594, %v3650, %v3651
    %v3663 = vsel %vm3595, %v3650, %v3651
    %v3664 = vsel %vm3596, %v3650, %v3651
    %v3665 = vsel %vm3597, %v3650, %v3651
    %v3666 = vsel %vm3598, %v3650, %v3651
    %v3667 = vsel %vm3599, %v3650, %v3651
    %v3668 = vsel %vm3600, %v3650, %v3651
    %v3669 = vsel %vm3601, %v3650, %v3651
    %v3670 = vsel %vm3602, %v3650, %v3651
    %v3671 = vsel %vm3603, %v3650, %v3651
    %v3672 = vsel %vm3604, %v3650, %v3651
    %v3673 = vsel %vm3605, %v3650, %v3651
    %v3674 = vsel %vm3606, %v3650, %v3651
    %v3675 = vsel %vm3607, %v3650, %v3651
    %v3676 = vsel %vm3608, %v3650, %v3651
    %v3677 = vsel %vm3609, %v3650, %v3651
    %v3678 = vsel %vm3610, %v3650, %v3651
    %v3679 = vsel %vm3611, %v3650, %v3651
    %v3680 = vsel %vm3612, %v3650, %v3651
    %v3681 = vsel %vm3613, %v3650, %v3651
    %v3682 = vsel %vm3614, %v3650, %v3651
    %v3683 = vsel %vm3615, %v3650, %v3651
    %v3684 = vsel %vm3616, %v3650, %v3651
    %v3685 = vsel %vm3617, %v3650, %v3651
    %v3686 = vsel %vm3618, %v3650, %v3651
    %v3687 = vsel %vm3619, %v3650, %v3651
    %v3688 = vsel %vm3620, %v3650, %v3651
    %v3689 = vsel %vm3621, %v3650, %v3651
    %v3690 = vsel %vm3622, %v3650, %v3651
    %v3691 = vsel %vm3623, %v3650, %v3651
    %v3692 = vsel %vm3624, %v3650, %v3651
    %v3693 = vsel %vm3625, %v3650, %v3651
    %v3694 = vsel %vm3626, %v3650, %v3651
    %v3695 = vsel %vm3627, %v3650, %v3651
    %v3696 = vsel %vm3628, %v3650, %v3651
    %v3697 = vsel %vm3629, %v3650, %v3651
    %v3698 = vsel %vm3630, %v3650, %v3651
    %v3699 = vsel %vm3631, %v3650, %v3651
    %v3700 = vsel %vm3632, %v3650, %v3651
    %v3701 = vsel %vm3633, %v3650, %v3651
    %v3702 = vsel %vm3634, %v3650, %v3651
    %v3703 = vsel %vm3635, %v3650, %v3651
    %v3704 = vsel %vm3636, %v3650, %v3651
    %v3705 = vsel %vm3637, %v3650, %v3651
    %v3706 = vsel %vm3638, %v3650, %v3651
    %v3707 = vsel %vm3639, %v3650, %v3651
    %v3708 = vsel %vm3640, %v3650, %v3651
    %v3709 = vsel %vm3641, %v3650, %v3651
    %v3710 = vsel %vm3642, %v3650, %v3651
    %v3711 = vsel %vm3643, %v3650, %v3651
    %v3712 = vsel %vm3644, %v3650, %v3651
    %v3713 = vsel %vm3645, %v3650, %v3651
    %v3714 = vsel %vm3646, %v3650, %v3651
    %v3715 = vsel %vm3647, %v3650, %v3651
    %vm3716 = vcmp.lt.s32.totalorder %v1312, 19
    %vm3717 = vcmp.lt.s32.totalorder %v1313, 19
    %vm3718 = vcmp.lt.s32.totalorder %v1314, 19
    %vm3719 = vcmp.lt.s32.totalorder %v1315, 19
    %vm3720 = vcmp.lt.s32.totalorder %v1316, 19
    %vm3721 = vcmp.lt.s32.totalorder %v1317, 19
    %vm3722 = vcmp.lt.s32.totalorder %v1318, 19
    %vm3723 = vcmp.lt.s32.totalorder %v1319, 19
    %vm3724 = vcmp.lt.s32.totalorder %v1320, 19
    %vm3725 = vcmp.lt.s32.totalorder %v1321, 19
    %vm3726 = vcmp.lt.s32.totalorder %v1322, 19
    %vm3727 = vcmp.lt.s32.totalorder %v1323, 19
    %vm3728 = vcmp.lt.s32.totalorder %v1324, 19
    %vm3729 = vcmp.lt.s32.totalorder %v1325, 19
    %vm3730 = vcmp.lt.s32.totalorder %v1326, 19
    %vm3731 = vcmp.lt.s32.totalorder %v1327, 19
    %vm3732 = vcmp.lt.s32.totalorder %v1328, 19
    %vm3733 = vcmp.lt.s32.totalorder %v1329, 19
    %vm3734 = vcmp.lt.s32.totalorder %v1330, 19
    %vm3735 = vcmp.lt.s32.totalorder %v1331, 19
    %vm3736 = vcmp.lt.s32.totalorder %v1332, 19
    %vm3737 = vcmp.lt.s32.totalorder %v1333, 19
    %vm3738 = vcmp.lt.s32.totalorder %v1334, 19
    %vm3739 = vcmp.lt.s32.totalorder %v1335, 19
    %vm3740 = vcmp.lt.s32.totalorder %v1336, 19
    %vm3741 = vcmp.lt.s32.totalorder %v1337, 19
    %vm3742 = vcmp.lt.s32.totalorder %v1338, 19
    %vm3743 = vcmp.lt.s32.totalorder %v1339, 19
    %vm3744 = vcmp.lt.s32.totalorder %v1340, 19
    %vm3745 = vcmp.lt.s32.totalorder %v1341, 19
    %vm3746 = vcmp.lt.s32.totalorder %v1342, 19
    %vm3747 = vcmp.lt.s32.totalorder %v1343, 19
    %vm3748 = vcmp.lt.s32.totalorder %v1344, 19
    %vm3749 = vcmp.lt.s32.totalorder %v1345, 19
    %vm3750 = vcmp.lt.s32.totalorder %v1346, 19
    %vm3751 = vcmp.lt.s32.totalorder %v1347, 19
    %vm3752 = vcmp.lt.s32.totalorder %v1348, 19
    %vm3753 = vcmp.lt.s32.totalorder %v1349, 19
    %vm3754 = vcmp.lt.s32.totalorder %v1350, 19
    %vm3755 = vcmp.lt.s32.totalorder %v1351, 19
    %vm3756 = vcmp.lt.s32.totalorder %v1352, 19
    %vm3757 = vcmp.lt.s32.totalorder %v1353, 19
    %vm3758 = vcmp.lt.s32.totalorder %v1354, 19
    %vm3759 = vcmp.lt.s32.totalorder %v1355, 19
    %vm3760 = vcmp.lt.s32.totalorder %v1356, 19
    %vm3761 = vcmp.lt.s32.totalorder %v1357, 19
    %vm3762 = vcmp.lt.s32.totalorder %v1358, 19
    %vm3763 = vcmp.lt.s32.totalorder %v1359, 19
    %vm3764 = vcmp.lt.s32.totalorder %v1360, 19
    %vm3765 = vcmp.lt.s32.totalorder %v1361, 19
    %vm3766 = vcmp.lt.s32.totalorder %v1362, 19
    %vm3767 = vcmp.lt.s32.totalorder %v1363, 19
    %vm3768 = vcmp.lt.s32.totalorder %v1364, 19
    %vm3769 = vcmp.lt.s32.totalorder %v1365, 19
    %vm3770 = vcmp.lt.s32.totalorder %v1366, 19
    %vm3771 = vcmp.lt.s32.totalorder %v1367, 19
    %vm3772 = vcmp.lt.s32.totalorder %v1368, 19
    %vm3773 = vcmp.lt.s32.totalorder %v1369, 19
    %vm3774 = vcmp.lt.s32.totalorder %v1370, 19
    %vm3775 = vcmp.lt.s32.totalorder %v1371, 19
    %vm3776 = vcmp.lt.s32.totalorder %v1372, 19
    %vm3777 = vcmp.lt.s32.totalorder %v1373, 19
    %vm3778 = vcmp.lt.s32.totalorder %v1374, 19
    %vm3779 = vcmp.lt.s32.totalorder %v1375, 19
    %s3780 = sld [smem:[#allocation2 + $0x12]]
    %s3781 = sld [smem:[#allocation2 + $0x13]]
    %v3782 = vstv %s3780
    %v3783 = vstv %s3781
    %v3784 = vsel %vm3716, %v3782, %v3783
    %v3785 = vsel %vm3717, %v3782, %v3783
    %v3786 = vsel %vm3718, %v3782, %v3783
    %v3787 = vsel %vm3719, %v3782, %v3783
    %v3788 = vsel %vm3720, %v3782, %v3783
    %v3789 = vsel %vm3721, %v3782, %v3783
    %v3790 = vsel %vm3722, %v3782, %v3783
    %v3791 = vsel %vm3723, %v3782, %v3783
    %v3792 = vsel %vm3724, %v3782, %v3783
    %v3793 = vsel %vm3725, %v3782, %v3783
    %v3794 = vsel %vm3726, %v3782, %v3783
    %v3795 = vsel %vm3727, %v3782, %v3783
    %v3796 = vsel %vm3728, %v3782, %v3783
    %v3797 = vsel %vm3729, %v3782, %v3783
    %v3798 = vsel %vm3730, %v3782, %v3783
    %v3799 = vsel %vm3731, %v3782, %v3783
    %v3800 = vsel %vm3732, %v3782, %v3783
    %v3801 = vsel %vm3733, %v3782, %v3783
    %v3802 = vsel %vm3734, %v3782, %v3783
    %v3803 = vsel %vm3735, %v3782, %v3783
    %v3804 = vsel %vm3736, %v3782, %v3783
    %v3805 = vsel %vm3737, %v3782, %v3783
    %v3806 = vsel %vm3738, %v3782, %v3783
    %v3807 = vsel %vm3739, %v3782, %v3783
    %v3808 = vsel %vm3740, %v3782, %v3783
    %v3809 = vsel %vm3741, %v3782, %v3783
    %v3810 = vsel %vm3742, %v3782, %v3783
    %v3811 = vsel %vm3743, %v3782, %v3783
    %v3812 = vsel %vm3744, %v3782, %v3783
    %v3813 = vsel %vm3745, %v3782, %v3783
    %v3814 = vsel %vm3746, %v3782, %v3783
    %v3815 = vsel %vm3747, %v3782, %v3783
    %v3816 = vsel %vm3748, %v3782, %v3783
    %v3817 = vsel %vm3749, %v3782, %v3783
    %v3818 = vsel %vm3750, %v3782, %v3783
    %v3819 = vsel %vm3751, %v3782, %v3783
    %v3820 = vsel %vm3752, %v3782, %v3783
    %v3821 = vsel %vm3753, %v3782, %v3783
    %v3822 = vsel %vm3754, %v3782, %v3783
    %v3823 = vsel %vm3755, %v3782, %v3783
    %v3824 = vsel %vm3756, %v3782, %v3783
    %v3825 = vsel %vm3757, %v3782, %v3783
    %v3826 = vsel %vm3758, %v3782, %v3783
    %v3827 = vsel %vm3759, %v3782, %v3783
    %v3828 = vsel %vm3760, %v3782, %v3783
    %v3829 = vsel %vm3761, %v3782, %v3783
    %v3830 = vsel %vm3762, %v3782, %v3783
    %v3831 = vsel %vm3763, %v3782, %v3783
    %v3832 = vsel %vm3764, %v3782, %v3783
    %v3833 = vsel %vm3765, %v3782, %v3783
    %v3834 = vsel %vm3766, %v3782, %v3783
    %v3835 = vsel %vm3767, %v3782, %v3783
    %v3836 = vsel %vm3768, %v3782, %v3783
    %v3837 = vsel %vm3769, %v3782, %v3783
    %v3838 = vsel %vm3770, %v3782, %v3783
    %v3839 = vsel %vm3771, %v3782, %v3783
    %v3840 = vsel %vm3772, %v3782, %v3783
    %v3841 = vsel %vm3773, %v3782, %v3783
    %v3842 = vsel %vm3774, %v3782, %v3783
    %v3843 = vsel %vm3775, %v3782, %v3783
    %v3844 = vsel %vm3776, %v3782, %v3783
    %v3845 = vsel %vm3777, %v3782, %v3783
    %v3846 = vsel %vm3778, %v3782, %v3783
    %v3847 = vsel %vm3779, %v3782, %v3783
    %v3848 = vsel %vm3520, %v3652, %v3784
    %v3849 = vsel %vm3521, %v3653, %v3785
    %v3850 = vsel %vm3522, %v3654, %v3786
    %v3851 = vsel %vm3523, %v3655, %v3787
    %v3852 = vsel %vm3524, %v3656, %v3788
    %v3853 = vsel %vm3525, %v3657, %v3789
    %v3854 = vsel %vm3526, %v3658, %v3790
    %v3855 = vsel %vm3527, %v3659, %v3791
    %v3856 = vsel %vm3528, %v3660, %v3792
    %v3857 = vsel %vm3529, %v3661, %v3793
    %v3858 = vsel %vm3530, %v3662, %v3794
    %v3859 = vsel %vm3531, %v3663, %v3795
    %v3860 = vsel %vm3532, %v3664, %v3796
    %v3861 = vsel %vm3533, %v3665, %v3797
    %v3862 = vsel %vm3534, %v3666, %v3798
    %v3863 = vsel %vm3535, %v3667, %v3799
    %v3864 = vsel %vm3536, %v3668, %v3800
    %v3865 = vsel %vm3537, %v3669, %v3801
    %v3866 = vsel %vm3538, %v3670, %v3802
    %v3867 = vsel %vm3539, %v3671, %v3803
    %v3868 = vsel %vm3540, %v3672, %v3804
    %v3869 = vsel %vm3541, %v3673, %v3805
    %v3870 = vsel %vm3542, %v3674, %v3806
    %v3871 = vsel %vm3543, %v3675, %v3807
    %v3872 = vsel %vm3544, %v3676, %v3808
    %v3873 = vsel %vm3545, %v3677, %v3809
    %v3874 = vsel %vm3546, %v3678, %v3810
    %v3875 = vsel %vm3547, %v3679, %v3811
    %v3876 = vsel %vm3548, %v3680, %v3812
    %v3877 = vsel %vm3549, %v3681, %v3813
    %v3878 = vsel %vm3550, %v3682, %v3814
    %v3879 = vsel %vm3551, %v3683, %v3815
    %v3880 = vsel %vm3552, %v3684, %v3816
    %v3881 = vsel %vm3553, %v3685, %v3817
    %v3882 = vsel %vm3554, %v3686, %v3818
    %v3883 = vsel %vm3555, %v3687, %v3819
    %v3884 = vsel %vm3556, %v3688, %v3820
    %v3885 = vsel %vm3557, %v3689, %v3821
    %v3886 = vsel %vm3558, %v3690, %v3822
    %v3887 = vsel %vm3559, %v3691, %v3823
    %v3888 = vsel %vm3560, %v3692, %v3824
    %v3889 = vsel %vm3561, %v3693, %v3825
    %v3890 = vsel %vm3562, %v3694, %v3826
    %v3891 = vsel %vm3563, %v3695, %v3827
    %v3892 = vsel %vm3564, %v3696, %v3828
    %v3893 = vsel %vm3565, %v3697, %v3829
    %v3894 = vsel %vm3566, %v3698, %v3830
    %v3895 = vsel %vm3567, %v3699, %v3831
    %v3896 = vsel %vm3568, %v3700, %v3832
    %v3897 = vsel %vm3569, %v3701, %v3833
    %v3898 = vsel %vm3570, %v3702, %v3834
    %v3899 = vsel %vm3571, %v3703, %v3835
    %v3900 = vsel %vm3572, %v3704, %v3836
    %v3901 = vsel %vm3573, %v3705, %v3837
    %v3902 = vsel %vm3574, %v3706, %v3838
    %v3903 = vsel %vm3575, %v3707, %v3839
    %v3904 = vsel %vm3576, %v3708, %v3840
    %v3905 = vsel %vm3577, %v3709, %v3841
    %v3906 = vsel %vm3578, %v3710, %v3842
    %v3907 = vsel %vm3579, %v3711, %v3843
    %v3908 = vsel %vm3580, %v3712, %v3844
    %v3909 = vsel %vm3581, %v3713, %v3845
    %v3910 = vsel %vm3582, %v3714, %v3846
    %v3911 = vsel %vm3583, %v3715, %v3847
    %vm3912 = vcmp.lt.s32.totalorder %v1312, 22
    %vm3913 = vcmp.lt.s32.totalorder %v1313, 22
    %vm3914 = vcmp.lt.s32.totalorder %v1314, 22
    %vm3915 = vcmp.lt.s32.totalorder %v1315, 22
    %vm3916 = vcmp.lt.s32.totalorder %v1316, 22
    %vm3917 = vcmp.lt.s32.totalorder %v1317, 22
    %vm3918 = vcmp.lt.s32.totalorder %v1318, 22
    %vm3919 = vcmp.lt.s32.totalorder %v1319, 22
    %vm3920 = vcmp.lt.s32.totalorder %v1320, 22
    %vm3921 = vcmp.lt.s32.totalorder %v1321, 22
    %vm3922 = vcmp.lt.s32.totalorder %v1322, 22
    %vm3923 = vcmp.lt.s32.totalorder %v1323, 22
    %vm3924 = vcmp.lt.s32.totalorder %v1324, 22
    %vm3925 = vcmp.lt.s32.totalorder %v1325, 22
    %vm3926 = vcmp.lt.s32.totalorder %v1326, 22
    %vm3927 = vcmp.lt.s32.totalorder %v1327, 22
    %vm3928 = vcmp.lt.s32.totalorder %v1328, 22
    %vm3929 = vcmp.lt.s32.totalorder %v1329, 22
    %vm3930 = vcmp.lt.s32.totalorder %v1330, 22
    %vm3931 = vcmp.lt.s32.totalorder %v1331, 22
    %vm3932 = vcmp.lt.s32.totalorder %v1332, 22
    %vm3933 = vcmp.lt.s32.totalorder %v1333, 22
    %vm3934 = vcmp.lt.s32.totalorder %v1334, 22
    %vm3935 = vcmp.lt.s32.totalorder %v1335, 22
    %vm3936 = vcmp.lt.s32.totalorder %v1336, 22
    %vm3937 = vcmp.lt.s32.totalorder %v1337, 22
    %vm3938 = vcmp.lt.s32.totalorder %v1338, 22
    %vm3939 = vcmp.lt.s32.totalorder %v1339, 22
    %vm3940 = vcmp.lt.s32.totalorder %v1340, 22
    %vm3941 = vcmp.lt.s32.totalorder %v1341, 22
    %vm3942 = vcmp.lt.s32.totalorder %v1342, 22
    %vm3943 = vcmp.lt.s32.totalorder %v1343, 22
    %vm3944 = vcmp.lt.s32.totalorder %v1344, 22
    %vm3945 = vcmp.lt.s32.totalorder %v1345, 22
    %vm3946 = vcmp.lt.s32.totalorder %v1346, 22
    %vm3947 = vcmp.lt.s32.totalorder %v1347, 22
    %vm3948 = vcmp.lt.s32.totalorder %v1348, 22
    %vm3949 = vcmp.lt.s32.totalorder %v1349, 22
    %vm3950 = vcmp.lt.s32.totalorder %v1350, 22
    %vm3951 = vcmp.lt.s32.totalorder %v1351, 22
    %vm3952 = vcmp.lt.s32.totalorder %v1352, 22
    %vm3953 = vcmp.lt.s32.totalorder %v1353, 22
    %vm3954 = vcmp.lt.s32.totalorder %v1354, 22
    %vm3955 = vcmp.lt.s32.totalorder %v1355, 22
    %vm3956 = vcmp.lt.s32.totalorder %v1356, 22
    %vm3957 = vcmp.lt.s32.totalorder %v1357, 22
    %vm3958 = vcmp.lt.s32.totalorder %v1358, 22
    %vm3959 = vcmp.lt.s32.totalorder %v1359, 22
    %vm3960 = vcmp.lt.s32.totalorder %v1360, 22
    %vm3961 = vcmp.lt.s32.totalorder %v1361, 22
    %vm3962 = vcmp.lt.s32.totalorder %v1362, 22
    %vm3963 = vcmp.lt.s32.totalorder %v1363, 22
    %vm3964 = vcmp.lt.s32.totalorder %v1364, 22
    %vm3965 = vcmp.lt.s32.totalorder %v1365, 22
    %vm3966 = vcmp.lt.s32.totalorder %v1366, 22
    %vm3967 = vcmp.lt.s32.totalorder %v1367, 22
    %vm3968 = vcmp.lt.s32.totalorder %v1368, 22
    %vm3969 = vcmp.lt.s32.totalorder %v1369, 22
    %vm3970 = vcmp.lt.s32.totalorder %v1370, 22
    %vm3971 = vcmp.lt.s32.totalorder %v1371, 22
    %vm3972 = vcmp.lt.s32.totalorder %v1372, 22
    %vm3973 = vcmp.lt.s32.totalorder %v1373, 22
    %vm3974 = vcmp.lt.s32.totalorder %v1374, 22
    %vm3975 = vcmp.lt.s32.totalorder %v1375, 22
    %vm3976 = vcmp.lt.s32.totalorder %v1312, 21
    %vm3977 = vcmp.lt.s32.totalorder %v1313, 21
    %vm3978 = vcmp.lt.s32.totalorder %v1314, 21
    %vm3979 = vcmp.lt.s32.totalorder %v1315, 21
    %vm3980 = vcmp.lt.s32.totalorder %v1316, 21
    %vm3981 = vcmp.lt.s32.totalorder %v1317, 21
    %vm3982 = vcmp.lt.s32.totalorder %v1318, 21
    %vm3983 = vcmp.lt.s32.totalorder %v1319, 21
    %vm3984 = vcmp.lt.s32.totalorder %v1320, 21
    %vm3985 = vcmp.lt.s32.totalorder %v1321, 21
    %vm3986 = vcmp.lt.s32.totalorder %v1322, 21
    %vm3987 = vcmp.lt.s32.totalorder %v1323, 21
    %vm3988 = vcmp.lt.s32.totalorder %v1324, 21
    %vm3989 = vcmp.lt.s32.totalorder %v1325, 21
    %vm3990 = vcmp.lt.s32.totalorder %v1326, 21
    %vm3991 = vcmp.lt.s32.totalorder %v1327, 21
    %vm3992 = vcmp.lt.s32.totalorder %v1328, 21
    %vm3993 = vcmp.lt.s32.totalorder %v1329, 21
    %vm3994 = vcmp.lt.s32.totalorder %v1330, 21
    %vm3995 = vcmp.lt.s32.totalorder %v1331, 21
    %vm3996 = vcmp.lt.s32.totalorder %v1332, 21
    %vm3997 = vcmp.lt.s32.totalorder %v1333, 21
    %vm3998 = vcmp.lt.s32.totalorder %v1334, 21
    %vm3999 = vcmp.lt.s32.totalorder %v1335, 21
    %vm4000 = vcmp.lt.s32.totalorder %v1336, 21
    %vm4001 = vcmp.lt.s32.totalorder %v1337, 21
    %vm4002 = vcmp.lt.s32.totalorder %v1338, 21
    %vm4003 = vcmp.lt.s32.totalorder %v1339, 21
    %vm4004 = vcmp.lt.s32.totalorder %v1340, 21
    %vm4005 = vcmp.lt.s32.totalorder %v1341, 21
    %vm4006 = vcmp.lt.s32.totalorder %v1342, 21
    %vm4007 = vcmp.lt.s32.totalorder %v1343, 21
    %vm4008 = vcmp.lt.s32.totalorder %v1344, 21
    %vm4009 = vcmp.lt.s32.totalorder %v1345, 21
    %vm4010 = vcmp.lt.s32.totalorder %v1346, 21
    %vm4011 = vcmp.lt.s32.totalorder %v1347, 21
    %vm4012 = vcmp.lt.s32.totalorder %v1348, 21
    %vm4013 = vcmp.lt.s32.totalorder %v1349, 21
    %vm4014 = vcmp.lt.s32.totalorder %v1350, 21
    %vm4015 = vcmp.lt.s32.totalorder %v1351, 21
    %vm4016 = vcmp.lt.s32.totalorder %v1352, 21
    %vm4017 = vcmp.lt.s32.totalorder %v1353, 21
    %vm4018 = vcmp.lt.s32.totalorder %v1354, 21
    %vm4019 = vcmp.lt.s32.totalorder %v1355, 21
    %vm4020 = vcmp.lt.s32.totalorder %v1356, 21
    %vm4021 = vcmp.lt.s32.totalorder %v1357, 21
    %vm4022 = vcmp.lt.s32.totalorder %v1358, 21
    %vm4023 = vcmp.lt.s32.totalorder %v1359, 21
    %vm4024 = vcmp.lt.s32.totalorder %v1360, 21
    %vm4025 = vcmp.lt.s32.totalorder %v1361, 21
    %vm4026 = vcmp.lt.s32.totalorder %v1362, 21
    %vm4027 = vcmp.lt.s32.totalorder %v1363, 21
    %vm4028 = vcmp.lt.s32.totalorder %v1364, 21
    %vm4029 = vcmp.lt.s32.totalorder %v1365, 21
    %vm4030 = vcmp.lt.s32.totalorder %v1366, 21
    %vm4031 = vcmp.lt.s32.totalorder %v1367, 21
    %vm4032 = vcmp.lt.s32.totalorder %v1368, 21
    %vm4033 = vcmp.lt.s32.totalorder %v1369, 21
    %vm4034 = vcmp.lt.s32.totalorder %v1370, 21
    %vm4035 = vcmp.lt.s32.totalorder %v1371, 21
    %vm4036 = vcmp.lt.s32.totalorder %v1372, 21
    %vm4037 = vcmp.lt.s32.totalorder %v1373, 21
    %vm4038 = vcmp.lt.s32.totalorder %v1374, 21
    %vm4039 = vcmp.lt.s32.totalorder %v1375, 21
    %s4040 = sld [smem:[#allocation2 + $0x14]]
    %s4041 = sld [smem:[#allocation2 + $0x15]]
    %v4042 = vstv %s4040
    %v4043 = vstv %s4041
    %v4044 = vsel %vm3976, %v4042, %v4043
    %v4045 = vsel %vm3977, %v4042, %v4043
    %v4046 = vsel %vm3978, %v4042, %v4043
    %v4047 = vsel %vm3979, %v4042, %v4043
    %v4048 = vsel %vm3980, %v4042, %v4043
    %v4049 = vsel %vm3981, %v4042, %v4043
    %v4050 = vsel %vm3982, %v4042, %v4043
    %v4051 = vsel %vm3983, %v4042, %v4043
    %v4052 = vsel %vm3984, %v4042, %v4043
    %v4053 = vsel %vm3985, %v4042, %v4043
    %v4054 = vsel %vm3986, %v4042, %v4043
    %v4055 = vsel %vm3987, %v4042, %v4043
    %v4056 = vsel %vm3988, %v4042, %v4043
    %v4057 = vsel %vm3989, %v4042, %v4043
    %v4058 = vsel %vm3990, %v4042, %v4043
    %v4059 = vsel %vm3991, %v4042, %v4043
    %v4060 = vsel %vm3992, %v4042, %v4043
    %v4061 = vsel %vm3993, %v4042, %v4043
    %v4062 = vsel %vm3994, %v4042, %v4043
    %v4063 = vsel %vm3995, %v4042, %v4043
    %v4064 = vsel %vm3996, %v4042, %v4043
    %v4065 = vsel %vm3997, %v4042, %v4043
    %v4066 = vsel %vm3998, %v4042, %v4043
    %v4067 = vsel %vm3999, %v4042, %v4043
    %v4068 = vsel %vm4000, %v4042, %v4043
    %v4069 = vsel %vm4001, %v4042, %v4043
    %v4070 = vsel %vm4002, %v4042, %v4043
    %v4071 = vsel %vm4003, %v4042, %v4043
    %v4072 = vsel %vm4004, %v4042, %v4043
    %v4073 = vsel %vm4005, %v4042, %v4043
    %v4074 = vsel %vm4006, %v4042, %v4043
    %v4075 = vsel %vm4007, %v4042, %v4043
    %v4076 = vsel %vm4008, %v4042, %v4043
    %v4077 = vsel %vm4009, %v4042, %v4043
    %v4078 = vsel %vm4010, %v4042, %v4043
    %v4079 = vsel %vm4011, %v4042, %v4043
    %v4080 = vsel %vm4012, %v4042, %v4043
    %v4081 = vsel %vm4013, %v4042, %v4043
    %v4082 = vsel %vm4014, %v4042, %v4043
    %v4083 = vsel %vm4015, %v4042, %v4043
    %v4084 = vsel %vm4016, %v4042, %v4043
    %v4085 = vsel %vm4017, %v4042, %v4043
    %v4086 = vsel %vm4018, %v4042, %v4043
    %v4087 = vsel %vm4019, %v4042, %v4043
    %v4088 = vsel %vm4020, %v4042, %v4043
    %v4089 = vsel %vm4021, %v4042, %v4043
    %v4090 = vsel %vm4022, %v4042, %v4043
    %v4091 = vsel %vm4023, %v4042, %v4043
    %v4092 = vsel %vm4024, %v4042, %v4043
    %v4093 = vsel %vm4025, %v4042, %v4043
    %v4094 = vsel %vm4026, %v4042, %v4043
    %v4095 = vsel %vm4027, %v4042, %v4043
    %v4096 = vsel %vm4028, %v4042, %v4043
    %v4097 = vsel %vm4029, %v4042, %v4043
    %v4098 = vsel %vm4030, %v4042, %v4043
    %v4099 = vsel %vm4031, %v4042, %v4043
    %v4100 = vsel %vm4032, %v4042, %v4043
    %v4101 = vsel %vm4033, %v4042, %v4043
    %v4102 = vsel %vm4034, %v4042, %v4043
    %v4103 = vsel %vm4035, %v4042, %v4043
    %v4104 = vsel %vm4036, %v4042, %v4043
    %v4105 = vsel %vm4037, %v4042, %v4043
    %v4106 = vsel %vm4038, %v4042, %v4043
    %v4107 = vsel %vm4039, %v4042, %v4043
    %vm4108 = vcmp.lt.s32.totalorder %v1312, 23
    %vm4109 = vcmp.lt.s32.totalorder %v1313, 23
    %vm4110 = vcmp.lt.s32.totalorder %v1314, 23
    %vm4111 = vcmp.lt.s32.totalorder %v1315, 23
    %vm4112 = vcmp.lt.s32.totalorder %v1316, 23
    %vm4113 = vcmp.lt.s32.totalorder %v1317, 23
    %vm4114 = vcmp.lt.s32.totalorder %v1318, 23
    %vm4115 = vcmp.lt.s32.totalorder %v1319, 23
    %vm4116 = vcmp.lt.s32.totalorder %v1320, 23
    %vm4117 = vcmp.lt.s32.totalorder %v1321, 23
    %vm4118 = vcmp.lt.s32.totalorder %v1322, 23
    %vm4119 = vcmp.lt.s32.totalorder %v1323, 23
    %vm4120 = vcmp.lt.s32.totalorder %v1324, 23
    %vm4121 = vcmp.lt.s32.totalorder %v1325, 23
    %vm4122 = vcmp.lt.s32.totalorder %v1326, 23
    %vm4123 = vcmp.lt.s32.totalorder %v1327, 23
    %vm4124 = vcmp.lt.s32.totalorder %v1328, 23
    %vm4125 = vcmp.lt.s32.totalorder %v1329, 23
    %vm4126 = vcmp.lt.s32.totalorder %v1330, 23
    %vm4127 = vcmp.lt.s32.totalorder %v1331, 23
    %vm4128 = vcmp.lt.s32.totalorder %v1332, 23
    %vm4129 = vcmp.lt.s32.totalorder %v1333, 23
    %vm4130 = vcmp.lt.s32.totalorder %v1334, 23
    %vm4131 = vcmp.lt.s32.totalorder %v1335, 23
    %vm4132 = vcmp.lt.s32.totalorder %v1336, 23
    %vm4133 = vcmp.lt.s32.totalorder %v1337, 23
    %vm4134 = vcmp.lt.s32.totalorder %v1338, 23
    %vm4135 = vcmp.lt.s32.totalorder %v1339, 23
    %vm4136 = vcmp.lt.s32.totalorder %v1340, 23
    %vm4137 = vcmp.lt.s32.totalorder %v1341, 23
    %vm4138 = vcmp.lt.s32.totalorder %v1342, 23
    %vm4139 = vcmp.lt.s32.totalorder %v1343, 23
    %vm4140 = vcmp.lt.s32.totalorder %v1344, 23
    %vm4141 = vcmp.lt.s32.totalorder %v1345, 23
    %vm4142 = vcmp.lt.s32.totalorder %v1346, 23
    %vm4143 = vcmp.lt.s32.totalorder %v1347, 23
    %vm4144 = vcmp.lt.s32.totalorder %v1348, 23
    %vm4145 = vcmp.lt.s32.totalorder %v1349, 23
    %vm4146 = vcmp.lt.s32.totalorder %v1350, 23
    %vm4147 = vcmp.lt.s32.totalorder %v1351, 23
    %vm4148 = vcmp.lt.s32.totalorder %v1352, 23
    %vm4149 = vcmp.lt.s32.totalorder %v1353, 23
    %vm4150 = vcmp.lt.s32.totalorder %v1354, 23
    %vm4151 = vcmp.lt.s32.totalorder %v1355, 23
    %vm4152 = vcmp.lt.s32.totalorder %v1356, 23
    %vm4153 = vcmp.lt.s32.totalorder %v1357, 23
    %vm4154 = vcmp.lt.s32.totalorder %v1358, 23
    %vm4155 = vcmp.lt.s32.totalorder %v1359, 23
    %vm4156 = vcmp.lt.s32.totalorder %v1360, 23
    %vm4157 = vcmp.lt.s32.totalorder %v1361, 23
    %vm4158 = vcmp.lt.s32.totalorder %v1362, 23
    %vm4159 = vcmp.lt.s32.totalorder %v1363, 23
    %vm4160 = vcmp.lt.s32.totalorder %v1364, 23
    %vm4161 = vcmp.lt.s32.totalorder %v1365, 23
    %vm4162 = vcmp.lt.s32.totalorder %v1366, 23
    %vm4163 = vcmp.lt.s32.totalorder %v1367, 23
    %vm4164 = vcmp.lt.s32.totalorder %v1368, 23
    %vm4165 = vcmp.lt.s32.totalorder %v1369, 23
    %vm4166 = vcmp.lt.s32.totalorder %v1370, 23
    %vm4167 = vcmp.lt.s32.totalorder %v1371, 23
    %vm4168 = vcmp.lt.s32.totalorder %v1372, 23
    %vm4169 = vcmp.lt.s32.totalorder %v1373, 23
    %vm4170 = vcmp.lt.s32.totalorder %v1374, 23
    %vm4171 = vcmp.lt.s32.totalorder %v1375, 23
    %s4172 = sld [smem:[#allocation2 + $0x16]]
    %s4173 = sld [smem:[#allocation2 + $0x17]]
    %v4174 = vstv %s4172
    %v4175 = vstv %s4173
    %v4176 = vsel %vm4108, %v4174, %v4175
    %v4177 = vsel %vm4109, %v4174, %v4175
    %v4178 = vsel %vm4110, %v4174, %v4175
    %v4179 = vsel %vm4111, %v4174, %v4175
    %v4180 = vsel %vm4112, %v4174, %v4175
    %v4181 = vsel %vm4113, %v4174, %v4175
    %v4182 = vsel %vm4114, %v4174, %v4175
    %v4183 = vsel %vm4115, %v4174, %v4175
    %v4184 = vsel %vm4116, %v4174, %v4175
    %v4185 = vsel %vm4117, %v4174, %v4175
    %v4186 = vsel %vm4118, %v4174, %v4175
    %v4187 = vsel %vm4119, %v4174, %v4175
    %v4188 = vsel %vm4120, %v4174, %v4175
    %v4189 = vsel %vm4121, %v4174, %v4175
    %v4190 = vsel %vm4122, %v4174, %v4175
    %v4191 = vsel %vm4123, %v4174, %v4175
    %v4192 = vsel %vm4124, %v4174, %v4175
    %v4193 = vsel %vm4125, %v4174, %v4175
    %v4194 = vsel %vm4126, %v4174, %v4175
    %v4195 = vsel %vm4127, %v4174, %v4175
    %v4196 = vsel %vm4128, %v4174, %v4175
    %v4197 = vsel %vm4129, %v4174, %v4175
    %v4198 = vsel %vm4130, %v4174, %v4175
    %v4199 = vsel %vm4131, %v4174, %v4175
    %v4200 = vsel %vm4132, %v4174, %v4175
    %v4201 = vsel %vm4133, %v4174, %v4175
    %v4202 = vsel %vm4134, %v4174, %v4175
    %v4203 = vsel %vm4135, %v4174, %v4175
    %v4204 = vsel %vm4136, %v4174, %v4175
    %v4205 = vsel %vm4137, %v4174, %v4175
    %v4206 = vsel %vm4138, %v4174, %v4175
    %v4207 = vsel %vm4139, %v4174, %v4175
    %v4208 = vsel %vm4140, %v4174, %v4175
    %v4209 = vsel %vm4141, %v4174, %v4175
    %v4210 = vsel %vm4142, %v4174, %v4175
    %v4211 = vsel %vm4143, %v4174, %v4175
    %v4212 = vsel %vm4144, %v4174, %v4175
    %v4213 = vsel %vm4145, %v4174, %v4175
    %v4214 = vsel %vm4146, %v4174, %v4175
    %v4215 = vsel %vm4147, %v4174, %v4175
    %v4216 = vsel %vm4148, %v4174, %v4175
    %v4217 = vsel %vm4149, %v4174, %v4175
    %v4218 = vsel %vm4150, %v4174, %v4175
    %v4219 = vsel %vm4151, %v4174, %v4175
    %v4220 = vsel %vm4152, %v4174, %v4175
    %v4221 = vsel %vm4153, %v4174, %v4175
    %v4222 = vsel %vm4154, %v4174, %v4175
    %v4223 = vsel %vm4155, %v4174, %v4175
    %v4224 = vsel %vm4156, %v4174, %v4175
    %v4225 = vsel %vm4157, %v4174, %v4175
    %v4226 = vsel %vm4158, %v4174, %v4175
    %v4227 = vsel %vm4159, %v4174, %v4175
    %v4228 = vsel %vm4160, %v4174, %v4175
    %v4229 = vsel %vm4161, %v4174, %v4175
    %v4230 = vsel %vm4162, %v4174, %v4175
    %v4231 = vsel %vm4163, %v4174, %v4175
    %v4232 = vsel %vm4164, %v4174, %v4175
    %v4233 = vsel %vm4165, %v4174, %v4175
    %v4234 = vsel %vm4166, %v4174, %v4175
    %v4235 = vsel %vm4167, %v4174, %v4175
    %v4236 = vsel %vm4168, %v4174, %v4175
    %v4237 = vsel %vm4169, %v4174, %v4175
    %v4238 = vsel %vm4170, %v4174, %v4175
    %v4239 = vsel %vm4171, %v4174, %v4175
    %v4240 = vsel %vm3912, %v4044, %v4176
    %v4241 = vsel %vm3913, %v4045, %v4177
    %v4242 = vsel %vm3914, %v4046, %v4178
    %v4243 = vsel %vm3915, %v4047, %v4179
    %v4244 = vsel %vm3916, %v4048, %v4180
    %v4245 = vsel %vm3917, %v4049, %v4181
    %v4246 = vsel %vm3918, %v4050, %v4182
    %v4247 = vsel %vm3919, %v4051, %v4183
    %v4248 = vsel %vm3920, %v4052, %v4184
    %v4249 = vsel %vm3921, %v4053, %v4185
    %v4250 = vsel %vm3922, %v4054, %v4186
    %v4251 = vsel %vm3923, %v4055, %v4187
    %v4252 = vsel %vm3924, %v4056, %v4188
    %v4253 = vsel %vm3925, %v4057, %v4189
    %v4254 = vsel %vm3926, %v4058, %v4190
    %v4255 = vsel %vm3927, %v4059, %v4191
    %v4256 = vsel %vm3928, %v4060, %v4192
    %v4257 = vsel %vm3929, %v4061, %v4193
    %v4258 = vsel %vm3930, %v4062, %v4194
    %v4259 = vsel %vm3931, %v4063, %v4195
    %v4260 = vsel %vm3932, %v4064, %v4196
    %v4261 = vsel %vm3933, %v4065, %v4197
    %v4262 = vsel %vm3934, %v4066, %v4198
    %v4263 = vsel %vm3935, %v4067, %v4199
    %v4264 = vsel %vm3936, %v4068, %v4200
    %v4265 = vsel %vm3937, %v4069, %v4201
    %v4266 = vsel %vm3938, %v4070, %v4202
    %v4267 = vsel %vm3939, %v4071, %v4203
    %v4268 = vsel %vm3940, %v4072, %v4204
    %v4269 = vsel %vm3941, %v4073, %v4205
    %v4270 = vsel %vm3942, %v4074, %v4206
    %v4271 = vsel %vm3943, %v4075, %v4207
    %v4272 = vsel %vm3944, %v4076, %v4208
    %v4273 = vsel %vm3945, %v4077, %v4209
    %v4274 = vsel %vm3946, %v4078, %v4210
    %v4275 = vsel %vm3947, %v4079, %v4211
    %v4276 = vsel %vm3948, %v4080, %v4212
    %v4277 = vsel %vm3949, %v4081, %v4213
    %v4278 = vsel %vm3950, %v4082, %v4214
    %v4279 = vsel %vm3951, %v4083, %v4215
    %v4280 = vsel %vm3952, %v4084, %v4216
    %v4281 = vsel %vm3953, %v4085, %v4217
    %v4282 = vsel %vm3954, %v4086, %v4218
    %v4283 = vsel %vm3955, %v4087, %v4219
    %v4284 = vsel %vm3956, %v4088, %v4220
    %v4285 = vsel %vm3957, %v4089, %v4221
    %v4286 = vsel %vm3958, %v4090, %v4222
    %v4287 = vsel %vm3959, %v4091, %v4223
    %v4288 = vsel %vm3960, %v4092, %v4224
    %v4289 = vsel %vm3961, %v4093, %v4225
    %v4290 = vsel %vm3962, %v4094, %v4226
    %v4291 = vsel %vm3963, %v4095, %v4227
    %v4292 = vsel %vm3964, %v4096, %v4228
    %v4293 = vsel %vm3965, %v4097, %v4229
    %v4294 = vsel %vm3966, %v4098, %v4230
    %v4295 = vsel %vm3967, %v4099, %v4231
    %v4296 = vsel %vm3968, %v4100, %v4232
    %v4297 = vsel %vm3969, %v4101, %v4233
    %v4298 = vsel %vm3970, %v4102, %v4234
    %v4299 = vsel %vm3971, %v4103, %v4235
    %v4300 = vsel %vm3972, %v4104, %v4236
    %v4301 = vsel %vm3973, %v4105, %v4237
    %v4302 = vsel %vm3974, %v4106, %v4238
    %v4303 = vsel %vm3975, %v4107, %v4239
    %v4304 = vsel %vm3456, %v3848, %v4240
    %v4305 = vsel %vm3457, %v3849, %v4241
    %v4306 = vsel %vm3458, %v3850, %v4242
    %v4307 = vsel %vm3459, %v3851, %v4243
    %v4308 = vsel %vm3460, %v3852, %v4244
    %v4309 = vsel %vm3461, %v3853, %v4245
    %v4310 = vsel %vm3462, %v3854, %v4246
    %v4311 = vsel %vm3463, %v3855, %v4247
    %v4312 = vsel %vm3464, %v3856, %v4248
    %v4313 = vsel %vm3465, %v3857, %v4249
    %v4314 = vsel %vm3466, %v3858, %v4250
    %v4315 = vsel %vm3467, %v3859, %v4251
    %v4316 = vsel %vm3468, %v3860, %v4252
    %v4317 = vsel %vm3469, %v3861, %v4253
    %v4318 = vsel %vm3470, %v3862, %v4254
    %v4319 = vsel %vm3471, %v3863, %v4255
    %v4320 = vsel %vm3472, %v3864, %v4256
    %v4321 = vsel %vm3473, %v3865, %v4257
    %v4322 = vsel %vm3474, %v3866, %v4258
    %v4323 = vsel %vm3475, %v3867, %v4259
    %v4324 = vsel %vm3476, %v3868, %v4260
    %v4325 = vsel %vm3477, %v3869, %v4261
    %v4326 = vsel %vm3478, %v3870, %v4262
    %v4327 = vsel %vm3479, %v3871, %v4263
    %v4328 = vsel %vm3480, %v3872, %v4264
    %v4329 = vsel %vm3481, %v3873, %v4265
    %v4330 = vsel %vm3482, %v3874, %v4266
    %v4331 = vsel %vm3483, %v3875, %v4267
    %v4332 = vsel %vm3484, %v3876, %v4268
    %v4333 = vsel %vm3485, %v3877, %v4269
    %v4334 = vsel %vm3486, %v3878, %v4270
    %v4335 = vsel %vm3487, %v3879, %v4271
    %v4336 = vsel %vm3488, %v3880, %v4272
    %v4337 = vsel %vm3489, %v3881, %v4273
    %v4338 = vsel %vm3490, %v3882, %v4274
    %v4339 = vsel %vm3491, %v3883, %v4275
    %v4340 = vsel %vm3492, %v3884, %v4276
    %v4341 = vsel %vm3493, %v3885, %v4277
    %v4342 = vsel %vm3494, %v3886, %v4278
    %v4343 = vsel %vm3495, %v3887, %v4279
    %v4344 = vsel %vm3496, %v3888, %v4280
    %v4345 = vsel %vm3497, %v3889, %v4281
    %v4346 = vsel %vm3498, %v3890, %v4282
    %v4347 = vsel %vm3499, %v3891, %v4283
    %v4348 = vsel %vm3500, %v3892, %v4284
    %v4349 = vsel %vm3501, %v3893, %v4285
    %v4350 = vsel %vm3502, %v3894, %v4286
    %v4351 = vsel %vm3503, %v3895, %v4287
    %v4352 = vsel %vm3504, %v3896, %v4288
    %v4353 = vsel %vm3505, %v3897, %v4289
    %v4354 = vsel %vm3506, %v3898, %v4290
    %v4355 = vsel %vm3507, %v3899, %v4291
    %v4356 = vsel %vm3508, %v3900, %v4292
    %v4357 = vsel %vm3509, %v3901, %v4293
    %v4358 = vsel %vm3510, %v3902, %v4294
    %v4359 = vsel %vm3511, %v3903, %v4295
    %v4360 = vsel %vm3512, %v3904, %v4296
    %v4361 = vsel %vm3513, %v3905, %v4297
    %v4362 = vsel %vm3514, %v3906, %v4298
    %v4363 = vsel %vm3515, %v3907, %v4299
    %v4364 = vsel %vm3516, %v3908, %v4300
    %v4365 = vsel %vm3517, %v3909, %v4301
    %v4366 = vsel %vm3518, %v3910, %v4302
    %v4367 = vsel %vm3519, %v3911, %v4303
    %vm4368 = vcmp.lt.s32.totalorder %v1312, 28
    %vm4369 = vcmp.lt.s32.totalorder %v1313, 28
    %vm4370 = vcmp.lt.s32.totalorder %v1314, 28
    %vm4371 = vcmp.lt.s32.totalorder %v1315, 28
    %vm4372 = vcmp.lt.s32.totalorder %v1316, 28
    %vm4373 = vcmp.lt.s32.totalorder %v1317, 28
    %vm4374 = vcmp.lt.s32.totalorder %v1318, 28
    %vm4375 = vcmp.lt.s32.totalorder %v1319, 28
    %vm4376 = vcmp.lt.s32.totalorder %v1320, 28
    %vm4377 = vcmp.lt.s32.totalorder %v1321, 28
    %vm4378 = vcmp.lt.s32.totalorder %v1322, 28
    %vm4379 = vcmp.lt.s32.totalorder %v1323, 28
    %vm4380 = vcmp.lt.s32.totalorder %v1324, 28
    %vm4381 = vcmp.lt.s32.totalorder %v1325, 28
    %vm4382 = vcmp.lt.s32.totalorder %v1326, 28
    %vm4383 = vcmp.lt.s32.totalorder %v1327, 28
    %vm4384 = vcmp.lt.s32.totalorder %v1328, 28
    %vm4385 = vcmp.lt.s32.totalorder %v1329, 28
    %vm4386 = vcmp.lt.s32.totalorder %v1330, 28
    %vm4387 = vcmp.lt.s32.totalorder %v1331, 28
    %vm4388 = vcmp.lt.s32.totalorder %v1332, 28
    %vm4389 = vcmp.lt.s32.totalorder %v1333, 28
    %vm4390 = vcmp.lt.s32.totalorder %v1334, 28
    %vm4391 = vcmp.lt.s32.totalorder %v1335, 28
    %vm4392 = vcmp.lt.s32.totalorder %v1336, 28
    %vm4393 = vcmp.lt.s32.totalorder %v1337, 28
    %vm4394 = vcmp.lt.s32.totalorder %v1338, 28
    %vm4395 = vcmp.lt.s32.totalorder %v1339, 28
    %vm4396 = vcmp.lt.s32.totalorder %v1340, 28
    %vm4397 = vcmp.lt.s32.totalorder %v1341, 28
    %vm4398 = vcmp.lt.s32.totalorder %v1342, 28
    %vm4399 = vcmp.lt.s32.totalorder %v1343, 28
    %vm4400 = vcmp.lt.s32.totalorder %v1344, 28
    %vm4401 = vcmp.lt.s32.totalorder %v1345, 28
    %vm4402 = vcmp.lt.s32.totalorder %v1346, 28
    %vm4403 = vcmp.lt.s32.totalorder %v1347, 28
    %vm4404 = vcmp.lt.s32.totalorder %v1348, 28
    %vm4405 = vcmp.lt.s32.totalorder %v1349, 28
    %vm4406 = vcmp.lt.s32.totalorder %v1350, 28
    %vm4407 = vcmp.lt.s32.totalorder %v1351, 28
    %vm4408 = vcmp.lt.s32.totalorder %v1352, 28
    %vm4409 = vcmp.lt.s32.totalorder %v1353, 28
    %vm4410 = vcmp.lt.s32.totalorder %v1354, 28
    %vm4411 = vcmp.lt.s32.totalorder %v1355, 28
    %vm4412 = vcmp.lt.s32.totalorder %v1356, 28
    %vm4413 = vcmp.lt.s32.totalorder %v1357, 28
    %vm4414 = vcmp.lt.s32.totalorder %v1358, 28
    %vm4415 = vcmp.lt.s32.totalorder %v1359, 28
    %vm4416 = vcmp.lt.s32.totalorder %v1360, 28
    %vm4417 = vcmp.lt.s32.totalorder %v1361, 28
    %vm4418 = vcmp.lt.s32.totalorder %v1362, 28
    %vm4419 = vcmp.lt.s32.totalorder %v1363, 28
    %vm4420 = vcmp.lt.s32.totalorder %v1364, 28
    %vm4421 = vcmp.lt.s32.totalorder %v1365, 28
    %vm4422 = vcmp.lt.s32.totalorder %v1366, 28
    %vm4423 = vcmp.lt.s32.totalorder %v1367, 28
    %vm4424 = vcmp.lt.s32.totalorder %v1368, 28
    %vm4425 = vcmp.lt.s32.totalorder %v1369, 28
    %vm4426 = vcmp.lt.s32.totalorder %v1370, 28
    %vm4427 = vcmp.lt.s32.totalorder %v1371, 28
    %vm4428 = vcmp.lt.s32.totalorder %v1372, 28
    %vm4429 = vcmp.lt.s32.totalorder %v1373, 28
    %vm4430 = vcmp.lt.s32.totalorder %v1374, 28
    %vm4431 = vcmp.lt.s32.totalorder %v1375, 28
    %vm4432 = vcmp.lt.s32.totalorder %v1312, 26
    %vm4433 = vcmp.lt.s32.totalorder %v1313, 26
    %vm4434 = vcmp.lt.s32.totalorder %v1314, 26
    %vm4435 = vcmp.lt.s32.totalorder %v1315, 26
    %vm4436 = vcmp.lt.s32.totalorder %v1316, 26
    %vm4437 = vcmp.lt.s32.totalorder %v1317, 26
    %vm4438 = vcmp.lt.s32.totalorder %v1318, 26
    %vm4439 = vcmp.lt.s32.totalorder %v1319, 26
    %vm4440 = vcmp.lt.s32.totalorder %v1320, 26
    %vm4441 = vcmp.lt.s32.totalorder %v1321, 26
    %vm4442 = vcmp.lt.s32.totalorder %v1322, 26
    %vm4443 = vcmp.lt.s32.totalorder %v1323, 26
    %vm4444 = vcmp.lt.s32.totalorder %v1324, 26
    %vm4445 = vcmp.lt.s32.totalorder %v1325, 26
    %vm4446 = vcmp.lt.s32.totalorder %v1326, 26
    %vm4447 = vcmp.lt.s32.totalorder %v1327, 26
    %vm4448 = vcmp.lt.s32.totalorder %v1328, 26
    %vm4449 = vcmp.lt.s32.totalorder %v1329, 26
    %vm4450 = vcmp.lt.s32.totalorder %v1330, 26
    %vm4451 = vcmp.lt.s32.totalorder %v1331, 26
    %vm4452 = vcmp.lt.s32.totalorder %v1332, 26
    %vm4453 = vcmp.lt.s32.totalorder %v1333, 26
    %vm4454 = vcmp.lt.s32.totalorder %v1334, 26
    %vm4455 = vcmp.lt.s32.totalorder %v1335, 26
    %vm4456 = vcmp.lt.s32.totalorder %v1336, 26
    %vm4457 = vcmp.lt.s32.totalorder %v1337, 26
    %vm4458 = vcmp.lt.s32.totalorder %v1338, 26
    %vm4459 = vcmp.lt.s32.totalorder %v1339, 26
    %vm4460 = vcmp.lt.s32.totalorder %v1340, 26
    %vm4461 = vcmp.lt.s32.totalorder %v1341, 26
    %vm4462 = vcmp.lt.s32.totalorder %v1342, 26
    %vm4463 = vcmp.lt.s32.totalorder %v1343, 26
    %vm4464 = vcmp.lt.s32.totalorder %v1344, 26
    %vm4465 = vcmp.lt.s32.totalorder %v1345, 26
    %vm4466 = vcmp.lt.s32.totalorder %v1346, 26
    %vm4467 = vcmp.lt.s32.totalorder %v1347, 26
    %vm4468 = vcmp.lt.s32.totalorder %v1348, 26
    %vm4469 = vcmp.lt.s32.totalorder %v1349, 26
    %vm4470 = vcmp.lt.s32.totalorder %v1350, 26
    %vm4471 = vcmp.lt.s32.totalorder %v1351, 26
    %vm4472 = vcmp.lt.s32.totalorder %v1352, 26
    %vm4473 = vcmp.lt.s32.totalorder %v1353, 26
    %vm4474 = vcmp.lt.s32.totalorder %v1354, 26
    %vm4475 = vcmp.lt.s32.totalorder %v1355, 26
    %vm4476 = vcmp.lt.s32.totalorder %v1356, 26
    %vm4477 = vcmp.lt.s32.totalorder %v1357, 26
    %vm4478 = vcmp.lt.s32.totalorder %v1358, 26
    %vm4479 = vcmp.lt.s32.totalorder %v1359, 26
    %vm4480 = vcmp.lt.s32.totalorder %v1360, 26
    %vm4481 = vcmp.lt.s32.totalorder %v1361, 26
    %vm4482 = vcmp.lt.s32.totalorder %v1362, 26
    %vm4483 = vcmp.lt.s32.totalorder %v1363, 26
    %vm4484 = vcmp.lt.s32.totalorder %v1364, 26
    %vm4485 = vcmp.lt.s32.totalorder %v1365, 26
    %vm4486 = vcmp.lt.s32.totalorder %v1366, 26
    %vm4487 = vcmp.lt.s32.totalorder %v1367, 26
    %vm4488 = vcmp.lt.s32.totalorder %v1368, 26
    %vm4489 = vcmp.lt.s32.totalorder %v1369, 26
    %vm4490 = vcmp.lt.s32.totalorder %v1370, 26
    %vm4491 = vcmp.lt.s32.totalorder %v1371, 26
    %vm4492 = vcmp.lt.s32.totalorder %v1372, 26
    %vm4493 = vcmp.lt.s32.totalorder %v1373, 26
    %vm4494 = vcmp.lt.s32.totalorder %v1374, 26
    %vm4495 = vcmp.lt.s32.totalorder %v1375, 26
    %vm4496 = vcmp.lt.s32.totalorder %v1312, 25
    %vm4497 = vcmp.lt.s32.totalorder %v1313, 25
    %vm4498 = vcmp.lt.s32.totalorder %v1314, 25
    %vm4499 = vcmp.lt.s32.totalorder %v1315, 25
    %vm4500 = vcmp.lt.s32.totalorder %v1316, 25
    %vm4501 = vcmp.lt.s32.totalorder %v1317, 25
    %vm4502 = vcmp.lt.s32.totalorder %v1318, 25
    %vm4503 = vcmp.lt.s32.totalorder %v1319, 25
    %vm4504 = vcmp.lt.s32.totalorder %v1320, 25
    %vm4505 = vcmp.lt.s32.totalorder %v1321, 25
    %vm4506 = vcmp.lt.s32.totalorder %v1322, 25
    %vm4507 = vcmp.lt.s32.totalorder %v1323, 25
    %vm4508 = vcmp.lt.s32.totalorder %v1324, 25
    %vm4509 = vcmp.lt.s32.totalorder %v1325, 25
    %vm4510 = vcmp.lt.s32.totalorder %v1326, 25
    %vm4511 = vcmp.lt.s32.totalorder %v1327, 25
    %vm4512 = vcmp.lt.s32.totalorder %v1328, 25
    %vm4513 = vcmp.lt.s32.totalorder %v1329, 25
    %vm4514 = vcmp.lt.s32.totalorder %v1330, 25
    %vm4515 = vcmp.lt.s32.totalorder %v1331, 25
    %vm4516 = vcmp.lt.s32.totalorder %v1332, 25
    %vm4517 = vcmp.lt.s32.totalorder %v1333, 25
    %vm4518 = vcmp.lt.s32.totalorder %v1334, 25
    %vm4519 = vcmp.lt.s32.totalorder %v1335, 25
    %vm4520 = vcmp.lt.s32.totalorder %v1336, 25
    %vm4521 = vcmp.lt.s32.totalorder %v1337, 25
    %vm4522 = vcmp.lt.s32.totalorder %v1338, 25
    %vm4523 = vcmp.lt.s32.totalorder %v1339, 25
    %vm4524 = vcmp.lt.s32.totalorder %v1340, 25
    %vm4525 = vcmp.lt.s32.totalorder %v1341, 25
    %vm4526 = vcmp.lt.s32.totalorder %v1342, 25
    %vm4527 = vcmp.lt.s32.totalorder %v1343, 25
    %vm4528 = vcmp.lt.s32.totalorder %v1344, 25
    %vm4529 = vcmp.lt.s32.totalorder %v1345, 25
    %vm4530 = vcmp.lt.s32.totalorder %v1346, 25
    %vm4531 = vcmp.lt.s32.totalorder %v1347, 25
    %vm4532 = vcmp.lt.s32.totalorder %v1348, 25
    %vm4533 = vcmp.lt.s32.totalorder %v1349, 25
    %vm4534 = vcmp.lt.s32.totalorder %v1350, 25
    %vm4535 = vcmp.lt.s32.totalorder %v1351, 25
    %vm4536 = vcmp.lt.s32.totalorder %v1352, 25
    %vm4537 = vcmp.lt.s32.totalorder %v1353, 25
    %vm4538 = vcmp.lt.s32.totalorder %v1354, 25
    %vm4539 = vcmp.lt.s32.totalorder %v1355, 25
    %vm4540 = vcmp.lt.s32.totalorder %v1356, 25
    %vm4541 = vcmp.lt.s32.totalorder %v1357, 25
    %vm4542 = vcmp.lt.s32.totalorder %v1358, 25
    %vm4543 = vcmp.lt.s32.totalorder %v1359, 25
    %vm4544 = vcmp.lt.s32.totalorder %v1360, 25
    %vm4545 = vcmp.lt.s32.totalorder %v1361, 25
    %vm4546 = vcmp.lt.s32.totalorder %v1362, 25
    %vm4547 = vcmp.lt.s32.totalorder %v1363, 25
    %vm4548 = vcmp.lt.s32.totalorder %v1364, 25
    %vm4549 = vcmp.lt.s32.totalorder %v1365, 25
    %vm4550 = vcmp.lt.s32.totalorder %v1366, 25
    %vm4551 = vcmp.lt.s32.totalorder %v1367, 25
    %vm4552 = vcmp.lt.s32.totalorder %v1368, 25
    %vm4553 = vcmp.lt.s32.totalorder %v1369, 25
    %vm4554 = vcmp.lt.s32.totalorder %v1370, 25
    %vm4555 = vcmp.lt.s32.totalorder %v1371, 25
    %vm4556 = vcmp.lt.s32.totalorder %v1372, 25
    %vm4557 = vcmp.lt.s32.totalorder %v1373, 25
    %vm4558 = vcmp.lt.s32.totalorder %v1374, 25
    %vm4559 = vcmp.lt.s32.totalorder %v1375, 25
    %s4560 = sld [smem:[#allocation2 + $0x18]]
    %s4561 = sld [smem:[#allocation2 + $0x19]]
    %v4562 = vstv %s4560
    %v4563 = vstv %s4561
    %v4564 = vsel %vm4496, %v4562, %v4563
    %v4565 = vsel %vm4497, %v4562, %v4563
    %v4566 = vsel %vm4498, %v4562, %v4563
    %v4567 = vsel %vm4499, %v4562, %v4563
    %v4568 = vsel %vm4500, %v4562, %v4563
    %v4569 = vsel %vm4501, %v4562, %v4563
    %v4570 = vsel %vm4502, %v4562, %v4563
    %v4571 = vsel %vm4503, %v4562, %v4563
    %v4572 = vsel %vm4504, %v4562, %v4563
    %v4573 = vsel %vm4505, %v4562, %v4563
    %v4574 = vsel %vm4506, %v4562, %v4563
    %v4575 = vsel %vm4507, %v4562, %v4563
    %v4576 = vsel %vm4508, %v4562, %v4563
    %v4577 = vsel %vm4509, %v4562, %v4563
    %v4578 = vsel %vm4510, %v4562, %v4563
    %v4579 = vsel %vm4511, %v4562, %v4563
    %v4580 = vsel %vm4512, %v4562, %v4563
    %v4581 = vsel %vm4513, %v4562, %v4563
    %v4582 = vsel %vm4514, %v4562, %v4563
    %v4583 = vsel %vm4515, %v4562, %v4563
    %v4584 = vsel %vm4516, %v4562, %v4563
    %v4585 = vsel %vm4517, %v4562, %v4563
    %v4586 = vsel %vm4518, %v4562, %v4563
    %v4587 = vsel %vm4519, %v4562, %v4563
    %v4588 = vsel %vm4520, %v4562, %v4563
    %v4589 = vsel %vm4521, %v4562, %v4563
    %v4590 = vsel %vm4522, %v4562, %v4563
    %v4591 = vsel %vm4523, %v4562, %v4563
    %v4592 = vsel %vm4524, %v4562, %v4563
    %v4593 = vsel %vm4525, %v4562, %v4563
    %v4594 = vsel %vm4526, %v4562, %v4563
    %v4595 = vsel %vm4527, %v4562, %v4563
    %v4596 = vsel %vm4528, %v4562, %v4563
    %v4597 = vsel %vm4529, %v4562, %v4563
    %v4598 = vsel %vm4530, %v4562, %v4563
    %v4599 = vsel %vm4531, %v4562, %v4563
    %v4600 = vsel %vm4532, %v4562, %v4563
    %v4601 = vsel %vm4533, %v4562, %v4563
    %v4602 = vsel %vm4534, %v4562, %v4563
    %v4603 = vsel %vm4535, %v4562, %v4563
    %v4604 = vsel %vm4536, %v4562, %v4563
    %v4605 = vsel %vm4537, %v4562, %v4563
    %v4606 = vsel %vm4538, %v4562, %v4563
    %v4607 = vsel %vm4539, %v4562, %v4563
    %v4608 = vsel %vm4540, %v4562, %v4563
    %v4609 = vsel %vm4541, %v4562, %v4563
    %v4610 = vsel %vm4542, %v4562, %v4563
    %v4611 = vsel %vm4543, %v4562, %v4563
    %v4612 = vsel %vm4544, %v4562, %v4563
    %v4613 = vsel %vm4545, %v4562, %v4563
    %v4614 = vsel %vm4546, %v4562, %v4563
    %v4615 = vsel %vm4547, %v4562, %v4563
    %v4616 = vsel %vm4548, %v4562, %v4563
    %v4617 = vsel %vm4549, %v4562, %v4563
    %v4618 = vsel %vm4550, %v4562, %v4563
    %v4619 = vsel %vm4551, %v4562, %v4563
    %v4620 = vsel %vm4552, %v4562, %v4563
    %v4621 = vsel %vm4553, %v4562, %v4563
    %v4622 = vsel %vm4554, %v4562, %v4563
    %v4623 = vsel %vm4555, %v4562, %v4563
    %v4624 = vsel %vm4556, %v4562, %v4563
    %v4625 = vsel %vm4557, %v4562, %v4563
    %v4626 = vsel %vm4558, %v4562, %v4563
    %v4627 = vsel %vm4559, %v4562, %v4563
    %vm4628 = vcmp.lt.s32.totalorder %v1312, 27
    %vm4629 = vcmp.lt.s32.totalorder %v1313, 27
    %vm4630 = vcmp.lt.s32.totalorder %v1314, 27
    %vm4631 = vcmp.lt.s32.totalorder %v1315, 27
    %vm4632 = vcmp.lt.s32.totalorder %v1316, 27
    %vm4633 = vcmp.lt.s32.totalorder %v1317, 27
    %vm4634 = vcmp.lt.s32.totalorder %v1318, 27
    %vm4635 = vcmp.lt.s32.totalorder %v1319, 27
    %vm4636 = vcmp.lt.s32.totalorder %v1320, 27
    %vm4637 = vcmp.lt.s32.totalorder %v1321, 27
    %vm4638 = vcmp.lt.s32.totalorder %v1322, 27
    %vm4639 = vcmp.lt.s32.totalorder %v1323, 27
    %vm4640 = vcmp.lt.s32.totalorder %v1324, 27
    %vm4641 = vcmp.lt.s32.totalorder %v1325, 27
    %vm4642 = vcmp.lt.s32.totalorder %v1326, 27
    %vm4643 = vcmp.lt.s32.totalorder %v1327, 27
    %vm4644 = vcmp.lt.s32.totalorder %v1328, 27
    %vm4645 = vcmp.lt.s32.totalorder %v1329, 27
    %vm4646 = vcmp.lt.s32.totalorder %v1330, 27
    %vm4647 = vcmp.lt.s32.totalorder %v1331, 27
    %vm4648 = vcmp.lt.s32.totalorder %v1332, 27
    %vm4649 = vcmp.lt.s32.totalorder %v1333, 27
    %vm4650 = vcmp.lt.s32.totalorder %v1334, 27
    %vm4651 = vcmp.lt.s32.totalorder %v1335, 27
    %vm4652 = vcmp.lt.s32.totalorder %v1336, 27
    %vm4653 = vcmp.lt.s32.totalorder %v1337, 27
    %vm4654 = vcmp.lt.s32.totalorder %v1338, 27
    %vm4655 = vcmp.lt.s32.totalorder %v1339, 27
    %vm4656 = vcmp.lt.s32.totalorder %v1340, 27
    %vm4657 = vcmp.lt.s32.totalorder %v1341, 27
    %vm4658 = vcmp.lt.s32.totalorder %v1342, 27
    %vm4659 = vcmp.lt.s32.totalorder %v1343, 27
    %vm4660 = vcmp.lt.s32.totalorder %v1344, 27
    %vm4661 = vcmp.lt.s32.totalorder %v1345, 27
    %vm4662 = vcmp.lt.s32.totalorder %v1346, 27
    %vm4663 = vcmp.lt.s32.totalorder %v1347, 27
    %vm4664 = vcmp.lt.s32.totalorder %v1348, 27
    %vm4665 = vcmp.lt.s32.totalorder %v1349, 27
    %vm4666 = vcmp.lt.s32.totalorder %v1350, 27
    %vm4667 = vcmp.lt.s32.totalorder %v1351, 27
    %vm4668 = vcmp.lt.s32.totalorder %v1352, 27
    %vm4669 = vcmp.lt.s32.totalorder %v1353, 27
    %vm4670 = vcmp.lt.s32.totalorder %v1354, 27
    %vm4671 = vcmp.lt.s32.totalorder %v1355, 27
    %vm4672 = vcmp.lt.s32.totalorder %v1356, 27
    %vm4673 = vcmp.lt.s32.totalorder %v1357, 27
    %vm4674 = vcmp.lt.s32.totalorder %v1358, 27
    %vm4675 = vcmp.lt.s32.totalorder %v1359, 27
    %vm4676 = vcmp.lt.s32.totalorder %v1360, 27
    %vm4677 = vcmp.lt.s32.totalorder %v1361, 27
    %vm4678 = vcmp.lt.s32.totalorder %v1362, 27
    %vm4679 = vcmp.lt.s32.totalorder %v1363, 27
    %vm4680 = vcmp.lt.s32.totalorder %v1364, 27
    %vm4681 = vcmp.lt.s32.totalorder %v1365, 27
    %vm4682 = vcmp.lt.s32.totalorder %v1366, 27
    %vm4683 = vcmp.lt.s32.totalorder %v1367, 27
    %vm4684 = vcmp.lt.s32.totalorder %v1368, 27
    %vm4685 = vcmp.lt.s32.totalorder %v1369, 27
    %vm4686 = vcmp.lt.s32.totalorder %v1370, 27
    %vm4687 = vcmp.lt.s32.totalorder %v1371, 27
    %vm4688 = vcmp.lt.s32.totalorder %v1372, 27
    %vm4689 = vcmp.lt.s32.totalorder %v1373, 27
    %vm4690 = vcmp.lt.s32.totalorder %v1374, 27
    %vm4691 = vcmp.lt.s32.totalorder %v1375, 27
    %s4692 = sld [smem:[#allocation2 + $0x1a]]
    %s4693 = sld [smem:[#allocation2 + $0x1b]]
    %v4694 = vstv %s4692
    %v4695 = vstv %s4693
    %v4696 = vsel %vm4628, %v4694, %v4695
    %v4697 = vsel %vm4629, %v4694, %v4695
    %v4698 = vsel %vm4630, %v4694, %v4695
    %v4699 = vsel %vm4631, %v4694, %v4695
    %v4700 = vsel %vm4632, %v4694, %v4695
    %v4701 = vsel %vm4633, %v4694, %v4695
    %v4702 = vsel %vm4634, %v4694, %v4695
    %v4703 = vsel %vm4635, %v4694, %v4695
    %v4704 = vsel %vm4636, %v4694, %v4695
    %v4705 = vsel %vm4637, %v4694, %v4695
    %v4706 = vsel %vm4638, %v4694, %v4695
    %v4707 = vsel %vm4639, %v4694, %v4695
    %v4708 = vsel %vm4640, %v4694, %v4695
    %v4709 = vsel %vm4641, %v4694, %v4695
    %v4710 = vsel %vm4642, %v4694, %v4695
    %v4711 = vsel %vm4643, %v4694, %v4695
    %v4712 = vsel %vm4644, %v4694, %v4695
    %v4713 = vsel %vm4645, %v4694, %v4695
    %v4714 = vsel %vm4646, %v4694, %v4695
    %v4715 = vsel %vm4647, %v4694, %v4695
    %v4716 = vsel %vm4648, %v4694, %v4695
    %v4717 = vsel %vm4649, %v4694, %v4695
    %v4718 = vsel %vm4650, %v4694, %v4695
    %v4719 = vsel %vm4651, %v4694, %v4695
    %v4720 = vsel %vm4652, %v4694, %v4695
    %v4721 = vsel %vm4653, %v4694, %v4695
    %v4722 = vsel %vm4654, %v4694, %v4695
    %v4723 = vsel %vm4655, %v4694, %v4695
    %v4724 = vsel %vm4656, %v4694, %v4695
    %v4725 = vsel %vm4657, %v4694, %v4695
    %v4726 = vsel %vm4658, %v4694, %v4695
    %v4727 = vsel %vm4659, %v4694, %v4695
    %v4728 = vsel %vm4660, %v4694, %v4695
    %v4729 = vsel %vm4661, %v4694, %v4695
    %v4730 = vsel %vm4662, %v4694, %v4695
    %v4731 = vsel %vm4663, %v4694, %v4695
    %v4732 = vsel %vm4664, %v4694, %v4695
    %v4733 = vsel %vm4665, %v4694, %v4695
    %v4734 = vsel %vm4666, %v4694, %v4695
    %v4735 = vsel %vm4667, %v4694, %v4695
    %v4736 = vsel %vm4668, %v4694, %v4695
    %v4737 = vsel %vm4669, %v4694, %v4695
    %v4738 = vsel %vm4670, %v4694, %v4695
    %v4739 = vsel %vm4671, %v4694, %v4695
    %v4740 = vsel %vm4672, %v4694, %v4695
    %v4741 = vsel %vm4673, %v4694, %v4695
    %v4742 = vsel %vm4674, %v4694, %v4695
    %v4743 = vsel %vm4675, %v4694, %v4695
    %v4744 = vsel %vm4676, %v4694, %v4695
    %v4745 = vsel %vm4677, %v4694, %v4695
    %v4746 = vsel %vm4678, %v4694, %v4695
    %v4747 = vsel %vm4679, %v4694, %v4695
    %v4748 = vsel %vm4680, %v4694, %v4695
    %v4749 = vsel %vm4681, %v4694, %v4695
    %v4750 = vsel %vm4682, %v4694, %v4695
    %v4751 = vsel %vm4683, %v4694, %v4695
    %v4752 = vsel %vm4684, %v4694, %v4695
    %v4753 = vsel %vm4685, %v4694, %v4695
    %v4754 = vsel %vm4686, %v4694, %v4695
    %v4755 = vsel %vm4687, %v4694, %v4695
    %v4756 = vsel %vm4688, %v4694, %v4695
    %v4757 = vsel %vm4689, %v4694, %v4695
    %v4758 = vsel %vm4690, %v4694, %v4695
    %v4759 = vsel %vm4691, %v4694, %v4695
    %v4760 = vsel %vm4432, %v4564, %v4696
    %v4761 = vsel %vm4433, %v4565, %v4697
    %v4762 = vsel %vm4434, %v4566, %v4698
    %v4763 = vsel %vm4435, %v4567, %v4699
    %v4764 = vsel %vm4436, %v4568, %v4700
    %v4765 = vsel %vm4437, %v4569, %v4701
    %v4766 = vsel %vm4438, %v4570, %v4702
    %v4767 = vsel %vm4439, %v4571, %v4703
    %v4768 = vsel %vm4440, %v4572, %v4704
    %v4769 = vsel %vm4441, %v4573, %v4705
    %v4770 = vsel %vm4442, %v4574, %v4706
    %v4771 = vsel %vm4443, %v4575, %v4707
    %v4772 = vsel %vm4444, %v4576, %v4708
    %v4773 = vsel %vm4445, %v4577, %v4709
    %v4774 = vsel %vm4446, %v4578, %v4710
    %v4775 = vsel %vm4447, %v4579, %v4711
    %v4776 = vsel %vm4448, %v4580, %v4712
    %v4777 = vsel %vm4449, %v4581, %v4713
    %v4778 = vsel %vm4450, %v4582, %v4714
    %v4779 = vsel %vm4451, %v4583, %v4715
    %v4780 = vsel %vm4452, %v4584, %v4716
    %v4781 = vsel %vm4453, %v4585, %v4717
    %v4782 = vsel %vm4454, %v4586, %v4718
    %v4783 = vsel %vm4455, %v4587, %v4719
    %v4784 = vsel %vm4456, %v4588, %v4720
    %v4785 = vsel %vm4457, %v4589, %v4721
    %v4786 = vsel %vm4458, %v4590, %v4722
    %v4787 = vsel %vm4459, %v4591, %v4723
    %v4788 = vsel %vm4460, %v4592, %v4724
    %v4789 = vsel %vm4461, %v4593, %v4725
    %v4790 = vsel %vm4462, %v4594, %v4726
    %v4791 = vsel %vm4463, %v4595, %v4727
    %v4792 = vsel %vm4464, %v4596, %v4728
    %v4793 = vsel %vm4465, %v4597, %v4729
    %v4794 = vsel %vm4466, %v4598, %v4730
    %v4795 = vsel %vm4467, %v4599, %v4731
    %v4796 = vsel %vm4468, %v4600, %v4732
    %v4797 = vsel %vm4469, %v4601, %v4733
    %v4798 = vsel %vm4470, %v4602, %v4734
    %v4799 = vsel %vm4471, %v4603, %v4735
    %v4800 = vsel %vm4472, %v4604, %v4736
    %v4801 = vsel %vm4473, %v4605, %v4737
    %v4802 = vsel %vm4474, %v4606, %v4738
    %v4803 = vsel %vm4475, %v4607, %v4739
    %v4804 = vsel %vm4476, %v4608, %v4740
    %v4805 = vsel %vm4477, %v4609, %v4741
    %v4806 = vsel %vm4478, %v4610, %v4742
    %v4807 = vsel %vm4479, %v4611, %v4743
    %v4808 = vsel %vm4480, %v4612, %v4744
    %v4809 = vsel %vm4481, %v4613, %v4745
    %v4810 = vsel %vm4482, %v4614, %v4746
    %v4811 = vsel %vm4483, %v4615, %v4747
    %v4812 = vsel %vm4484, %v4616, %v4748
    %v4813 = vsel %vm4485, %v4617, %v4749
    %v4814 = vsel %vm4486, %v4618, %v4750
    %v4815 = vsel %vm4487, %v4619, %v4751
    %v4816 = vsel %vm4488, %v4620, %v4752
    %v4817 = vsel %vm4489, %v4621, %v4753
    %v4818 = vsel %vm4490, %v4622, %v4754
    %v4819 = vsel %vm4491, %v4623, %v4755
    %v4820 = vsel %vm4492, %v4624, %v4756
    %v4821 = vsel %vm4493, %v4625, %v4757
    %v4822 = vsel %vm4494, %v4626, %v4758
    %v4823 = vsel %vm4495, %v4627, %v4759
    %vm4824 = vcmp.lt.s32.totalorder %v1312, 30
    %vm4825 = vcmp.lt.s32.totalorder %v1313, 30
    %vm4826 = vcmp.lt.s32.totalorder %v1314, 30
    %vm4827 = vcmp.lt.s32.totalorder %v1315, 30
    %vm4828 = vcmp.lt.s32.totalorder %v1316, 30
    %vm4829 = vcmp.lt.s32.totalorder %v1317, 30
    %vm4830 = vcmp.lt.s32.totalorder %v1318, 30
    %vm4831 = vcmp.lt.s32.totalorder %v1319, 30
    %vm4832 = vcmp.lt.s32.totalorder %v1320, 30
    %vm4833 = vcmp.lt.s32.totalorder %v1321, 30
    %vm4834 = vcmp.lt.s32.totalorder %v1322, 30
    %vm4835 = vcmp.lt.s32.totalorder %v1323, 30
    %vm4836 = vcmp.lt.s32.totalorder %v1324, 30
    %vm4837 = vcmp.lt.s32.totalorder %v1325, 30
    %vm4838 = vcmp.lt.s32.totalorder %v1326, 30
    %vm4839 = vcmp.lt.s32.totalorder %v1327, 30
    %vm4840 = vcmp.lt.s32.totalorder %v1328, 30
    %vm4841 = vcmp.lt.s32.totalorder %v1329, 30
    %vm4842 = vcmp.lt.s32.totalorder %v1330, 30
    %vm4843 = vcmp.lt.s32.totalorder %v1331, 30
    %vm4844 = vcmp.lt.s32.totalorder %v1332, 30
    %vm4845 = vcmp.lt.s32.totalorder %v1333, 30
    %vm4846 = vcmp.lt.s32.totalorder %v1334, 30
    %vm4847 = vcmp.lt.s32.totalorder %v1335, 30
    %vm4848 = vcmp.lt.s32.totalorder %v1336, 30
    %vm4849 = vcmp.lt.s32.totalorder %v1337, 30
    %vm4850 = vcmp.lt.s32.totalorder %v1338, 30
    %vm4851 = vcmp.lt.s32.totalorder %v1339, 30
    %vm4852 = vcmp.lt.s32.totalorder %v1340, 30
    %vm4853 = vcmp.lt.s32.totalorder %v1341, 30
    %vm4854 = vcmp.lt.s32.totalorder %v1342, 30
    %vm4855 = vcmp.lt.s32.totalorder %v1343, 30
    %vm4856 = vcmp.lt.s32.totalorder %v1344, 30
    %vm4857 = vcmp.lt.s32.totalorder %v1345, 30
    %vm4858 = vcmp.lt.s32.totalorder %v1346, 30
    %vm4859 = vcmp.lt.s32.totalorder %v1347, 30
    %vm4860 = vcmp.lt.s32.totalorder %v1348, 30
    %vm4861 = vcmp.lt.s32.totalorder %v1349, 30
    %vm4862 = vcmp.lt.s32.totalorder %v1350, 30
    %vm4863 = vcmp.lt.s32.totalorder %v1351, 30
    %vm4864 = vcmp.lt.s32.totalorder %v1352, 30
    %vm4865 = vcmp.lt.s32.totalorder %v1353, 30
    %vm4866 = vcmp.lt.s32.totalorder %v1354, 30
    %vm4867 = vcmp.lt.s32.totalorder %v1355, 30
    %vm4868 = vcmp.lt.s32.totalorder %v1356, 30
    %vm4869 = vcmp.lt.s32.totalorder %v1357, 30
    %vm4870 = vcmp.lt.s32.totalorder %v1358, 30
    %vm4871 = vcmp.lt.s32.totalorder %v1359, 30
    %vm4872 = vcmp.lt.s32.totalorder %v1360, 30
    %vm4873 = vcmp.lt.s32.totalorder %v1361, 30
    %vm4874 = vcmp.lt.s32.totalorder %v1362, 30
    %vm4875 = vcmp.lt.s32.totalorder %v1363, 30
    %vm4876 = vcmp.lt.s32.totalorder %v1364, 30
    %vm4877 = vcmp.lt.s32.totalorder %v1365, 30
    %vm4878 = vcmp.lt.s32.totalorder %v1366, 30
    %vm4879 = vcmp.lt.s32.totalorder %v1367, 30
    %vm4880 = vcmp.lt.s32.totalorder %v1368, 30
    %vm4881 = vcmp.lt.s32.totalorder %v1369, 30
    %vm4882 = vcmp.lt.s32.totalorder %v1370, 30
    %vm4883 = vcmp.lt.s32.totalorder %v1371, 30
    %vm4884 = vcmp.lt.s32.totalorder %v1372, 30
    %vm4885 = vcmp.lt.s32.totalorder %v1373, 30
    %vm4886 = vcmp.lt.s32.totalorder %v1374, 30
    %vm4887 = vcmp.lt.s32.totalorder %v1375, 30
    %vm4888 = vcmp.lt.s32.totalorder %v1312, 29
    %vm4889 = vcmp.lt.s32.totalorder %v1313, 29
    %vm4890 = vcmp.lt.s32.totalorder %v1314, 29
    %vm4891 = vcmp.lt.s32.totalorder %v1315, 29
    %vm4892 = vcmp.lt.s32.totalorder %v1316, 29
    %vm4893 = vcmp.lt.s32.totalorder %v1317, 29
    %vm4894 = vcmp.lt.s32.totalorder %v1318, 29
    %vm4895 = vcmp.lt.s32.totalorder %v1319, 29
    %vm4896 = vcmp.lt.s32.totalorder %v1320, 29
    %vm4897 = vcmp.lt.s32.totalorder %v1321, 29
    %vm4898 = vcmp.lt.s32.totalorder %v1322, 29
    %vm4899 = vcmp.lt.s32.totalorder %v1323, 29
    %vm4900 = vcmp.lt.s32.totalorder %v1324, 29
    %vm4901 = vcmp.lt.s32.totalorder %v1325, 29
    %vm4902 = vcmp.lt.s32.totalorder %v1326, 29
    %vm4903 = vcmp.lt.s32.totalorder %v1327, 29
    %vm4904 = vcmp.lt.s32.totalorder %v1328, 29
    %vm4905 = vcmp.lt.s32.totalorder %v1329, 29
    %vm4906 = vcmp.lt.s32.totalorder %v1330, 29
    %vm4907 = vcmp.lt.s32.totalorder %v1331, 29
    %vm4908 = vcmp.lt.s32.totalorder %v1332, 29
    %vm4909 = vcmp.lt.s32.totalorder %v1333, 29
    %vm4910 = vcmp.lt.s32.totalorder %v1334, 29
    %vm4911 = vcmp.lt.s32.totalorder %v1335, 29
    %vm4912 = vcmp.lt.s32.totalorder %v1336, 29
    %vm4913 = vcmp.lt.s32.totalorder %v1337, 29
    %vm4914 = vcmp.lt.s32.totalorder %v1338, 29
    %vm4915 = vcmp.lt.s32.totalorder %v1339, 29
    %vm4916 = vcmp.lt.s32.totalorder %v1340, 29
    %vm4917 = vcmp.lt.s32.totalorder %v1341, 29
    %vm4918 = vcmp.lt.s32.totalorder %v1342, 29
    %vm4919 = vcmp.lt.s32.totalorder %v1343, 29
    %vm4920 = vcmp.lt.s32.totalorder %v1344, 29
    %vm4921 = vcmp.lt.s32.totalorder %v1345, 29
    %vm4922 = vcmp.lt.s32.totalorder %v1346, 29
    %vm4923 = vcmp.lt.s32.totalorder %v1347, 29
    %vm4924 = vcmp.lt.s32.totalorder %v1348, 29
    %vm4925 = vcmp.lt.s32.totalorder %v1349, 29
    %vm4926 = vcmp.lt.s32.totalorder %v1350, 29
    %vm4927 = vcmp.lt.s32.totalorder %v1351, 29
    %vm4928 = vcmp.lt.s32.totalorder %v1352, 29
    %vm4929 = vcmp.lt.s32.totalorder %v1353, 29
    %vm4930 = vcmp.lt.s32.totalorder %v1354, 29
    %vm4931 = vcmp.lt.s32.totalorder %v1355, 29
    %vm4932 = vcmp.lt.s32.totalorder %v1356, 29
    %vm4933 = vcmp.lt.s32.totalorder %v1357, 29
    %vm4934 = vcmp.lt.s32.totalorder %v1358, 29
    %vm4935 = vcmp.lt.s32.totalorder %v1359, 29
    %vm4936 = vcmp.lt.s32.totalorder %v1360, 29
    %vm4937 = vcmp.lt.s32.totalorder %v1361, 29
    %vm4938 = vcmp.lt.s32.totalorder %v1362, 29
    %vm4939 = vcmp.lt.s32.totalorder %v1363, 29
    %vm4940 = vcmp.lt.s32.totalorder %v1364, 29
    %vm4941 = vcmp.lt.s32.totalorder %v1365, 29
    %vm4942 = vcmp.lt.s32.totalorder %v1366, 29
    %vm4943 = vcmp.lt.s32.totalorder %v1367, 29
    %vm4944 = vcmp.lt.s32.totalorder %v1368, 29
    %vm4945 = vcmp.lt.s32.totalorder %v1369, 29
    %vm4946 = vcmp.lt.s32.totalorder %v1370, 29
    %vm4947 = vcmp.lt.s32.totalorder %v1371, 29
    %vm4948 = vcmp.lt.s32.totalorder %v1372, 29
    %vm4949 = vcmp.lt.s32.totalorder %v1373, 29
    %vm4950 = vcmp.lt.s32.totalorder %v1374, 29
    %vm4951 = vcmp.lt.s32.totalorder %v1375, 29
    %s4952 = sld [smem:[#allocation2 + $0x1c]]
    %s4953 = sld [smem:[#allocation2 + $0x1d]]
    %v4954 = vstv %s4952
    %v4955 = vstv %s4953
    %v4956 = vsel %vm4888, %v4954, %v4955
    %v4957 = vsel %vm4889, %v4954, %v4955
    %v4958 = vsel %vm4890, %v4954, %v4955
    %v4959 = vsel %vm4891, %v4954, %v4955
    %v4960 = vsel %vm4892, %v4954, %v4955
    %v4961 = vsel %vm4893, %v4954, %v4955
    %v4962 = vsel %vm4894, %v4954, %v4955
    %v4963 = vsel %vm4895, %v4954, %v4955
    %v4964 = vsel %vm4896, %v4954, %v4955
    %v4965 = vsel %vm4897, %v4954, %v4955
    %v4966 = vsel %vm4898, %v4954, %v4955
    %v4967 = vsel %vm4899, %v4954, %v4955
    %v4968 = vsel %vm4900, %v4954, %v4955
    %v4969 = vsel %vm4901, %v4954, %v4955
    %v4970 = vsel %vm4902, %v4954, %v4955
    %v4971 = vsel %vm4903, %v4954, %v4955
    %v4972 = vsel %vm4904, %v4954, %v4955
    %v4973 = vsel %vm4905, %v4954, %v4955
    %v4974 = vsel %vm4906, %v4954, %v4955
    %v4975 = vsel %vm4907, %v4954, %v4955
    %v4976 = vsel %vm4908, %v4954, %v4955
    %v4977 = vsel %vm4909, %v4954, %v4955
    %v4978 = vsel %vm4910, %v4954, %v4955
    %v4979 = vsel %vm4911, %v4954, %v4955
    %v4980 = vsel %vm4912, %v4954, %v4955
    %v4981 = vsel %vm4913, %v4954, %v4955
    %v4982 = vsel %vm4914, %v4954, %v4955
    %v4983 = vsel %vm4915, %v4954, %v4955
    %v4984 = vsel %vm4916, %v4954, %v4955
    %v4985 = vsel %vm4917, %v4954, %v4955
    %v4986 = vsel %vm4918, %v4954, %v4955
    %v4987 = vsel %vm4919, %v4954, %v4955
    %v4988 = vsel %vm4920, %v4954, %v4955
    %v4989 = vsel %vm4921, %v4954, %v4955
    %v4990 = vsel %vm4922, %v4954, %v4955
    %v4991 = vsel %vm4923, %v4954, %v4955
    %v4992 = vsel %vm4924, %v4954, %v4955
    %v4993 = vsel %vm4925, %v4954, %v4955
    %v4994 = vsel %vm4926, %v4954, %v4955
    %v4995 = vsel %vm4927, %v4954, %v4955
    %v4996 = vsel %vm4928, %v4954, %v4955
    %v4997 = vsel %vm4929, %v4954, %v4955
    %v4998 = vsel %vm4930, %v4954, %v4955
    %v4999 = vsel %vm4931, %v4954, %v4955
    %v5000 = vsel %vm4932, %v4954, %v4955
    %v5001 = vsel %vm4933, %v4954, %v4955
    %v5002 = vsel %vm4934, %v4954, %v4955
    %v5003 = vsel %vm4935, %v4954, %v4955
    %v5004 = vsel %vm4936, %v4954, %v4955
    %v5005 = vsel %vm4937, %v4954, %v4955
    %v5006 = vsel %vm4938, %v4954, %v4955
    %v5007 = vsel %vm4939, %v4954, %v4955
    %v5008 = vsel %vm4940, %v4954, %v4955
    %v5009 = vsel %vm4941, %v4954, %v4955
    %v5010 = vsel %vm4942, %v4954, %v4955
    %v5011 = vsel %vm4943, %v4954, %v4955
    %v5012 = vsel %vm4944, %v4954, %v4955
    %v5013 = vsel %vm4945, %v4954, %v4955
    %v5014 = vsel %vm4946, %v4954, %v4955
    %v5015 = vsel %vm4947, %v4954, %v4955
    %v5016 = vsel %vm4948, %v4954, %v4955
    %v5017 = vsel %vm4949, %v4954, %v4955
    %v5018 = vsel %vm4950, %v4954, %v4955
    %v5019 = vsel %vm4951, %v4954, %v4955
    %vm5020 = vcmp.lt.s32.totalorder %v1312, 31
    %vm5021 = vcmp.lt.s32.totalorder %v1313, 31
    %vm5022 = vcmp.lt.s32.totalorder %v1314, 31
    %vm5023 = vcmp.lt.s32.totalorder %v1315, 31
    %vm5024 = vcmp.lt.s32.totalorder %v1316, 31
    %vm5025 = vcmp.lt.s32.totalorder %v1317, 31
    %vm5026 = vcmp.lt.s32.totalorder %v1318, 31
    %vm5027 = vcmp.lt.s32.totalorder %v1319, 31
    %vm5028 = vcmp.lt.s32.totalorder %v1320, 31
    %vm5029 = vcmp.lt.s32.totalorder %v1321, 31
    %vm5030 = vcmp.lt.s32.totalorder %v1322, 31
    %vm5031 = vcmp.lt.s32.totalorder %v1323, 31
    %vm5032 = vcmp.lt.s32.totalorder %v1324, 31
    %vm5033 = vcmp.lt.s32.totalorder %v1325, 31
    %vm5034 = vcmp.lt.s32.totalorder %v1326, 31
    %vm5035 = vcmp.lt.s32.totalorder %v1327, 31
    %vm5036 = vcmp.lt.s32.totalorder %v1328, 31
    %vm5037 = vcmp.lt.s32.totalorder %v1329, 31
    %vm5038 = vcmp.lt.s32.totalorder %v1330, 31
    %vm5039 = vcmp.lt.s32.totalorder %v1331, 31
    %vm5040 = vcmp.lt.s32.totalorder %v1332, 31
    %vm5041 = vcmp.lt.s32.totalorder %v1333, 31
    %vm5042 = vcmp.lt.s32.totalorder %v1334, 31
    %vm5043 = vcmp.lt.s32.totalorder %v1335, 31
    %vm5044 = vcmp.lt.s32.totalorder %v1336, 31
    %vm5045 = vcmp.lt.s32.totalorder %v1337, 31
    %vm5046 = vcmp.lt.s32.totalorder %v1338, 31
    %vm5047 = vcmp.lt.s32.totalorder %v1339, 31
    %vm5048 = vcmp.lt.s32.totalorder %v1340, 31
    %vm5049 = vcmp.lt.s32.totalorder %v1341, 31
    %vm5050 = vcmp.lt.s32.totalorder %v1342, 31
    %vm5051 = vcmp.lt.s32.totalorder %v1343, 31
    %vm5052 = vcmp.lt.s32.totalorder %v1344, 31
    %vm5053 = vcmp.lt.s32.totalorder %v1345, 31
    %vm5054 = vcmp.lt.s32.totalorder %v1346, 31
    %vm5055 = vcmp.lt.s32.totalorder %v1347, 31
    %vm5056 = vcmp.lt.s32.totalorder %v1348, 31
    %vm5057 = vcmp.lt.s32.totalorder %v1349, 31
    %vm5058 = vcmp.lt.s32.totalorder %v1350, 31
    %vm5059 = vcmp.lt.s32.totalorder %v1351, 31
    %vm5060 = vcmp.lt.s32.totalorder %v1352, 31
    %vm5061 = vcmp.lt.s32.totalorder %v1353, 31
    %vm5062 = vcmp.lt.s32.totalorder %v1354, 31
    %vm5063 = vcmp.lt.s32.totalorder %v1355, 31
    %vm5064 = vcmp.lt.s32.totalorder %v1356, 31
    %vm5065 = vcmp.lt.s32.totalorder %v1357, 31
    %vm5066 = vcmp.lt.s32.totalorder %v1358, 31
    %vm5067 = vcmp.lt.s32.totalorder %v1359, 31
    %vm5068 = vcmp.lt.s32.totalorder %v1360, 31
    %vm5069 = vcmp.lt.s32.totalorder %v1361, 31
    %vm5070 = vcmp.lt.s32.totalorder %v1362, 31
    %vm5071 = vcmp.lt.s32.totalorder %v1363, 31
    %vm5072 = vcmp.lt.s32.totalorder %v1364, 31
    %vm5073 = vcmp.lt.s32.totalorder %v1365, 31
    %vm5074 = vcmp.lt.s32.totalorder %v1366, 31
    %vm5075 = vcmp.lt.s32.totalorder %v1367, 31
    %vm5076 = vcmp.lt.s32.totalorder %v1368, 31
    %vm5077 = vcmp.lt.s32.totalorder %v1369, 31
    %vm5078 = vcmp.lt.s32.totalorder %v1370, 31
    %vm5079 = vcmp.lt.s32.totalorder %v1371, 31
    %vm5080 = vcmp.lt.s32.totalorder %v1372, 31
    %vm5081 = vcmp.lt.s32.totalorder %v1373, 31
    %vm5082 = vcmp.lt.s32.totalorder %v1374, 31
    %vm5083 = vcmp.lt.s32.totalorder %v1375, 31
    %s5084 = sld [smem:[#allocation2 + $0x1e]]
    %s5085 = sld [smem:[#allocation2 + $0x1f]]
    %v5086 = vstv %s5084
    %v5087 = vstv %s5085
    %v5088 = vsel %vm5020, %v5086, %v5087
    %v5089 = vsel %vm5021, %v5086, %v5087
    %v5090 = vsel %vm5022, %v5086, %v5087
    %v5091 = vsel %vm5023, %v5086, %v5087
    %v5092 = vsel %vm5024, %v5086, %v5087
    %v5093 = vsel %vm5025, %v5086, %v5087
    %v5094 = vsel %vm5026, %v5086, %v5087
    %v5095 = vsel %vm5027, %v5086, %v5087
    %v5096 = vsel %vm5028, %v5086, %v5087
    %v5097 = vsel %vm5029, %v5086, %v5087
    %v5098 = vsel %vm5030, %v5086, %v5087
    %v5099 = vsel %vm5031, %v5086, %v5087
    %v5100 = vsel %vm5032, %v5086, %v5087
    %v5101 = vsel %vm5033, %v5086, %v5087
    %v5102 = vsel %vm5034, %v5086, %v5087
    %v5103 = vsel %vm5035, %v5086, %v5087
    %v5104 = vsel %vm5036, %v5086, %v5087
    %v5105 = vsel %vm5037, %v5086, %v5087
    %v5106 = vsel %vm5038, %v5086, %v5087
    %v5107 = vsel %vm5039, %v5086, %v5087
    %v5108 = vsel %vm5040, %v5086, %v5087
    %v5109 = vsel %vm5041, %v5086, %v5087
    %v5110 = vsel %vm5042, %v5086, %v5087
    %v5111 = vsel %vm5043, %v5086, %v5087
    %v5112 = vsel %vm5044, %v5086, %v5087
    %v5113 = vsel %vm5045, %v5086, %v5087
    %v5114 = vsel %vm5046, %v5086, %v5087
    %v5115 = vsel %vm5047, %v5086, %v5087
    %v5116 = vsel %vm5048, %v5086, %v5087
    %v5117 = vsel %vm5049, %v5086, %v5087
    %v5118 = vsel %vm5050, %v5086, %v5087
    %v5119 = vsel %vm5051, %v5086, %v5087
    %v5120 = vsel %vm5052, %v5086, %v5087
    %v5121 = vsel %vm5053, %v5086, %v5087
    %v5122 = vsel %vm5054, %v5086, %v5087
    %v5123 = vsel %vm5055, %v5086, %v5087
    %v5124 = vsel %vm5056, %v5086, %v5087
    %v5125 = vsel %vm5057, %v5086, %v5087
    %v5126 = vsel %vm5058, %v5086, %v5087
    %v5127 = vsel %vm5059, %v5086, %v5087
    %v5128 = vsel %vm5060, %v5086, %v5087
    %v5129 = vsel %vm5061, %v5086, %v5087
    %v5130 = vsel %vm5062, %v5086, %v5087
    %v5131 = vsel %vm5063, %v5086, %v5087
    %v5132 = vsel %vm5064, %v5086, %v5087
    %v5133 = vsel %vm5065, %v5086, %v5087
    %v5134 = vsel %vm5066, %v5086, %v5087
    %v5135 = vsel %vm5067, %v5086, %v5087
    %v5136 = vsel %vm5068, %v5086, %v5087
    %v5137 = vsel %vm5069, %v5086, %v5087
    %v5138 = vsel %vm5070, %v5086, %v5087
    %v5139 = vsel %vm5071, %v5086, %v5087
    %v5140 = vsel %vm5072, %v5086, %v5087
    %v5141 = vsel %vm5073, %v5086, %v5087
    %v5142 = vsel %vm5074, %v5086, %v5087
    %v5143 = vsel %vm5075, %v5086, %v5087
    %v5144 = vsel %vm5076, %v5086, %v5087
    %v5145 = vsel %vm5077, %v5086, %v5087
    %v5146 = vsel %vm5078, %v5086, %v5087
    %v5147 = vsel %vm5079, %v5086, %v5087
    %v5148 = vsel %vm5080, %v5086, %v5087
    %v5149 = vsel %vm5081, %v5086, %v5087
    %v5150 = vsel %vm5082, %v5086, %v5087
    %v5151 = vsel %vm5083, %v5086, %v5087
    %v5152 = vsel %vm4824, %v4956, %v5088
    %v5153 = vsel %vm4825, %v4957, %v5089
    %v5154 = vsel %vm4826, %v4958, %v5090
    %v5155 = vsel %vm4827, %v4959, %v5091
    %v5156 = vsel %vm4828, %v4960, %v5092
    %v5157 = vsel %vm4829, %v4961, %v5093
    %v5158 = vsel %vm4830, %v4962, %v5094
    %v5159 = vsel %vm4831, %v4963, %v5095
    %v5160 = vsel %vm4832, %v4964, %v5096
    %v5161 = vsel %vm4833, %v4965, %v5097
    %v5162 = vsel %vm4834, %v4966, %v5098
    %v5163 = vsel %vm4835, %v4967, %v5099
    %v5164 = vsel %vm4836, %v4968, %v5100
    %v5165 = vsel %vm4837, %v4969, %v5101
    %v5166 = vsel %vm4838, %v4970, %v5102
    %v5167 = vsel %vm4839, %v4971, %v5103
    %v5168 = vsel %vm4840, %v4972, %v5104
    %v5169 = vsel %vm4841, %v4973, %v5105
    %v5170 = vsel %vm4842, %v4974, %v5106
    %v5171 = vsel %vm4843, %v4975, %v5107
    %v5172 = vsel %vm4844, %v4976, %v5108
    %v5173 = vsel %vm4845, %v4977, %v5109
    %v5174 = vsel %vm4846, %v4978, %v5110
    %v5175 = vsel %vm4847, %v4979, %v5111
    %v5176 = vsel %vm4848, %v4980, %v5112
    %v5177 = vsel %vm4849, %v4981, %v5113
    %v5178 = vsel %vm4850, %v4982, %v5114
    %v5179 = vsel %vm4851, %v4983, %v5115
    %v5180 = vsel %vm4852, %v4984, %v5116
    %v5181 = vsel %vm4853, %v4985, %v5117
    %v5182 = vsel %vm4854, %v4986, %v5118
    %v5183 = vsel %vm4855, %v4987, %v5119
    %v5184 = vsel %vm4856, %v4988, %v5120
    %v5185 = vsel %vm4857, %v4989, %v5121
    %v5186 = vsel %vm4858, %v4990, %v5122
    %v5187 = vsel %vm4859, %v4991, %v5123
    %v5188 = vsel %vm4860, %v4992, %v5124
    %v5189 = vsel %vm4861, %v4993, %v5125
    %v5190 = vsel %vm4862, %v4994, %v5126
    %v5191 = vsel %vm4863, %v4995, %v5127
    %v5192 = vsel %vm4864, %v4996, %v5128
    %v5193 = vsel %vm4865, %v4997, %v5129
    %v5194 = vsel %vm4866, %v4998, %v5130
    %v5195 = vsel %vm4867, %v4999, %v5131
    %v5196 = vsel %vm4868, %v5000, %v5132
    %v5197 = vsel %vm4869, %v5001, %v5133
    %v5198 = vsel %vm4870, %v5002, %v5134
    %v5199 = vsel %vm4871, %v5003, %v5135
    %v5200 = vsel %vm4872, %v5004, %v5136
    %v5201 = vsel %vm4873, %v5005, %v5137
    %v5202 = vsel %vm4874, %v5006, %v5138
    %v5203 = vsel %vm4875, %v5007, %v5139
    %v5204 = vsel %vm4876, %v5008, %v5140
    %v5205 = vsel %vm4877, %v5009, %v5141
    %v5206 = vsel %vm4878, %v5010, %v5142
    %v5207 = vsel %vm4879, %v5011, %v5143
    %v5208 = vsel %vm4880, %v5012, %v5144
    %v5209 = vsel %vm4881, %v5013, %v5145
    %v5210 = vsel %vm4882, %v5014, %v5146
    %v5211 = vsel %vm4883, %v5015, %v5147
    %v5212 = vsel %vm4884, %v5016, %v5148
    %v5213 = vsel %vm4885, %v5017, %v5149
    %v5214 = vsel %vm4886, %v5018, %v5150
    %v5215 = vsel %vm4887, %v5019, %v5151
    %v5216 = vsel %vm4368, %v4760, %v5152
    %v5217 = vsel %vm4369, %v4761, %v5153
    %v5218 = vsel %vm4370, %v4762, %v5154
    %v5219 = vsel %vm4371, %v4763, %v5155
    %v5220 = vsel %vm4372, %v4764, %v5156
    %v5221 = vsel %vm4373, %v4765, %v5157
    %v5222 = vsel %vm4374, %v4766, %v5158
    %v5223 = vsel %vm4375, %v4767, %v5159
    %v5224 = vsel %vm4376, %v4768, %v5160
    %v5225 = vsel %vm4377, %v4769, %v5161
    %v5226 = vsel %vm4378, %v4770, %v5162
    %v5227 = vsel %vm4379, %v4771, %v5163
    %v5228 = vsel %vm4380, %v4772, %v5164
    %v5229 = vsel %vm4381, %v4773, %v5165
    %v5230 = vsel %vm4382, %v4774, %v5166
    %v5231 = vsel %vm4383, %v4775, %v5167
    %v5232 = vsel %vm4384, %v4776, %v5168
    %v5233 = vsel %vm4385, %v4777, %v5169
    %v5234 = vsel %vm4386, %v4778, %v5170
    %v5235 = vsel %vm4387, %v4779, %v5171
    %v5236 = vsel %vm4388, %v4780, %v5172
    %v5237 = vsel %vm4389, %v4781, %v5173
    %v5238 = vsel %vm4390, %v4782, %v5174
    %v5239 = vsel %vm4391, %v4783, %v5175
    %v5240 = vsel %vm4392, %v4784, %v5176
    %v5241 = vsel %vm4393, %v4785, %v5177
    %v5242 = vsel %vm4394, %v4786, %v5178
    %v5243 = vsel %vm4395, %v4787, %v5179
    %v5244 = vsel %vm4396, %v4788, %v5180
    %v5245 = vsel %vm4397, %v4789, %v5181
    %v5246 = vsel %vm4398, %v4790, %v5182
    %v5247 = vsel %vm4399, %v4791, %v5183
    %v5248 = vsel %vm4400, %v4792, %v5184
    %v5249 = vsel %vm4401, %v4793, %v5185
    %v5250 = vsel %vm4402, %v4794, %v5186
    %v5251 = vsel %vm4403, %v4795, %v5187
    %v5252 = vsel %vm4404, %v4796, %v5188
    %v5253 = vsel %vm4405, %v4797, %v5189
    %v5254 = vsel %vm4406, %v4798, %v5190
    %v5255 = vsel %vm4407, %v4799, %v5191
    %v5256 = vsel %vm4408, %v4800, %v5192
    %v5257 = vsel %vm4409, %v4801, %v5193
    %v5258 = vsel %vm4410, %v4802, %v5194
    %v5259 = vsel %vm4411, %v4803, %v5195
    %v5260 = vsel %vm4412, %v4804, %v5196
    %v5261 = vsel %vm4413, %v4805, %v5197
    %v5262 = vsel %vm4414, %v4806, %v5198
    %v5263 = vsel %vm4415, %v4807, %v5199
    %v5264 = vsel %vm4416, %v4808, %v5200
    %v5265 = vsel %vm4417, %v4809, %v5201
    %v5266 = vsel %vm4418, %v4810, %v5202
    %v5267 = vsel %vm4419, %v4811, %v5203
    %v5268 = vsel %vm4420, %v4812, %v5204
    %v5269 = vsel %vm4421, %v4813, %v5205
    %v5270 = vsel %vm4422, %v4814, %v5206
    %v5271 = vsel %vm4423, %v4815, %v5207
    %v5272 = vsel %vm4424, %v4816, %v5208
    %v5273 = vsel %vm4425, %v4817, %v5209
    %v5274 = vsel %vm4426, %v4818, %v5210
    %v5275 = vsel %vm4427, %v4819, %v5211
    %v5276 = vsel %vm4428, %v4820, %v5212
    %v5277 = vsel %vm4429, %v4821, %v5213
    %v5278 = vsel %vm4430, %v4822, %v5214
    %v5279 = vsel %vm4431, %v4823, %v5215
    %v5280 = vsel %vm3392, %v4304, %v5216
    %v5281 = vsel %vm3393, %v4305, %v5217
    %v5282 = vsel %vm3394, %v4306, %v5218
    %v5283 = vsel %vm3395, %v4307, %v5219
    %v5284 = vsel %vm3396, %v4308, %v5220
    %v5285 = vsel %vm3397, %v4309, %v5221
    %v5286 = vsel %vm3398, %v4310, %v5222
    %v5287 = vsel %vm3399, %v4311, %v5223
    %v5288 = vsel %vm3400, %v4312, %v5224
    %v5289 = vsel %vm3401, %v4313, %v5225
    %v5290 = vsel %vm3402, %v4314, %v5226
    %v5291 = vsel %vm3403, %v4315, %v5227
    %v5292 = vsel %vm3404, %v4316, %v5228
    %v5293 = vsel %vm3405, %v4317, %v5229
    %v5294 = vsel %vm3406, %v4318, %v5230
    %v5295 = vsel %vm3407, %v4319, %v5231
    %v5296 = vsel %vm3408, %v4320, %v5232
    %v5297 = vsel %vm3409, %v4321, %v5233
    %v5298 = vsel %vm3410, %v4322, %v5234
    %v5299 = vsel %vm3411, %v4323, %v5235
    %v5300 = vsel %vm3412, %v4324, %v5236
    %v5301 = vsel %vm3413, %v4325, %v5237
    %v5302 = vsel %vm3414, %v4326, %v5238
    %v5303 = vsel %vm3415, %v4327, %v5239
    %v5304 = vsel %vm3416, %v4328, %v5240
    %v5305 = vsel %vm3417, %v4329, %v5241
    %v5306 = vsel %vm3418, %v4330, %v5242
    %v5307 = vsel %vm3419, %v4331, %v5243
    %v5308 = vsel %vm3420, %v4332, %v5244
    %v5309 = vsel %vm3421, %v4333, %v5245
    %v5310 = vsel %vm3422, %v4334, %v5246
    %v5311 = vsel %vm3423, %v4335, %v5247
    %v5312 = vsel %vm3424, %v4336, %v5248
    %v5313 = vsel %vm3425, %v4337, %v5249
    %v5314 = vsel %vm3426, %v4338, %v5250
    %v5315 = vsel %vm3427, %v4339, %v5251
    %v5316 = vsel %vm3428, %v4340, %v5252
    %v5317 = vsel %vm3429, %v4341, %v5253
    %v5318 = vsel %vm3430, %v4342, %v5254
    %v5319 = vsel %vm3431, %v4343, %v5255
    %v5320 = vsel %vm3432, %v4344, %v5256
    %v5321 = vsel %vm3433, %v4345, %v5257
    %v5322 = vsel %vm3434, %v4346, %v5258
    %v5323 = vsel %vm3435, %v4347, %v5259
    %v5324 = vsel %vm3436, %v4348, %v5260
    %v5325 = vsel %vm3437, %v4349, %v5261
    %v5326 = vsel %vm3438, %v4350, %v5262
    %v5327 = vsel %vm3439, %v4351, %v5263
    %v5328 = vsel %vm3440, %v4352, %v5264
    %v5329 = vsel %vm3441, %v4353, %v5265
    %v5330 = vsel %vm3442, %v4354, %v5266
    %v5331 = vsel %vm3443, %v4355, %v5267
    %v5332 = vsel %vm3444, %v4356, %v5268
    %v5333 = vsel %vm3445, %v4357, %v5269
    %v5334 = vsel %vm3446, %v4358, %v5270
    %v5335 = vsel %vm3447, %v4359, %v5271
    %v5336 = vsel %vm3448, %v4360, %v5272
    %v5337 = vsel %vm3449, %v4361, %v5273
    %v5338 = vsel %vm3450, %v4362, %v5274
    %v5339 = vsel %vm3451, %v4363, %v5275
    %v5340 = vsel %vm3452, %v4364, %v5276
    %v5341 = vsel %vm3453, %v4365, %v5277
    %v5342 = vsel %vm3454, %v4366, %v5278
    %v5343 = vsel %vm3455, %v4367, %v5279
    %v5344 = vsel %vm1376, %v3328, %v5280
    %v5345 = vsel %vm1377, %v3329, %v5281
    %v5346 = vsel %vm1378, %v3330, %v5282
    %v5347 = vsel %vm1379, %v3331, %v5283
    %v5348 = vsel %vm1380, %v3332, %v5284
    %v5349 = vsel %vm1381, %v3333, %v5285
    %v5350 = vsel %vm1382, %v3334, %v5286
    %v5351 = vsel %vm1383, %v3335, %v5287
    %v5352 = vsel %vm1384, %v3336, %v5288
    %v5353 = vsel %vm1385, %v3337, %v5289
    %v5354 = vsel %vm1386, %v3338, %v5290
    %v5355 = vsel %vm1387, %v3339, %v5291
    %v5356 = vsel %vm1388, %v3340, %v5292
    %v5357 = vsel %vm1389, %v3341, %v5293
    %v5358 = vsel %vm1390, %v3342, %v5294
    %v5359 = vsel %vm1391, %v3343, %v5295
    %v5360 = vsel %vm1392, %v3344, %v5296
    %v5361 = vsel %vm1393, %v3345, %v5297
    %v5362 = vsel %vm1394, %v3346, %v5298
    %v5363 = vsel %vm1395, %v3347, %v5299
    %v5364 = vsel %vm1396, %v3348, %v5300
    %v5365 = vsel %vm1397, %v3349, %v5301
    %v5366 = vsel %vm1398, %v3350, %v5302
    %v5367 = vsel %vm1399, %v3351, %v5303
    %v5368 = vsel %vm1400, %v3352, %v5304
    %v5369 = vsel %vm1401, %v3353, %v5305
    %v5370 = vsel %vm1402, %v3354, %v5306
    %v5371 = vsel %vm1403, %v3355, %v5307
    %v5372 = vsel %vm1404, %v3356, %v5308
    %v5373 = vsel %vm1405, %v3357, %v5309
    %v5374 = vsel %vm1406, %v3358, %v5310
    %v5375 = vsel %vm1407, %v3359, %v5311
    %v5376 = vsel %vm1408, %v3360, %v5312
    %v5377 = vsel %vm1409, %v3361, %v5313
    %v5378 = vsel %vm1410, %v3362, %v5314
    %v5379 = vsel %vm1411, %v3363, %v5315
    %v5380 = vsel %vm1412, %v3364, %v5316
    %v5381 = vsel %vm1413, %v3365, %v5317
    %v5382 = vsel %vm1414, %v3366, %v5318
    %v5383 = vsel %vm1415, %v3367, %v5319
    %v5384 = vsel %vm1416, %v3368, %v5320
    %v5385 = vsel %vm1417, %v3369, %v5321
    %v5386 = vsel %vm1418, %v3370, %v5322
    %v5387 = vsel %vm1419, %v3371, %v5323
    %v5388 = vsel %vm1420, %v3372, %v5324
    %v5389 = vsel %vm1421, %v3373, %v5325
    %v5390 = vsel %vm1422, %v3374, %v5326
    %v5391 = vsel %vm1423, %v3375, %v5327
    %v5392 = vsel %vm1424, %v3376, %v5328
    %v5393 = vsel %vm1425, %v3377, %v5329
    %v5394 = vsel %vm1426, %v3378, %v5330
    %v5395 = vsel %vm1427, %v3379, %v5331
    %v5396 = vsel %vm1428, %v3380, %v5332
    %v5397 = vsel %vm1429, %v3381, %v5333
    %v5398 = vsel %vm1430, %v3382, %v5334
    %v5399 = vsel %vm1431, %v3383, %v5335
    %v5400 = vsel %vm1432, %v3384, %v5336
    %v5401 = vsel %vm1433, %v3385, %v5337
    %v5402 = vsel %vm1434, %v3386, %v5338
    %v5403 = vsel %vm1435, %v3387, %v5339
    %v5404 = vsel %vm1436, %v3388, %v5340
    %v5405 = vsel %vm1437, %v3389, %v5341
    %v5406 = vsel %vm1438, %v3390, %v5342
    %v5407 = vsel %vm1439, %v3391, %v5343
    %5408 = vst [vmem:[#allocation5] sm:$0xff] %v5344
    %5409 = vst [vmem:[#allocation5 + $0x8] sm:$0xff] %v5345
    %5410 = vst [vmem:[#allocation5 + $0x10] sm:$0xff] %v5346
    %5411 = vst [vmem:[#allocation5 + $0x18] sm:$0xff] %v5347
    %5412 = vst [vmem:[#allocation5 + $0x20] sm:$0xff] %v5348
    %5413 = vst [vmem:[#allocation5 + $0x28] sm:$0xff] %v5349
    %5414 = vst [vmem:[#allocation5 + $0x30] sm:$0xff] %v5350
    %5415 = vst [vmem:[#allocation5 + $0x38] sm:$0xff] %v5351
    %5416 = vst [vmem:[#allocation5 + $0x40] sm:$0xff] %v5352
    %5417 = vst [vmem:[#allocation5 + $0x48] sm:$0xff] %v5353
    %5418 = vst [vmem:[#allocation5 + $0x50] sm:$0xff] %v5354
    %5419 = vst [vmem:[#allocation5 + $0x58] sm:$0xff] %v5355
    %5420 = vst [vmem:[#allocation5 + $0x60] sm:$0xff] %v5356
    %5421 = vst [vmem:[#allocation5 + $0x68] sm:$0xff] %v5357
    %5422 = vst [vmem:[#allocation5 + $0x70] sm:$0xff] %v5358
    %5423 = vst [vmem:[#allocation5 + $0x78] sm:$0xff] %v5359
    %5424 = vst [vmem:[#allocation5 + $0x80] sm:$0xff] %v5360
    %5425 = vst [vmem:[#allocation5 + $0x88] sm:$0xff] %v5361
    %5426 = vst [vmem:[#allocation5 + $0x90] sm:$0xff] %v5362
    %5427 = vst [vmem:[#allocation5 + $0x98] sm:$0xff] %v5363
    %5428 = vst [vmem:[#allocation5 + $0xa0] sm:$0xff] %v5364
    %5429 = vst [vmem:[#allocation5 + $0xa8] sm:$0xff] %v5365
    %5430 = vst [vmem:[#allocation5 + $0xb0] sm:$0xff] %v5366
    %5431 = vst [vmem:[#allocation5 + $0xb8] sm:$0xff] %v5367
    %5432 = vst [vmem:[#allocation5 + $0xc0] sm:$0xff] %v5368
    %5433 = vst [vmem:[#allocation5 + $0xc8] sm:$0xff] %v5369
    %5434 = vst [vmem:[#allocation5 + $0xd0] sm:$0xff] %v5370
    %5435 = vst [vmem:[#allocation5 + $0xd8] sm:$0xff] %v5371
    %5436 = vst [vmem:[#allocation5 + $0xe0] sm:$0xff] %v5372
    %5437 = vst [vmem:[#allocation5 + $0xe8] sm:$0xff] %v5373
    %5438 = vst [vmem:[#allocation5 + $0xf0] sm:$0xff] %v5374
    %5439 = vst [vmem:[#allocation5 + $0xf8] sm:$0xff] %v5375
    %5440 = vst [vmem:[#allocation5 + $0x100] sm:$0xff] %v5376
    %5441 = vst [vmem:[#allocation5 + $0x108] sm:$0xff] %v5377
    %5442 = vst [vmem:[#allocation5 + $0x110] sm:$0xff] %v5378
    %5443 = vst [vmem:[#allocation5 + $0x118] sm:$0xff] %v5379
    %5444 = vst [vmem:[#allocation5 + $0x120] sm:$0xff] %v5380
    %5445 = vst [vmem:[#allocation5 + $0x128] sm:$0xff] %v5381
    %5446 = vst [vmem:[#allocation5 + $0x130] sm:$0xff] %v5382
    %5447 = vst [vmem:[#allocation5 + $0x138] sm:$0xff] %v5383
    %5448 = vst [vmem:[#allocation5 + $0x140] sm:$0xff] %v5384
    %5449 = vst [vmem:[#allocation5 + $0x148] sm:$0xff] %v5385
    %5450 = vst [vmem:[#allocation5 + $0x150] sm:$0xff] %v5386
    %5451 = vst [vmem:[#allocation5 + $0x158] sm:$0xff] %v5387
    %5452 = vst [vmem:[#allocation5 + $0x160] sm:$0xff] %v5388
    %5453 = vst [vmem:[#allocation5 + $0x168] sm:$0xff] %v5389
    %5454 = vst [vmem:[#allocation5 + $0x170] sm:$0xff] %v5390
    %5455 = vst [vmem:[#allocation5 + $0x178] sm:$0xff] %v5391
    %5456 = vst [vmem:[#allocation5 + $0x180] sm:$0xff] %v5392
    %5457 = vst [vmem:[#allocation5 + $0x188] sm:$0xff] %v5393
    %5458 = vst [vmem:[#allocation5 + $0x190] sm:$0xff] %v5394
    %5459 = vst [vmem:[#allocation5 + $0x198] sm:$0xff] %v5395
    %5460 = vst [vmem:[#allocation5 + $0x1a0] sm:$0xff] %v5396
    %5461 = vst [vmem:[#allocation5 + $0x1a8] sm:$0xff] %v5397
    %5462 = vst [vmem:[#allocation5 + $0x1b0] sm:$0xff] %v5398
    %5463 = vst [vmem:[#allocation5 + $0x1b8] sm:$0xff] %v5399
    %5464 = vst [vmem:[#allocation5 + $0x1c0] sm:$0xff] %v5400
    %5465 = vst [vmem:[#allocation5 + $0x1c8] sm:$0xff] %v5401
    %5466 = vst [vmem:[#allocation5 + $0x1d0] sm:$0xff] %v5402
    %5467 = vst [vmem:[#allocation5 + $0x1d8] sm:$0xff] %v5403
    %5468 = vst [vmem:[#allocation5 + $0x1e0] sm:$0xff] %v5404
    %5469 = vst [vmem:[#allocation5 + $0x1e8] sm:$0xff] %v5405
    %5470 = vst [vmem:[#allocation5 + $0x1f0] sm:$0xff] %v5406
    %5471 = vst [vmem:[#allocation5 + $0x1f8] sm:$0xff] %v5407
    // Predicated region
    $region10: #{tpu_custom_call.1} parent=1 // pred_check
      _
    $region11: #{tpu_custom_call.1} parent=1 // pred_check_branch
      %5473 = sbr.rel (0) target = $region13
    $region12: #{tpu_custom_call.1} parent=1 // pred_region
      %s5475 = ssub.s32 8192, 8192
      %5476 = vsyncadd [#allocation3], %s5475
      %s5477 = sshll.u32 [#allocation5], 4
      %s5478 = int_to_ptr.vmem [resolvable:$true] %s5477
      %5483 = dma.vmem_to_hbm [thread:$0]  %s5478, 8192, %s1, [#allocation3], 256, 256, 16
    $region13: #{tpu_custom_call.1} parent=1 // pred_fallthru
      _
    // Predicated region
    $region14: #{tpu_custom_call.1} parent=1 // pred_check
      _
    $region15: #{tpu_custom_call.1} parent=1 // pred_check_branch
      %5485 = sbr.rel (0) target = $region17
    $region16: #{tpu_custom_call.1} parent=1 // pred_region
      %5486 = dma.done [#allocation3], 8192
    $region17: #{tpu_custom_call.1} parent=1 // pred_fallthru
      _
    %5487 = vsyncpa [#allocation3], 1
    %5488 = vsyncpa [#allocation4], 1

</llo_original>
